<compile_context>
chip_gen: v7x
topology: tpu7x:2x2x1
jax: 0.10.0
libtpu: 0.0.40
codegen_flags: <defaults>
</compile_context>

<pallas_src>
import functools

import jax
import jax.numpy as jnp
from jax.experimental import pallas as pl
from jax.experimental.pallas import tpu as pltpu


def _border_rows(W):
    # Left/right zero border of the flat scratch: must cover a full tap reach
    # (W + 1 rows) and be a multiple of 16 so the interior store stays
    # sublane-aligned for both f32 and packed dtypes.
    return max(16, ((W + 1 + 15) // 16) * 16)


def _make_resblocks_kernel(num_blocks, H, W, C, norm, use_bias, eps=1e-5):
    """Fused ResBlocks kernel body: one batch element per grid step."""
    assert norm in ("in", "none")
    HW = H * W
    B0 = _border_rows(W)

    def kernel(*refs):
        if use_bias:
            x_ref, w1_ref, w2_ref, b1_ref, b2_ref, o_ref, pad_ref = refs
        else:
            x_ref, w1_ref, w2_ref, o_ref, pad_ref = refs
            b1_ref = b2_ref = None

        # Zero only the two border strips; the interior is fully rewritten by
        # every conv, so the zero padding persists across layers and steps.
        pad_ref[0:B0, :] = jnp.zeros((B0, C), pad_ref.dtype)
        pad_ref[B0 + HW:2 * B0 + HW, :] = jnp.zeros((B0, C), pad_ref.dtype)

        # Column-edge validity masks (flat pixel index -> image column),
        # computed once per grid step.
        flat = jax.lax.broadcasted_iota(jnp.int32, (HW, C), 0)
        if (W & (W - 1)) == 0:                       # power-of-two width
            col = jnp.bitwise_and(flat, W - 1)
        else:
            col = jax.lax.rem(flat, W)
        not_left = col != 0                          # kx=0 taps: don't wrap across w=0
        not_right = col != (W - 1)                   # kx=2 taps: don't wrap across w=W-1

        def conv3x3(act_f32, w_ref, b_ref, layer):
            # act_f32: (HW, C) f32.  One bf16 MXU matmul: (HW, 9C) x (9C, C).
            pad_ref[B0:B0 + HW, :] = act_f32.astype(pad_ref.dtype)
            taps = []
            for ky in range(3):
                for kx in range(3):
                    start = B0 + (ky - 1) * W + (kx - 1)
                    slab = pad_ref[start:start + HW, :].astype(jnp.bfloat16)
                    if kx == 0:
                        slab = jnp.where(not_left, slab, jnp.zeros_like(slab))
                    elif kx == 2:
                        slab = jnp.where(not_right, slab, jnp.zeros_like(slab))
                    taps.append(slab)
            im2col = jnp.concatenate(taps, axis=-1)               # (HW, 9C) bf16
            y = jnp.dot(im2col, w_ref[layer],
                        preferred_element_type=jnp.float32)       # (HW, C) f32
            if b_ref is not None:
                y = y + b_ref[layer].astype(jnp.float32)
            return y

        def instance_norm(y):
            # PyTorch InstanceNorm2d: biased variance over H*W, affine=False.
            mean = jnp.mean(y, axis=0, keepdims=True)
            centered = y - mean
            var = jnp.mean(centered * centered, axis=0, keepdims=True)
            return centered * jax.lax.rsqrt(var + eps)

        act = x_ref[...].astype(jnp.float32)                      # (HW, C), VMEM-resident
        # TODO(synk): switch to lax.fori_loop with dynamic w_ref[l] indexing if
        # num_blocks grows beyond ~4 (bounds vreg live ranges / compile time).
        for l in range(num_blocks):
            res = act
            # Conv2dBlock #1: conv -> norm -> ReLU
            y = conv3x3(act, w1_ref, b1_ref, l)
            if norm == "in":
                y = instance_norm(y)
            y = jnp.maximum(y, 0.0)
            # Conv2dBlock #2: conv -> norm (activation='none')
            y = conv3x3(y, w2_ref, b2_ref, l)
            if norm == "in":
                y = instance_norm(y)
            act = y + res                                          # residual add
        o_ref[...] = act.astype(o_ref.dtype)

    return kernel


@functools.partial(jax.jit, static_argnames=("norm",))
def resblocks_forward(x_nchw, w1, b1, w2, b2, *, norm="in"):
    """x_nchw: [B, C, H, W]; w1/w2: [L, 9C, C] bf16 (rows ordered ky,kx,cin);
    b1/b2: [L, 1, C] f32 (only used when norm='none').  Returns [B, C, H, W]."""
    B, C, H, W = x_nchw.shape
    if C % 128 != 0:
        raise ValueError("dim must be a multiple of 128 (lane-dense channel axis)")
    L = w1.shape[0]
    HW = H * W
    use_bias = (norm != "in")   # InstanceNorm cancels a per-channel bias exactly
    B0 = _border_rows(W)

    # NCHW -> (B, HW, C): channels on the 128-lane axis.
    # TODO(synk): in a production pipeline keep activations NHWC end-to-end and
    # drop these transposes (pure HBM-traffic overhead around the kernel).
    x_flat = jnp.transpose(x_nchw, (0, 2, 3, 1)).reshape(B, HW, C)

    in_specs = [
        pl.BlockSpec((None, HW, C), lambda b: (b, 0, 0)),
        pl.BlockSpec((L, 9 * C, C), lambda b: (0, 0, 0)),
        pl.BlockSpec((L, 9 * C, C), lambda b: (0, 0, 0)),
    ]
    args = [x_flat, w1, w2]
    if use_bias:
        in_specs += [pl.BlockSpec((L, 1, C), lambda b: (0, 0, 0)),
                     pl.BlockSpec((L, 1, C), lambda b: (0, 0, 0))]
        args += [b1, b2]

    out = pl.pallas_call(
        _make_resblocks_kernel(L, H, W, C, norm, use_bias),
        out_shape=jax.ShapeDtypeStruct((B, HW, C), x_nchw.dtype),
        grid_spec=pltpu.PrefetchScalarGridSpec(
            num_scalar_prefetch=0,
            grid=(B,),
            in_specs=in_specs,
            out_specs=pl.BlockSpec((None, HW, C), lambda b: (b, 0, 0)),
            scratch_shapes=[pltpu.VMEM((2 * B0 + HW, C), jnp.float32)],
        ),
        compiler_params=pltpu.CompilerParams(
            dimension_semantics=("parallel",),        # shard batch across TCs on v7x
            vmem_limit_bytes=48 * 1024 * 1024,
        ),
    )(*args)
    return jnp.transpose(out.reshape(B, H, W, C), (0, 3, 1, 2))


def init_resblocks_params(key, num_blocks, dim, dtype=jnp.float32):
    """PyTorch Conv2d default init: U(-1/sqrt(fan_in), 1/sqrt(fan_in)), fan_in=C*3*3."""
    params = []
    fan_in = dim * 3 * 3
    bound = 1.0 / jnp.sqrt(jnp.float32(fan_in))
    for _ in range(num_blocks):
        key, k1, k2, k3, k4 = jax.random.split(key, 5)
        w1 = jax.random.uniform(k1, (dim, dim, 3, 3), dtype, -bound, bound)
        b1 = jax.random.uniform(k2, (dim,), dtype, -bound, bound)
        w2 = jax.random.uniform(k3, (dim, dim, 3, 3), dtype, -bound, bound)
        b2 = jax.random.uniform(k4, (dim,), dtype, -bound, bound)
        params.append((w1, b1, w2, b2))
    return params


def prepare_params(params, compute_dtype=jnp.bfloat16):
    """One-time re-layout of PyTorch conv params for the kernel:
    w [Cout, Cin, 3, 3] -> im2col weight [9*Cin, Cout] (rows ordered ky, kx, cin),
    stacked over layers -> [L, 9C, C], cast to bf16 for native MXU rate."""
    L = len(params)
    C = params[0][0].shape[0]

    def flat(w):
        return jnp.transpose(w, (2, 3, 1, 0)).reshape(9 * C, C)

    w1 = jnp.stack([flat(p[0]) for p in params]).astype(compute_dtype)
    w2 = jnp.stack([flat(p[2]) for p in params]).astype(compute_dtype)
    b1 = jnp.stack([p[1].reshape(1, C) for p in params])
    b2 = jnp.stack([p[3].reshape(1, C) for p in params])
    return w1, b1, w2, b2


def resblocks_reference(x, params, norm="in", eps=1e-5):
    """Pure-JAX reference matching the PyTorch ResBlocks forward."""
    def conv3x3(x, w, b):
        y = jax.lax.conv_general_dilated(
            x, w, window_strides=(1, 1), padding=((1, 1), (1, 1)),
            dimension_numbers=("NCHW", "OIHW", "NCHW"),
            precision=jax.lax.Precision.HIGHEST)
        return y + b[None, :, None, None]

    def inorm(x):
        mean = jnp.mean(x, axis=(2, 3), keepdims=True)
        var = jnp.mean(jnp.square(x - mean), axis=(2, 3), keepdims=True)
        return (x - mean) * jax.lax.rsqrt(var + eps)

    y = x
    for (w1, b1, w2, b2) in params:
        r = y
        t = conv3x3(y, w1, b1)
        if norm == "in":
            t = inorm(t)
        t = jnp.maximum(t, 0.0)
        t = conv3x3(t, w2, b2)
        if norm == "in":
            t = inorm(t)
        y = t + r
    return y


if __name__ == "__main__":
    key = jax.random.PRNGKey(0)
    k_x, k_p = jax.random.split(key)

    # ResBlocks(num_blocks=2, dim=128, norm='in', activation='relu', pad_type='zero')
    batch, dim, H, W = 2, 128, 16, 16   # dim=128 => lane-dense channel axis
    num_blocks = 2

    x = jax.random.normal(k_x, (batch, dim, H, W), dtype=jnp.float32)
    params = init_resblocks_params(k_p, num_blocks, dim)
    w1, b1, w2, b2 = prepare_params(params)   # one-time weight re-layout + bf16 cast

    out = resblocks_forward(x, w1, b1, w2, b2, norm="in")
    out = jax.block_until_ready(out)

    ref = resblocks_reference(x, params, norm="in")
    assert out.shape == (batch, dim, H, W)
    # Tolerance reflects bf16 MXU operands (f32 accumulate) vs. the f32
    # HIGHEST-precision reference, over 4 convs + 4 instance norms.
    max_err = float(jnp.max(jnp.abs(out - ref)))
    assert jnp.allclose(out, ref, atol=3e-2, rtol=3e-2), max_err

    print("KERNEL_OK")
</pallas_src>

<mosaic_0001>
module attributes {stable_mosaic.version = 11 : i64} {
  func.func @kernel(%arg0: i32, %arg1: memref<1x256x128xf32, #tpu.memory_space<vmem>>, %arg2: memref<2x1152x128xbf16, #tpu.memory_space<vmem>>, %arg3: memref<2x1152x128xbf16, #tpu.memory_space<vmem>>, %arg4: memref<1x256x128xf32, #tpu.memory_space<vmem>>, %arg5: memref<320x128xf32, #tpu.memory_space<vmem>>) attributes {dimension_semantics = [#tpu.dimension_semantics<parallel>], iteration_bounds = array<i64: 2>, scalar_prefetch = 0 : i64, scratch_operands = 1 : i64, tpu.core_type = #tpu.core_type<tc>, window_params = [{transform_indices = @transform_0, window_bounds = array<i64: 1, 256, 128>}, {pipeline_mode = #tpu.pipeline_mode<synchronous>, transform_indices = @transform_1, window_bounds = array<i64: 2, 1152, 128>}, {pipeline_mode = #tpu.pipeline_mode<synchronous>, transform_indices = @transform_2, window_bounds = array<i64: 2, 1152, 128>}, {transform_indices = @transform_3, window_bounds = array<i64: 1, 256, 128>}]} {
    %cst = arith.constant 0.000000e+00 : f32
    %0 = vector.broadcast %cst : f32 to vector<32x128xf32>
    %c0 = arith.constant 0 : index
    %c0_0 = arith.constant 0 : index
    %1 = vector.load %arg5[%c0, %c0_0] : memref<320x128xf32, #tpu.memory_space<vmem>>, vector<32x128xf32>
    tpu.vector_store %arg5[%c0, %c0_0], %0 {strides = array<i32>} : memref<320x128xf32, #tpu.memory_space<vmem>>, vector<32x128xf32>,
    %cst_1 = arith.constant 0.000000e+00 : f32
    %2 = vector.broadcast %cst_1 : f32 to vector<32x128xf32>
    %c288 = arith.constant 288 : index
    %c0_2 = arith.constant 0 : index
    %3 = vector.load %arg5[%c288, %c0_2] : memref<320x128xf32, #tpu.memory_space<vmem>>, vector<32x128xf32>
    tpu.vector_store %arg5[%c288, %c0_2], %2 {strides = array<i32>} : memref<320x128xf32, #tpu.memory_space<vmem>>, vector<32x128xf32>,
    %4 = tpu.iota {dimensions = array<i32: 0>} : vector<256x128xi32>
    %c15_i32 = arith.constant 15 : i32
    %5 = vector.broadcast %c15_i32 : i32 to vector<256x128xi32>
    %6 = arith.andi %4, %5 : vector<256x128xi32>
    %c0_i32 = arith.constant 0 : i32
    %7 = vector.broadcast %c0_i32 : i32 to vector<256x128xi32>
    %8 = arith.cmpi ne, %6, %7 : vector<256x128xi32>
    %c15_i32_3 = arith.constant 15 : i32
    %9 = vector.broadcast %c15_i32_3 : i32 to vector<256x128xi32>
    %10 = arith.cmpi ne, %6, %9 : vector<256x128xi32>
    %c0_4 = arith.constant 0 : index
    %c0_5 = arith.constant 0 : index
    %c0_6 = arith.constant 0 : index
    %11 = vector.load %arg1[%c0_4, %c0_5, %c0_6] : memref<1x256x128xf32, #tpu.memory_space<vmem>>, vector<1x256x128xf32>
    %12 = vector.shape_cast %11 : vector<1x256x128xf32> to vector<256x128xf32>
    %c32 = arith.constant 32 : index
    %c0_7 = arith.constant 0 : index
    %13 = vector.load %arg5[%c32, %c0_7] : memref<320x128xf32, #tpu.memory_space<vmem>>, vector<256x128xf32>
    tpu.vector_store %arg5[%c32, %c0_7], %12 {strides = array<i32>} : memref<320x128xf32, #tpu.memory_space<vmem>>, vector<256x128xf32>,
    %c15 = arith.constant 15 : index
    %c0_8 = arith.constant 0 : index
    %14 = vector.load %arg5[%c15, %c0_8] : memref<320x128xf32, #tpu.memory_space<vmem>>, vector<256x128xf32>
    %15 = arith.truncf %14 : vector<256x128xf32> to vector<256x128xbf16>
    %cst_9 = arith.constant 0.000000e+00 : bf16
    %16 = vector.broadcast %cst_9 : bf16 to vector<256x128xbf16>
    %17 = arith.select %8, %15, %16 : vector<256x128xi1>, vector<256x128xbf16>
    %c16 = arith.constant 16 : index
    %c0_10 = arith.constant 0 : index
    %18 = vector.load %arg5[%c16, %c0_10] : memref<320x128xf32, #tpu.memory_space<vmem>>, vector<256x128xf32>
    %19 = arith.truncf %18 : vector<256x128xf32> to vector<256x128xbf16>
    %c17 = arith.constant 17 : index
    %c0_11 = arith.constant 0 : index
    %20 = vector.load %arg5[%c17, %c0_11] : memref<320x128xf32, #tpu.memory_space<vmem>>, vector<256x128xf32>
    %21 = arith.truncf %20 : vector<256x128xf32> to vector<256x128xbf16>
    %cst_12 = arith.constant 0.000000e+00 : bf16
    %22 = vector.broadcast %cst_12 : bf16 to vector<256x128xbf16>
    %23 = arith.select %10, %21, %22 : vector<256x128xi1>, vector<256x128xbf16>
    %c31 = arith.constant 31 : index
    %c0_13 = arith.constant 0 : index
    %24 = vector.load %arg5[%c31, %c0_13] : memref<320x128xf32, #tpu.memory_space<vmem>>, vector<256x128xf32>
    %25 = arith.truncf %24 : vector<256x128xf32> to vector<256x128xbf16>
    %cst_14 = arith.constant 0.000000e+00 : bf16
    %26 = vector.broadcast %cst_14 : bf16 to vector<256x128xbf16>
    %27 = arith.select %8, %25, %26 : vector<256x128xi1>, vector<256x128xbf16>
    %c32_15 = arith.constant 32 : index
    %c0_16 = arith.constant 0 : index
    %28 = vector.load %arg5[%c32_15, %c0_16] : memref<320x128xf32, #tpu.memory_space<vmem>>, vector<256x128xf32>
    %29 = arith.truncf %28 : vector<256x128xf32> to vector<256x128xbf16>
    %c33 = arith.constant 33 : index
    %c0_17 = arith.constant 0 : index
    %30 = vector.load %arg5[%c33, %c0_17] : memref<320x128xf32, #tpu.memory_space<vmem>>, vector<256x128xf32>
    %31 = arith.truncf %30 : vector<256x128xf32> to vector<256x128xbf16>
    %cst_18 = arith.constant 0.000000e+00 : bf16
    %32 = vector.broadcast %cst_18 : bf16 to vector<256x128xbf16>
    %33 = arith.select %10, %31, %32 : vector<256x128xi1>, vector<256x128xbf16>
    %c47 = arith.constant 47 : index
    %c0_19 = arith.constant 0 : index
    %34 = vector.load %arg5[%c47, %c0_19] : memref<320x128xf32, #tpu.memory_space<vmem>>, vector<256x128xf32>
    %35 = arith.truncf %34 : vector<256x128xf32> to vector<256x128xbf16>
    %cst_20 = arith.constant 0.000000e+00 : bf16
    %36 = vector.broadcast %cst_20 : bf16 to vector<256x128xbf16>
    %37 = arith.select %8, %35, %36 : vector<256x128xi1>, vector<256x128xbf16>
    %c48 = arith.constant 48 : index
    %c0_21 = arith.constant 0 : index
    %38 = vector.load %arg5[%c48, %c0_21] : memref<320x128xf32, #tpu.memory_space<vmem>>, vector<256x128xf32>
    %39 = arith.truncf %38 : vector<256x128xf32> to vector<256x128xbf16>
    %c49 = arith.constant 49 : index
    %c0_22 = arith.constant 0 : index
    %40 = vector.load %arg5[%c49, %c0_22] : memref<320x128xf32, #tpu.memory_space<vmem>>, vector<256x128xf32>
    %41 = arith.truncf %40 : vector<256x128xf32> to vector<256x128xbf16>
    %cst_23 = arith.constant 0.000000e+00 : bf16
    %42 = vector.broadcast %cst_23 : bf16 to vector<256x128xbf16>
    %43 = arith.select %10, %41, %42 : vector<256x128xi1>, vector<256x128xbf16>
    %44 = tpu.concatenate %17, %19, %23, %27, %29, %33, %37, %39, %43 in 1 : vector<256x128xbf16>, vector<256x128xbf16>, vector<256x128xbf16>, vector<256x128xbf16>, vector<256x128xbf16>, vector<256x128xbf16>, vector<256x128xbf16>, vector<256x128xbf16>, vector<256x128xbf16> -> vector<256x1152xbf16>
    %c0_24 = arith.constant 0 : index
    %c0_25 = arith.constant 0 : index
    %c0_26 = arith.constant 0 : index
    %45 = vector.load %arg2[%c0_24, %c0_25, %c0_26] : memref<2x1152x128xbf16, #tpu.memory_space<vmem>>, vector<1x1152x128xbf16>
    %46 = vector.shape_cast %45 : vector<1x1152x128xbf16> to vector<1152x128xbf16>
    %cst_27 = arith.constant dense<0.000000e+00> : vector<256x128xf32>
    %47 = tpu.matmul %44, %46, %cst_27 {dimension_numbers = #tpu.dot_dimension_numbers<[1], [0], [0], [1], [0, 0, 1, 1], [], []>} : vector<256x1152xbf16>, vector<1152x128xbf16>, vector<256x128xf32> -> vector<256x128xf32>
    %cst_28 = arith.constant dense<0.000000e+00> : vector<128xf32>
    %48 = vector.multi_reduction <add>, %47, %cst_28 [0] : vector<256x128xf32> to vector<128xf32>
    %49 = vector.shape_cast %48 : vector<128xf32> to vector<1x128xf32>
    %cst_29 = arith.constant 2.560000e+02 : f32
    %50 = vector.broadcast %cst_29 : f32 to vector<1x128xf32>
    %51 = arith.divf %49, %50 : vector<1x128xf32>
    %52 = vector.broadcast %51 : vector<1x128xf32> to vector<256x128xf32>
    %53 = arith.subf %47, %52 : vector<256x128xf32>
    %54 = arith.mulf %53, %53 : vector<256x128xf32>
    %cst_30 = arith.constant dense<0.000000e+00> : vector<128xf32>
    %55 = vector.multi_reduction <add>, %54, %cst_30 [0] : vector<256x128xf32> to vector<128xf32>
    %56 = vector.shape_cast %55 : vector<128xf32> to vector<1x128xf32>
    %cst_31 = arith.constant 2.560000e+02 : f32
    %57 = vector.broadcast %cst_31 : f32 to vector<1x128xf32>
    %58 = arith.divf %56, %57 : vector<1x128xf32>
    %cst_32 = arith.constant 9.99999974E-6 : f32
    %59 = vector.broadcast %cst_32 : f32 to vector<1x128xf32>
    %60 = arith.addf %58, %59 : vector<1x128xf32>
    %61 = math.rsqrt %60 : vector<1x128xf32>
    %62 = vector.broadcast %61 : vector<1x128xf32> to vector<256x128xf32>
    %63 = arith.mulf %53, %62 : vector<256x128xf32>
    %cst_33 = arith.constant 0.000000e+00 : f32
    %64 = vector.broadcast %cst_33 : f32 to vector<256x128xf32>
    %65 = arith.maximumf %63, %64 : vector<256x128xf32>
    %c32_34 = arith.constant 32 : index
    %c0_35 = arith.constant 0 : index
    %66 = vector.load %arg5[%c32_34, %c0_35] : memref<320x128xf32, #tpu.memory_space<vmem>>, vector<256x128xf32>
    tpu.vector_store %arg5[%c32_34, %c0_35], %65 {strides = array<i32>} : memref<320x128xf32, #tpu.memory_space<vmem>>, vector<256x128xf32>,
    %c15_36 = arith.constant 15 : index
    %c0_37 = arith.constant 0 : index
    %67 = vector.load %arg5[%c15_36, %c0_37] : memref<320x128xf32, #tpu.memory_space<vmem>>, vector<256x128xf32>
    %68 = arith.truncf %67 : vector<256x128xf32> to vector<256x128xbf16>
    %cst_38 = arith.constant 0.000000e+00 : bf16
    %69 = vector.broadcast %cst_38 : bf16 to vector<256x128xbf16>
    %70 = arith.select %8, %68, %69 : vector<256x128xi1>, vector<256x128xbf16>
    %c16_39 = arith.constant 16 : index
    %c0_40 = arith.constant 0 : index
    %71 = vector.load %arg5[%c16_39, %c0_40] : memref<320x128xf32, #tpu.memory_space<vmem>>, vector<256x128xf32>
    %72 = arith.truncf %71 : vector<256x128xf32> to vector<256x128xbf16>
    %c17_41 = arith.constant 17 : index
    %c0_42 = arith.constant 0 : index
    %73 = vector.load %arg5[%c17_41, %c0_42] : memref<320x128xf32, #tpu.memory_space<vmem>>, vector<256x128xf32>
    %74 = arith.truncf %73 : vector<256x128xf32> to vector<256x128xbf16>
    %cst_43 = arith.constant 0.000000e+00 : bf16
    %75 = vector.broadcast %cst_43 : bf16 to vector<256x128xbf16>
    %76 = arith.select %10, %74, %75 : vector<256x128xi1>, vector<256x128xbf16>
    %c31_44 = arith.constant 31 : index
    %c0_45 = arith.constant 0 : index
    %77 = vector.load %arg5[%c31_44, %c0_45] : memref<320x128xf32, #tpu.memory_space<vmem>>, vector<256x128xf32>
    %78 = arith.truncf %77 : vector<256x128xf32> to vector<256x128xbf16>
    %cst_46 = arith.constant 0.000000e+00 : bf16
    %79 = vector.broadcast %cst_46 : bf16 to vector<256x128xbf16>
    %80 = arith.select %8, %78, %79 : vector<256x128xi1>, vector<256x128xbf16>
    %c32_47 = arith.constant 32 : index
    %c0_48 = arith.constant 0 : index
    %81 = vector.load %arg5[%c32_47, %c0_48] : memref<320x128xf32, #tpu.memory_space<vmem>>, vector<256x128xf32>
    %82 = arith.truncf %81 : vector<256x128xf32> to vector<256x128xbf16>
    %c33_49 = arith.constant 33 : index
    %c0_50 = arith.constant 0 : index
    %83 = vector.load %arg5[%c33_49, %c0_50] : memref<320x128xf32, #tpu.memory_space<vmem>>, vector<256x128xf32>
    %84 = arith.truncf %83 : vector<256x128xf32> to vector<256x128xbf16>
    %cst_51 = arith.constant 0.000000e+00 : bf16
    %85 = vector.broadcast %cst_51 : bf16 to vector<256x128xbf16>
    %86 = arith.select %10, %84, %85 : vector<256x128xi1>, vector<256x128xbf16>
    %c47_52 = arith.constant 47 : index
    %c0_53 = arith.constant 0 : index
    %87 = vector.load %arg5[%c47_52, %c0_53] : memref<320x128xf32, #tpu.memory_space<vmem>>, vector<256x128xf32>
    %88 = arith.truncf %87 : vector<256x128xf32> to vector<256x128xbf16>
    %cst_54 = arith.constant 0.000000e+00 : bf16
    %89 = vector.broadcast %cst_54 : bf16 to vector<256x128xbf16>
    %90 = arith.select %8, %88, %89 : vector<256x128xi1>, vector<256x128xbf16>
    %c48_55 = arith.constant 48 : index
    %c0_56 = arith.constant 0 : index
    %91 = vector.load %arg5[%c48_55, %c0_56] : memref<320x128xf32, #tpu.memory_space<vmem>>, vector<256x128xf32>
    %92 = arith.truncf %91 : vector<256x128xf32> to vector<256x128xbf16>
    %c49_57 = arith.constant 49 : index
    %c0_58 = arith.constant 0 : index
    %93 = vector.load %arg5[%c49_57, %c0_58] : memref<320x128xf32, #tpu.memory_space<vmem>>, vector<256x128xf32>
    %94 = arith.truncf %93 : vector<256x128xf32> to vector<256x128xbf16>
    %cst_59 = arith.constant 0.000000e+00 : bf16
    %95 = vector.broadcast %cst_59 : bf16 to vector<256x128xbf16>
    %96 = arith.select %10, %94, %95 : vector<256x128xi1>, vector<256x128xbf16>
    %97 = tpu.concatenate %70, %72, %76, %80, %82, %86, %90, %92, %96 in 1 : vector<256x128xbf16>, vector<256x128xbf16>, vector<256x128xbf16>, vector<256x128xbf16>, vector<256x128xbf16>, vector<256x128xbf16>, vector<256x128xbf16>, vector<256x128xbf16>, vector<256x128xbf16> -> vector<256x1152xbf16>
    %c0_60 = arith.constant 0 : index
    %c0_61 = arith.constant 0 : index
    %c0_62 = arith.constant 0 : index
    %98 = vector.load %arg3[%c0_60, %c0_61, %c0_62] : memref<2x1152x128xbf16, #tpu.memory_space<vmem>>, vector<1x1152x128xbf16>
    %99 = vector.shape_cast %98 : vector<1x1152x128xbf16> to vector<1152x128xbf16>
    %cst_63 = arith.constant dense<0.000000e+00> : vector<256x128xf32>
    %100 = tpu.matmul %97, %99, %cst_63 {dimension_numbers = #tpu.dot_dimension_numbers<[1], [0], [0], [1], [0, 0, 1, 1], [], []>} : vector<256x1152xbf16>, vector<1152x128xbf16>, vector<256x128xf32> -> vector<256x128xf32>
    %cst_64 = arith.constant dense<0.000000e+00> : vector<128xf32>
    %101 = vector.multi_reduction <add>, %100, %cst_64 [0] : vector<256x128xf32> to vector<128xf32>
    %102 = vector.shape_cast %101 : vector<128xf32> to vector<1x128xf32>
    %cst_65 = arith.constant 2.560000e+02 : f32
    %103 = vector.broadcast %cst_65 : f32 to vector<1x128xf32>
    %104 = arith.divf %102, %103 : vector<1x128xf32>
    %105 = vector.broadcast %104 : vector<1x128xf32> to vector<256x128xf32>
    %106 = arith.subf %100, %105 : vector<256x128xf32>
    %107 = arith.mulf %106, %106 : vector<256x128xf32>
    %cst_66 = arith.constant dense<0.000000e+00> : vector<128xf32>
    %108 = vector.multi_reduction <add>, %107, %cst_66 [0] : vector<256x128xf32> to vector<128xf32>
    %109 = vector.shape_cast %108 : vector<128xf32> to vector<1x128xf32>
    %cst_67 = arith.constant 2.560000e+02 : f32
    %110 = vector.broadcast %cst_67 : f32 to vector<1x128xf32>
    %111 = arith.divf %109, %110 : vector<1x128xf32>
    %cst_68 = arith.constant 9.99999974E-6 : f32
    %112 = vector.broadcast %cst_68 : f32 to vector<1x128xf32>
    %113 = arith.addf %111, %112 : vector<1x128xf32>
    %114 = math.rsqrt %113 : vector<1x128xf32>
    %115 = vector.broadcast %114 : vector<1x128xf32> to vector<256x128xf32>
    %116 = arith.mulf %106, %115 : vector<256x128xf32>
    %117 = arith.addf %116, %12 : vector<256x128xf32>
    %c32_69 = arith.constant 32 : index
    %c0_70 = arith.constant 0 : index
    %118 = vector.load %arg5[%c32_69, %c0_70] : memref<320x128xf32, #tpu.memory_space<vmem>>, vector<256x128xf32>
    tpu.vector_store %arg5[%c32_69, %c0_70], %117 {strides = array<i32>} : memref<320x128xf32, #tpu.memory_space<vmem>>, vector<256x128xf32>,
    %c15_71 = arith.constant 15 : index
    %c0_72 = arith.constant 0 : index
    %119 = vector.load %arg5[%c15_71, %c0_72] : memref<320x128xf32, #tpu.memory_space<vmem>>, vector<256x128xf32>
    %120 = arith.truncf %119 : vector<256x128xf32> to vector<256x128xbf16>
    %cst_73 = arith.constant 0.000000e+00 : bf16
    %121 = vector.broadcast %cst_73 : bf16 to vector<256x128xbf16>
    %122 = arith.select %8, %120, %121 : vector<256x128xi1>, vector<256x128xbf16>
    %c16_74 = arith.constant 16 : index
    %c0_75 = arith.constant 0 : index
    %123 = vector.load %arg5[%c16_74, %c0_75] : memref<320x128xf32, #tpu.memory_space<vmem>>, vector<256x128xf32>
    %124 = arith.truncf %123 : vector<256x128xf32> to vector<256x128xbf16>
    %c17_76 = arith.constant 17 : index
    %c0_77 = arith.constant 0 : index
    %125 = vector.load %arg5[%c17_76, %c0_77] : memref<320x128xf32, #tpu.memory_space<vmem>>, vector<256x128xf32>
    %126 = arith.truncf %125 : vector<256x128xf32> to vector<256x128xbf16>
    %cst_78 = arith.constant 0.000000e+00 : bf16
    %127 = vector.broadcast %cst_78 : bf16 to vector<256x128xbf16>
    %128 = arith.select %10, %126, %127 : vector<256x128xi1>, vector<256x128xbf16>
    %c31_79 = arith.constant 31 : index
    %c0_80 = arith.constant 0 : index
    %129 = vector.load %arg5[%c31_79, %c0_80] : memref<320x128xf32, #tpu.memory_space<vmem>>, vector<256x128xf32>
    %130 = arith.truncf %129 : vector<256x128xf32> to vector<256x128xbf16>
    %cst_81 = arith.constant 0.000000e+00 : bf16
    %131 = vector.broadcast %cst_81 : bf16 to vector<256x128xbf16>
    %132 = arith.select %8, %130, %131 : vector<256x128xi1>, vector<256x128xbf16>
    %c32_82 = arith.constant 32 : index
    %c0_83 = arith.constant 0 : index
    %133 = vector.load %arg5[%c32_82, %c0_83] : memref<320x128xf32, #tpu.memory_space<vmem>>, vector<256x128xf32>
    %134 = arith.truncf %133 : vector<256x128xf32> to vector<256x128xbf16>
    %c33_84 = arith.constant 33 : index
    %c0_85 = arith.constant 0 : index
    %135 = vector.load %arg5[%c33_84, %c0_85] : memref<320x128xf32, #tpu.memory_space<vmem>>, vector<256x128xf32>
    %136 = arith.truncf %135 : vector<256x128xf32> to vector<256x128xbf16>
    %cst_86 = arith.constant 0.000000e+00 : bf16
    %137 = vector.broadcast %cst_86 : bf16 to vector<256x128xbf16>
    %138 = arith.select %10, %136, %137 : vector<256x128xi1>, vector<256x128xbf16>
    %c47_87 = arith.constant 47 : index
    %c0_88 = arith.constant 0 : index
    %139 = vector.load %arg5[%c47_87, %c0_88] : memref<320x128xf32, #tpu.memory_space<vmem>>, vector<256x128xf32>
    %140 = arith.truncf %139 : vector<256x128xf32> to vector<256x128xbf16>
    %cst_89 = arith.constant 0.000000e+00 : bf16
    %141 = vector.broadcast %cst_89 : bf16 to vector<256x128xbf16>
    %142 = arith.select %8, %140, %141 : vector<256x128xi1>, vector<256x128xbf16>
    %c48_90 = arith.constant 48 : index
    %c0_91 = arith.constant 0 : index
    %143 = vector.load %arg5[%c48_90, %c0_91] : memref<320x128xf32, #tpu.memory_space<vmem>>, vector<256x128xf32>
    %144 = arith.truncf %143 : vector<256x128xf32> to vector<256x128xbf16>
    %c49_92 = arith.constant 49 : index
    %c0_93 = arith.constant 0 : index
    %145 = vector.load %arg5[%c49_92, %c0_93] : memref<320x128xf32, #tpu.memory_space<vmem>>, vector<256x128xf32>
    %146 = arith.truncf %145 : vector<256x128xf32> to vector<256x128xbf16>
    %cst_94 = arith.constant 0.000000e+00 : bf16
    %147 = vector.broadcast %cst_94 : bf16 to vector<256x128xbf16>
    %148 = arith.select %10, %146, %147 : vector<256x128xi1>, vector<256x128xbf16>
    %149 = tpu.concatenate %122, %124, %128, %132, %134, %138, %142, %144, %148 in 1 : vector<256x128xbf16>, vector<256x128xbf16>, vector<256x128xbf16>, vector<256x128xbf16>, vector<256x128xbf16>, vector<256x128xbf16>, vector<256x128xbf16>, vector<256x128xbf16>, vector<256x128xbf16> -> vector<256x1152xbf16>
    %c1 = arith.constant 1 : index
    %c0_95 = arith.constant 0 : index
    %c0_96 = arith.constant 0 : index
    %150 = vector.load %arg2[%c1, %c0_95, %c0_96] : memref<2x1152x128xbf16, #tpu.memory_space<vmem>>, vector<1x1152x128xbf16>
    %151 = vector.shape_cast %150 : vector<1x1152x128xbf16> to vector<1152x128xbf16>
    %cst_97 = arith.constant dense<0.000000e+00> : vector<256x128xf32>
    %152 = tpu.matmul %149, %151, %cst_97 {dimension_numbers = #tpu.dot_dimension_numbers<[1], [0], [0], [1], [0, 0, 1, 1], [], []>} : vector<256x1152xbf16>, vector<1152x128xbf16>, vector<256x128xf32> -> vector<256x128xf32>
    %cst_98 = arith.constant dense<0.000000e+00> : vector<128xf32>
    %153 = vector.multi_reduction <add>, %152, %cst_98 [0] : vector<256x128xf32> to vector<128xf32>
    %154 = vector.shape_cast %153 : vector<128xf32> to vector<1x128xf32>
    %cst_99 = arith.constant 2.560000e+02 : f32
    %155 = vector.broadcast %cst_99 : f32 to vector<1x128xf32>
    %156 = arith.divf %154, %155 : vector<1x128xf32>
    %157 = vector.broadcast %156 : vector<1x128xf32> to vector<256x128xf32>
    %158 = arith.subf %152, %157 : vector<256x128xf32>
    %159 = arith.mulf %158, %158 : vector<256x128xf32>
    %cst_100 = arith.constant dense<0.000000e+00> : vector<128xf32>
    %160 = vector.multi_reduction <add>, %159, %cst_100 [0] : vector<256x128xf32> to vector<128xf32>
    %161 = vector.shape_cast %160 : vector<128xf32> to vector<1x128xf32>
    %cst_101 = arith.constant 2.560000e+02 : f32
    %162 = vector.broadcast %cst_101 : f32 to vector<1x128xf32>
    %163 = arith.divf %161, %162 : vector<1x128xf32>
    %cst_102 = arith.constant 9.99999974E-6 : f32
    %164 = vector.broadcast %cst_102 : f32 to vector<1x128xf32>
    %165 = arith.addf %163, %164 : vector<1x128xf32>
    %166 = math.rsqrt %165 : vector<1x128xf32>
    %167 = vector.broadcast %166 : vector<1x128xf32> to vector<256x128xf32>
    %168 = arith.mulf %158, %167 : vector<256x128xf32>
    %cst_103 = arith.constant 0.000000e+00 : f32
    %169 = vector.broadcast %cst_103 : f32 to vector<256x128xf32>
    %170 = arith.maximumf %168, %169 : vector<256x128xf32>
    %c32_104 = arith.constant 32 : index
    %c0_105 = arith.constant 0 : index
    %171 = vector.load %arg5[%c32_104, %c0_105] : memref<320x128xf32, #tpu.memory_space<vmem>>, vector<256x128xf32>
    tpu.vector_store %arg5[%c32_104, %c0_105], %170 {strides = array<i32>} : memref<320x128xf32, #tpu.memory_space<vmem>>, vector<256x128xf32>,
    %c15_106 = arith.constant 15 : index
    %c0_107 = arith.constant 0 : index
    %172 = vector.load %arg5[%c15_106, %c0_107] : memref<320x128xf32, #tpu.memory_space<vmem>>, vector<256x128xf32>
    %173 = arith.truncf %172 : vector<256x128xf32> to vector<256x128xbf16>
    %cst_108 = arith.constant 0.000000e+00 : bf16
    %174 = vector.broadcast %cst_108 : bf16 to vector<256x128xbf16>
    %175 = arith.select %8, %173, %174 : vector<256x128xi1>, vector<256x128xbf16>
    %c16_109 = arith.constant 16 : index
    %c0_110 = arith.constant 0 : index
    %176 = vector.load %arg5[%c16_109, %c0_110] : memref<320x128xf32, #tpu.memory_space<vmem>>, vector<256x128xf32>
    %177 = arith.truncf %176 : vector<256x128xf32> to vector<256x128xbf16>
    %c17_111 = arith.constant 17 : index
    %c0_112 = arith.constant 0 : index
    %178 = vector.load %arg5[%c17_111, %c0_112] : memref<320x128xf32, #tpu.memory_space<vmem>>, vector<256x128xf32>
    %179 = arith.truncf %178 : vector<256x128xf32> to vector<256x128xbf16>
    %cst_113 = arith.constant 0.000000e+00 : bf16
    %180 = vector.broadcast %cst_113 : bf16 to vector<256x128xbf16>
    %181 = arith.select %10, %179, %180 : vector<256x128xi1>, vector<256x128xbf16>
    %c31_114 = arith.constant 31 : index
    %c0_115 = arith.constant 0 : index
    %182 = vector.load %arg5[%c31_114, %c0_115] : memref<320x128xf32, #tpu.memory_space<vmem>>, vector<256x128xf32>
    %183 = arith.truncf %182 : vector<256x128xf32> to vector<256x128xbf16>
    %cst_116 = arith.constant 0.000000e+00 : bf16
    %184 = vector.broadcast %cst_116 : bf16 to vector<256x128xbf16>
    %185 = arith.select %8, %183, %184 : vector<256x128xi1>, vector<256x128xbf16>
    %c32_117 = arith.constant 32 : index
    %c0_118 = arith.constant 0 : index
    %186 = vector.load %arg5[%c32_117, %c0_118] : memref<320x128xf32, #tpu.memory_space<vmem>>, vector<256x128xf32>
    %187 = arith.truncf %186 : vector<256x128xf32> to vector<256x128xbf16>
    %c33_119 = arith.constant 33 : index
    %c0_120 = arith.constant 0 : index
    %188 = vector.load %arg5[%c33_119, %c0_120] : memref<320x128xf32, #tpu.memory_space<vmem>>, vector<256x128xf32>
    %189 = arith.truncf %188 : vector<256x128xf32> to vector<256x128xbf16>
    %cst_121 = arith.constant 0.000000e+00 : bf16
    %190 = vector.broadcast %cst_121 : bf16 to vector<256x128xbf16>
    %191 = arith.select %10, %189, %190 : vector<256x128xi1>, vector<256x128xbf16>
    %c47_122 = arith.constant 47 : index
    %c0_123 = arith.constant 0 : index
    %192 = vector.load %arg5[%c47_122, %c0_123] : memref<320x128xf32, #tpu.memory_space<vmem>>, vector<256x128xf32>
    %193 = arith.truncf %192 : vector<256x128xf32> to vector<256x128xbf16>
    %cst_124 = arith.constant 0.000000e+00 : bf16
    %194 = vector.broadcast %cst_124 : bf16 to vector<256x128xbf16>
    %195 = arith.select %8, %193, %194 : vector<256x128xi1>, vector<256x128xbf16>
    %c48_125 = arith.constant 48 : index
    %c0_126 = arith.constant 0 : index
    %196 = vector.load %arg5[%c48_125, %c0_126] : memref<320x128xf32, #tpu.memory_space<vmem>>, vector<256x128xf32>
    %197 = arith.truncf %196 : vector<256x128xf32> to vector<256x128xbf16>
    %c49_127 = arith.constant 49 : index
    %c0_128 = arith.constant 0 : index
    %198 = vector.load %arg5[%c49_127, %c0_128] : memref<320x128xf32, #tpu.memory_space<vmem>>, vector<256x128xf32>
    %199 = arith.truncf %198 : vector<256x128xf32> to vector<256x128xbf16>
    %cst_129 = arith.constant 0.000000e+00 : bf16
    %200 = vector.broadcast %cst_129 : bf16 to vector<256x128xbf16>
    %201 = arith.select %10, %199, %200 : vector<256x128xi1>, vector<256x128xbf16>
    %202 = tpu.concatenate %175, %177, %181, %185, %187, %191, %195, %197, %201 in 1 : vector<256x128xbf16>, vector<256x128xbf16>, vector<256x128xbf16>, vector<256x128xbf16>, vector<256x128xbf16>, vector<256x128xbf16>, vector<256x128xbf16>, vector<256x128xbf16>, vector<256x128xbf16> -> vector<256x1152xbf16>
    %c1_130 = arith.constant 1 : index
    %c0_131 = arith.constant 0 : index
    %c0_132 = arith.constant 0 : index
    %203 = vector.load %arg3[%c1_130, %c0_131, %c0_132] : memref<2x1152x128xbf16, #tpu.memory_space<vmem>>, vector<1x1152x128xbf16>
    %204 = vector.shape_cast %203 : vector<1x1152x128xbf16> to vector<1152x128xbf16>
    %cst_133 = arith.constant dense<0.000000e+00> : vector<256x128xf32>
    %205 = tpu.matmul %202, %204, %cst_133 {dimension_numbers = #tpu.dot_dimension_numbers<[1], [0], [0], [1], [0, 0, 1, 1], [], []>} : vector<256x1152xbf16>, vector<1152x128xbf16>, vector<256x128xf32> -> vector<256x128xf32>
    %cst_134 = arith.constant dense<0.000000e+00> : vector<128xf32>
    %206 = vector.multi_reduction <add>, %205, %cst_134 [0] : vector<256x128xf32> to vector<128xf32>
    %207 = vector.shape_cast %206 : vector<128xf32> to vector<1x128xf32>
    %cst_135 = arith.constant 2.560000e+02 : f32
    %208 = vector.broadcast %cst_135 : f32 to vector<1x128xf32>
    %209 = arith.divf %207, %208 : vector<1x128xf32>
    %210 = vector.broadcast %209 : vector<1x128xf32> to vector<256x128xf32>
    %211 = arith.subf %205, %210 : vector<256x128xf32>
    %212 = arith.mulf %211, %211 : vector<256x128xf32>
    %cst_136 = arith.constant dense<0.000000e+00> : vector<128xf32>
    %213 = vector.multi_reduction <add>, %212, %cst_136 [0] : vector<256x128xf32> to vector<128xf32>
    %214 = vector.shape_cast %213 : vector<128xf32> to vector<1x128xf32>
    %cst_137 = arith.constant 2.560000e+02 : f32
    %215 = vector.broadcast %cst_137 : f32 to vector<1x128xf32>
    %216 = arith.divf %214, %215 : vector<1x128xf32>
    %cst_138 = arith.constant 9.99999974E-6 : f32
    %217 = vector.broadcast %cst_138 : f32 to vector<1x128xf32>
    %218 = arith.addf %216, %217 : vector<1x128xf32>
    %219 = math.rsqrt %218 : vector<1x128xf32>
    %220 = vector.broadcast %219 : vector<1x128xf32> to vector<256x128xf32>
    %221 = arith.mulf %211, %220 : vector<256x128xf32>
    %222 = arith.addf %221, %117 : vector<256x128xf32>
    %c0_139 = arith.constant 0 : index
    %c0_140 = arith.constant 0 : index
    %c0_141 = arith.constant 0 : index
    %223 = vector.load %arg4[%c0_139, %c0_140, %c0_141] : memref<1x256x128xf32, #tpu.memory_space<vmem>>, vector<1x256x128xf32>
    %224 = vector.shape_cast %223 : vector<1x256x128xf32> to vector<256x128xf32>
    %225 = vector.shape_cast %222 : vector<256x128xf32> to vector<1x256x128xf32>
    tpu.vector_store %arg4[%c0_139, %c0_140, %c0_141], %225 {strides = array<i32>} : memref<1x256x128xf32, #tpu.memory_space<vmem>>, vector<1x256x128xf32>,
    return
  }
  func.func @transform_0(%arg0: i32) -> (i32, i32, i32) {
    %c0_i32 = arith.constant 0 : i32
    %c0_i32_0 = arith.constant 0 : i32
    %c0_i32_1 = arith.constant 0 : i32
    return %arg0, %c0_i32, %c0_i32_0 : i32, i32, i32
  }
  func.func @transform_1(%arg0: i32) -> (i32, i32, i32) {
    %c0_i32 = arith.constant 0 : i32
    %c0_i32_0 = arith.constant 0 : i32
    %c0_i32_1 = arith.constant 0 : i32
    %c0_i32_2 = arith.constant 0 : i32
    return %c0_i32, %c0_i32_0, %c0_i32_1 : i32, i32, i32
  }
  func.func @transform_2(%arg0: i32) -> (i32, i32, i32) {
    %c0_i32 = arith.constant 0 : i32
    %c0_i32_0 = arith.constant 0 : i32
    %c0_i32_1 = arith.constant 0 : i32
    %c0_i32_2 = arith.constant 0 : i32
    return %c0_i32, %c0_i32_0, %c0_i32_1 : i32, i32, i32
  }
  func.func @transform_3(%arg0: i32) -> (i32, i32, i32) {
    %c0_i32 = arith.constant 0 : i32
    %c0_i32_0 = arith.constant 0 : i32
    %c0_i32_1 = arith.constant 0 : i32
    return %arg0, %c0_i32, %c0_i32_0 : i32, i32, i32
  }
}

</mosaic_0001>

<llo_original>
// kernel: resblocks_forward.1
$region0: #{resblocks_forward.1}
  #allocation0 [shape = 'u32[]', space=smem, size = 0x4, offset = 0x4, fixed_abs, tag = 'smem constant byte address 0x4 - core index']
  #allocation1 [shape = 'u32[144,128]{1,0:T(1,128)}', space=vmem, size = 0x12000, scoped, tag = 'internal scratch']
  #allocation2 [shape = 'f32[320,128]{1,0:T(8,128)}', space=vmem, size = 0x28000, scoped, tag = 'scratch operand']
  %s0 = inlined_call_operand.hbm [shape: f32[2,256,128], index: 0, kind: input, shape index: {}]
  %s1 = inlined_call_operand.hbm [shape: bf16[2,1152,128], index: 1, kind: input, shape index: {}]
  %s2 = inlined_call_operand.hbm [shape: bf16[2,1152,128], index: 2, kind: input, shape index: {}]
  %s3 = inlined_call_operand.hbm [shape: f32[2,256,128], index: 3, kind: output, shape index: {}]
  %s4 = sld [smem:[#allocation0]]
  $region57: #{resblocks_forward.1} parent=0
    _
  %s6 = ssub.s32 1, %s4
  %s7 = scalar_select 0, %s6, %s4
  $region1: #{resblocks_forward.1} parent=0
    #allocation3 [shape = 'u8[262144]{0}', space=vmem, size = 0x40000, scoped, tag = 'input window, operand 0']
    #allocation4 [shape = 's32[2]{0}', space=sflag, size = 0x8, scoped, tag = 'scoped memory for resblocks_forward.1']
    #allocation5 [shape = 's32[2]{0}', space=sflag, size = 0x8, scoped, tag = 'scoped memory for resblocks_forward.1']
    #allocation6 [shape = 'u8[589824]{0}', space=vmem, size = 0x90000, scoped, tag = 'input window, operand 1, single buffered']
    #allocation7 [shape = 's32[1]{0}', space=sflag, size = 0x4, scoped, tag = 'scoped memory for resblocks_forward.1']
    #allocation8 [shape = 'u8[589824]{0}', space=vmem, size = 0x90000, scoped, tag = 'input window, operand 2, single buffered']
    #allocation9 [shape = 'u8[262144]{0}', space=vmem, size = 0x40000, scoped, tag = 'output window, operand 0']
    %8 = vsyncpa [#allocation4], 0
    %s9 = scalar_lea.sflag [#allocation4], 1
    %10 = vsyncpa %s9, 0
    %11 = vsyncpa [#allocation7], 0
    %12 = vsyncpa [#allocation5], 0
    %s13 = scalar_lea.sflag [#allocation5], 1
    %14 = vsyncpa %s13, 0
    loop: start=0, step=1, limit=4
    $region2: #{resblocks_forward.1} parent=1 // loop_pre_header
      _
    $region3: #{resblocks_forward.1} parent=1 // loop_header
      %s16 = sphi 0, %s20
      %p17 = scmp.ge.s32.totalorder %s16, 4
      %s26 = sphi 0, %s28
      %s29 = sphi 0, %s26
      %s30 = sphi 0, %s29
      %s46 = sphi 0, %s30
      %s50 = sphi 0, %s50
      %s52 = sphi 0, %s50
      %s53 = sphi 0, %s52
      %s67 = sphi 0, %s53
      %s71 = sphi 0, %s71
      %s73 = sphi 0, %s71
      %s74 = sphi 0, %s73
      %s88 = sphi 0, %s74
      %s94 = sphi 0, %s96
      %s97 = sphi 0, %s94
      %s98 = sphi 0, %s97
      %s114 = sphi 0, %s98
    $region4: #{resblocks_forward.1} parent=1 // loop_header_branch
      %19 = sbr.rel (%p17) target = $region8
    $region5: #{resblocks_forward.1} parent=1 // loop_body
      %s21 = ssub.s32 %s16, 1
      %s22 = ssub.s32 %s16, 2
      %s23 = sadd.s32 %s16, 1
      %s24 = ssub.s32 %s16, %s23
      %p25 = scmp.eq.s32.totalorder %s24, 0
      %s27 = sadd.s32 %s26, 1
      %s28 = scalar_select %p25, %s26, %s27
      %p31 = pneg %p25
      %p32 = scmp.eq.s32.totalorder %s16, 1
      %p33 = por %p31, %p32
      %p34 = scmp.ne.s32.totalorder %s26, %s29
      %p35 = scmp.eq.s32.totalorder %s16, 0
      %p36 = por %p34, %p35
      %p37 = scmp.ne.s32.totalorder %s26, %s29
      %p38 = scmp.eq.s32.totalorder %s21, 1
      %p39 = por %p37, %p38
      %p40 = scmp.ne.s32.totalorder %s29, %s30
      %p41 = scmp.eq.s32.totalorder %s21, 0
      %p42 = por %p40, %p41
      %p43 = scmp.ne.s32.totalorder %s29, %s30
      %p44 = scmp.eq.s32.totalorder %s22, 1
      %p45 = por %p43, %p44
      %p47 = scmp.ne.s32.totalorder %s30, %s46
      %p48 = scmp.eq.s32.totalorder %s22, 0
      %p49 = por %p47, %p48
      %s51 = sadd.s32 %s50, 1
      %p54 = scmp.eq.s32.totalorder %s16, 1
      %p55 = scmp.ne.s32.totalorder %s50, %s52
      %p56 = scmp.eq.s32.totalorder %s16, 0
      %p57 = por %p55, %p56
      %p58 = scmp.ne.s32.totalorder %s50, %s52
      %p59 = scmp.eq.s32.totalorder %s21, 1
      %p60 = por %p58, %p59
      %p61 = scmp.ne.s32.totalorder %s52, %s53
      %p62 = scmp.eq.s32.totalorder %s21, 0
      %p63 = por %p61, %p62
      %p64 = scmp.ne.s32.totalorder %s52, %s53
      %p65 = scmp.eq.s32.totalorder %s22, 1
      %p66 = por %p64, %p65
      %p68 = scmp.ne.s32.totalorder %s53, %s67
      %p69 = scmp.eq.s32.totalorder %s22, 0
      %p70 = por %p68, %p69
      %s72 = sadd.s32 %s71, 1
      %p75 = scmp.eq.s32.totalorder %s16, 1
      %p76 = scmp.ne.s32.totalorder %s71, %s73
      %p77 = scmp.eq.s32.totalorder %s16, 0
      %p78 = por %p76, %p77
      %p79 = scmp.ne.s32.totalorder %s71, %s73
      %p80 = scmp.eq.s32.totalorder %s21, 1
      %p81 = por %p79, %p80
      %p82 = scmp.ne.s32.totalorder %s73, %s74
      %p83 = scmp.eq.s32.totalorder %s21, 0
      %p84 = por %p82, %p83
      %p85 = scmp.ne.s32.totalorder %s73, %s74
      %p86 = scmp.eq.s32.totalorder %s22, 1
      %p87 = por %p85, %p86
      %p89 = scmp.ne.s32.totalorder %s74, %s88
      %p90 = scmp.eq.s32.totalorder %s22, 0
      %p91 = por %p89, %p90
      %s92 = ssub.s32 %s16, %s23
      %p93 = scmp.eq.s32.totalorder %s92, 0
      %s95 = sadd.s32 %s94, 1
      %s96 = scalar_select %p93, %s94, %s95
      %p99 = pneg %p93
      %p100 = scmp.eq.s32.totalorder %s16, 1
      %p101 = por %p99, %p100
      %p102 = scmp.ne.s32.totalorder %s94, %s97
      %p103 = scmp.eq.s32.totalorder %s16, 0
      %p104 = por %p102, %p103
      %p105 = scmp.ne.s32.totalorder %s94, %s97
      %p106 = scmp.eq.s32.totalorder %s21, 1
      %p107 = por %p105, %p106
      %p108 = scmp.ne.s32.totalorder %s97, %s98
      %p109 = scmp.eq.s32.totalorder %s21, 0
      %p110 = por %p108, %p109
      %p111 = scmp.ne.s32.totalorder %s97, %s98
      %p112 = scmp.eq.s32.totalorder %s22, 1
      %p113 = por %p111, %p112
      %p115 = scmp.ne.s32.totalorder %s98, %s114
      %p116 = scmp.eq.s32.totalorder %s22, 0
      %p117 = por %p115, %p116
      %p118 = scmp.le.s32.totalorder 1, %s16
      %p119 = scmp.lt.s32.totalorder %s16, 3
      %p120 = pnand %p118, %p119
      %p121 = pneg %p120
      // Predicated region
      $region9: #{resblocks_forward.1} parent=5 // pred_check
        _
      $region10: #{resblocks_forward.1} parent=5 // pred_check_branch
        %123 = sbr.rel (%p120) target = $region12
      $region11: #{resblocks_forward.1} parent=5 // pred_region
        %s124 = ssub.s32 %s16, 1
        // Predicated region
        $region13: #{resblocks_forward.1} parent=11 // pred_check
          %p125 = pneg %p63
        $region14: #{resblocks_forward.1} parent=11 // pred_check_branch
          %127 = sbr.rel (%p125) target = $region16
        $region15: #{resblocks_forward.1} parent=11 // pred_region
          %s129 = ssub.s32 18432, 18432
          %130 = vsyncadd [#allocation7], %s129
          %s131 = sshll.u32 [#allocation6], 4
          %s132 = int_to_ptr.vmem [resolvable:$true] %s131
          %137 = dma.hbm_to_vmem [thread:$0]  %s1, 18432, %s132, [#allocation7], 64, 64, 4
        $region16: #{resblocks_forward.1} parent=11 // pred_fallthru
          _
        // Predicated region
        $region17: #{resblocks_forward.1} parent=11 // pred_check
          %p138 = pneg %p84
        $region18: #{resblocks_forward.1} parent=11 // pred_check_branch
          %140 = sbr.rel (%p138) target = $region20
        $region19: #{resblocks_forward.1} parent=11 // pred_region
          %s142 = ssub.s32 18432, 18432
          %143 = vsyncadd [#allocation7], %s142
          %s144 = sshll.u32 [#allocation8], 4
          %s145 = int_to_ptr.vmem [resolvable:$true] %s144
          %150 = dma.hbm_to_vmem [thread:$0]  %s2, 18432, %s145, [#allocation7], 64, 64, 4
        $region20: #{resblocks_forward.1} parent=11 // pred_fallthru
          _
      $region12: #{resblocks_forward.1} parent=5 // pred_fallthru
        _
      %p151 = scmp.lt.s32.totalorder %s16, 2
      // Predicated region
      $region21: #{resblocks_forward.1} parent=5 // pred_check
        %p152 = pneg %p151
      $region22: #{resblocks_forward.1} parent=5 // pred_check_branch
        %154 = sbr.rel (%p152) target = $region24
      $region23: #{resblocks_forward.1} parent=5 // pred_region
        // Predicated region
        $region25: #{resblocks_forward.1} parent=23 // pred_check
          %p155 = pneg %p36
        $region26: #{resblocks_forward.1} parent=23 // pred_check_branch
          %157 = sbr.rel (%p155) target = $region28
        $region27: #{resblocks_forward.1} parent=23 // pred_region
          %s158 = sand.u32 %s26, 1
          %s159 = scalar_lea.sflag [#allocation4], %s158
          %s160 = sand.u32 %s26, 1
          %s161 = smul.addr %s160, 256
          %s162 = scalar_lea.vmem [#allocation3], %s161
          %s164 = ssub.s32 4096, 4096
          %165 = vsyncadd %s159, %s164
          %s166 = smul.addr %s16, 32
          %s167 = smul.addr %s166, 128
          %s168 = scalar_lea.hbm %s0, %s167
          %s169 = sshll.u32 %s162, 4
          %s170 = int_to_ptr.vmem [resolvable:$true] %s169
          %175 = dma.hbm_to_vmem [thread:$0]  %s168, 4096, %s170, %s159, 128, 128, 8
        $region28: #{resblocks_forward.1} parent=23 // pred_fallthru
          _
      $region24: #{resblocks_forward.1} parent=5 // pred_fallthru
        _
      %p176 = scmp.le.s32.totalorder 1, %s16
      %p177 = scmp.lt.s32.totalorder %s16, 3
      %p178 = pnand %p176, %p177
      %p179 = pneg %p178
      // Predicated region
      $region29: #{resblocks_forward.1} parent=5 // pred_check
        _
      $region30: #{resblocks_forward.1} parent=5 // pred_check_branch
        %181 = sbr.rel (%p178) target = $region32
      $region31: #{resblocks_forward.1} parent=5 // pred_region
        %s182 = ssub.s32 %s16, 1
        %s183 = sand.u32 %s29, 1
        %s184 = scalar_lea.sflag [#allocation4], %s183
        %s185 = sand.u32 %s29, 1
        %s186 = smul.addr %s185, 256
        %s187 = scalar_lea.vmem [#allocation3], %s186
        // Predicated region
        $region33: #{resblocks_forward.1} parent=31 // pred_check
          %p188 = pneg %p42
        $region34: #{resblocks_forward.1} parent=31 // pred_check_branch
          %190 = sbr.rel (%p188) target = $region36
        $region35: #{resblocks_forward.1} parent=31 // pred_region
          %191 = dma.done %s184, 4096
        $region36: #{resblocks_forward.1} parent=31 // pred_fallthru
          _
        // Predicated region
        $region37: #{resblocks_forward.1} parent=31 // pred_check
          %p192 = pneg %p63
        $region38: #{resblocks_forward.1} parent=31 // pred_check_branch
          %194 = sbr.rel (%p192) target = $region40
        $region39: #{resblocks_forward.1} parent=31 // pred_region
          %195 = dma.done [#allocation7], 18432
        $region40: #{resblocks_forward.1} parent=31 // pred_fallthru
          _
        // Predicated region
        $region41: #{resblocks_forward.1} parent=31 // pred_check
          %p196 = pneg %p84
        $region42: #{resblocks_forward.1} parent=31 // pred_check_branch
          %198 = sbr.rel (%p196) target = $region44
        $region43: #{resblocks_forward.1} parent=31 // pred_region
          %199 = dma.done [#allocation7], 18432
        $region44: #{resblocks_forward.1} parent=31 // pred_fallthru
          _
        %s200 = sand.u32 %s29, 1
        %s201 = scalar_lea.sflag [#allocation4], %s200
        %s202 = sand.u32 %s29, 1
        %s203 = smul.addr %s202, 256
        %s204 = scalar_lea.vmem [#allocation3], %s203
        %p205 = pneg %p42
        %p206 = pneg %p39
        %p207 = pneg %p63
        %p208 = pneg %p60
        %p209 = pneg %p84
        %p210 = pneg %p81
        %p211 = pneg %p110
        %p212 = pneg %p107
        %s213 = sand.u32 %s97, 1
        %s214 = scalar_lea.sflag [#allocation5], %s213
        %s215 = sand.u32 %s97, 1
        %s216 = smul.addr %s215, 256
        %s217 = scalar_lea.vmem [#allocation9], %s216
        %221 = vst [vmem:[#allocation2] sm:$0xff] 0.0
        %222 = vst [vmem:[#allocation2 + $0x8] sm:$0xff] 0.0
        %223 = vst [vmem:[#allocation2 + $0x10] sm:$0xff] 0.0
        %224 = vst [vmem:[#allocation2 + $0x18] sm:$0xff] 0.0
        %225 = vst [vmem:[#allocation2 + $0x120] sm:$0xff] 0.0
        %226 = vst [vmem:[#allocation2 + $0x128] sm:$0xff] 0.0
        %227 = vst [vmem:[#allocation2 + $0x130] sm:$0xff] 0.0
        %228 = vst [vmem:[#allocation2 + $0x138] sm:$0xff] 0.0
        %v229 = vlaneseq
        %v230 = vshrl.u32 %v229, 7
        %v231 = vadd.s32 %v230, 8
        %v232 = vadd.s32 %v230, 16
        %v233 = vadd.s32 %v230, 24
        %v234 = vadd.s32 %v230, 32
        %v235 = vadd.s32 %v230, 40
        %v236 = vadd.s32 %v230, 48
        %v237 = vadd.s32 %v230, 56
        %v238 = vadd.s32 %v230, 64
        %v239 = vadd.s32 %v230, 72
        %v240 = vadd.s32 %v230, 80
        %v241 = vadd.s32 %v230, 88
        %v242 = vadd.s32 %v230, 96
        %v243 = vadd.s32 %v230, 104
        %v244 = vadd.s32 %v230, 112
        %v245 = vadd.s32 %v230, 120
        %v246 = vadd.s32 %v230, 128
        %v247 = vadd.s32 %v230, 136
        %v248 = vadd.s32 %v230, 144
        %v249 = vadd.s32 %v230, 152
        %v250 = vadd.s32 %v230, 160
        %v251 = vadd.s32 %v230, 168
        %v252 = vadd.s32 %v230, 176
        %v253 = vadd.s32 %v230, 184
        %v254 = vadd.s32 %v230, 192
        %v255 = vadd.s32 %v230, 200
        %v256 = vadd.s32 %v230, 208
        %v257 = vadd.s32 %v230, 216
        %v258 = vadd.s32 %v230, 224
        %v259 = vadd.s32 %v230, 232
        %v260 = vadd.s32 %v230, 240
        %v261 = vadd.s32 %v230, 248
        %v262 = vand.u32 %v230, 15
        %v263 = vand.u32 %v231, 15
        %v264 = vand.u32 %v232, 15
        %v265 = vand.u32 %v233, 15
        %v266 = vand.u32 %v234, 15
        %v267 = vand.u32 %v235, 15
        %v268 = vand.u32 %v236, 15
        %v269 = vand.u32 %v237, 15
        %v270 = vand.u32 %v238, 15
        %v271 = vand.u32 %v239, 15
        %v272 = vand.u32 %v240, 15
        %v273 = vand.u32 %v241, 15
        %v274 = vand.u32 %v242, 15
        %v275 = vand.u32 %v243, 15
        %v276 = vand.u32 %v244, 15
        %v277 = vand.u32 %v245, 15
        %v278 = vand.u32 %v246, 15
        %v279 = vand.u32 %v247, 15
        %v280 = vand.u32 %v248, 15
        %v281 = vand.u32 %v249, 15
        %v282 = vand.u32 %v250, 15
        %v283 = vand.u32 %v251, 15
        %v284 = vand.u32 %v252, 15
        %v285 = vand.u32 %v253, 15
        %v286 = vand.u32 %v254, 15
        %v287 = vand.u32 %v255, 15
        %v288 = vand.u32 %v256, 15
        %v289 = vand.u32 %v257, 15
        %v290 = vand.u32 %v258, 15
        %v291 = vand.u32 %v259, 15
        %v292 = vand.u32 %v260, 15
        %v293 = vand.u32 %v261, 15
        %vm294 = vcmp.ne.s32.totalorder %v262, 0
        %vm295 = vcmp.ne.s32.totalorder %v263, 0
        %vm296 = vcmp.ne.s32.totalorder %v264, 0
        %vm297 = vcmp.ne.s32.totalorder %v265, 0
        %vm298 = vcmp.ne.s32.totalorder %v266, 0
        %vm299 = vcmp.ne.s32.totalorder %v267, 0
        %vm300 = vcmp.ne.s32.totalorder %v268, 0
        %vm301 = vcmp.ne.s32.totalorder %v269, 0
        %vm302 = vcmp.ne.s32.totalorder %v270, 0
        %vm303 = vcmp.ne.s32.totalorder %v271, 0
        %vm304 = vcmp.ne.s32.totalorder %v272, 0
        %vm305 = vcmp.ne.s32.totalorder %v273, 0
        %vm306 = vcmp.ne.s32.totalorder %v274, 0
        %vm307 = vcmp.ne.s32.totalorder %v275, 0
        %vm308 = vcmp.ne.s32.totalorder %v276, 0
        %vm309 = vcmp.ne.s32.totalorder %v277, 0
        %vm310 = vcmp.ne.s32.totalorder %v278, 0
        %vm311 = vcmp.ne.s32.totalorder %v279, 0
        %vm312 = vcmp.ne.s32.totalorder %v280, 0
        %vm313 = vcmp.ne.s32.totalorder %v281, 0
        %vm314 = vcmp.ne.s32.totalorder %v282, 0
        %vm315 = vcmp.ne.s32.totalorder %v283, 0
        %vm316 = vcmp.ne.s32.totalorder %v284, 0
        %vm317 = vcmp.ne.s32.totalorder %v285, 0
        %vm318 = vcmp.ne.s32.totalorder %v286, 0
        %vm319 = vcmp.ne.s32.totalorder %v287, 0
        %vm320 = vcmp.ne.s32.totalorder %v288, 0
        %vm321 = vcmp.ne.s32.totalorder %v289, 0
        %vm322 = vcmp.ne.s32.totalorder %v290, 0
        %vm323 = vcmp.ne.s32.totalorder %v291, 0
        %vm324 = vcmp.ne.s32.totalorder %v292, 0
        %vm325 = vcmp.ne.s32.totalorder %v293, 0
        %vm326 = vcmp.ne.s32.totalorder %v262, 15
        %vm327 = vcmp.ne.s32.totalorder %v263, 15
        %vm328 = vcmp.ne.s32.totalorder %v264, 15
        %vm329 = vcmp.ne.s32.totalorder %v265, 15
        %vm330 = vcmp.ne.s32.totalorder %v266, 15
        %vm331 = vcmp.ne.s32.totalorder %v267, 15
        %vm332 = vcmp.ne.s32.totalorder %v268, 15
        %vm333 = vcmp.ne.s32.totalorder %v269, 15
        %vm334 = vcmp.ne.s32.totalorder %v270, 15
        %vm335 = vcmp.ne.s32.totalorder %v271, 15
        %vm336 = vcmp.ne.s32.totalorder %v272, 15
        %vm337 = vcmp.ne.s32.totalorder %v273, 15
        %vm338 = vcmp.ne.s32.totalorder %v274, 15
        %vm339 = vcmp.ne.s32.totalorder %v275, 15
        %vm340 = vcmp.ne.s32.totalorder %v276, 15
        %vm341 = vcmp.ne.s32.totalorder %v277, 15
        %vm342 = vcmp.ne.s32.totalorder %v278, 15
        %vm343 = vcmp.ne.s32.totalorder %v279, 15
        %vm344 = vcmp.ne.s32.totalorder %v280, 15
        %vm345 = vcmp.ne.s32.totalorder %v281, 15
        %vm346 = vcmp.ne.s32.totalorder %v282, 15
        %vm347 = vcmp.ne.s32.totalorder %v283, 15
        %vm348 = vcmp.ne.s32.totalorder %v284, 15
        %vm349 = vcmp.ne.s32.totalorder %v285, 15
        %vm350 = vcmp.ne.s32.totalorder %v286, 15
        %vm351 = vcmp.ne.s32.totalorder %v287, 15
        %vm352 = vcmp.ne.s32.totalorder %v288, 15
        %vm353 = vcmp.ne.s32.totalorder %v289, 15
        %vm354 = vcmp.ne.s32.totalorder %v290, 15
        %vm355 = vcmp.ne.s32.totalorder %v291, 15
        %vm356 = vcmp.ne.s32.totalorder %v292, 15
        %vm357 = vcmp.ne.s32.totalorder %v293, 15
        %v358 = vld [vmem:[%s187] sm:$0xff]
        %v359 = vld [vmem:[%s187 + $0x8] sm:$0xff]
        %v360 = vld [vmem:[%s187 + $0x10] sm:$0xff]
        %v361 = vld [vmem:[%s187 + $0x18] sm:$0xff]
        %v362 = vld [vmem:[%s187 + $0x20] sm:$0xff]
        %v363 = vld [vmem:[%s187 + $0x28] sm:$0xff]
        %v364 = vld [vmem:[%s187 + $0x30] sm:$0xff]
        %v365 = vld [vmem:[%s187 + $0x38] sm:$0xff]
        %v366 = vld [vmem:[%s187 + $0x40] sm:$0xff]
        %v367 = vld [vmem:[%s187 + $0x48] sm:$0xff]
        %v368 = vld [vmem:[%s187 + $0x50] sm:$0xff]
        %v369 = vld [vmem:[%s187 + $0x58] sm:$0xff]
        %v370 = vld [vmem:[%s187 + $0x60] sm:$0xff]
        %v371 = vld [vmem:[%s187 + $0x68] sm:$0xff]
        %v372 = vld [vmem:[%s187 + $0x70] sm:$0xff]
        %v373 = vld [vmem:[%s187 + $0x78] sm:$0xff]
        %v374 = vld [vmem:[%s187 + $0x80] sm:$0xff]
        %v375 = vld [vmem:[%s187 + $0x88] sm:$0xff]
        %v376 = vld [vmem:[%s187 + $0x90] sm:$0xff]
        %v377 = vld [vmem:[%s187 + $0x98] sm:$0xff]
        %v378 = vld [vmem:[%s187 + $0xa0] sm:$0xff]
        %v379 = vld [vmem:[%s187 + $0xa8] sm:$0xff]
        %v380 = vld [vmem:[%s187 + $0xb0] sm:$0xff]
        %v381 = vld [vmem:[%s187 + $0xb8] sm:$0xff]
        %v382 = vld [vmem:[%s187 + $0xc0] sm:$0xff]
        %v383 = vld [vmem:[%s187 + $0xc8] sm:$0xff]
        %v384 = vld [vmem:[%s187 + $0xd0] sm:$0xff]
        %v385 = vld [vmem:[%s187 + $0xd8] sm:$0xff]
        %v386 = vld [vmem:[%s187 + $0xe0] sm:$0xff]
        %v387 = vld [vmem:[%s187 + $0xe8] sm:$0xff]
        %v388 = vld [vmem:[%s187 + $0xf0] sm:$0xff]
        %v389 = vld [vmem:[%s187 + $0xf8] sm:$0xff]
        %390 = vst [vmem:[#allocation2 + $0x20] sm:$0xff] %v358
        %391 = vst [vmem:[#allocation2 + $0x28] sm:$0xff] %v359
        %392 = vst [vmem:[#allocation2 + $0x30] sm:$0xff] %v360
        %393 = vst [vmem:[#allocation2 + $0x38] sm:$0xff] %v361
        %394 = vst [vmem:[#allocation2 + $0x40] sm:$0xff] %v362
        %395 = vst [vmem:[#allocation2 + $0x48] sm:$0xff] %v363
        %396 = vst [vmem:[#allocation2 + $0x50] sm:$0xff] %v364
        %397 = vst [vmem:[#allocation2 + $0x58] sm:$0xff] %v365
        %398 = vst [vmem:[#allocation2 + $0x60] sm:$0xff] %v366
        %399 = vst [vmem:[#allocation2 + $0x68] sm:$0xff] %v367
        %400 = vst [vmem:[#allocation2 + $0x70] sm:$0xff] %v368
        %401 = vst [vmem:[#allocation2 + $0x78] sm:$0xff] %v369
        %402 = vst [vmem:[#allocation2 + $0x80] sm:$0xff] %v370
        %403 = vst [vmem:[#allocation2 + $0x88] sm:$0xff] %v371
        %404 = vst [vmem:[#allocation2 + $0x90] sm:$0xff] %v372
        %405 = vst [vmem:[#allocation2 + $0x98] sm:$0xff] %v373
        %406 = vst [vmem:[#allocation2 + $0xa0] sm:$0xff] %v374
        %407 = vst [vmem:[#allocation2 + $0xa8] sm:$0xff] %v375
        %408 = vst [vmem:[#allocation2 + $0xb0] sm:$0xff] %v376
        %409 = vst [vmem:[#allocation2 + $0xb8] sm:$0xff] %v377
        %410 = vst [vmem:[#allocation2 + $0xc0] sm:$0xff] %v378
        %411 = vst [vmem:[#allocation2 + $0xc8] sm:$0xff] %v379
        %412 = vst [vmem:[#allocation2 + $0xd0] sm:$0xff] %v380
        %413 = vst [vmem:[#allocation2 + $0xd8] sm:$0xff] %v381
        %414 = vst [vmem:[#allocation2 + $0xe0] sm:$0xff] %v382
        %415 = vst [vmem:[#allocation2 + $0xe8] sm:$0xff] %v383
        %416 = vst [vmem:[#allocation2 + $0xf0] sm:$0xff] %v384
        %417 = vst [vmem:[#allocation2 + $0xf8] sm:$0xff] %v385
        %418 = vst [vmem:[#allocation2 + $0x100] sm:$0xff] %v386
        %419 = vst [vmem:[#allocation2 + $0x108] sm:$0xff] %v387
        %420 = vst [vmem:[#allocation2 + $0x110] sm:$0xff] %v388
        %421 = vst [vmem:[#allocation2 + $0x118] sm:$0xff] %v389
        %v422 = vld [vmem:[#allocation2 + $0xf] sm:$0xff]
        %v423 = vld [vmem:[#allocation2 + $0x17] sm:$0xff]
        %v424 = vld [vmem:[#allocation2 + $0x1f] sm:$0xff]
        %v425 = vld [vmem:[#allocation2 + $0x27] sm:$0xff]
        %v426 = vld [vmem:[#allocation2 + $0x2f] sm:$0xff]
        %v427 = vld [vmem:[#allocation2 + $0x37] sm:$0xff]
        %v428 = vld [vmem:[#allocation2 + $0x3f] sm:$0xff]
        %v429 = vld [vmem:[#allocation2 + $0x47] sm:$0xff]
        %v430 = vld [vmem:[#allocation2 + $0x4f] sm:$0xff]
        %v431 = vld [vmem:[#allocation2 + $0x57] sm:$0xff]
        %v432 = vld [vmem:[#allocation2 + $0x5f] sm:$0xff]
        %v433 = vld [vmem:[#allocation2 + $0x67] sm:$0xff]
        %v434 = vld [vmem:[#allocation2 + $0x6f] sm:$0xff]
        %v435 = vld [vmem:[#allocation2 + $0x77] sm:$0xff]
        %v436 = vld [vmem:[#allocation2 + $0x7f] sm:$0xff]
        %v437 = vld [vmem:[#allocation2 + $0x87] sm:$0xff]
        %v438 = vld [vmem:[#allocation2 + $0x8f] sm:$0xff]
        %v439 = vld [vmem:[#allocation2 + $0x97] sm:$0xff]
        %v440 = vld [vmem:[#allocation2 + $0x9f] sm:$0xff]
        %v441 = vld [vmem:[#allocation2 + $0xa7] sm:$0xff]
        %v442 = vld [vmem:[#allocation2 + $0xaf] sm:$0xff]
        %v443 = vld [vmem:[#allocation2 + $0xb7] sm:$0xff]
        %v444 = vld [vmem:[#allocation2 + $0xbf] sm:$0xff]
        %v445 = vld [vmem:[#allocation2 + $0xc7] sm:$0xff]
        %v446 = vld [vmem:[#allocation2 + $0xcf] sm:$0xff]
        %v447 = vld [vmem:[#allocation2 + $0xd7] sm:$0xff]
        %v448 = vld [vmem:[#allocation2 + $0xdf] sm:$0xff]
        %v449 = vld [vmem:[#allocation2 + $0xe7] sm:$0xff]
        %v450 = vld [vmem:[#allocation2 + $0xef] sm:$0xff]
        %v451 = vld [vmem:[#allocation2 + $0xf7] sm:$0xff]
        %v452 = vld [vmem:[#allocation2 + $0xff] sm:$0xff]
        %v453 = vld [vmem:[#allocation2 + $0x107] sm:$0xff]
        %v454 = vpack.c.bf16 %v423, %v422
        %v455 = vpack.c.bf16 %v425, %v424
        %v456 = vpack.c.bf16 %v427, %v426
        %v457 = vpack.c.bf16 %v429, %v428
        %v458 = vpack.c.bf16 %v431, %v430
        %v459 = vpack.c.bf16 %v433, %v432
        %v460 = vpack.c.bf16 %v435, %v434
        %v461 = vpack.c.bf16 %v437, %v436
        %v462 = vpack.c.bf16 %v439, %v438
        %v463 = vpack.c.bf16 %v441, %v440
        %v464 = vpack.c.bf16 %v443, %v442
        %v465 = vpack.c.bf16 %v445, %v444
        %v466 = vpack.c.bf16 %v447, %v446
        %v467 = vpack.c.bf16 %v449, %v448
        %v468 = vpack.c.bf16 %v451, %v450
        %v469 = vpack.c.bf16 %v453, %v452
        %vm470 = vmpackc.low %vm294, %vm294
        %vm471 = vmpackc.low %vm295, %vm295
        %vm472 = vmpackc.low %vm296, %vm296
        %vm473 = vmpackc.low %vm297, %vm297
        %vm474 = vmpackc.low %vm298, %vm298
        %vm475 = vmpackc.low %vm299, %vm299
        %vm476 = vmpackc.low %vm300, %vm300
        %vm477 = vmpackc.low %vm301, %vm301
        %vm478 = vmpackc.low %vm302, %vm302
        %vm479 = vmpackc.low %vm303, %vm303
        %vm480 = vmpackc.low %vm304, %vm304
        %vm481 = vmpackc.low %vm305, %vm305
        %vm482 = vmpackc.low %vm306, %vm306
        %vm483 = vmpackc.low %vm307, %vm307
        %vm484 = vmpackc.low %vm308, %vm308
        %vm485 = vmpackc.low %vm309, %vm309
        %vm486 = vmpackc.low %vm310, %vm310
        %vm487 = vmpackc.low %vm311, %vm311
        %vm488 = vmpackc.low %vm312, %vm312
        %vm489 = vmpackc.low %vm313, %vm313
        %vm490 = vmpackc.low %vm314, %vm314
        %vm491 = vmpackc.low %vm315, %vm315
        %vm492 = vmpackc.low %vm316, %vm316
        %vm493 = vmpackc.low %vm317, %vm317
        %vm494 = vmpackc.low %vm318, %vm318
        %vm495 = vmpackc.low %vm319, %vm319
        %vm496 = vmpackc.low %vm320, %vm320
        %vm497 = vmpackc.low %vm321, %vm321
        %vm498 = vmpackc.low %vm322, %vm322
        %vm499 = vmpackc.low %vm323, %vm323
        %vm500 = vmpackc.low %vm324, %vm324
        %vm501 = vmpackc.low %vm325, %vm325
        %v502 = vsel %vm470, 65537, 0
        %v503 = vsel %vm471, 65537, 0
        %v504 = vsel %vm472, 65537, 0
        %v505 = vsel %vm473, 65537, 0
        %v506 = vsel %vm474, 65537, 0
        %v507 = vsel %vm475, 65537, 0
        %v508 = vsel %vm476, 65537, 0
        %v509 = vsel %vm477, 65537, 0
        %v510 = vsel %vm478, 65537, 0
        %v511 = vsel %vm479, 65537, 0
        %v512 = vsel %vm480, 65537, 0
        %v513 = vsel %vm481, 65537, 0
        %v514 = vsel %vm482, 65537, 0
        %v515 = vsel %vm483, 65537, 0
        %v516 = vsel %vm484, 65537, 0
        %v517 = vsel %vm485, 65537, 0
        %v518 = vsel %vm486, 65537, 0
        %v519 = vsel %vm487, 65537, 0
        %v520 = vsel %vm488, 65537, 0
        %v521 = vsel %vm489, 65537, 0
        %v522 = vsel %vm490, 65537, 0
        %v523 = vsel %vm491, 65537, 0
        %v524 = vsel %vm492, 65537, 0
        %v525 = vsel %vm493, 65537, 0
        %v526 = vsel %vm494, 65537, 0
        %v527 = vsel %vm495, 65537, 0
        %v528 = vsel %vm496, 65537, 0
        %v529 = vsel %vm497, 65537, 0
        %v530 = vsel %vm498, 65537, 0
        %v531 = vsel %vm499, 65537, 0
        %v532 = vsel %vm500, 65537, 0
        %v533 = vsel %vm501, 65537, 0
        %v534 = vunpack.c.l.b16 %v502
        %v535 = vunpack.c.l.b16 %v503
        %v536 = vunpack.c.l.b16 %v504
        %v537 = vunpack.c.l.b16 %v505
        %v538 = vunpack.c.l.b16 %v506
        %v539 = vunpack.c.l.b16 %v507
        %v540 = vunpack.c.l.b16 %v508
        %v541 = vunpack.c.l.b16 %v509
        %v542 = vunpack.c.l.b16 %v510
        %v543 = vunpack.c.l.b16 %v511
        %v544 = vunpack.c.l.b16 %v512
        %v545 = vunpack.c.l.b16 %v513
        %v546 = vunpack.c.l.b16 %v514
        %v547 = vunpack.c.l.b16 %v515
        %v548 = vunpack.c.l.b16 %v516
        %v549 = vunpack.c.l.b16 %v517
        %v550 = vunpack.c.l.b16 %v518
        %v551 = vunpack.c.l.b16 %v519
        %v552 = vunpack.c.l.b16 %v520
        %v553 = vunpack.c.l.b16 %v521
        %v554 = vunpack.c.l.b16 %v522
        %v555 = vunpack.c.l.b16 %v523
        %v556 = vunpack.c.l.b16 %v524
        %v557 = vunpack.c.l.b16 %v525
        %v558 = vunpack.c.l.b16 %v526
        %v559 = vunpack.c.l.b16 %v527
        %v560 = vunpack.c.l.b16 %v528
        %v561 = vunpack.c.l.b16 %v529
        %v562 = vunpack.c.l.b16 %v530
        %v563 = vunpack.c.l.b16 %v531
        %v564 = vunpack.c.l.b16 %v532
        %v565 = vunpack.c.l.b16 %v533
        %v566 = vpack.c.b16 %v535, %v534
        %v567 = vpack.c.b16 %v537, %v536
        %v568 = vpack.c.b16 %v539, %v538
        %v569 = vpack.c.b16 %v541, %v540
        %v570 = vpack.c.b16 %v543, %v542
        %v571 = vpack.c.b16 %v545, %v544
        %v572 = vpack.c.b16 %v547, %v546
        %v573 = vpack.c.b16 %v549, %v548
        %v574 = vpack.c.b16 %v551, %v550
        %v575 = vpack.c.b16 %v553, %v552
        %v576 = vpack.c.b16 %v555, %v554
        %v577 = vpack.c.b16 %v557, %v556
        %v578 = vpack.c.b16 %v559, %v558
        %v579 = vpack.c.b16 %v561, %v560
        %v580 = vpack.c.b16 %v563, %v562
        %v581 = vpack.c.b16 %v565, %v564
        %vm582 = vcmp.ne.s16.totalorder %v566, 0
        %vm583 = vcmp.ne.s16.totalorder %v567, 0
        %vm584 = vcmp.ne.s16.totalorder %v568, 0
        %vm585 = vcmp.ne.s16.totalorder %v569, 0
        %vm586 = vcmp.ne.s16.totalorder %v570, 0
        %vm587 = vcmp.ne.s16.totalorder %v571, 0
        %vm588 = vcmp.ne.s16.totalorder %v572, 0
        %vm589 = vcmp.ne.s16.totalorder %v573, 0
        %vm590 = vcmp.ne.s16.totalorder %v574, 0
        %vm591 = vcmp.ne.s16.totalorder %v575, 0
        %vm592 = vcmp.ne.s16.totalorder %v576, 0
        %vm593 = vcmp.ne.s16.totalorder %v577, 0
        %vm594 = vcmp.ne.s16.totalorder %v578, 0
        %vm595 = vcmp.ne.s16.totalorder %v579, 0
        %vm596 = vcmp.ne.s16.totalorder %v580, 0
        %vm597 = vcmp.ne.s16.totalorder %v581, 0
        %v598 = vsel %vm582, %v454, 0
        %v599 = vsel %vm583, %v455, 0
        %v600 = vsel %vm584, %v456, 0
        %v601 = vsel %vm585, %v457, 0
        %v602 = vsel %vm586, %v458, 0
        %v603 = vsel %vm587, %v459, 0
        %v604 = vsel %vm588, %v460, 0
        %v605 = vsel %vm589, %v461, 0
        %v606 = vsel %vm590, %v462, 0
        %v607 = vsel %vm591, %v463, 0
        %v608 = vsel %vm592, %v464, 0
        %v609 = vsel %vm593, %v465, 0
        %v610 = vsel %vm594, %v466, 0
        %v611 = vsel %vm595, %v467, 0
        %v612 = vsel %vm596, %v468, 0
        %v613 = vsel %vm597, %v469, 0
        %v614 = vld [vmem:[#allocation2 + $0x10] sm:$0xff]
        %v615 = vld [vmem:[#allocation2 + $0x18] sm:$0xff]
        %v616 = vld [vmem:[#allocation2 + $0x20] sm:$0xff]
        %v617 = vld [vmem:[#allocation2 + $0x28] sm:$0xff]
        %v618 = vld [vmem:[#allocation2 + $0x30] sm:$0xff]
        %v619 = vld [vmem:[#allocation2 + $0x38] sm:$0xff]
        %v620 = vld [vmem:[#allocation2 + $0x40] sm:$0xff]
        %v621 = vld [vmem:[#allocation2 + $0x48] sm:$0xff]
        %v622 = vld [vmem:[#allocation2 + $0x50] sm:$0xff]
        %v623 = vld [vmem:[#allocation2 + $0x58] sm:$0xff]
        %v624 = vld [vmem:[#allocation2 + $0x60] sm:$0xff]
        %v625 = vld [vmem:[#allocation2 + $0x68] sm:$0xff]
        %v626 = vld [vmem:[#allocation2 + $0x70] sm:$0xff]
        %v627 = vld [vmem:[#allocation2 + $0x78] sm:$0xff]
        %v628 = vld [vmem:[#allocation2 + $0x80] sm:$0xff]
        %v629 = vld [vmem:[#allocation2 + $0x88] sm:$0xff]
        %v630 = vld [vmem:[#allocation2 + $0x90] sm:$0xff]
        %v631 = vld [vmem:[#allocation2 + $0x98] sm:$0xff]
        %v632 = vld [vmem:[#allocation2 + $0xa0] sm:$0xff]
        %v633 = vld [vmem:[#allocation2 + $0xa8] sm:$0xff]
        %v634 = vld [vmem:[#allocation2 + $0xb0] sm:$0xff]
        %v635 = vld [vmem:[#allocation2 + $0xb8] sm:$0xff]
        %v636 = vld [vmem:[#allocation2 + $0xc0] sm:$0xff]
        %v637 = vld [vmem:[#allocation2 + $0xc8] sm:$0xff]
        %v638 = vld [vmem:[#allocation2 + $0xd0] sm:$0xff]
        %v639 = vld [vmem:[#allocation2 + $0xd8] sm:$0xff]
        %v640 = vld [vmem:[#allocation2 + $0xe0] sm:$0xff]
        %v641 = vld [vmem:[#allocation2 + $0xe8] sm:$0xff]
        %v642 = vld [vmem:[#allocation2 + $0xf0] sm:$0xff]
        %v643 = vld [vmem:[#allocation2 + $0xf8] sm:$0xff]
        %v644 = vld [vmem:[#allocation2 + $0x100] sm:$0xff]
        %v645 = vld [vmem:[#allocation2 + $0x108] sm:$0xff]
        %v646 = vpack.c.bf16 %v615, %v614
        %v647 = vpack.c.bf16 %v617, %v616
        %v648 = vpack.c.bf16 %v619, %v618
        %v649 = vpack.c.bf16 %v621, %v620
        %v650 = vpack.c.bf16 %v623, %v622
        %v651 = vpack.c.bf16 %v625, %v624
        %v652 = vpack.c.bf16 %v627, %v626
        %v653 = vpack.c.bf16 %v629, %v628
        %v654 = vpack.c.bf16 %v631, %v630
        %v655 = vpack.c.bf16 %v633, %v632
        %v656 = vpack.c.bf16 %v635, %v634
        %v657 = vpack.c.bf16 %v637, %v636
        %v658 = vpack.c.bf16 %v639, %v638
        %v659 = vpack.c.bf16 %v641, %v640
        %v660 = vpack.c.bf16 %v643, %v642
        %v661 = vpack.c.bf16 %v645, %v644
        %v662 = vld [vmem:[#allocation2 + $0x11] sm:$0xff]
        %v663 = vld [vmem:[#allocation2 + $0x19] sm:$0xff]
        %v664 = vld [vmem:[#allocation2 + $0x21] sm:$0xff]
        %v665 = vld [vmem:[#allocation2 + $0x29] sm:$0xff]
        %v666 = vld [vmem:[#allocation2 + $0x31] sm:$0xff]
        %v667 = vld [vmem:[#allocation2 + $0x39] sm:$0xff]
        %v668 = vld [vmem:[#allocation2 + $0x41] sm:$0xff]
        %v669 = vld [vmem:[#allocation2 + $0x49] sm:$0xff]
        %v670 = vld [vmem:[#allocation2 + $0x51] sm:$0xff]
        %v671 = vld [vmem:[#allocation2 + $0x59] sm:$0xff]
        %v672 = vld [vmem:[#allocation2 + $0x61] sm:$0xff]
        %v673 = vld [vmem:[#allocation2 + $0x69] sm:$0xff]
        %v674 = vld [vmem:[#allocation2 + $0x71] sm:$0xff]
        %v675 = vld [vmem:[#allocation2 + $0x79] sm:$0xff]
        %v676 = vld [vmem:[#allocation2 + $0x81] sm:$0xff]
        %v677 = vld [vmem:[#allocation2 + $0x89] sm:$0xff]
        %v678 = vld [vmem:[#allocation2 + $0x91] sm:$0xff]
        %v679 = vld [vmem:[#allocation2 + $0x99] sm:$0xff]
        %v680 = vld [vmem:[#allocation2 + $0xa1] sm:$0xff]
        %v681 = vld [vmem:[#allocation2 + $0xa9] sm:$0xff]
        %v682 = vld [vmem:[#allocation2 + $0xb1] sm:$0xff]
        %v683 = vld [vmem:[#allocation2 + $0xb9] sm:$0xff]
        %v684 = vld [vmem:[#allocation2 + $0xc1] sm:$0xff]
        %v685 = vld [vmem:[#allocation2 + $0xc9] sm:$0xff]
        %v686 = vld [vmem:[#allocation2 + $0xd1] sm:$0xff]
        %v687 = vld [vmem:[#allocation2 + $0xd9] sm:$0xff]
        %v688 = vld [vmem:[#allocation2 + $0xe1] sm:$0xff]
        %v689 = vld [vmem:[#allocation2 + $0xe9] sm:$0xff]
        %v690 = vld [vmem:[#allocation2 + $0xf1] sm:$0xff]
        %v691 = vld [vmem:[#allocation2 + $0xf9] sm:$0xff]
        %v692 = vld [vmem:[#allocation2 + $0x101] sm:$0xff]
        %v693 = vld [vmem:[#allocation2 + $0x109] sm:$0xff]
        %v694 = vpack.c.bf16 %v663, %v662
        %v695 = vpack.c.bf16 %v665, %v664
        %v696 = vpack.c.bf16 %v667, %v666
        %v697 = vpack.c.bf16 %v669, %v668
        %v698 = vpack.c.bf16 %v671, %v670
        %v699 = vpack.c.bf16 %v673, %v672
        %v700 = vpack.c.bf16 %v675, %v674
        %v701 = vpack.c.bf16 %v677, %v676
        %v702 = vpack.c.bf16 %v679, %v678
        %v703 = vpack.c.bf16 %v681, %v680
        %v704 = vpack.c.bf16 %v683, %v682
        %v705 = vpack.c.bf16 %v685, %v684
        %v706 = vpack.c.bf16 %v687, %v686
        %v707 = vpack.c.bf16 %v689, %v688
        %v708 = vpack.c.bf16 %v691, %v690
        %v709 = vpack.c.bf16 %v693, %v692
        %vm710 = vmpackc.low %vm326, %vm326
        %vm711 = vmpackc.low %vm327, %vm327
        %vm712 = vmpackc.low %vm328, %vm328
        %vm713 = vmpackc.low %vm329, %vm329
        %vm714 = vmpackc.low %vm330, %vm330
        %vm715 = vmpackc.low %vm331, %vm331
        %vm716 = vmpackc.low %vm332, %vm332
        %vm717 = vmpackc.low %vm333, %vm333
        %vm718 = vmpackc.low %vm334, %vm334
        %vm719 = vmpackc.low %vm335, %vm335
        %vm720 = vmpackc.low %vm336, %vm336
        %vm721 = vmpackc.low %vm337, %vm337
        %vm722 = vmpackc.low %vm338, %vm338
        %vm723 = vmpackc.low %vm339, %vm339
        %vm724 = vmpackc.low %vm340, %vm340
        %vm725 = vmpackc.low %vm341, %vm341
        %vm726 = vmpackc.low %vm342, %vm342
        %vm727 = vmpackc.low %vm343, %vm343
        %vm728 = vmpackc.low %vm344, %vm344
        %vm729 = vmpackc.low %vm345, %vm345
        %vm730 = vmpackc.low %vm346, %vm346
        %vm731 = vmpackc.low %vm347, %vm347
        %vm732 = vmpackc.low %vm348, %vm348
        %vm733 = vmpackc.low %vm349, %vm349
        %vm734 = vmpackc.low %vm350, %vm350
        %vm735 = vmpackc.low %vm351, %vm351
        %vm736 = vmpackc.low %vm352, %vm352
        %vm737 = vmpackc.low %vm353, %vm353
        %vm738 = vmpackc.low %vm354, %vm354
        %vm739 = vmpackc.low %vm355, %vm355
        %vm740 = vmpackc.low %vm356, %vm356
        %vm741 = vmpackc.low %vm357, %vm357
        %v742 = vsel %vm710, 65537, 0
        %v743 = vsel %vm711, 65537, 0
        %v744 = vsel %vm712, 65537, 0
        %v745 = vsel %vm713, 65537, 0
        %v746 = vsel %vm714, 65537, 0
        %v747 = vsel %vm715, 65537, 0
        %v748 = vsel %vm716, 65537, 0
        %v749 = vsel %vm717, 65537, 0
        %v750 = vsel %vm718, 65537, 0
        %v751 = vsel %vm719, 65537, 0
        %v752 = vsel %vm720, 65537, 0
        %v753 = vsel %vm721, 65537, 0
        %v754 = vsel %vm722, 65537, 0
        %v755 = vsel %vm723, 65537, 0
        %v756 = vsel %vm724, 65537, 0
        %v757 = vsel %vm725, 65537, 0
        %v758 = vsel %vm726, 65537, 0
        %v759 = vsel %vm727, 65537, 0
        %v760 = vsel %vm728, 65537, 0
        %v761 = vsel %vm729, 65537, 0
        %v762 = vsel %vm730, 65537, 0
        %v763 = vsel %vm731, 65537, 0
        %v764 = vsel %vm732, 65537, 0
        %v765 = vsel %vm733, 65537, 0
        %v766 = vsel %vm734, 65537, 0
        %v767 = vsel %vm735, 65537, 0
        %v768 = vsel %vm736, 65537, 0
        %v769 = vsel %vm737, 65537, 0
        %v770 = vsel %vm738, 65537, 0
        %v771 = vsel %vm739, 65537, 0
        %v772 = vsel %vm740, 65537, 0
        %v773 = vsel %vm741, 65537, 0
        %v774 = vunpack.c.l.b16 %v742
        %v775 = vunpack.c.l.b16 %v743
        %v776 = vunpack.c.l.b16 %v744
        %v777 = vunpack.c.l.b16 %v745
        %v778 = vunpack.c.l.b16 %v746
        %v779 = vunpack.c.l.b16 %v747
        %v780 = vunpack.c.l.b16 %v748
        %v781 = vunpack.c.l.b16 %v749
        %v782 = vunpack.c.l.b16 %v750
        %v783 = vunpack.c.l.b16 %v751
        %v784 = vunpack.c.l.b16 %v752
        %v785 = vunpack.c.l.b16 %v753
        %v786 = vunpack.c.l.b16 %v754
        %v787 = vunpack.c.l.b16 %v755
        %v788 = vunpack.c.l.b16 %v756
        %v789 = vunpack.c.l.b16 %v757
        %v790 = vunpack.c.l.b16 %v758
        %v791 = vunpack.c.l.b16 %v759
        %v792 = vunpack.c.l.b16 %v760
        %v793 = vunpack.c.l.b16 %v761
        %v794 = vunpack.c.l.b16 %v762
        %v795 = vunpack.c.l.b16 %v763
        %v796 = vunpack.c.l.b16 %v764
        %v797 = vunpack.c.l.b16 %v765
        %v798 = vunpack.c.l.b16 %v766
        %v799 = vunpack.c.l.b16 %v767
        %v800 = vunpack.c.l.b16 %v768
        %v801 = vunpack.c.l.b16 %v769
        %v802 = vunpack.c.l.b16 %v770
        %v803 = vunpack.c.l.b16 %v771
        %v804 = vunpack.c.l.b16 %v772
        %v805 = vunpack.c.l.b16 %v773
        %v806 = vpack.c.b16 %v775, %v774
        %v807 = vpack.c.b16 %v777, %v776
        %v808 = vpack.c.b16 %v779, %v778
        %v809 = vpack.c.b16 %v781, %v780
        %v810 = vpack.c.b16 %v783, %v782
        %v811 = vpack.c.b16 %v785, %v784
        %v812 = vpack.c.b16 %v787, %v786
        %v813 = vpack.c.b16 %v789, %v788
        %v814 = vpack.c.b16 %v791, %v790
        %v815 = vpack.c.b16 %v793, %v792
        %v816 = vpack.c.b16 %v795, %v794
        %v817 = vpack.c.b16 %v797, %v796
        %v818 = vpack.c.b16 %v799, %v798
        %v819 = vpack.c.b16 %v801, %v800
        %v820 = vpack.c.b16 %v803, %v802
        %v821 = vpack.c.b16 %v805, %v804
        %vm822 = vcmp.ne.s16.totalorder %v806, 0
        %vm823 = vcmp.ne.s16.totalorder %v807, 0
        %vm824 = vcmp.ne.s16.totalorder %v808, 0
        %vm825 = vcmp.ne.s16.totalorder %v809, 0
        %vm826 = vcmp.ne.s16.totalorder %v810, 0
        %vm827 = vcmp.ne.s16.totalorder %v811, 0
        %vm828 = vcmp.ne.s16.totalorder %v812, 0
        %vm829 = vcmp.ne.s16.totalorder %v813, 0
        %vm830 = vcmp.ne.s16.totalorder %v814, 0
        %vm831 = vcmp.ne.s16.totalorder %v815, 0
        %vm832 = vcmp.ne.s16.totalorder %v816, 0
        %vm833 = vcmp.ne.s16.totalorder %v817, 0
        %vm834 = vcmp.ne.s16.totalorder %v818, 0
        %vm835 = vcmp.ne.s16.totalorder %v819, 0
        %vm836 = vcmp.ne.s16.totalorder %v820, 0
        %vm837 = vcmp.ne.s16.totalorder %v821, 0
        %v838 = vsel %vm822, %v694, 0
        %v839 = vsel %vm823, %v695, 0
        %v840 = vsel %vm824, %v696, 0
        %v841 = vsel %vm825, %v697, 0
        %v842 = vsel %vm826, %v698, 0
        %v843 = vsel %vm827, %v699, 0
        %v844 = vsel %vm828, %v700, 0
        %v845 = vsel %vm829, %v701, 0
        %v846 = vsel %vm830, %v702, 0
        %v847 = vsel %vm831, %v703, 0
        %v848 = vsel %vm832, %v704, 0
        %v849 = vsel %vm833, %v705, 0
        %v850 = vsel %vm834, %v706, 0
        %v851 = vsel %vm835, %v707, 0
        %v852 = vsel %vm836, %v708, 0
        %v853 = vsel %vm837, %v709, 0
        %v854 = vld [vmem:[#allocation2 + $0x10f] sm:$0xff]
        %v855 = vld [vmem:[#allocation2 + $0x117] sm:$0xff]
        %v856 = vpack.c.bf16 %v855, %v854
        %v857 = vsel %vm582, %v455, 0
        %v858 = vsel %vm583, %v456, 0
        %v859 = vsel %vm584, %v457, 0
        %v860 = vsel %vm585, %v458, 0
        %v861 = vsel %vm586, %v459, 0
        %v862 = vsel %vm587, %v460, 0
        %v863 = vsel %vm588, %v461, 0
        %v864 = vsel %vm589, %v462, 0
        %v865 = vsel %vm590, %v463, 0
        %v866 = vsel %vm591, %v464, 0
        %v867 = vsel %vm592, %v465, 0
        %v868 = vsel %vm593, %v466, 0
        %v869 = vsel %vm594, %v467, 0
        %v870 = vsel %vm595, %v468, 0
        %v871 = vsel %vm596, %v469, 0
        %v872 = vsel %vm597, %v856, 0
        %v873 = vld [vmem:[#allocation2 + $0x110] sm:$0xff]
        %v874 = vld [vmem:[#allocation2 + $0x118] sm:$0xff]
        %v875 = vpack.c.bf16 %v874, %v873
        %v876 = vld [vmem:[#allocation2 + $0x111] sm:$0xff]
        %v877 = vld [vmem:[#allocation2 + $0x119] sm:$0xff]
        %v878 = vpack.c.bf16 %v877, %v876
        %v879 = vsel %vm822, %v695, 0
        %v880 = vsel %vm823, %v696, 0
        %v881 = vsel %vm824, %v697, 0
        %v882 = vsel %vm825, %v698, 0
        %v883 = vsel %vm826, %v699, 0
        %v884 = vsel %vm827, %v700, 0
        %v885 = vsel %vm828, %v701, 0
        %v886 = vsel %vm829, %v702, 0
        %v887 = vsel %vm830, %v703, 0
        %v888 = vsel %vm831, %v704, 0
        %v889 = vsel %vm832, %v705, 0
        %v890 = vsel %vm833, %v706, 0
        %v891 = vsel %vm834, %v707, 0
        %v892 = vsel %vm835, %v708, 0
        %v893 = vsel %vm836, %v709, 0
        %v894 = vsel %vm837, %v878, 0
        %v895 = vld [vmem:[#allocation2 + $0x11f] sm:$0xff]
        %v896 = vld [vmem:[#allocation2 + $0x127] sm:$0xff]
        %v897 = vpack.c.bf16 %v896, %v895
        %v898 = vsel %vm582, %v456, 0
        %v899 = vsel %vm583, %v457, 0
        %v900 = vsel %vm584, %v458, 0
        %v901 = vsel %vm585, %v459, 0
        %v902 = vsel %vm586, %v460, 0
        %v903 = vsel %vm587, %v461, 0
        %v904 = vsel %vm588, %v462, 0
        %v905 = vsel %vm589, %v463, 0
        %v906 = vsel %vm590, %v464, 0
        %v907 = vsel %vm591, %v465, 0
        %v908 = vsel %vm592, %v466, 0
        %v909 = vsel %vm593, %v467, 0
        %v910 = vsel %vm594, %v468, 0
        %v911 = vsel %vm595, %v469, 0
        %v912 = vsel %vm596, %v856, 0
        %v913 = vsel %vm597, %v897, 0
        %v914 = vld [vmem:[#allocation2 + $0x120] sm:$0xff]
        %v915 = vld [vmem:[#allocation2 + $0x128] sm:$0xff]
        %v916 = vpack.c.bf16 %v915, %v914
        %v917 = vld [vmem:[#allocation2 + $0x121] sm:$0xff]
        %v918 = vld [vmem:[#allocation2 + $0x129] sm:$0xff]
        %v919 = vpack.c.bf16 %v918, %v917
        %v920 = vsel %vm822, %v696, 0
        %v921 = vsel %vm823, %v697, 0
        %v922 = vsel %vm824, %v698, 0
        %v923 = vsel %vm825, %v699, 0
        %v924 = vsel %vm826, %v700, 0
        %v925 = vsel %vm827, %v701, 0
        %v926 = vsel %vm828, %v702, 0
        %v927 = vsel %vm829, %v703, 0
        %v928 = vsel %vm830, %v704, 0
        %v929 = vsel %vm831, %v705, 0
        %v930 = vsel %vm832, %v706, 0
        %v931 = vsel %vm833, %v707, 0
        %v932 = vsel %vm834, %v708, 0
        %v933 = vsel %vm835, %v709, 0
        %v934 = vsel %vm836, %v878, 0
        %v935 = vsel %vm837, %v919, 0
        %v936 = vld [vmem:[#allocation6] sm:$0xf]
        %v937 = vld [vmem:[#allocation6 + $0x4] sm:$0xf]
        %v938 = vld [vmem:[#allocation6 + $0x8] sm:$0xf]
        %v939 = vld [vmem:[#allocation6 + $0xc] sm:$0xf]
        %v940 = vld [vmem:[#allocation6 + $0x10] sm:$0xf]
        %v941 = vld [vmem:[#allocation6 + $0x14] sm:$0xf]
        %v942 = vld [vmem:[#allocation6 + $0x18] sm:$0xf]
        %v943 = vld [vmem:[#allocation6 + $0x1c] sm:$0xf]
        %v944 = vld [vmem:[#allocation6 + $0x20] sm:$0xf]
        %v945 = vld [vmem:[#allocation6 + $0x24] sm:$0xf]
        %v946 = vld [vmem:[#allocation6 + $0x28] sm:$0xf]
        %v947 = vld [vmem:[#allocation6 + $0x2c] sm:$0xf]
        %v948 = vld [vmem:[#allocation6 + $0x30] sm:$0xf]
        %v949 = vld [vmem:[#allocation6 + $0x34] sm:$0xf]
        %v950 = vld [vmem:[#allocation6 + $0x38] sm:$0xf]
        %v951 = vld [vmem:[#allocation6 + $0x3c] sm:$0xf]
        %v952 = vld [vmem:[#allocation6 + $0x40] sm:$0xf]
        %v953 = vld [vmem:[#allocation6 + $0x44] sm:$0xf]
        %v954 = vld [vmem:[#allocation6 + $0x48] sm:$0xf]
        %v955 = vld [vmem:[#allocation6 + $0x4c] sm:$0xf]
        %v956 = vld [vmem:[#allocation6 + $0x50] sm:$0xf]
        %v957 = vld [vmem:[#allocation6 + $0x54] sm:$0xf]
        %v958 = vld [vmem:[#allocation6 + $0x58] sm:$0xf]
        %v959 = vld [vmem:[#allocation6 + $0x5c] sm:$0xf]
        %v960 = vld [vmem:[#allocation6 + $0x60] sm:$0xf]
        %v961 = vld [vmem:[#allocation6 + $0x64] sm:$0xf]
        %v962 = vld [vmem:[#allocation6 + $0x68] sm:$0xf]
        %v963 = vld [vmem:[#allocation6 + $0x6c] sm:$0xf]
        %v964 = vld [vmem:[#allocation6 + $0x70] sm:$0xf]
        %v965 = vld [vmem:[#allocation6 + $0x74] sm:$0xf]
        %v966 = vld [vmem:[#allocation6 + $0x78] sm:$0xf]
        %v967 = vld [vmem:[#allocation6 + $0x7c] sm:$0xf]
        %v968 = vld [vmem:[#allocation6 + $0x80] sm:$0xf]
        %v969 = vld [vmem:[#allocation6 + $0x84] sm:$0xf]
        %v970 = vld [vmem:[#allocation6 + $0x88] sm:$0xf]
        %v971 = vld [vmem:[#allocation6 + $0x8c] sm:$0xf]
        %v972 = vld [vmem:[#allocation6 + $0x90] sm:$0xf]
        %v973 = vld [vmem:[#allocation6 + $0x94] sm:$0xf]
        %v974 = vld [vmem:[#allocation6 + $0x98] sm:$0xf]
        %v975 = vld [vmem:[#allocation6 + $0x9c] sm:$0xf]
        %v976 = vld [vmem:[#allocation6 + $0xa0] sm:$0xf]
        %v977 = vld [vmem:[#allocation6 + $0xa4] sm:$0xf]
        %v978 = vld [vmem:[#allocation6 + $0xa8] sm:$0xf]
        %v979 = vld [vmem:[#allocation6 + $0xac] sm:$0xf]
        %v980 = vld [vmem:[#allocation6 + $0xb0] sm:$0xf]
        %v981 = vld [vmem:[#allocation6 + $0xb4] sm:$0xf]
        %v982 = vld [vmem:[#allocation6 + $0xb8] sm:$0xf]
        %v983 = vld [vmem:[#allocation6 + $0xbc] sm:$0xf]
        %v984 = vld [vmem:[#allocation6 + $0xc0] sm:$0xf]
        %v985 = vld [vmem:[#allocation6 + $0xc4] sm:$0xf]
        %v986 = vld [vmem:[#allocation6 + $0xc8] sm:$0xf]
        %v987 = vld [vmem:[#allocation6 + $0xcc] sm:$0xf]
        %v988 = vld [vmem:[#allocation6 + $0xd0] sm:$0xf]
        %v989 = vld [vmem:[#allocation6 + $0xd4] sm:$0xf]
        %v990 = vld [vmem:[#allocation6 + $0xd8] sm:$0xf]
        %v991 = vld [vmem:[#allocation6 + $0xdc] sm:$0xf]
        %v992 = vld [vmem:[#allocation6 + $0xe0] sm:$0xf]
        %v993 = vld [vmem:[#allocation6 + $0xe4] sm:$0xf]
        %v994 = vld [vmem:[#allocation6 + $0xe8] sm:$0xf]
        %v995 = vld [vmem:[#allocation6 + $0xec] sm:$0xf]
        %v996 = vld [vmem:[#allocation6 + $0xf0] sm:$0xf]
        %v997 = vld [vmem:[#allocation6 + $0xf4] sm:$0xf]
        %v998 = vld [vmem:[#allocation6 + $0xf8] sm:$0xf]
        %v999 = vld [vmem:[#allocation6 + $0xfc] sm:$0xf]
        %v1000 = vld [vmem:[#allocation6 + $0x100] sm:$0xf]
        %v1001 = vld [vmem:[#allocation6 + $0x104] sm:$0xf]
        %v1002 = vld [vmem:[#allocation6 + $0x108] sm:$0xf]
        %v1003 = vld [vmem:[#allocation6 + $0x10c] sm:$0xf]
        %v1004 = vld [vmem:[#allocation6 + $0x110] sm:$0xf]
        %v1005 = vld [vmem:[#allocation6 + $0x114] sm:$0xf]
        %v1006 = vld [vmem:[#allocation6 + $0x118] sm:$0xf]
        %v1007 = vld [vmem:[#allocation6 + $0x11c] sm:$0xf]
        %v1008 = vld [vmem:[#allocation6 + $0x120] sm:$0xf]
        %v1009 = vld [vmem:[#allocation6 + $0x124] sm:$0xf]
        %v1010 = vld [vmem:[#allocation6 + $0x128] sm:$0xf]
        %v1011 = vld [vmem:[#allocation6 + $0x12c] sm:$0xf]
        %v1012 = vld [vmem:[#allocation6 + $0x130] sm:$0xf]
        %v1013 = vld [vmem:[#allocation6 + $0x134] sm:$0xf]
        %v1014 = vld [vmem:[#allocation6 + $0x138] sm:$0xf]
        %v1015 = vld [vmem:[#allocation6 + $0x13c] sm:$0xf]
        %v1016 = vld [vmem:[#allocation6 + $0x140] sm:$0xf]
        %v1017 = vld [vmem:[#allocation6 + $0x144] sm:$0xf]
        %v1018 = vld [vmem:[#allocation6 + $0x148] sm:$0xf]
        %v1019 = vld [vmem:[#allocation6 + $0x14c] sm:$0xf]
        %v1020 = vld [vmem:[#allocation6 + $0x150] sm:$0xf]
        %v1021 = vld [vmem:[#allocation6 + $0x154] sm:$0xf]
        %v1022 = vld [vmem:[#allocation6 + $0x158] sm:$0xf]
        %v1023 = vld [vmem:[#allocation6 + $0x15c] sm:$0xf]
        %v1024 = vld [vmem:[#allocation6 + $0x160] sm:$0xf]
        %v1025 = vld [vmem:[#allocation6 + $0x164] sm:$0xf]
        %v1026 = vld [vmem:[#allocation6 + $0x168] sm:$0xf]
        %v1027 = vld [vmem:[#allocation6 + $0x16c] sm:$0xf]
        %v1028 = vld [vmem:[#allocation6 + $0x170] sm:$0xf]
        %v1029 = vld [vmem:[#allocation6 + $0x174] sm:$0xf]
        %v1030 = vld [vmem:[#allocation6 + $0x178] sm:$0xf]
        %v1031 = vld [vmem:[#allocation6 + $0x17c] sm:$0xf]
        %v1032 = vld [vmem:[#allocation6 + $0x180] sm:$0xf]
        %v1033 = vld [vmem:[#allocation6 + $0x184] sm:$0xf]
        %v1034 = vld [vmem:[#allocation6 + $0x188] sm:$0xf]
        %v1035 = vld [vmem:[#allocation6 + $0x18c] sm:$0xf]
        %v1036 = vld [vmem:[#allocation6 + $0x190] sm:$0xf]
        %v1037 = vld [vmem:[#allocation6 + $0x194] sm:$0xf]
        %v1038 = vld [vmem:[#allocation6 + $0x198] sm:$0xf]
        %v1039 = vld [vmem:[#allocation6 + $0x19c] sm:$0xf]
        %v1040 = vld [vmem:[#allocation6 + $0x1a0] sm:$0xf]
        %v1041 = vld [vmem:[#allocation6 + $0x1a4] sm:$0xf]
        %v1042 = vld [vmem:[#allocation6 + $0x1a8] sm:$0xf]
        %v1043 = vld [vmem:[#allocation6 + $0x1ac] sm:$0xf]
        %v1044 = vld [vmem:[#allocation6 + $0x1b0] sm:$0xf]
        %v1045 = vld [vmem:[#allocation6 + $0x1b4] sm:$0xf]
        %v1046 = vld [vmem:[#allocation6 + $0x1b8] sm:$0xf]
        %v1047 = vld [vmem:[#allocation6 + $0x1bc] sm:$0xf]
        %v1048 = vld [vmem:[#allocation6 + $0x1c0] sm:$0xf]
        %v1049 = vld [vmem:[#allocation6 + $0x1c4] sm:$0xf]
        %v1050 = vld [vmem:[#allocation6 + $0x1c8] sm:$0xf]
        %v1051 = vld [vmem:[#allocation6 + $0x1cc] sm:$0xf]
        %v1052 = vld [vmem:[#allocation6 + $0x1d0] sm:$0xf]
        %v1053 = vld [vmem:[#allocation6 + $0x1d4] sm:$0xf]
        %v1054 = vld [vmem:[#allocation6 + $0x1d8] sm:$0xf]
        %v1055 = vld [vmem:[#allocation6 + $0x1dc] sm:$0xf]
        %v1056 = vld [vmem:[#allocation6 + $0x1e0] sm:$0xf]
        %v1057 = vld [vmem:[#allocation6 + $0x1e4] sm:$0xf]
        %v1058 = vld [vmem:[#allocation6 + $0x1e8] sm:$0xf]
        %v1059 = vld [vmem:[#allocation6 + $0x1ec] sm:$0xf]
        %v1060 = vld [vmem:[#allocation6 + $0x1f0] sm:$0xf]
        %v1061 = vld [vmem:[#allocation6 + $0x1f4] sm:$0xf]
        %v1062 = vld [vmem:[#allocation6 + $0x1f8] sm:$0xf]
        %v1063 = vld [vmem:[#allocation6 + $0x1fc] sm:$0xf]
        %v1064 = vld [vmem:[#allocation6 + $0x200] sm:$0xf]
        %v1065 = vld [vmem:[#allocation6 + $0x204] sm:$0xf]
        %v1066 = vld [vmem:[#allocation6 + $0x208] sm:$0xf]
        %v1067 = vld [vmem:[#allocation6 + $0x20c] sm:$0xf]
        %v1068 = vld [vmem:[#allocation6 + $0x210] sm:$0xf]
        %v1069 = vld [vmem:[#allocation6 + $0x214] sm:$0xf]
        %v1070 = vld [vmem:[#allocation6 + $0x218] sm:$0xf]
        %v1071 = vld [vmem:[#allocation6 + $0x21c] sm:$0xf]
        %v1072 = vld [vmem:[#allocation6 + $0x220] sm:$0xf]
        %v1073 = vld [vmem:[#allocation6 + $0x224] sm:$0xf]
        %v1074 = vld [vmem:[#allocation6 + $0x228] sm:$0xf]
        %v1075 = vld [vmem:[#allocation6 + $0x22c] sm:$0xf]
        %v1076 = vld [vmem:[#allocation6 + $0x230] sm:$0xf]
        %v1077 = vld [vmem:[#allocation6 + $0x234] sm:$0xf]
        %v1078 = vld [vmem:[#allocation6 + $0x238] sm:$0xf]
        %v1079 = vld [vmem:[#allocation6 + $0x23c] sm:$0xf]
        %v1224 = vunpack.c.l.b16 %v936
        %v1225 = vunpack.c.l.b16 %v937
        %v1226 = vunpack.c.l.b16 %v938
        %v1227 = vunpack.c.l.b16 %v939
        %v1228 = vunpack.c.l.b16 %v940
        %v1229 = vunpack.c.l.b16 %v941
        %v1230 = vunpack.c.l.b16 %v942
        %v1231 = vunpack.c.l.b16 %v943
        %v1232 = vunpack.c.l.b16 %v944
        %v1233 = vunpack.c.l.b16 %v945
        %v1234 = vunpack.c.l.b16 %v946
        %v1235 = vunpack.c.l.b16 %v947
        %v1236 = vunpack.c.l.b16 %v948
        %v1237 = vunpack.c.l.b16 %v949
        %v1238 = vunpack.c.l.b16 %v950
        %v1239 = vunpack.c.l.b16 %v951
        %v1240 = vunpack.c.l.b16 %v952
        %v1241 = vunpack.c.l.b16 %v953
        %v1242 = vunpack.c.l.b16 %v954
        %v1243 = vunpack.c.l.b16 %v955
        %v1244 = vunpack.c.l.b16 %v956
        %v1245 = vunpack.c.l.b16 %v957
        %v1246 = vunpack.c.l.b16 %v958
        %v1247 = vunpack.c.l.b16 %v959
        %v1248 = vunpack.c.l.b16 %v960
        %v1249 = vunpack.c.l.b16 %v961
        %v1250 = vunpack.c.l.b16 %v962
        %v1251 = vunpack.c.l.b16 %v963
        %v1252 = vunpack.c.l.b16 %v964
        %v1253 = vunpack.c.l.b16 %v965
        %v1254 = vunpack.c.l.b16 %v966
        %v1255 = vunpack.c.l.b16 %v967
        %v1256 = vunpack.c.l.b16 %v968
        %v1257 = vunpack.c.l.b16 %v969
        %v1258 = vunpack.c.l.b16 %v970
        %v1259 = vunpack.c.l.b16 %v971
        %v1260 = vunpack.c.l.b16 %v972
        %v1261 = vunpack.c.l.b16 %v973
        %v1262 = vunpack.c.l.b16 %v974
        %v1263 = vunpack.c.l.b16 %v975
        %v1264 = vunpack.c.l.b16 %v976
        %v1265 = vunpack.c.l.b16 %v977
        %v1266 = vunpack.c.l.b16 %v978
        %v1267 = vunpack.c.l.b16 %v979
        %v1268 = vunpack.c.l.b16 %v980
        %v1269 = vunpack.c.l.b16 %v981
        %v1270 = vunpack.c.l.b16 %v982
        %v1271 = vunpack.c.l.b16 %v983
        %v1272 = vunpack.c.l.b16 %v984
        %v1273 = vunpack.c.l.b16 %v985
        %v1274 = vunpack.c.l.b16 %v986
        %v1275 = vunpack.c.l.b16 %v987
        %v1276 = vunpack.c.l.b16 %v988
        %v1277 = vunpack.c.l.b16 %v989
        %v1278 = vunpack.c.l.b16 %v990
        %v1279 = vunpack.c.l.b16 %v991
        %v1280 = vunpack.c.l.b16 %v992
        %v1281 = vunpack.c.l.b16 %v993
        %v1282 = vunpack.c.l.b16 %v994
        %v1283 = vunpack.c.l.b16 %v995
        %v1284 = vunpack.c.l.b16 %v996
        %v1285 = vunpack.c.l.b16 %v997
        %v1286 = vunpack.c.l.b16 %v998
        %v1287 = vunpack.c.l.b16 %v999
        %v1288 = vunpack.c.l.b16 %v1000
        %v1289 = vunpack.c.l.b16 %v1001
        %v1290 = vunpack.c.l.b16 %v1002
        %v1291 = vunpack.c.l.b16 %v1003
        %v1292 = vunpack.c.l.b16 %v1004
        %v1293 = vunpack.c.l.b16 %v1005
        %v1294 = vunpack.c.l.b16 %v1006
        %v1295 = vunpack.c.l.b16 %v1007
        %v1296 = vunpack.c.l.b16 %v1008
        %v1297 = vunpack.c.l.b16 %v1009
        %v1298 = vunpack.c.l.b16 %v1010
        %v1299 = vunpack.c.l.b16 %v1011
        %v1300 = vunpack.c.l.b16 %v1012
        %v1301 = vunpack.c.l.b16 %v1013
        %v1302 = vunpack.c.l.b16 %v1014
        %v1303 = vunpack.c.l.b16 %v1015
        %v1304 = vunpack.c.l.b16 %v1016
        %v1305 = vunpack.c.l.b16 %v1017
        %v1306 = vunpack.c.l.b16 %v1018
        %v1307 = vunpack.c.l.b16 %v1019
        %v1308 = vunpack.c.l.b16 %v1020
        %v1309 = vunpack.c.l.b16 %v1021
        %v1310 = vunpack.c.l.b16 %v1022
        %v1311 = vunpack.c.l.b16 %v1023
        %v1312 = vunpack.c.l.b16 %v1024
        %v1313 = vunpack.c.l.b16 %v1025
        %v1314 = vunpack.c.l.b16 %v1026
        %v1315 = vunpack.c.l.b16 %v1027
        %v1316 = vunpack.c.l.b16 %v1028
        %v1317 = vunpack.c.l.b16 %v1029
        %v1318 = vunpack.c.l.b16 %v1030
        %v1319 = vunpack.c.l.b16 %v1031
        %v1320 = vunpack.c.l.b16 %v1032
        %v1321 = vunpack.c.l.b16 %v1033
        %v1322 = vunpack.c.l.b16 %v1034
        %v1323 = vunpack.c.l.b16 %v1035
        %v1324 = vunpack.c.l.b16 %v1036
        %v1325 = vunpack.c.l.b16 %v1037
        %v1326 = vunpack.c.l.b16 %v1038
        %v1327 = vunpack.c.l.b16 %v1039
        %v1328 = vunpack.c.l.b16 %v1040
        %v1329 = vunpack.c.l.b16 %v1041
        %v1330 = vunpack.c.l.b16 %v1042
        %v1331 = vunpack.c.l.b16 %v1043
        %v1332 = vunpack.c.l.b16 %v1044
        %v1333 = vunpack.c.l.b16 %v1045
        %v1334 = vunpack.c.l.b16 %v1046
        %v1335 = vunpack.c.l.b16 %v1047
        %v1336 = vunpack.c.l.b16 %v1048
        %v1337 = vunpack.c.l.b16 %v1049
        %v1338 = vunpack.c.l.b16 %v1050
        %v1339 = vunpack.c.l.b16 %v1051
        %v1340 = vunpack.c.l.b16 %v1052
        %v1341 = vunpack.c.l.b16 %v1053
        %v1342 = vunpack.c.l.b16 %v1054
        %v1343 = vunpack.c.l.b16 %v1055
        %v1344 = vunpack.c.l.b16 %v1056
        %v1345 = vunpack.c.l.b16 %v1057
        %v1346 = vunpack.c.l.b16 %v1058
        %v1347 = vunpack.c.l.b16 %v1059
        %v1348 = vunpack.c.l.b16 %v1060
        %v1349 = vunpack.c.l.b16 %v1061
        %v1350 = vunpack.c.l.b16 %v1062
        %v1351 = vunpack.c.l.b16 %v1063
        %v1352 = vunpack.c.l.b16 %v1064
        %v1353 = vunpack.c.l.b16 %v1065
        %v1354 = vunpack.c.l.b16 %v1066
        %v1355 = vunpack.c.l.b16 %v1067
        %v1356 = vunpack.c.l.b16 %v1068
        %v1357 = vunpack.c.l.b16 %v1069
        %v1358 = vunpack.c.l.b16 %v1070
        %v1359 = vunpack.c.l.b16 %v1071
        %v1360 = vunpack.c.l.b16 %v1072
        %v1361 = vunpack.c.l.b16 %v1073
        %v1362 = vunpack.c.l.b16 %v1074
        %v1363 = vunpack.c.l.b16 %v1075
        %v1364 = vunpack.c.l.b16 %v1076
        %v1365 = vunpack.c.l.b16 %v1077
        %v1366 = vunpack.c.l.b16 %v1078
        %v1367 = vunpack.c.l.b16 %v1079
        %v1368 = vpack.c.b16 %v1225, %v1224
        %v1369 = vpack.c.b16 %v1227, %v1226
        %v1370 = vpack.c.b16 %v1229, %v1228
        %v1371 = vpack.c.b16 %v1231, %v1230
        %v1372 = vpack.c.b16 %v1233, %v1232
        %v1373 = vpack.c.b16 %v1235, %v1234
        %v1374 = vpack.c.b16 %v1237, %v1236
        %v1375 = vpack.c.b16 %v1239, %v1238
        %v1376 = vpack.c.b16 %v1241, %v1240
        %v1377 = vpack.c.b16 %v1243, %v1242
        %v1378 = vpack.c.b16 %v1245, %v1244
        %v1379 = vpack.c.b16 %v1247, %v1246
        %v1380 = vpack.c.b16 %v1249, %v1248
        %v1381 = vpack.c.b16 %v1251, %v1250
        %v1382 = vpack.c.b16 %v1253, %v1252
        %v1383 = vpack.c.b16 %v1255, %v1254
        %v1384 = vpack.c.b16 %v1257, %v1256
        %v1385 = vpack.c.b16 %v1259, %v1258
        %v1386 = vpack.c.b16 %v1261, %v1260
        %v1387 = vpack.c.b16 %v1263, %v1262
        %v1388 = vpack.c.b16 %v1265, %v1264
        %v1389 = vpack.c.b16 %v1267, %v1266
        %v1390 = vpack.c.b16 %v1269, %v1268
        %v1391 = vpack.c.b16 %v1271, %v1270
        %v1392 = vpack.c.b16 %v1273, %v1272
        %v1393 = vpack.c.b16 %v1275, %v1274
        %v1394 = vpack.c.b16 %v1277, %v1276
        %v1395 = vpack.c.b16 %v1279, %v1278
        %v1396 = vpack.c.b16 %v1281, %v1280
        %v1397 = vpack.c.b16 %v1283, %v1282
        %v1398 = vpack.c.b16 %v1285, %v1284
        %v1399 = vpack.c.b16 %v1287, %v1286
        %v1400 = vpack.c.b16 %v1289, %v1288
        %v1401 = vpack.c.b16 %v1291, %v1290
        %v1402 = vpack.c.b16 %v1293, %v1292
        %v1403 = vpack.c.b16 %v1295, %v1294
        %v1404 = vpack.c.b16 %v1297, %v1296
        %v1405 = vpack.c.b16 %v1299, %v1298
        %v1406 = vpack.c.b16 %v1301, %v1300
        %v1407 = vpack.c.b16 %v1303, %v1302
        %v1408 = vpack.c.b16 %v1305, %v1304
        %v1409 = vpack.c.b16 %v1307, %v1306
        %v1410 = vpack.c.b16 %v1309, %v1308
        %v1411 = vpack.c.b16 %v1311, %v1310
        %v1412 = vpack.c.b16 %v1313, %v1312
        %v1413 = vpack.c.b16 %v1315, %v1314
        %v1414 = vpack.c.b16 %v1317, %v1316
        %v1415 = vpack.c.b16 %v1319, %v1318
        %v1416 = vpack.c.b16 %v1321, %v1320
        %v1417 = vpack.c.b16 %v1323, %v1322
        %v1418 = vpack.c.b16 %v1325, %v1324
        %v1419 = vpack.c.b16 %v1327, %v1326
        %v1420 = vpack.c.b16 %v1329, %v1328
        %v1421 = vpack.c.b16 %v1331, %v1330
        %v1422 = vpack.c.b16 %v1333, %v1332
        %v1423 = vpack.c.b16 %v1335, %v1334
        %v1424 = vpack.c.b16 %v1337, %v1336
        %v1425 = vpack.c.b16 %v1339, %v1338
        %v1426 = vpack.c.b16 %v1341, %v1340
        %v1427 = vpack.c.b16 %v1343, %v1342
        %v1428 = vpack.c.b16 %v1345, %v1344
        %v1429 = vpack.c.b16 %v1347, %v1346
        %v1430 = vpack.c.b16 %v1349, %v1348
        %v1431 = vpack.c.b16 %v1351, %v1350
        %v1432 = vpack.c.b16 %v1353, %v1352
        %v1433 = vpack.c.b16 %v1355, %v1354
        %v1434 = vpack.c.b16 %v1357, %v1356
        %v1435 = vpack.c.b16 %v1359, %v1358
        %v1436 = vpack.c.b16 %v1361, %v1360
        %v1437 = vpack.c.b16 %v1363, %v1362
        %v1438 = vpack.c.b16 %v1365, %v1364
        %v1439 = vpack.c.b16 %v1367, %v1366
        %1512 = vmatprep.subr.bf16.mxu0 0
        %1513 = vmatpush1.bf16.msra.mxu0 %v1368
        %1514 = vmatprep.subr.bf16.mxu0 0
        %1515 = vmatpush1.bf16.msra.mxu0 %v1369
        %1516 = vmatprep.subr.bf16.mxu0 0
        %1517 = vmatpush1.bf16.msra.mxu0 %v1370
        %1518 = vmatprep.subr.bf16.mxu0 0
        %1519 = vmatpush1.bf16.msra.mxu0 %v1371
        %1520 = vmatprep.subr.bf16.mxu0 0
        %1521 = vmatpush1.bf16.msra.mxu0 %v1372
        %1522 = vmatprep.subr.bf16.mxu0 0
        %1523 = vmatpush1.bf16.msra.mxu0 %v1373
        %1524 = vmatprep.subr.bf16.mxu0 0
        %1525 = vmatpush1.bf16.msra.mxu0 %v1374
        %1526 = vmatprep.subr.bf16.mxu0 0
        %1527 = vmatpush1.bf16.msra.mxu0 %v1375
        %1528 = vmatprep.subr.bf16.mxu0 0
        %1529 = vmatpush1.bf16.msra.mxu0 %v1376
        %1530 = vmatprep.subr.bf16.mxu0 0
        %1531 = vmatpush1.bf16.msra.mxu0 %v1377
        %1532 = vmatprep.subr.bf16.mxu0 0
        %1533 = vmatpush1.bf16.msra.mxu0 %v1378
        %1534 = vmatprep.subr.bf16.mxu0 0
        %1535 = vmatpush1.bf16.msra.mxu0 %v1379
        %1536 = vmatprep.subr.bf16.mxu0 0
        %1537 = vmatpush1.bf16.msra.mxu0 %v1380
        %1538 = vmatprep.subr.bf16.mxu0 0
        %1539 = vmatpush1.bf16.msra.mxu0 %v1381
        %1540 = vmatprep.subr.bf16.mxu0 0
        %1541 = vmatpush1.bf16.msra.mxu0 %v1382
        %1542 = vmatprep.subr.bf16.mxu0 0
        %1543 = vmatpush1.bf16.msra.mxu0 %v1383
        %1544 = vmatprep.mubr.bf16.mxu0 %v646
        %1545 = vmatmul.mubr.bf16.gmra.mrb[0].mxu0 %v598
        %v1546 = vpop.f32.mrb[0].mxu0
        %v1547 = vadd.f32 0.0, %v1546
        %v1548 = vpop.f32.mrb[0].mxu0
        %v1549 = vpop.f32.mrb[0].mxu0
        %v1550 = vadd.f32 0.0, %v1549
        %v1551 = vpop.f32.mrb[0].mxu0
        %1552 = vmatprep.mubr.bf16.mxu0 %v647
        %1553 = vmatmul.mubr.bf16.gmra.mrb[0].mxu0 %v599
        %v1554 = vpop.f32.mrb[0].mxu0
        %v1555 = vadd.f32 0.0, %v1554
        %v1556 = vpop.f32.mrb[0].mxu0
        %v1557 = vpop.f32.mrb[0].mxu0
        %v1558 = vadd.f32 0.0, %v1557
        %v1559 = vpop.f32.mrb[0].mxu0
        %1560 = vmatprep.mubr.bf16.mxu0 %v648
        %1561 = vmatmul.mubr.bf16.gmra.mrb[0].mxu0 %v600
        %v1562 = vpop.f32.mrb[0].mxu0
        %v1563 = vadd.f32 0.0, %v1562
        %v1564 = vpop.f32.mrb[0].mxu0
        %v1565 = vpop.f32.mrb[0].mxu0
        %v1566 = vadd.f32 0.0, %v1565
        %v1567 = vpop.f32.mrb[0].mxu0
        %1568 = vmatprep.mubr.bf16.mxu0 %v649
        %1569 = vmatmul.mubr.bf16.gmra.mrb[0].mxu0 %v601
        %v1570 = vpop.f32.mrb[0].mxu0
        %v1571 = vadd.f32 0.0, %v1570
        %v1572 = vpop.f32.mrb[0].mxu0
        %v1573 = vpop.f32.mrb[0].mxu0
        %v1574 = vadd.f32 0.0, %v1573
        %v1575 = vpop.f32.mrb[0].mxu0
        %1576 = vmatprep.mubr.bf16.mxu0 %v650
        %1577 = vmatmul.mubr.bf16.gmra.mrb[0].mxu0 %v602
        %v1578 = vpop.f32.mrb[0].mxu0
        %v1579 = vadd.f32 0.0, %v1578
        %v1580 = vpop.f32.mrb[0].mxu0
        %v1581 = vpop.f32.mrb[0].mxu0
        %v1582 = vadd.f32 0.0, %v1581
        %v1583 = vpop.f32.mrb[0].mxu0
        %1584 = vmatprep.mubr.bf16.mxu0 %v651
        %1585 = vmatmul.mubr.bf16.gmra.mrb[0].mxu0 %v603
        %v1586 = vpop.f32.mrb[0].mxu0
        %v1587 = vadd.f32 0.0, %v1586
        %v1588 = vpop.f32.mrb[0].mxu0
        %v1589 = vpop.f32.mrb[0].mxu0
        %v1590 = vadd.f32 0.0, %v1589
        %v1591 = vpop.f32.mrb[0].mxu0
        %1592 = vmatprep.mubr.bf16.mxu0 %v652
        %1593 = vmatmul.mubr.bf16.gmra.mrb[0].mxu0 %v604
        %v1594 = vpop.f32.mrb[0].mxu0
        %v1595 = vadd.f32 0.0, %v1594
        %v1596 = vpop.f32.mrb[0].mxu0
        %v1597 = vpop.f32.mrb[0].mxu0
        %v1598 = vadd.f32 0.0, %v1597
        %v1599 = vpop.f32.mrb[0].mxu0
        %1600 = vmatprep.mubr.bf16.mxu0 %v653
        %1601 = vmatmul.mubr.bf16.gmra.mrb[0].mxu0 %v605
        %v1602 = vpop.f32.mrb[0].mxu0
        %v1603 = vadd.f32 0.0, %v1602
        %v1604 = vpop.f32.mrb[0].mxu0
        %v1605 = vpop.f32.mrb[0].mxu0
        %v1606 = vadd.f32 0.0, %v1605
        %v1607 = vpop.f32.mrb[0].mxu0
        %1608 = vmatprep.mubr.bf16.mxu0 %v654
        %1609 = vmatmul.mubr.bf16.gmra.mrb[0].mxu0 %v606
        %v1610 = vpop.f32.mrb[0].mxu0
        %v1611 = vadd.f32 0.0, %v1610
        %v1612 = vpop.f32.mrb[0].mxu0
        %v1613 = vpop.f32.mrb[0].mxu0
        %v1614 = vadd.f32 0.0, %v1613
        %v1615 = vpop.f32.mrb[0].mxu0
        %1616 = vmatprep.mubr.bf16.mxu0 %v655
        %1617 = vmatmul.mubr.bf16.gmra.mrb[0].mxu0 %v607
        %v1618 = vpop.f32.mrb[0].mxu0
        %v1619 = vadd.f32 0.0, %v1618
        %v1620 = vpop.f32.mrb[0].mxu0
        %v1621 = vpop.f32.mrb[0].mxu0
        %v1622 = vadd.f32 0.0, %v1621
        %v1623 = vpop.f32.mrb[0].mxu0
        %1624 = vmatprep.mubr.bf16.mxu0 %v656
        %1625 = vmatmul.mubr.bf16.gmra.mrb[0].mxu0 %v608
        %v1626 = vpop.f32.mrb[0].mxu0
        %v1627 = vadd.f32 0.0, %v1626
        %v1628 = vpop.f32.mrb[0].mxu0
        %v1629 = vpop.f32.mrb[0].mxu0
        %v1630 = vadd.f32 0.0, %v1629
        %v1631 = vpop.f32.mrb[0].mxu0
        %1632 = vmatprep.mubr.bf16.mxu0 %v657
        %1633 = vmatmul.mubr.bf16.gmra.mrb[0].mxu0 %v609
        %v1634 = vpop.f32.mrb[0].mxu0
        %v1635 = vadd.f32 0.0, %v1634
        %v1636 = vpop.f32.mrb[0].mxu0
        %v1637 = vpop.f32.mrb[0].mxu0
        %v1638 = vadd.f32 0.0, %v1637
        %v1639 = vpop.f32.mrb[0].mxu0
        %1640 = vmatprep.mubr.bf16.mxu0 %v658
        %1641 = vmatmul.mubr.bf16.gmra.mrb[0].mxu0 %v610
        %v1642 = vpop.f32.mrb[0].mxu0
        %v1643 = vadd.f32 0.0, %v1642
        %v1644 = vpop.f32.mrb[0].mxu0
        %v1645 = vpop.f32.mrb[0].mxu0
        %v1646 = vadd.f32 0.0, %v1645
        %v1647 = vpop.f32.mrb[0].mxu0
        %1648 = vmatprep.mubr.bf16.mxu0 %v659
        %1649 = vmatmul.mubr.bf16.gmra.mrb[0].mxu0 %v611
        %v1650 = vpop.f32.mrb[0].mxu0
        %v1651 = vadd.f32 0.0, %v1650
        %v1652 = vpop.f32.mrb[0].mxu0
        %v1653 = vpop.f32.mrb[0].mxu0
        %v1654 = vadd.f32 0.0, %v1653
        %v1655 = vpop.f32.mrb[0].mxu0
        %1656 = vmatprep.mubr.bf16.mxu0 %v660
        %1657 = vmatmul.mubr.bf16.gmra.mrb[0].mxu0 %v612
        %v1658 = vpop.f32.mrb[0].mxu0
        %v1659 = vadd.f32 0.0, %v1658
        %v1660 = vpop.f32.mrb[0].mxu0
        %v1661 = vpop.f32.mrb[0].mxu0
        %v1662 = vadd.f32 0.0, %v1661
        %v1663 = vpop.f32.mrb[0].mxu0
        %1664 = vmatprep.mubr.bf16.mxu0 %v661
        %1665 = vmatmul.mubr.bf16.gmra.mrb[0].mxu0 %v613
        %v1666 = vpop.f32.mrb[0].mxu0
        %v1667 = vadd.f32 0.0, %v1666
        %v1668 = vpop.f32.mrb[0].mxu0
        %v1669 = vpop.f32.mrb[0].mxu0
        %v1670 = vadd.f32 0.0, %v1669
        %v1671 = vpop.f32.mrb[0].mxu0
        %1672 = vdwg.mxu0
        %1673 = vmatprep.subr.bf16.mxu0 0
        %1674 = vmatpush1.bf16.msra.mxu0 %v1384
        %1675 = vmatprep.subr.bf16.mxu0 0
        %1676 = vmatpush1.bf16.msra.mxu0 %v1385
        %1677 = vmatprep.subr.bf16.mxu0 0
        %1678 = vmatpush1.bf16.msra.mxu0 %v1386
        %1679 = vmatprep.subr.bf16.mxu0 0
        %1680 = vmatpush1.bf16.msra.mxu0 %v1387
        %1681 = vmatprep.subr.bf16.mxu0 0
        %1682 = vmatpush1.bf16.msra.mxu0 %v1388
        %1683 = vmatprep.subr.bf16.mxu0 0
        %1684 = vmatpush1.bf16.msra.mxu0 %v1389
        %1685 = vmatprep.subr.bf16.mxu0 0
        %1686 = vmatpush1.bf16.msra.mxu0 %v1390
        %1687 = vmatprep.subr.bf16.mxu0 0
        %1688 = vmatpush1.bf16.msra.mxu0 %v1391
        %1689 = vmatprep.subr.bf16.mxu0 0
        %1690 = vmatpush1.bf16.msra.mxu0 %v1392
        %1691 = vmatprep.subr.bf16.mxu0 0
        %1692 = vmatpush1.bf16.msra.mxu0 %v1393
        %1693 = vmatprep.subr.bf16.mxu0 0
        %1694 = vmatpush1.bf16.msra.mxu0 %v1394
        %1695 = vmatprep.subr.bf16.mxu0 0
        %1696 = vmatpush1.bf16.msra.mxu0 %v1395
        %1697 = vmatprep.subr.bf16.mxu0 0
        %1698 = vmatpush1.bf16.msra.mxu0 %v1396
        %1699 = vmatprep.subr.bf16.mxu0 0
        %1700 = vmatpush1.bf16.msra.mxu0 %v1397
        %1701 = vmatprep.subr.bf16.mxu0 0
        %1702 = vmatpush1.bf16.msra.mxu0 %v1398
        %1703 = vmatprep.subr.bf16.mxu0 0
        %1704 = vmatpush1.bf16.msra.mxu0 %v1399
        %1705 = vmatprep.mubr.bf16.mxu0 %v857
        %1706 = vmatmul.mubr.bf16.gmra.mrb[0].mxu0 %v838
        %v1707 = vpop.f32.mrb[0].mxu0
        %v1708 = vadd.f32 %v1547, %v1707
        %v1709 = vpop.f32.mrb[0].mxu0
        %v1710 = vpop.f32.mrb[0].mxu0
        %v1711 = vadd.f32 %v1550, %v1710
        %v1712 = vpop.f32.mrb[0].mxu0
        %1713 = vmatprep.mubr.bf16.mxu0 %v858
        %1714 = vmatmul.mubr.bf16.gmra.mrb[0].mxu0 %v839
        %v1715 = vpop.f32.mrb[0].mxu0
        %v1716 = vadd.f32 %v1555, %v1715
        %v1717 = vpop.f32.mrb[0].mxu0
        %v1718 = vpop.f32.mrb[0].mxu0
        %v1719 = vadd.f32 %v1558, %v1718
        %v1720 = vpop.f32.mrb[0].mxu0
        %1721 = vmatprep.mubr.bf16.mxu0 %v859
        %1722 = vmatmul.mubr.bf16.gmra.mrb[0].mxu0 %v840
        %v1723 = vpop.f32.mrb[0].mxu0
        %v1724 = vadd.f32 %v1563, %v1723
        %v1725 = vpop.f32.mrb[0].mxu0
        %v1726 = vpop.f32.mrb[0].mxu0
        %v1727 = vadd.f32 %v1566, %v1726
        %v1728 = vpop.f32.mrb[0].mxu0
        %1729 = vmatprep.mubr.bf16.mxu0 %v860
        %1730 = vmatmul.mubr.bf16.gmra.mrb[0].mxu0 %v841
        %v1731 = vpop.f32.mrb[0].mxu0
        %v1732 = vadd.f32 %v1571, %v1731
        %v1733 = vpop.f32.mrb[0].mxu0
        %v1734 = vpop.f32.mrb[0].mxu0
        %v1735 = vadd.f32 %v1574, %v1734
        %v1736 = vpop.f32.mrb[0].mxu0
        %1737 = vmatprep.mubr.bf16.mxu0 %v861
        %1738 = vmatmul.mubr.bf16.gmra.mrb[0].mxu0 %v842
        %v1739 = vpop.f32.mrb[0].mxu0
        %v1740 = vadd.f32 %v1579, %v1739
        %v1741 = vpop.f32.mrb[0].mxu0
        %v1742 = vpop.f32.mrb[0].mxu0
        %v1743 = vadd.f32 %v1582, %v1742
        %v1744 = vpop.f32.mrb[0].mxu0
        %1745 = vmatprep.mubr.bf16.mxu0 %v862
        %1746 = vmatmul.mubr.bf16.gmra.mrb[0].mxu0 %v843
        %v1747 = vpop.f32.mrb[0].mxu0
        %v1748 = vadd.f32 %v1587, %v1747
        %v1749 = vpop.f32.mrb[0].mxu0
        %v1750 = vpop.f32.mrb[0].mxu0
        %v1751 = vadd.f32 %v1590, %v1750
        %v1752 = vpop.f32.mrb[0].mxu0
        %1753 = vmatprep.mubr.bf16.mxu0 %v863
        %1754 = vmatmul.mubr.bf16.gmra.mrb[0].mxu0 %v844
        %v1755 = vpop.f32.mrb[0].mxu0
        %v1756 = vadd.f32 %v1595, %v1755
        %v1757 = vpop.f32.mrb[0].mxu0
        %v1758 = vpop.f32.mrb[0].mxu0
        %v1759 = vadd.f32 %v1598, %v1758
        %v1760 = vpop.f32.mrb[0].mxu0
        %1761 = vmatprep.mubr.bf16.mxu0 %v864
        %1762 = vmatmul.mubr.bf16.gmra.mrb[0].mxu0 %v845
        %v1763 = vpop.f32.mrb[0].mxu0
        %v1764 = vadd.f32 %v1603, %v1763
        %v1765 = vpop.f32.mrb[0].mxu0
        %v1766 = vpop.f32.mrb[0].mxu0
        %v1767 = vadd.f32 %v1606, %v1766
        %v1768 = vpop.f32.mrb[0].mxu0
        %1769 = vmatprep.mubr.bf16.mxu0 %v865
        %1770 = vmatmul.mubr.bf16.gmra.mrb[0].mxu0 %v846
        %v1771 = vpop.f32.mrb[0].mxu0
        %v1772 = vadd.f32 %v1611, %v1771
        %v1773 = vpop.f32.mrb[0].mxu0
        %v1774 = vpop.f32.mrb[0].mxu0
        %v1775 = vadd.f32 %v1614, %v1774
        %v1776 = vpop.f32.mrb[0].mxu0
        %1777 = vmatprep.mubr.bf16.mxu0 %v866
        %1778 = vmatmul.mubr.bf16.gmra.mrb[0].mxu0 %v847
        %v1779 = vpop.f32.mrb[0].mxu0
        %v1780 = vadd.f32 %v1619, %v1779
        %v1781 = vpop.f32.mrb[0].mxu0
        %v1782 = vpop.f32.mrb[0].mxu0
        %v1783 = vadd.f32 %v1622, %v1782
        %v1784 = vpop.f32.mrb[0].mxu0
        %1785 = vmatprep.mubr.bf16.mxu0 %v867
        %1786 = vmatmul.mubr.bf16.gmra.mrb[0].mxu0 %v848
        %v1787 = vpop.f32.mrb[0].mxu0
        %v1788 = vadd.f32 %v1627, %v1787
        %v1789 = vpop.f32.mrb[0].mxu0
        %v1790 = vpop.f32.mrb[0].mxu0
        %v1791 = vadd.f32 %v1630, %v1790
        %v1792 = vpop.f32.mrb[0].mxu0
        %1793 = vmatprep.mubr.bf16.mxu0 %v868
        %1794 = vmatmul.mubr.bf16.gmra.mrb[0].mxu0 %v849
        %v1795 = vpop.f32.mrb[0].mxu0
        %v1796 = vadd.f32 %v1635, %v1795
        %v1797 = vpop.f32.mrb[0].mxu0
        %v1798 = vpop.f32.mrb[0].mxu0
        %v1799 = vadd.f32 %v1638, %v1798
        %v1800 = vpop.f32.mrb[0].mxu0
        %1801 = vmatprep.mubr.bf16.mxu0 %v869
        %1802 = vmatmul.mubr.bf16.gmra.mrb[0].mxu0 %v850
        %v1803 = vpop.f32.mrb[0].mxu0
        %v1804 = vadd.f32 %v1643, %v1803
        %v1805 = vpop.f32.mrb[0].mxu0
        %v1806 = vpop.f32.mrb[0].mxu0
        %v1807 = vadd.f32 %v1646, %v1806
        %v1808 = vpop.f32.mrb[0].mxu0
        %1809 = vmatprep.mubr.bf16.mxu0 %v870
        %1810 = vmatmul.mubr.bf16.gmra.mrb[0].mxu0 %v851
        %v1811 = vpop.f32.mrb[0].mxu0
        %v1812 = vadd.f32 %v1651, %v1811
        %v1813 = vpop.f32.mrb[0].mxu0
        %v1814 = vpop.f32.mrb[0].mxu0
        %v1815 = vadd.f32 %v1654, %v1814
        %v1816 = vpop.f32.mrb[0].mxu0
        %1817 = vmatprep.mubr.bf16.mxu0 %v871
        %1818 = vmatmul.mubr.bf16.gmra.mrb[0].mxu0 %v852
        %v1819 = vpop.f32.mrb[0].mxu0
        %v1820 = vadd.f32 %v1659, %v1819
        %v1821 = vpop.f32.mrb[0].mxu0
        %v1822 = vpop.f32.mrb[0].mxu0
        %v1823 = vadd.f32 %v1662, %v1822
        %v1824 = vpop.f32.mrb[0].mxu0
        %1825 = vmatprep.mubr.bf16.mxu0 %v872
        %1826 = vmatmul.mubr.bf16.gmra.mrb[0].mxu0 %v853
        %v1827 = vpop.f32.mrb[0].mxu0
        %v1828 = vadd.f32 %v1667, %v1827
        %v1829 = vpop.f32.mrb[0].mxu0
        %v1830 = vpop.f32.mrb[0].mxu0
        %v1831 = vadd.f32 %v1670, %v1830
        %v1832 = vpop.f32.mrb[0].mxu0
        %1833 = vdwg.mxu0
        %1834 = vmatprep.subr.bf16.mxu0 0
        %1835 = vmatpush1.bf16.msra.mxu0 %v1400
        %1836 = vmatprep.subr.bf16.mxu0 0
        %1837 = vmatpush1.bf16.msra.mxu0 %v1401
        %1838 = vmatprep.subr.bf16.mxu0 0
        %1839 = vmatpush1.bf16.msra.mxu0 %v1402
        %1840 = vmatprep.subr.bf16.mxu0 0
        %1841 = vmatpush1.bf16.msra.mxu0 %v1403
        %1842 = vmatprep.subr.bf16.mxu0 0
        %1843 = vmatpush1.bf16.msra.mxu0 %v1404
        %1844 = vmatprep.subr.bf16.mxu0 0
        %1845 = vmatpush1.bf16.msra.mxu0 %v1405
        %1846 = vmatprep.subr.bf16.mxu0 0
        %1847 = vmatpush1.bf16.msra.mxu0 %v1406
        %1848 = vmatprep.subr.bf16.mxu0 0
        %1849 = vmatpush1.bf16.msra.mxu0 %v1407
        %1850 = vmatprep.subr.bf16.mxu0 0
        %1851 = vmatpush1.bf16.msra.mxu0 %v1408
        %1852 = vmatprep.subr.bf16.mxu0 0
        %1853 = vmatpush1.bf16.msra.mxu0 %v1409
        %1854 = vmatprep.subr.bf16.mxu0 0
        %1855 = vmatpush1.bf16.msra.mxu0 %v1410
        %1856 = vmatprep.subr.bf16.mxu0 0
        %1857 = vmatpush1.bf16.msra.mxu0 %v1411
        %1858 = vmatprep.subr.bf16.mxu0 0
        %1859 = vmatpush1.bf16.msra.mxu0 %v1412
        %1860 = vmatprep.subr.bf16.mxu0 0
        %1861 = vmatpush1.bf16.msra.mxu0 %v1413
        %1862 = vmatprep.subr.bf16.mxu0 0
        %1863 = vmatpush1.bf16.msra.mxu0 %v1414
        %1864 = vmatprep.subr.bf16.mxu0 0
        %1865 = vmatpush1.bf16.msra.mxu0 %v1415
        %1866 = vmatprep.mubr.bf16.mxu0 %v879
        %1867 = vmatmul.mubr.bf16.gmra.mrb[0].mxu0 %v647
        %v1868 = vpop.f32.mrb[0].mxu0
        %v1869 = vadd.f32 %v1708, %v1868
        %v1870 = vpop.f32.mrb[0].mxu0
        %v1871 = vpop.f32.mrb[0].mxu0
        %v1872 = vadd.f32 %v1711, %v1871
        %v1873 = vpop.f32.mrb[0].mxu0
        %1874 = vmatprep.mubr.bf16.mxu0 %v880
        %1875 = vmatmul.mubr.bf16.gmra.mrb[0].mxu0 %v648
        %v1876 = vpop.f32.mrb[0].mxu0
        %v1877 = vadd.f32 %v1716, %v1876
        %v1878 = vpop.f32.mrb[0].mxu0
        %v1879 = vpop.f32.mrb[0].mxu0
        %v1880 = vadd.f32 %v1719, %v1879
        %v1881 = vpop.f32.mrb[0].mxu0
        %1882 = vmatprep.mubr.bf16.mxu0 %v881
        %1883 = vmatmul.mubr.bf16.gmra.mrb[0].mxu0 %v649
        %v1884 = vpop.f32.mrb[0].mxu0
        %v1885 = vadd.f32 %v1724, %v1884
        %v1886 = vpop.f32.mrb[0].mxu0
        %v1887 = vpop.f32.mrb[0].mxu0
        %v1888 = vadd.f32 %v1727, %v1887
        %v1889 = vpop.f32.mrb[0].mxu0
        %1890 = vmatprep.mubr.bf16.mxu0 %v882
        %1891 = vmatmul.mubr.bf16.gmra.mrb[0].mxu0 %v650
        %v1892 = vpop.f32.mrb[0].mxu0
        %v1893 = vadd.f32 %v1732, %v1892
        %v1894 = vpop.f32.mrb[0].mxu0
        %v1895 = vpop.f32.mrb[0].mxu0
        %v1896 = vadd.f32 %v1735, %v1895
        %v1897 = vpop.f32.mrb[0].mxu0
        %1898 = vmatprep.mubr.bf16.mxu0 %v883
        %1899 = vmatmul.mubr.bf16.gmra.mrb[0].mxu0 %v651
        %v1900 = vpop.f32.mrb[0].mxu0
        %v1901 = vadd.f32 %v1740, %v1900
        %v1902 = vpop.f32.mrb[0].mxu0
        %v1903 = vpop.f32.mrb[0].mxu0
        %v1904 = vadd.f32 %v1743, %v1903
        %v1905 = vpop.f32.mrb[0].mxu0
        %1906 = vmatprep.mubr.bf16.mxu0 %v884
        %1907 = vmatmul.mubr.bf16.gmra.mrb[0].mxu0 %v652
        %v1908 = vpop.f32.mrb[0].mxu0
        %v1909 = vadd.f32 %v1748, %v1908
        %v1910 = vpop.f32.mrb[0].mxu0
        %v1911 = vpop.f32.mrb[0].mxu0
        %v1912 = vadd.f32 %v1751, %v1911
        %v1913 = vpop.f32.mrb[0].mxu0
        %1914 = vmatprep.mubr.bf16.mxu0 %v885
        %1915 = vmatmul.mubr.bf16.gmra.mrb[0].mxu0 %v653
        %v1916 = vpop.f32.mrb[0].mxu0
        %v1917 = vadd.f32 %v1756, %v1916
        %v1918 = vpop.f32.mrb[0].mxu0
        %v1919 = vpop.f32.mrb[0].mxu0
        %v1920 = vadd.f32 %v1759, %v1919
        %v1921 = vpop.f32.mrb[0].mxu0
        %1922 = vmatprep.mubr.bf16.mxu0 %v886
        %1923 = vmatmul.mubr.bf16.gmra.mrb[0].mxu0 %v654
        %v1924 = vpop.f32.mrb[0].mxu0
        %v1925 = vadd.f32 %v1764, %v1924
        %v1926 = vpop.f32.mrb[0].mxu0
        %v1927 = vpop.f32.mrb[0].mxu0
        %v1928 = vadd.f32 %v1767, %v1927
        %v1929 = vpop.f32.mrb[0].mxu0
        %1930 = vmatprep.mubr.bf16.mxu0 %v887
        %1931 = vmatmul.mubr.bf16.gmra.mrb[0].mxu0 %v655
        %v1932 = vpop.f32.mrb[0].mxu0
        %v1933 = vadd.f32 %v1772, %v1932
        %v1934 = vpop.f32.mrb[0].mxu0
        %v1935 = vpop.f32.mrb[0].mxu0
        %v1936 = vadd.f32 %v1775, %v1935
        %v1937 = vpop.f32.mrb[0].mxu0
        %1938 = vmatprep.mubr.bf16.mxu0 %v888
        %1939 = vmatmul.mubr.bf16.gmra.mrb[0].mxu0 %v656
        %v1940 = vpop.f32.mrb[0].mxu0
        %v1941 = vadd.f32 %v1780, %v1940
        %v1942 = vpop.f32.mrb[0].mxu0
        %v1943 = vpop.f32.mrb[0].mxu0
        %v1944 = vadd.f32 %v1783, %v1943
        %v1945 = vpop.f32.mrb[0].mxu0
        %1946 = vmatprep.mubr.bf16.mxu0 %v889
        %1947 = vmatmul.mubr.bf16.gmra.mrb[0].mxu0 %v657
        %v1948 = vpop.f32.mrb[0].mxu0
        %v1949 = vadd.f32 %v1788, %v1948
        %v1950 = vpop.f32.mrb[0].mxu0
        %v1951 = vpop.f32.mrb[0].mxu0
        %v1952 = vadd.f32 %v1791, %v1951
        %v1953 = vpop.f32.mrb[0].mxu0
        %1954 = vmatprep.mubr.bf16.mxu0 %v890
        %1955 = vmatmul.mubr.bf16.gmra.mrb[0].mxu0 %v658
        %v1956 = vpop.f32.mrb[0].mxu0
        %v1957 = vadd.f32 %v1796, %v1956
        %v1958 = vpop.f32.mrb[0].mxu0
        %v1959 = vpop.f32.mrb[0].mxu0
        %v1960 = vadd.f32 %v1799, %v1959
        %v1961 = vpop.f32.mrb[0].mxu0
        %1962 = vmatprep.mubr.bf16.mxu0 %v891
        %1963 = vmatmul.mubr.bf16.gmra.mrb[0].mxu0 %v659
        %v1964 = vpop.f32.mrb[0].mxu0
        %v1965 = vadd.f32 %v1804, %v1964
        %v1966 = vpop.f32.mrb[0].mxu0
        %v1967 = vpop.f32.mrb[0].mxu0
        %v1968 = vadd.f32 %v1807, %v1967
        %v1969 = vpop.f32.mrb[0].mxu0
        %1970 = vmatprep.mubr.bf16.mxu0 %v892
        %1971 = vmatmul.mubr.bf16.gmra.mrb[0].mxu0 %v660
        %v1972 = vpop.f32.mrb[0].mxu0
        %v1973 = vadd.f32 %v1812, %v1972
        %v1974 = vpop.f32.mrb[0].mxu0
        %v1975 = vpop.f32.mrb[0].mxu0
        %v1976 = vadd.f32 %v1815, %v1975
        %v1977 = vpop.f32.mrb[0].mxu0
        %1978 = vmatprep.mubr.bf16.mxu0 %v893
        %1979 = vmatmul.mubr.bf16.gmra.mrb[0].mxu0 %v661
        %v1980 = vpop.f32.mrb[0].mxu0
        %v1981 = vadd.f32 %v1820, %v1980
        %v1982 = vpop.f32.mrb[0].mxu0
        %v1983 = vpop.f32.mrb[0].mxu0
        %v1984 = vadd.f32 %v1823, %v1983
        %v1985 = vpop.f32.mrb[0].mxu0
        %1986 = vmatprep.mubr.bf16.mxu0 %v894
        %1987 = vmatmul.mubr.bf16.gmra.mrb[0].mxu0 %v875
        %v1988 = vpop.f32.mrb[0].mxu0
        %v1989 = vadd.f32 %v1828, %v1988
        %v1990 = vpop.f32.mrb[0].mxu0
        %v1991 = vpop.f32.mrb[0].mxu0
        %v1992 = vadd.f32 %v1831, %v1991
        %v1993 = vpop.f32.mrb[0].mxu0
        %1994 = vdwg.mxu0
        %1995 = vmatprep.subr.bf16.mxu0 0
        %1996 = vmatpush1.bf16.msra.mxu0 %v1416
        %1997 = vmatprep.subr.bf16.mxu0 0
        %1998 = vmatpush1.bf16.msra.mxu0 %v1417
        %1999 = vmatprep.subr.bf16.mxu0 0
        %2000 = vmatpush1.bf16.msra.mxu0 %v1418
        %2001 = vmatprep.subr.bf16.mxu0 0
        %2002 = vmatpush1.bf16.msra.mxu0 %v1419
        %2003 = vmatprep.subr.bf16.mxu0 0
        %2004 = vmatpush1.bf16.msra.mxu0 %v1420
        %2005 = vmatprep.subr.bf16.mxu0 0
        %2006 = vmatpush1.bf16.msra.mxu0 %v1421
        %2007 = vmatprep.subr.bf16.mxu0 0
        %2008 = vmatpush1.bf16.msra.mxu0 %v1422
        %2009 = vmatprep.subr.bf16.mxu0 0
        %2010 = vmatpush1.bf16.msra.mxu0 %v1423
        %2011 = vmatprep.subr.bf16.mxu0 0
        %2012 = vmatpush1.bf16.msra.mxu0 %v1424
        %2013 = vmatprep.subr.bf16.mxu0 0
        %2014 = vmatpush1.bf16.msra.mxu0 %v1425
        %2015 = vmatprep.subr.bf16.mxu0 0
        %2016 = vmatpush1.bf16.msra.mxu0 %v1426
        %2017 = vmatprep.subr.bf16.mxu0 0
        %2018 = vmatpush1.bf16.msra.mxu0 %v1427
        %2019 = vmatprep.subr.bf16.mxu0 0
        %2020 = vmatpush1.bf16.msra.mxu0 %v1428
        %2021 = vmatprep.subr.bf16.mxu0 0
        %2022 = vmatpush1.bf16.msra.mxu0 %v1429
        %2023 = vmatprep.subr.bf16.mxu0 0
        %2024 = vmatpush1.bf16.msra.mxu0 %v1430
        %2025 = vmatprep.subr.bf16.mxu0 0
        %2026 = vmatpush1.bf16.msra.mxu0 %v1431
        %2027 = vmatprep.mubr.bf16.mxu0 %v648
        %2028 = vmatmul.mubr.bf16.gmra.mrb[0].mxu0 %v898
        %v2029 = vpop.f32.mrb[0].mxu0
        %v2030 = vadd.f32 %v1869, %v2029
        %v2031 = vpop.f32.mrb[0].mxu0
        %v2032 = vpop.f32.mrb[0].mxu0
        %v2033 = vadd.f32 %v1872, %v2032
        %v2034 = vpop.f32.mrb[0].mxu0
        %2035 = vmatprep.mubr.bf16.mxu0 %v649
        %2036 = vmatmul.mubr.bf16.gmra.mrb[0].mxu0 %v899
        %v2037 = vpop.f32.mrb[0].mxu0
        %v2038 = vadd.f32 %v1877, %v2037
        %v2039 = vpop.f32.mrb[0].mxu0
        %v2040 = vpop.f32.mrb[0].mxu0
        %v2041 = vadd.f32 %v1880, %v2040
        %v2042 = vpop.f32.mrb[0].mxu0
        %2043 = vmatprep.mubr.bf16.mxu0 %v650
        %2044 = vmatmul.mubr.bf16.gmra.mrb[0].mxu0 %v900
        %v2045 = vpop.f32.mrb[0].mxu0
        %v2046 = vadd.f32 %v1885, %v2045
        %v2047 = vpop.f32.mrb[0].mxu0
        %v2048 = vpop.f32.mrb[0].mxu0
        %v2049 = vadd.f32 %v1888, %v2048
        %v2050 = vpop.f32.mrb[0].mxu0
        %2051 = vmatprep.mubr.bf16.mxu0 %v651
        %2052 = vmatmul.mubr.bf16.gmra.mrb[0].mxu0 %v901
        %v2053 = vpop.f32.mrb[0].mxu0
        %v2054 = vadd.f32 %v1893, %v2053
        %v2055 = vpop.f32.mrb[0].mxu0
        %v2056 = vpop.f32.mrb[0].mxu0
        %v2057 = vadd.f32 %v1896, %v2056
        %v2058 = vpop.f32.mrb[0].mxu0
        %2059 = vmatprep.mubr.bf16.mxu0 %v652
        %2060 = vmatmul.mubr.bf16.gmra.mrb[0].mxu0 %v902
        %v2061 = vpop.f32.mrb[0].mxu0
        %v2062 = vadd.f32 %v1901, %v2061
        %v2063 = vpop.f32.mrb[0].mxu0
        %v2064 = vpop.f32.mrb[0].mxu0
        %v2065 = vadd.f32 %v1904, %v2064
        %v2066 = vpop.f32.mrb[0].mxu0
        %2067 = vmatprep.mubr.bf16.mxu0 %v653
        %2068 = vmatmul.mubr.bf16.gmra.mrb[0].mxu0 %v903
        %v2069 = vpop.f32.mrb[0].mxu0
        %v2070 = vadd.f32 %v1909, %v2069
        %v2071 = vpop.f32.mrb[0].mxu0
        %v2072 = vpop.f32.mrb[0].mxu0
        %v2073 = vadd.f32 %v1912, %v2072
        %v2074 = vpop.f32.mrb[0].mxu0
        %2075 = vmatprep.mubr.bf16.mxu0 %v654
        %2076 = vmatmul.mubr.bf16.gmra.mrb[0].mxu0 %v904
        %v2077 = vpop.f32.mrb[0].mxu0
        %v2078 = vadd.f32 %v1917, %v2077
        %v2079 = vpop.f32.mrb[0].mxu0
        %v2080 = vpop.f32.mrb[0].mxu0
        %v2081 = vadd.f32 %v1920, %v2080
        %v2082 = vpop.f32.mrb[0].mxu0
        %2083 = vmatprep.mubr.bf16.mxu0 %v655
        %2084 = vmatmul.mubr.bf16.gmra.mrb[0].mxu0 %v905
        %v2085 = vpop.f32.mrb[0].mxu0
        %v2086 = vadd.f32 %v1925, %v2085
        %v2087 = vpop.f32.mrb[0].mxu0
        %v2088 = vpop.f32.mrb[0].mxu0
        %v2089 = vadd.f32 %v1928, %v2088
        %v2090 = vpop.f32.mrb[0].mxu0
        %2091 = vmatprep.mubr.bf16.mxu0 %v656
        %2092 = vmatmul.mubr.bf16.gmra.mrb[0].mxu0 %v906
        %v2093 = vpop.f32.mrb[0].mxu0
        %v2094 = vadd.f32 %v1933, %v2093
        %v2095 = vpop.f32.mrb[0].mxu0
        %v2096 = vpop.f32.mrb[0].mxu0
        %v2097 = vadd.f32 %v1936, %v2096
        %v2098 = vpop.f32.mrb[0].mxu0
        %2099 = vmatprep.mubr.bf16.mxu0 %v657
        %2100 = vmatmul.mubr.bf16.gmra.mrb[0].mxu0 %v907
        %v2101 = vpop.f32.mrb[0].mxu0
        %v2102 = vadd.f32 %v1941, %v2101
        %v2103 = vpop.f32.mrb[0].mxu0
        %v2104 = vpop.f32.mrb[0].mxu0
        %v2105 = vadd.f32 %v1944, %v2104
        %v2106 = vpop.f32.mrb[0].mxu0
        %2107 = vmatprep.mubr.bf16.mxu0 %v658
        %2108 = vmatmul.mubr.bf16.gmra.mrb[0].mxu0 %v908
        %v2109 = vpop.f32.mrb[0].mxu0
        %v2110 = vadd.f32 %v1949, %v2109
        %v2111 = vpop.f32.mrb[0].mxu0
        %v2112 = vpop.f32.mrb[0].mxu0
        %v2113 = vadd.f32 %v1952, %v2112
        %v2114 = vpop.f32.mrb[0].mxu0
        %2115 = vmatprep.mubr.bf16.mxu0 %v659
        %2116 = vmatmul.mubr.bf16.gmra.mrb[0].mxu0 %v909
        %v2117 = vpop.f32.mrb[0].mxu0
        %v2118 = vadd.f32 %v1957, %v2117
        %v2119 = vpop.f32.mrb[0].mxu0
        %v2120 = vpop.f32.mrb[0].mxu0
        %v2121 = vadd.f32 %v1960, %v2120
        %v2122 = vpop.f32.mrb[0].mxu0
        %2123 = vmatprep.mubr.bf16.mxu0 %v660
        %2124 = vmatmul.mubr.bf16.gmra.mrb[0].mxu0 %v910
        %v2125 = vpop.f32.mrb[0].mxu0
        %v2126 = vadd.f32 %v1965, %v2125
        %v2127 = vpop.f32.mrb[0].mxu0
        %v2128 = vpop.f32.mrb[0].mxu0
        %v2129 = vadd.f32 %v1968, %v2128
        %v2130 = vpop.f32.mrb[0].mxu0
        %2131 = vmatprep.mubr.bf16.mxu0 %v661
        %2132 = vmatmul.mubr.bf16.gmra.mrb[0].mxu0 %v911
        %v2133 = vpop.f32.mrb[0].mxu0
        %v2134 = vadd.f32 %v1973, %v2133
        %v2135 = vpop.f32.mrb[0].mxu0
        %v2136 = vpop.f32.mrb[0].mxu0
        %v2137 = vadd.f32 %v1976, %v2136
        %v2138 = vpop.f32.mrb[0].mxu0
        %2139 = vmatprep.mubr.bf16.mxu0 %v875
        %2140 = vmatmul.mubr.bf16.gmra.mrb[0].mxu0 %v912
        %v2141 = vpop.f32.mrb[0].mxu0
        %v2142 = vadd.f32 %v1981, %v2141
        %v2143 = vpop.f32.mrb[0].mxu0
        %v2144 = vpop.f32.mrb[0].mxu0
        %v2145 = vadd.f32 %v1984, %v2144
        %v2146 = vpop.f32.mrb[0].mxu0
        %2147 = vmatprep.mubr.bf16.mxu0 %v916
        %2148 = vmatmul.mubr.bf16.gmra.mrb[0].mxu0 %v913
        %v2149 = vpop.f32.mrb[0].mxu0
        %v2150 = vadd.f32 %v1989, %v2149
        %v2151 = vpop.f32.mrb[0].mxu0
        %v2152 = vpop.f32.mrb[0].mxu0
        %v2153 = vadd.f32 %v1992, %v2152
        %v2154 = vpop.f32.mrb[0].mxu0
        %2155 = vdwg.mxu0
        %2156 = vmatprep.subr.bf16.mxu0 0
        %2157 = vmatpush1.bf16.msra.mxu0 %v1432
        %2158 = vmatprep.subr.bf16.mxu0 0
        %2159 = vmatpush1.bf16.msra.mxu0 %v1433
        %2160 = vmatprep.subr.bf16.mxu0 0
        %2161 = vmatpush1.bf16.msra.mxu0 %v1434
        %2162 = vmatprep.subr.bf16.mxu0 0
        %2163 = vmatpush1.bf16.msra.mxu0 %v1435
        %2164 = vmatprep.subr.bf16.mxu0 0
        %2165 = vmatpush1.bf16.msra.mxu0 %v1436
        %2166 = vmatprep.subr.bf16.mxu0 0
        %2167 = vmatpush1.bf16.msra.mxu0 %v1437
        %2168 = vmatprep.subr.bf16.mxu0 0
        %2169 = vmatpush1.bf16.msra.mxu0 %v1438
        %2170 = vmatprep.subr.bf16.mxu0 0
        %2171 = vmatpush1.bf16.msra.mxu0 %v1439
        %2172 = vmatprep.subr.bf16.mxu0 0
        %2173 = vmatpush1.bf16.msra.mxu0 0
        %2174 = vmatprep.subr.bf16.mxu0 0
        %2175 = vmatpush1.bf16.msra.mxu0 0
        %2176 = vmatprep.subr.bf16.mxu0 0
        %2177 = vmatpush1.bf16.msra.mxu0 0
        %2178 = vmatprep.subr.bf16.mxu0 0
        %2179 = vmatpush1.bf16.msra.mxu0 0
        %2180 = vmatprep.subr.bf16.mxu0 0
        %2181 = vmatpush1.bf16.msra.mxu0 0
        %2182 = vmatprep.subr.bf16.mxu0 0
        %2183 = vmatpush1.bf16.msra.mxu0 0
        %2184 = vmatprep.subr.bf16.mxu0 0
        %2185 = vmatpush1.bf16.msra.mxu0 0
        %2186 = vmatprep.subr.bf16.mxu0 0
        %2187 = vmatpush1.bf16.msra.mxu0 0
        %2188 = vmatprep.mubr.bf16.mxu0 0
        %2189 = vmatmul.mubr.bf16.gmra.mrb[0].mxu0 %v920
        %v2190 = vpop.f32.mrb[0].mxu0
        %v2191 = vadd.f32 %v2030, %v2190
        %v2192 = vpop.f32.mrb[0].mxu0
        %v2193 = vpop.f32.mrb[0].mxu0
        %v2194 = vadd.f32 %v2033, %v2193
        %v2195 = vpop.f32.mrb[0].mxu0
        %2196 = vmatprep.mubr.bf16.mxu0 0
        %2197 = vmatmul.mubr.bf16.gmra.mrb[0].mxu0 %v921
        %v2198 = vpop.f32.mrb[0].mxu0
        %v2199 = vadd.f32 %v2038, %v2198
        %v2200 = vpop.f32.mrb[0].mxu0
        %v2201 = vpop.f32.mrb[0].mxu0
        %v2202 = vadd.f32 %v2041, %v2201
        %v2203 = vpop.f32.mrb[0].mxu0
        %2204 = vmatprep.mubr.bf16.mxu0 0
        %2205 = vmatmul.mubr.bf16.gmra.mrb[0].mxu0 %v922
        %v2206 = vpop.f32.mrb[0].mxu0
        %v2207 = vadd.f32 %v2046, %v2206
        %v2208 = vpop.f32.mrb[0].mxu0
        %v2209 = vpop.f32.mrb[0].mxu0
        %v2210 = vadd.f32 %v2049, %v2209
        %v2211 = vpop.f32.mrb[0].mxu0
        %2212 = vmatprep.mubr.bf16.mxu0 0
        %2213 = vmatmul.mubr.bf16.gmra.mrb[0].mxu0 %v923
        %v2214 = vpop.f32.mrb[0].mxu0
        %v2215 = vadd.f32 %v2054, %v2214
        %v2216 = vpop.f32.mrb[0].mxu0
        %v2217 = vpop.f32.mrb[0].mxu0
        %v2218 = vadd.f32 %v2057, %v2217
        %v2219 = vpop.f32.mrb[0].mxu0
        %2220 = vmatprep.mubr.bf16.mxu0 0
        %2221 = vmatmul.mubr.bf16.gmra.mrb[0].mxu0 %v924
        %v2222 = vpop.f32.mrb[0].mxu0
        %v2223 = vadd.f32 %v2062, %v2222
        %v2224 = vpop.f32.mrb[0].mxu0
        %v2225 = vpop.f32.mrb[0].mxu0
        %v2226 = vadd.f32 %v2065, %v2225
        %v2227 = vpop.f32.mrb[0].mxu0
        %2228 = vmatprep.mubr.bf16.mxu0 0
        %2229 = vmatmul.mubr.bf16.gmra.mrb[0].mxu0 %v925
        %v2230 = vpop.f32.mrb[0].mxu0
        %v2231 = vadd.f32 %v2070, %v2230
        %v2232 = vpop.f32.mrb[0].mxu0
        %v2233 = vpop.f32.mrb[0].mxu0
        %v2234 = vadd.f32 %v2073, %v2233
        %v2235 = vpop.f32.mrb[0].mxu0
        %2236 = vmatprep.mubr.bf16.mxu0 0
        %2237 = vmatmul.mubr.bf16.gmra.mrb[0].mxu0 %v926
        %v2238 = vpop.f32.mrb[0].mxu0
        %v2239 = vadd.f32 %v2078, %v2238
        %v2240 = vpop.f32.mrb[0].mxu0
        %v2241 = vpop.f32.mrb[0].mxu0
        %v2242 = vadd.f32 %v2081, %v2241
        %v2243 = vpop.f32.mrb[0].mxu0
        %2244 = vmatprep.mubr.bf16.mxu0 0
        %2245 = vmatmul.mubr.bf16.gmra.mrb[0].mxu0 %v927
        %v2246 = vpop.f32.mrb[0].mxu0
        %v2247 = vadd.f32 %v2086, %v2246
        %v2248 = vpop.f32.mrb[0].mxu0
        %v2249 = vpop.f32.mrb[0].mxu0
        %v2250 = vadd.f32 %v2089, %v2249
        %v2251 = vpop.f32.mrb[0].mxu0
        %2252 = vmatprep.mubr.bf16.mxu0 0
        %2253 = vmatmul.mubr.bf16.gmra.mrb[0].mxu0 %v928
        %v2254 = vpop.f32.mrb[0].mxu0
        %v2255 = vadd.f32 %v2094, %v2254
        %v2256 = vpop.f32.mrb[0].mxu0
        %v2257 = vpop.f32.mrb[0].mxu0
        %v2258 = vadd.f32 %v2097, %v2257
        %v2259 = vpop.f32.mrb[0].mxu0
        %2260 = vmatprep.mubr.bf16.mxu0 0
        %2261 = vmatmul.mubr.bf16.gmra.mrb[0].mxu0 %v929
        %v2262 = vpop.f32.mrb[0].mxu0
        %v2263 = vadd.f32 %v2102, %v2262
        %v2264 = vpop.f32.mrb[0].mxu0
        %v2265 = vpop.f32.mrb[0].mxu0
        %v2266 = vadd.f32 %v2105, %v2265
        %v2267 = vpop.f32.mrb[0].mxu0
        %2268 = vmatprep.mubr.bf16.mxu0 0
        %2269 = vmatmul.mubr.bf16.gmra.mrb[0].mxu0 %v930
        %v2270 = vpop.f32.mrb[0].mxu0
        %v2271 = vadd.f32 %v2110, %v2270
        %v2272 = vpop.f32.mrb[0].mxu0
        %v2273 = vpop.f32.mrb[0].mxu0
        %v2274 = vadd.f32 %v2113, %v2273
        %v2275 = vpop.f32.mrb[0].mxu0
        %2276 = vmatprep.mubr.bf16.mxu0 0
        %2277 = vmatmul.mubr.bf16.gmra.mrb[0].mxu0 %v931
        %v2278 = vpop.f32.mrb[0].mxu0
        %v2279 = vadd.f32 %v2118, %v2278
        %v2280 = vpop.f32.mrb[0].mxu0
        %v2281 = vpop.f32.mrb[0].mxu0
        %v2282 = vadd.f32 %v2121, %v2281
        %v2283 = vpop.f32.mrb[0].mxu0
        %2284 = vmatprep.mubr.bf16.mxu0 0
        %2285 = vmatmul.mubr.bf16.gmra.mrb[0].mxu0 %v932
        %v2286 = vpop.f32.mrb[0].mxu0
        %v2287 = vadd.f32 %v2126, %v2286
        %v2288 = vpop.f32.mrb[0].mxu0
        %v2289 = vpop.f32.mrb[0].mxu0
        %v2290 = vadd.f32 %v2129, %v2289
        %v2291 = vpop.f32.mrb[0].mxu0
        %2292 = vmatprep.mubr.bf16.mxu0 0
        %2293 = vmatmul.mubr.bf16.gmra.mrb[0].mxu0 %v933
        %v2294 = vpop.f32.mrb[0].mxu0
        %v2295 = vadd.f32 %v2134, %v2294
        %v2296 = vpop.f32.mrb[0].mxu0
        %v2297 = vpop.f32.mrb[0].mxu0
        %v2298 = vadd.f32 %v2137, %v2297
        %v2299 = vpop.f32.mrb[0].mxu0
        %2300 = vmatprep.mubr.bf16.mxu0 0
        %2301 = vmatmul.mubr.bf16.gmra.mrb[0].mxu0 %v934
        %v2302 = vpop.f32.mrb[0].mxu0
        %v2303 = vadd.f32 %v2142, %v2302
        %v2304 = vpop.f32.mrb[0].mxu0
        %v2305 = vpop.f32.mrb[0].mxu0
        %v2306 = vadd.f32 %v2145, %v2305
        %v2307 = vpop.f32.mrb[0].mxu0
        %2308 = vmatprep.mubr.bf16.mxu0 0
        %2309 = vmatmul.mubr.bf16.gmra.mrb[0].mxu0 %v935
        %v2310 = vpop.f32.mrb[0].mxu0
        %v2311 = vadd.f32 %v2150, %v2310
        %v2312 = vpop.f32.mrb[0].mxu0
        %v2313 = vpop.f32.mrb[0].mxu0
        %v2314 = vadd.f32 %v2153, %v2313
        %v2315 = vpop.f32.mrb[0].mxu0
        %2316 = vdwg.mxu0
        %v2317 = vadd.f32 %v2191, %v2194
        %v2318 = vadd.f32 %v2317, %v2199
        %v2319 = vadd.f32 %v2318, %v2202
        %v2320 = vadd.f32 %v2319, %v2207
        %v2321 = vadd.f32 %v2320, %v2210
        %v2322 = vadd.f32 %v2321, %v2215
        %v2323 = vadd.f32 %v2322, %v2218
        %v2324 = vadd.f32 %v2323, %v2223
        %v2325 = vadd.f32 %v2324, %v2226
        %v2326 = vadd.f32 %v2325, %v2231
        %v2327 = vadd.f32 %v2326, %v2234
        %v2328 = vadd.f32 %v2327, %v2239
        %v2329 = vadd.f32 %v2328, %v2242
        %v2330 = vadd.f32 %v2329, %v2247
        %v2331 = vadd.f32 %v2330, %v2250
        %v2332 = vadd.f32 %v2331, %v2255
        %v2333 = vadd.f32 %v2332, %v2258
        %v2334 = vadd.f32 %v2333, %v2263
        %v2335 = vadd.f32 %v2334, %v2266
        %v2336 = vadd.f32 %v2335, %v2271
        %v2337 = vadd.f32 %v2336, %v2274
        %v2338 = vadd.f32 %v2337, %v2279
        %v2339 = vadd.f32 %v2338, %v2282
        %v2340 = vadd.f32 %v2339, %v2287
        %v2341 = vadd.f32 %v2340, %v2290
        %v2342 = vadd.f32 %v2341, %v2295
        %v2343 = vadd.f32 %v2342, %v2298
        %v2344 = vadd.f32 %v2343, %v2303
        %v2345 = vadd.f32 %v2344, %v2306
        %v2346 = vadd.f32 %v2345, %v2311
        %v2347 = vadd.f32 %v2346, %v2314
        %v2348 = vrot.slane %v2347, 4
        %v2349 = vadd.f32 %v2347, %v2348
        %v2350 = vrot.slane %v2349, 2
        %v2351 = vadd.f32 %v2349, %v2350
        %v2352 = vrot.slane %v2351, 1
        %v2353 = vadd.f32 %v2351, %v2352
        %v2354 = vrcp.pop 256.0
        %v2355 = vmul.f32 %v2353, %v2354
        %v2356 = vsub.f32 %v2191, %v2355
        %v2357 = vsub.f32 %v2194, %v2355
        %v2358 = vsub.f32 %v2199, %v2355
        %v2359 = vsub.f32 %v2202, %v2355
        %v2360 = vsub.f32 %v2207, %v2355
        %v2361 = vsub.f32 %v2210, %v2355
        %v2362 = vsub.f32 %v2215, %v2355
        %v2363 = vsub.f32 %v2218, %v2355
        %v2364 = vsub.f32 %v2223, %v2355
        %v2365 = vsub.f32 %v2226, %v2355
        %v2366 = vsub.f32 %v2231, %v2355
        %v2367 = vsub.f32 %v2234, %v2355
        %v2368 = vsub.f32 %v2239, %v2355
        %v2369 = vsub.f32 %v2242, %v2355
        %v2370 = vsub.f32 %v2247, %v2355
        %v2371 = vsub.f32 %v2250, %v2355
        %v2372 = vsub.f32 %v2255, %v2355
        %v2373 = vsub.f32 %v2258, %v2355
        %v2374 = vsub.f32 %v2263, %v2355
        %v2375 = vsub.f32 %v2266, %v2355
        %v2376 = vsub.f32 %v2271, %v2355
        %v2377 = vsub.f32 %v2274, %v2355
        %v2378 = vsub.f32 %v2279, %v2355
        %v2379 = vsub.f32 %v2282, %v2355
        %v2380 = vsub.f32 %v2287, %v2355
        %v2381 = vsub.f32 %v2290, %v2355
        %v2382 = vsub.f32 %v2295, %v2355
        %v2383 = vsub.f32 %v2298, %v2355
        %v2384 = vsub.f32 %v2303, %v2355
        %v2385 = vsub.f32 %v2306, %v2355
        %v2386 = vsub.f32 %v2311, %v2355
        %v2387 = vsub.f32 %v2314, %v2355
        %v2388 = vmul.f32 %v2356, %v2356
        %v2389 = vmul.f32 %v2357, %v2357
        %v2390 = vmul.f32 %v2358, %v2358
        %v2391 = vmul.f32 %v2359, %v2359
        %v2392 = vmul.f32 %v2360, %v2360
        %v2393 = vmul.f32 %v2361, %v2361
        %v2394 = vmul.f32 %v2362, %v2362
        %v2395 = vmul.f32 %v2363, %v2363
        %v2396 = vmul.f32 %v2364, %v2364
        %v2397 = vmul.f32 %v2365, %v2365
        %v2398 = vmul.f32 %v2366, %v2366
        %v2399 = vmul.f32 %v2367, %v2367
        %v2400 = vmul.f32 %v2368, %v2368
        %v2401 = vmul.f32 %v2369, %v2369
        %v2402 = vmul.f32 %v2370, %v2370
        %v2403 = vmul.f32 %v2371, %v2371
        %v2404 = vmul.f32 %v2372, %v2372
        %v2405 = vmul.f32 %v2373, %v2373
        %v2406 = vmul.f32 %v2374, %v2374
        %v2407 = vmul.f32 %v2375, %v2375
        %v2408 = vmul.f32 %v2376, %v2376
        %v2409 = vmul.f32 %v2377, %v2377
        %v2410 = vmul.f32 %v2378, %v2378
        %v2411 = vmul.f32 %v2379, %v2379
        %v2412 = vmul.f32 %v2380, %v2380
        %v2413 = vmul.f32 %v2381, %v2381
        %v2414 = vmul.f32 %v2382, %v2382
        %v2415 = vmul.f32 %v2383, %v2383
        %v2416 = vmul.f32 %v2384, %v2384
        %v2417 = vmul.f32 %v2385, %v2385
        %v2418 = vmul.f32 %v2386, %v2386
        %v2419 = vmul.f32 %v2387, %v2387
        %v2420 = vadd.f32 %v2388, %v2389
        %v2421 = vadd.f32 %v2420, %v2390
        %v2422 = vadd.f32 %v2421, %v2391
        %v2423 = vadd.f32 %v2422, %v2392
        %v2424 = vadd.f32 %v2423, %v2393
        %v2425 = vadd.f32 %v2424, %v2394
        %v2426 = vadd.f32 %v2425, %v2395
        %v2427 = vadd.f32 %v2426, %v2396
        %v2428 = vadd.f32 %v2427, %v2397
        %v2429 = vadd.f32 %v2428, %v2398
        %v2430 = vadd.f32 %v2429, %v2399
        %v2431 = vadd.f32 %v2430, %v2400
        %v2432 = vadd.f32 %v2431, %v2401
        %v2433 = vadd.f32 %v2432, %v2402
        %v2434 = vadd.f32 %v2433, %v2403
        %v2435 = vadd.f32 %v2434, %v2404
        %v2436 = vadd.f32 %v2435, %v2405
        %v2437 = vadd.f32 %v2436, %v2406
        %v2438 = vadd.f32 %v2437, %v2407
        %v2439 = vadd.f32 %v2438, %v2408
        %v2440 = vadd.f32 %v2439, %v2409
        %v2441 = vadd.f32 %v2440, %v2410
        %v2442 = vadd.f32 %v2441, %v2411
        %v2443 = vadd.f32 %v2442, %v2412
        %v2444 = vadd.f32 %v2443, %v2413
        %v2445 = vadd.f32 %v2444, %v2414
        %v2446 = vadd.f32 %v2445, %v2415
        %v2447 = vadd.f32 %v2446, %v2416
        %v2448 = vadd.f32 %v2447, %v2417
        %v2449 = vadd.f32 %v2448, %v2418
        %v2450 = vadd.f32 %v2449, %v2419
        %v2451 = vrot.slane %v2450, 4
        %v2452 = vadd.f32 %v2450, %v2451
        %v2453 = vrot.slane %v2452, 2
        %v2454 = vadd.f32 %v2452, %v2453
        %v2455 = vrot.slane %v2454, 1
        %v2456 = vadd.f32 %v2454, %v2455
        %v2457 = vmul.f32 %v2456, %v2354
        %v2458 = vadd.f32 %v2457, 1e-05
        %v2459 = vrsqrt.pop %v2458
        %v2460 = vmul.f32 %v2356, %v2459
        %v2461 = vmul.f32 %v2357, %v2459
        %v2462 = vmul.f32 %v2358, %v2459
        %v2463 = vmul.f32 %v2359, %v2459
        %v2464 = vmul.f32 %v2360, %v2459
        %v2465 = vmul.f32 %v2361, %v2459
        %v2466 = vmul.f32 %v2362, %v2459
        %v2467 = vmul.f32 %v2363, %v2459
        %v2468 = vmul.f32 %v2364, %v2459
        %v2469 = vmul.f32 %v2365, %v2459
        %v2470 = vmul.f32 %v2366, %v2459
        %v2471 = vmul.f32 %v2367, %v2459
        %v2472 = vmul.f32 %v2368, %v2459
        %v2473 = vmul.f32 %v2369, %v2459
        %v2474 = vmul.f32 %v2370, %v2459
        %v2475 = vmul.f32 %v2371, %v2459
        %v2476 = vmul.f32 %v2372, %v2459
        %v2477 = vmul.f32 %v2373, %v2459
        %v2478 = vmul.f32 %v2374, %v2459
        %v2479 = vmul.f32 %v2375, %v2459
        %v2480 = vmul.f32 %v2376, %v2459
        %v2481 = vmul.f32 %v2377, %v2459
        %v2482 = vmul.f32 %v2378, %v2459
        %v2483 = vmul.f32 %v2379, %v2459
        %v2484 = vmul.f32 %v2380, %v2459
        %v2485 = vmul.f32 %v2381, %v2459
        %v2486 = vmul.f32 %v2382, %v2459
        %v2487 = vmul.f32 %v2383, %v2459
        %v2488 = vmul.f32 %v2384, %v2459
        %v2489 = vmul.f32 %v2385, %v2459
        %v2490 = vmul.f32 %v2386, %v2459
        %v2491 = vmul.f32 %v2387, %v2459
        %v2492 = vmax.f32 %v2460, 0.0
        %v2493 = vmax.f32 %v2461, 0.0
        %v2494 = vmax.f32 %v2462, 0.0
        %v2495 = vmax.f32 %v2463, 0.0
        %v2496 = vmax.f32 %v2464, 0.0
        %v2497 = vmax.f32 %v2465, 0.0
        %v2498 = vmax.f32 %v2466, 0.0
        %v2499 = vmax.f32 %v2467, 0.0
        %v2500 = vmax.f32 %v2468, 0.0
        %v2501 = vmax.f32 %v2469, 0.0
        %v2502 = vmax.f32 %v2470, 0.0
        %v2503 = vmax.f32 %v2471, 0.0
        %v2504 = vmax.f32 %v2472, 0.0
        %v2505 = vmax.f32 %v2473, 0.0
        %v2506 = vmax.f32 %v2474, 0.0
        %v2507 = vmax.f32 %v2475, 0.0
        %v2508 = vmax.f32 %v2476, 0.0
        %v2509 = vmax.f32 %v2477, 0.0
        %v2510 = vmax.f32 %v2478, 0.0
        %v2511 = vmax.f32 %v2479, 0.0
        %v2512 = vmax.f32 %v2480, 0.0
        %v2513 = vmax.f32 %v2481, 0.0
        %v2514 = vmax.f32 %v2482, 0.0
        %v2515 = vmax.f32 %v2483, 0.0
        %v2516 = vmax.f32 %v2484, 0.0
        %v2517 = vmax.f32 %v2485, 0.0
        %v2518 = vmax.f32 %v2486, 0.0
        %v2519 = vmax.f32 %v2487, 0.0
        %v2520 = vmax.f32 %v2488, 0.0
        %v2521 = vmax.f32 %v2489, 0.0
        %v2522 = vmax.f32 %v2490, 0.0
        %v2523 = vmax.f32 %v2491, 0.0
        %2524 = vst [vmem:[#allocation2 + $0x20] sm:$0xff] %v2492
        %2525 = vst [vmem:[#allocation2 + $0x28] sm:$0xff] %v2493
        %2526 = vst [vmem:[#allocation2 + $0x30] sm:$0xff] %v2494
        %2527 = vst [vmem:[#allocation2 + $0x38] sm:$0xff] %v2495
        %2528 = vst [vmem:[#allocation2 + $0x40] sm:$0xff] %v2496
        %2529 = vst [vmem:[#allocation2 + $0x48] sm:$0xff] %v2497
        %2530 = vst [vmem:[#allocation2 + $0x50] sm:$0xff] %v2498
        %2531 = vst [vmem:[#allocation2 + $0x58] sm:$0xff] %v2499
        %2532 = vst [vmem:[#allocation2 + $0x60] sm:$0xff] %v2500
        %2533 = vst [vmem:[#allocation2 + $0x68] sm:$0xff] %v2501
        %2534 = vst [vmem:[#allocation2 + $0x70] sm:$0xff] %v2502
        %2535 = vst [vmem:[#allocation2 + $0x78] sm:$0xff] %v2503
        %2536 = vst [vmem:[#allocation2 + $0x80] sm:$0xff] %v2504
        %2537 = vst [vmem:[#allocation2 + $0x88] sm:$0xff] %v2505
        %2538 = vst [vmem:[#allocation2 + $0x90] sm:$0xff] %v2506
        %2539 = vst [vmem:[#allocation2 + $0x98] sm:$0xff] %v2507
        %2540 = vst [vmem:[#allocation2 + $0xa0] sm:$0xff] %v2508
        %2541 = vst [vmem:[#allocation2 + $0xa8] sm:$0xff] %v2509
        %2542 = vst [vmem:[#allocation2 + $0xb0] sm:$0xff] %v2510
        %2543 = vst [vmem:[#allocation2 + $0xb8] sm:$0xff] %v2511
        %2544 = vst [vmem:[#allocation2 + $0xc0] sm:$0xff] %v2512
        %2545 = vst [vmem:[#allocation2 + $0xc8] sm:$0xff] %v2513
        %2546 = vst [vmem:[#allocation2 + $0xd0] sm:$0xff] %v2514
        %2547 = vst [vmem:[#allocation2 + $0xd8] sm:$0xff] %v2515
        %2548 = vst [vmem:[#allocation2 + $0xe0] sm:$0xff] %v2516
        %2549 = vst [vmem:[#allocation2 + $0xe8] sm:$0xff] %v2517
        %2550 = vst [vmem:[#allocation2 + $0xf0] sm:$0xff] %v2518
        %2551 = vst [vmem:[#allocation2 + $0xf8] sm:$0xff] %v2519
        %2552 = vst [vmem:[#allocation2 + $0x100] sm:$0xff] %v2520
        %2553 = vst [vmem:[#allocation2 + $0x108] sm:$0xff] %v2521
        %2554 = vst [vmem:[#allocation2 + $0x110] sm:$0xff] %v2522
        %2555 = vst [vmem:[#allocation2 + $0x118] sm:$0xff] %v2523
        %v2556 = vld [vmem:[#allocation2 + $0xf] sm:$0xff]
        %v2557 = vld [vmem:[#allocation2 + $0x17] sm:$0xff]
        %v2558 = vld [vmem:[#allocation2 + $0x1f] sm:$0xff]
        %v2559 = vld [vmem:[#allocation2 + $0x27] sm:$0xff]
        %v2560 = vld [vmem:[#allocation2 + $0x2f] sm:$0xff]
        %v2561 = vld [vmem:[#allocation2 + $0x37] sm:$0xff]
        %v2562 = vld [vmem:[#allocation2 + $0x3f] sm:$0xff]
        %v2563 = vld [vmem:[#allocation2 + $0x47] sm:$0xff]
        %v2564 = vld [vmem:[#allocation2 + $0x4f] sm:$0xff]
        %v2565 = vld [vmem:[#allocation2 + $0x57] sm:$0xff]
        %v2566 = vld [vmem:[#allocation2 + $0x5f] sm:$0xff]
        %v2567 = vld [vmem:[#allocation2 + $0x67] sm:$0xff]
        %v2568 = vld [vmem:[#allocation2 + $0x6f] sm:$0xff]
        %v2569 = vld [vmem:[#allocation2 + $0x77] sm:$0xff]
        %v2570 = vld [vmem:[#allocation2 + $0x7f] sm:$0xff]
        %v2571 = vld [vmem:[#allocation2 + $0x87] sm:$0xff]
        %v2572 = vld [vmem:[#allocation2 + $0x8f] sm:$0xff]
        %v2573 = vld [vmem:[#allocation2 + $0x97] sm:$0xff]
        %v2574 = vld [vmem:[#allocation2 + $0x9f] sm:$0xff]
        %v2575 = vld [vmem:[#allocation2 + $0xa7] sm:$0xff]
        %v2576 = vld [vmem:[#allocation2 + $0xaf] sm:$0xff]
        %v2577 = vld [vmem:[#allocation2 + $0xb7] sm:$0xff]
        %v2578 = vld [vmem:[#allocation2 + $0xbf] sm:$0xff]
        %v2579 = vld [vmem:[#allocation2 + $0xc7] sm:$0xff]
        %v2580 = vld [vmem:[#allocation2 + $0xcf] sm:$0xff]
        %v2581 = vld [vmem:[#allocation2 + $0xd7] sm:$0xff]
        %v2582 = vld [vmem:[#allocation2 + $0xdf] sm:$0xff]
        %v2583 = vld [vmem:[#allocation2 + $0xe7] sm:$0xff]
        %v2584 = vld [vmem:[#allocation2 + $0xef] sm:$0xff]
        %v2585 = vld [vmem:[#allocation2 + $0xf7] sm:$0xff]
        %v2586 = vld [vmem:[#allocation2 + $0xff] sm:$0xff]
        %v2587 = vld [vmem:[#allocation2 + $0x107] sm:$0xff]
        %v2588 = vpack.c.bf16 %v2557, %v2556
        %v2589 = vpack.c.bf16 %v2559, %v2558
        %v2590 = vpack.c.bf16 %v2561, %v2560
        %v2591 = vpack.c.bf16 %v2563, %v2562
        %v2592 = vpack.c.bf16 %v2565, %v2564
        %v2593 = vpack.c.bf16 %v2567, %v2566
        %v2594 = vpack.c.bf16 %v2569, %v2568
        %v2595 = vpack.c.bf16 %v2571, %v2570
        %v2596 = vpack.c.bf16 %v2573, %v2572
        %v2597 = vpack.c.bf16 %v2575, %v2574
        %v2598 = vpack.c.bf16 %v2577, %v2576
        %v2599 = vpack.c.bf16 %v2579, %v2578
        %v2600 = vpack.c.bf16 %v2581, %v2580
        %v2601 = vpack.c.bf16 %v2583, %v2582
        %v2602 = vpack.c.bf16 %v2585, %v2584
        %v2603 = vpack.c.bf16 %v2587, %v2586
        %v2604 = vsel %vm582, %v2588, 0
        %v2605 = vsel %vm583, %v2589, 0
        %v2606 = vsel %vm584, %v2590, 0
        %v2607 = vsel %vm585, %v2591, 0
        %v2608 = vsel %vm586, %v2592, 0
        %v2609 = vsel %vm587, %v2593, 0
        %v2610 = vsel %vm588, %v2594, 0
        %v2611 = vsel %vm589, %v2595, 0
        %v2612 = vsel %vm590, %v2596, 0
        %v2613 = vsel %vm591, %v2597, 0
        %v2614 = vsel %vm592, %v2598, 0
        %v2615 = vsel %vm593, %v2599, 0
        %v2616 = vsel %vm594, %v2600, 0
        %v2617 = vsel %vm595, %v2601, 0
        %v2618 = vsel %vm596, %v2602, 0
        %v2619 = vsel %vm597, %v2603, 0
        %v2620 = vld [vmem:[#allocation2 + $0x10] sm:$0xff]
        %v2621 = vld [vmem:[#allocation2 + $0x18] sm:$0xff]
        %v2622 = vld [vmem:[#allocation2 + $0x20] sm:$0xff]
        %v2623 = vld [vmem:[#allocation2 + $0x28] sm:$0xff]
        %v2624 = vld [vmem:[#allocation2 + $0x30] sm:$0xff]
        %v2625 = vld [vmem:[#allocation2 + $0x38] sm:$0xff]
        %v2626 = vld [vmem:[#allocation2 + $0x40] sm:$0xff]
        %v2627 = vld [vmem:[#allocation2 + $0x48] sm:$0xff]
        %v2628 = vld [vmem:[#allocation2 + $0x50] sm:$0xff]
        %v2629 = vld [vmem:[#allocation2 + $0x58] sm:$0xff]
        %v2630 = vld [vmem:[#allocation2 + $0x60] sm:$0xff]
        %v2631 = vld [vmem:[#allocation2 + $0x68] sm:$0xff]
        %v2632 = vld [vmem:[#allocation2 + $0x70] sm:$0xff]
        %v2633 = vld [vmem:[#allocation2 + $0x78] sm:$0xff]
        %v2634 = vld [vmem:[#allocation2 + $0x80] sm:$0xff]
        %v2635 = vld [vmem:[#allocation2 + $0x88] sm:$0xff]
        %v2636 = vld [vmem:[#allocation2 + $0x90] sm:$0xff]
        %v2637 = vld [vmem:[#allocation2 + $0x98] sm:$0xff]
        %v2638 = vld [vmem:[#allocation2 + $0xa0] sm:$0xff]
        %v2639 = vld [vmem:[#allocation2 + $0xa8] sm:$0xff]
        %v2640 = vld [vmem:[#allocation2 + $0xb0] sm:$0xff]
        %v2641 = vld [vmem:[#allocation2 + $0xb8] sm:$0xff]
        %v2642 = vld [vmem:[#allocation2 + $0xc0] sm:$0xff]
        %v2643 = vld [vmem:[#allocation2 + $0xc8] sm:$0xff]
        %v2644 = vld [vmem:[#allocation2 + $0xd0] sm:$0xff]
        %v2645 = vld [vmem:[#allocation2 + $0xd8] sm:$0xff]
        %v2646 = vld [vmem:[#allocation2 + $0xe0] sm:$0xff]
        %v2647 = vld [vmem:[#allocation2 + $0xe8] sm:$0xff]
        %v2648 = vld [vmem:[#allocation2 + $0xf0] sm:$0xff]
        %v2649 = vld [vmem:[#allocation2 + $0xf8] sm:$0xff]
        %v2650 = vld [vmem:[#allocation2 + $0x100] sm:$0xff]
        %v2651 = vld [vmem:[#allocation2 + $0x108] sm:$0xff]
        %v2652 = vpack.c.bf16 %v2621, %v2620
        %v2653 = vpack.c.bf16 %v2623, %v2622
        %v2654 = vpack.c.bf16 %v2625, %v2624
        %v2655 = vpack.c.bf16 %v2627, %v2626
        %v2656 = vpack.c.bf16 %v2629, %v2628
        %v2657 = vpack.c.bf16 %v2631, %v2630
        %v2658 = vpack.c.bf16 %v2633, %v2632
        %v2659 = vpack.c.bf16 %v2635, %v2634
        %v2660 = vpack.c.bf16 %v2637, %v2636
        %v2661 = vpack.c.bf16 %v2639, %v2638
        %v2662 = vpack.c.bf16 %v2641, %v2640
        %v2663 = vpack.c.bf16 %v2643, %v2642
        %v2664 = vpack.c.bf16 %v2645, %v2644
        %v2665 = vpack.c.bf16 %v2647, %v2646
        %v2666 = vpack.c.bf16 %v2649, %v2648
        %v2667 = vpack.c.bf16 %v2651, %v2650
        %v2668 = vld [vmem:[#allocation2 + $0x11] sm:$0xff]
        %v2669 = vld [vmem:[#allocation2 + $0x19] sm:$0xff]
        %v2670 = vld [vmem:[#allocation2 + $0x21] sm:$0xff]
        %v2671 = vld [vmem:[#allocation2 + $0x29] sm:$0xff]
        %v2672 = vld [vmem:[#allocation2 + $0x31] sm:$0xff]
        %v2673 = vld [vmem:[#allocation2 + $0x39] sm:$0xff]
        %v2674 = vld [vmem:[#allocation2 + $0x41] sm:$0xff]
        %v2675 = vld [vmem:[#allocation2 + $0x49] sm:$0xff]
        %v2676 = vld [vmem:[#allocation2 + $0x51] sm:$0xff]
        %v2677 = vld [vmem:[#allocation2 + $0x59] sm:$0xff]
        %v2678 = vld [vmem:[#allocation2 + $0x61] sm:$0xff]
        %v2679 = vld [vmem:[#allocation2 + $0x69] sm:$0xff]
        %v2680 = vld [vmem:[#allocation2 + $0x71] sm:$0xff]
        %v2681 = vld [vmem:[#allocation2 + $0x79] sm:$0xff]
        %v2682 = vld [vmem:[#allocation2 + $0x81] sm:$0xff]
        %v2683 = vld [vmem:[#allocation2 + $0x89] sm:$0xff]
        %v2684 = vld [vmem:[#allocation2 + $0x91] sm:$0xff]
        %v2685 = vld [vmem:[#allocation2 + $0x99] sm:$0xff]
        %v2686 = vld [vmem:[#allocation2 + $0xa1] sm:$0xff]
        %v2687 = vld [vmem:[#allocation2 + $0xa9] sm:$0xff]
        %v2688 = vld [vmem:[#allocation2 + $0xb1] sm:$0xff]
        %v2689 = vld [vmem:[#allocation2 + $0xb9] sm:$0xff]
        %v2690 = vld [vmem:[#allocation2 + $0xc1] sm:$0xff]
        %v2691 = vld [vmem:[#allocation2 + $0xc9] sm:$0xff]
        %v2692 = vld [vmem:[#allocation2 + $0xd1] sm:$0xff]
        %v2693 = vld [vmem:[#allocation2 + $0xd9] sm:$0xff]
        %v2694 = vld [vmem:[#allocation2 + $0xe1] sm:$0xff]
        %v2695 = vld [vmem:[#allocation2 + $0xe9] sm:$0xff]
        %v2696 = vld [vmem:[#allocation2 + $0xf1] sm:$0xff]
        %v2697 = vld [vmem:[#allocation2 + $0xf9] sm:$0xff]
        %v2698 = vld [vmem:[#allocation2 + $0x101] sm:$0xff]
        %v2699 = vld [vmem:[#allocation2 + $0x109] sm:$0xff]
        %v2700 = vpack.c.bf16 %v2669, %v2668
        %v2701 = vpack.c.bf16 %v2671, %v2670
        %v2702 = vpack.c.bf16 %v2673, %v2672
        %v2703 = vpack.c.bf16 %v2675, %v2674
        %v2704 = vpack.c.bf16 %v2677, %v2676
        %v2705 = vpack.c.bf16 %v2679, %v2678
        %v2706 = vpack.c.bf16 %v2681, %v2680
        %v2707 = vpack.c.bf16 %v2683, %v2682
        %v2708 = vpack.c.bf16 %v2685, %v2684
        %v2709 = vpack.c.bf16 %v2687, %v2686
        %v2710 = vpack.c.bf16 %v2689, %v2688
        %v2711 = vpack.c.bf16 %v2691, %v2690
        %v2712 = vpack.c.bf16 %v2693, %v2692
        %v2713 = vpack.c.bf16 %v2695, %v2694
        %v2714 = vpack.c.bf16 %v2697, %v2696
        %v2715 = vpack.c.bf16 %v2699, %v2698
        %v2716 = vsel %vm822, %v2700, 0
        %v2717 = vsel %vm823, %v2701, 0
        %v2718 = vsel %vm824, %v2702, 0
        %v2719 = vsel %vm825, %v2703, 0
        %v2720 = vsel %vm826, %v2704, 0
        %v2721 = vsel %vm827, %v2705, 0
        %v2722 = vsel %vm828, %v2706, 0
        %v2723 = vsel %vm829, %v2707, 0
        %v2724 = vsel %vm830, %v2708, 0
        %v2725 = vsel %vm831, %v2709, 0
        %v2726 = vsel %vm832, %v2710, 0
        %v2727 = vsel %vm833, %v2711, 0
        %v2728 = vsel %vm834, %v2712, 0
        %v2729 = vsel %vm835, %v2713, 0
        %v2730 = vsel %vm836, %v2714, 0
        %v2731 = vsel %vm837, %v2715, 0
        %v2732 = vld [vmem:[#allocation2 + $0x10f] sm:$0xff]
        %v2733 = vld [vmem:[#allocation2 + $0x117] sm:$0xff]
        %v2734 = vpack.c.bf16 %v2733, %v2732
        %v2735 = vsel %vm582, %v2589, 0
        %v2736 = vsel %vm583, %v2590, 0
        %v2737 = vsel %vm584, %v2591, 0
        %v2738 = vsel %vm585, %v2592, 0
        %v2739 = vsel %vm586, %v2593, 0
        %v2740 = vsel %vm587, %v2594, 0
        %v2741 = vsel %vm588, %v2595, 0
        %v2742 = vsel %vm589, %v2596, 0
        %v2743 = vsel %vm590, %v2597, 0
        %v2744 = vsel %vm591, %v2598, 0
        %v2745 = vsel %vm592, %v2599, 0
        %v2746 = vsel %vm593, %v2600, 0
        %v2747 = vsel %vm594, %v2601, 0
        %v2748 = vsel %vm595, %v2602, 0
        %v2749 = vsel %vm596, %v2603, 0
        %v2750 = vsel %vm597, %v2734, 0
        %v2751 = vld [vmem:[#allocation2 + $0x110] sm:$0xff]
        %v2752 = vld [vmem:[#allocation2 + $0x118] sm:$0xff]
        %v2753 = vpack.c.bf16 %v2752, %v2751
        %v2754 = vld [vmem:[#allocation2 + $0x111] sm:$0xff]
        %v2755 = vld [vmem:[#allocation2 + $0x119] sm:$0xff]
        %v2756 = vpack.c.bf16 %v2755, %v2754
        %v2757 = vsel %vm822, %v2701, 0
        %v2758 = vsel %vm823, %v2702, 0
        %v2759 = vsel %vm824, %v2703, 0
        %v2760 = vsel %vm825, %v2704, 0
        %v2761 = vsel %vm826, %v2705, 0
        %v2762 = vsel %vm827, %v2706, 0
        %v2763 = vsel %vm828, %v2707, 0
        %v2764 = vsel %vm829, %v2708, 0
        %v2765 = vsel %vm830, %v2709, 0
        %v2766 = vsel %vm831, %v2710, 0
        %v2767 = vsel %vm832, %v2711, 0
        %v2768 = vsel %vm833, %v2712, 0
        %v2769 = vsel %vm834, %v2713, 0
        %v2770 = vsel %vm835, %v2714, 0
        %v2771 = vsel %vm836, %v2715, 0
        %v2772 = vsel %vm837, %v2756, 0
        %v2773 = vld [vmem:[#allocation2 + $0x11f] sm:$0xff]
        %v2774 = vld [vmem:[#allocation2 + $0x127] sm:$0xff]
        %v2775 = vpack.c.bf16 %v2774, %v2773
        %v2776 = vsel %vm582, %v2590, 0
        %v2777 = vsel %vm583, %v2591, 0
        %v2778 = vsel %vm584, %v2592, 0
        %v2779 = vsel %vm585, %v2593, 0
        %v2780 = vsel %vm586, %v2594, 0
        %v2781 = vsel %vm587, %v2595, 0
        %v2782 = vsel %vm588, %v2596, 0
        %v2783 = vsel %vm589, %v2597, 0
        %v2784 = vsel %vm590, %v2598, 0
        %v2785 = vsel %vm591, %v2599, 0
        %v2786 = vsel %vm592, %v2600, 0
        %v2787 = vsel %vm593, %v2601, 0
        %v2788 = vsel %vm594, %v2602, 0
        %v2789 = vsel %vm595, %v2603, 0
        %v2790 = vsel %vm596, %v2734, 0
        %v2791 = vsel %vm597, %v2775, 0
        %v2792 = vld [vmem:[#allocation2 + $0x120] sm:$0xff]
        %v2793 = vld [vmem:[#allocation2 + $0x128] sm:$0xff]
        %v2794 = vpack.c.bf16 %v2793, %v2792
        %v2795 = vld [vmem:[#allocation2 + $0x121] sm:$0xff]
        %v2796 = vld [vmem:[#allocation2 + $0x129] sm:$0xff]
        %v2797 = vpack.c.bf16 %v2796, %v2795
        %v2798 = vsel %vm822, %v2702, 0
        %v2799 = vsel %vm823, %v2703, 0
        %v2800 = vsel %vm824, %v2704, 0
        %v2801 = vsel %vm825, %v2705, 0
        %v2802 = vsel %vm826, %v2706, 0
        %v2803 = vsel %vm827, %v2707, 0
        %v2804 = vsel %vm828, %v2708, 0
        %v2805 = vsel %vm829, %v2709, 0
        %v2806 = vsel %vm830, %v2710, 0
        %v2807 = vsel %vm831, %v2711, 0
        %v2808 = vsel %vm832, %v2712, 0
        %v2809 = vsel %vm833, %v2713, 0
        %v2810 = vsel %vm834, %v2714, 0
        %v2811 = vsel %vm835, %v2715, 0
        %v2812 = vsel %vm836, %v2756, 0
        %v2813 = vsel %vm837, %v2797, 0
        %v2814 = vld [vmem:[#allocation8] sm:$0xf]
        %v2815 = vld [vmem:[#allocation8 + $0x4] sm:$0xf]
        %v2816 = vld [vmem:[#allocation8 + $0x8] sm:$0xf]
        %v2817 = vld [vmem:[#allocation8 + $0xc] sm:$0xf]
        %v2818 = vld [vmem:[#allocation8 + $0x10] sm:$0xf]
        %v2819 = vld [vmem:[#allocation8 + $0x14] sm:$0xf]
        %v2820 = vld [vmem:[#allocation8 + $0x18] sm:$0xf]
        %v2821 = vld [vmem:[#allocation8 + $0x1c] sm:$0xf]
        %v2822 = vld [vmem:[#allocation8 + $0x20] sm:$0xf]
        %v2823 = vld [vmem:[#allocation8 + $0x24] sm:$0xf]
        %v2824 = vld [vmem:[#allocation8 + $0x28] sm:$0xf]
        %v2825 = vld [vmem:[#allocation8 + $0x2c] sm:$0xf]
        %v2826 = vld [vmem:[#allocation8 + $0x30] sm:$0xf]
        %v2827 = vld [vmem:[#allocation8 + $0x34] sm:$0xf]
        %v2828 = vld [vmem:[#allocation8 + $0x38] sm:$0xf]
        %v2829 = vld [vmem:[#allocation8 + $0x3c] sm:$0xf]
        %v2830 = vld [vmem:[#allocation8 + $0x40] sm:$0xf]
        %v2831 = vld [vmem:[#allocation8 + $0x44] sm:$0xf]
        %v2832 = vld [vmem:[#allocation8 + $0x48] sm:$0xf]
        %v2833 = vld [vmem:[#allocation8 + $0x4c] sm:$0xf]
        %v2834 = vld [vmem:[#allocation8 + $0x50] sm:$0xf]
        %v2835 = vld [vmem:[#allocation8 + $0x54] sm:$0xf]
        %v2836 = vld [vmem:[#allocation8 + $0x58] sm:$0xf]
        %v2837 = vld [vmem:[#allocation8 + $0x5c] sm:$0xf]
        %v2838 = vld [vmem:[#allocation8 + $0x60] sm:$0xf]
        %v2839 = vld [vmem:[#allocation8 + $0x64] sm:$0xf]
        %v2840 = vld [vmem:[#allocation8 + $0x68] sm:$0xf]
        %v2841 = vld [vmem:[#allocation8 + $0x6c] sm:$0xf]
        %v2842 = vld [vmem:[#allocation8 + $0x70] sm:$0xf]
        %v2843 = vld [vmem:[#allocation8 + $0x74] sm:$0xf]
        %v2844 = vld [vmem:[#allocation8 + $0x78] sm:$0xf]
        %v2845 = vld [vmem:[#allocation8 + $0x7c] sm:$0xf]
        %v2846 = vld [vmem:[#allocation8 + $0x80] sm:$0xf]
        %v2847 = vld [vmem:[#allocation8 + $0x84] sm:$0xf]
        %v2848 = vld [vmem:[#allocation8 + $0x88] sm:$0xf]
        %v2849 = vld [vmem:[#allocation8 + $0x8c] sm:$0xf]
        %v2850 = vld [vmem:[#allocation8 + $0x90] sm:$0xf]
        %v2851 = vld [vmem:[#allocation8 + $0x94] sm:$0xf]
        %v2852 = vld [vmem:[#allocation8 + $0x98] sm:$0xf]
        %v2853 = vld [vmem:[#allocation8 + $0x9c] sm:$0xf]
        %v2854 = vld [vmem:[#allocation8 + $0xa0] sm:$0xf]
        %v2855 = vld [vmem:[#allocation8 + $0xa4] sm:$0xf]
        %v2856 = vld [vmem:[#allocation8 + $0xa8] sm:$0xf]
        %v2857 = vld [vmem:[#allocation8 + $0xac] sm:$0xf]
        %v2858 = vld [vmem:[#allocation8 + $0xb0] sm:$0xf]
        %v2859 = vld [vmem:[#allocation8 + $0xb4] sm:$0xf]
        %v2860 = vld [vmem:[#allocation8 + $0xb8] sm:$0xf]
        %v2861 = vld [vmem:[#allocation8 + $0xbc] sm:$0xf]
        %v2862 = vld [vmem:[#allocation8 + $0xc0] sm:$0xf]
        %v2863 = vld [vmem:[#allocation8 + $0xc4] sm:$0xf]
        %v2864 = vld [vmem:[#allocation8 + $0xc8] sm:$0xf]
        %v2865 = vld [vmem:[#allocation8 + $0xcc] sm:$0xf]
        %v2866 = vld [vmem:[#allocation8 + $0xd0] sm:$0xf]
        %v2867 = vld [vmem:[#allocation8 + $0xd4] sm:$0xf]
        %v2868 = vld [vmem:[#allocation8 + $0xd8] sm:$0xf]
        %v2869 = vld [vmem:[#allocation8 + $0xdc] sm:$0xf]
        %v2870 = vld [vmem:[#allocation8 + $0xe0] sm:$0xf]
        %v2871 = vld [vmem:[#allocation8 + $0xe4] sm:$0xf]
        %v2872 = vld [vmem:[#allocation8 + $0xe8] sm:$0xf]
        %v2873 = vld [vmem:[#allocation8 + $0xec] sm:$0xf]
        %v2874 = vld [vmem:[#allocation8 + $0xf0] sm:$0xf]
        %v2875 = vld [vmem:[#allocation8 + $0xf4] sm:$0xf]
        %v2876 = vld [vmem:[#allocation8 + $0xf8] sm:$0xf]
        %v2877 = vld [vmem:[#allocation8 + $0xfc] sm:$0xf]
        %v2878 = vld [vmem:[#allocation8 + $0x100] sm:$0xf]
        %v2879 = vld [vmem:[#allocation8 + $0x104] sm:$0xf]
        %v2880 = vld [vmem:[#allocation8 + $0x108] sm:$0xf]
        %v2881 = vld [vmem:[#allocation8 + $0x10c] sm:$0xf]
        %v2882 = vld [vmem:[#allocation8 + $0x110] sm:$0xf]
        %v2883 = vld [vmem:[#allocation8 + $0x114] sm:$0xf]
        %v2884 = vld [vmem:[#allocation8 + $0x118] sm:$0xf]
        %v2885 = vld [vmem:[#allocation8 + $0x11c] sm:$0xf]
        %v2886 = vld [vmem:[#allocation8 + $0x120] sm:$0xf]
        %v2887 = vld [vmem:[#allocation8 + $0x124] sm:$0xf]
        %v2888 = vld [vmem:[#allocation8 + $0x128] sm:$0xf]
        %v2889 = vld [vmem:[#allocation8 + $0x12c] sm:$0xf]
        %v2890 = vld [vmem:[#allocation8 + $0x130] sm:$0xf]
        %v2891 = vld [vmem:[#allocation8 + $0x134] sm:$0xf]
        %v2892 = vld [vmem:[#allocation8 + $0x138] sm:$0xf]
        %v2893 = vld [vmem:[#allocation8 + $0x13c] sm:$0xf]
        %v2894 = vld [vmem:[#allocation8 + $0x140] sm:$0xf]
        %v2895 = vld [vmem:[#allocation8 + $0x144] sm:$0xf]
        %v2896 = vld [vmem:[#allocation8 + $0x148] sm:$0xf]
        %v2897 = vld [vmem:[#allocation8 + $0x14c] sm:$0xf]
        %v2898 = vld [vmem:[#allocation8 + $0x150] sm:$0xf]
        %v2899 = vld [vmem:[#allocation8 + $0x154] sm:$0xf]
        %v2900 = vld [vmem:[#allocation8 + $0x158] sm:$0xf]
        %v2901 = vld [vmem:[#allocation8 + $0x15c] sm:$0xf]
        %v2902 = vld [vmem:[#allocation8 + $0x160] sm:$0xf]
        %v2903 = vld [vmem:[#allocation8 + $0x164] sm:$0xf]
        %v2904 = vld [vmem:[#allocation8 + $0x168] sm:$0xf]
        %v2905 = vld [vmem:[#allocation8 + $0x16c] sm:$0xf]
        %v2906 = vld [vmem:[#allocation8 + $0x170] sm:$0xf]
        %v2907 = vld [vmem:[#allocation8 + $0x174] sm:$0xf]
        %v2908 = vld [vmem:[#allocation8 + $0x178] sm:$0xf]
        %v2909 = vld [vmem:[#allocation8 + $0x17c] sm:$0xf]
        %v2910 = vld [vmem:[#allocation8 + $0x180] sm:$0xf]
        %v2911 = vld [vmem:[#allocation8 + $0x184] sm:$0xf]
        %v2912 = vld [vmem:[#allocation8 + $0x188] sm:$0xf]
        %v2913 = vld [vmem:[#allocation8 + $0x18c] sm:$0xf]
        %v2914 = vld [vmem:[#allocation8 + $0x190] sm:$0xf]
        %v2915 = vld [vmem:[#allocation8 + $0x194] sm:$0xf]
        %v2916 = vld [vmem:[#allocation8 + $0x198] sm:$0xf]
        %v2917 = vld [vmem:[#allocation8 + $0x19c] sm:$0xf]
        %v2918 = vld [vmem:[#allocation8 + $0x1a0] sm:$0xf]
        %v2919 = vld [vmem:[#allocation8 + $0x1a4] sm:$0xf]
        %v2920 = vld [vmem:[#allocation8 + $0x1a8] sm:$0xf]
        %v2921 = vld [vmem:[#allocation8 + $0x1ac] sm:$0xf]
        %v2922 = vld [vmem:[#allocation8 + $0x1b0] sm:$0xf]
        %v2923 = vld [vmem:[#allocation8 + $0x1b4] sm:$0xf]
        %v2924 = vld [vmem:[#allocation8 + $0x1b8] sm:$0xf]
        %v2925 = vld [vmem:[#allocation8 + $0x1bc] sm:$0xf]
        %v2926 = vld [vmem:[#allocation8 + $0x1c0] sm:$0xf]
        %v2927 = vld [vmem:[#allocation8 + $0x1c4] sm:$0xf]
        %v2928 = vld [vmem:[#allocation8 + $0x1c8] sm:$0xf]
        %v2929 = vld [vmem:[#allocation8 + $0x1cc] sm:$0xf]
        %v2930 = vld [vmem:[#allocation8 + $0x1d0] sm:$0xf]
        %v2931 = vld [vmem:[#allocation8 + $0x1d4] sm:$0xf]
        %v2932 = vld [vmem:[#allocation8 + $0x1d8] sm:$0xf]
        %v2933 = vld [vmem:[#allocation8 + $0x1dc] sm:$0xf]
        %v2934 = vld [vmem:[#allocation8 + $0x1e0] sm:$0xf]
        %v2935 = vld [vmem:[#allocation8 + $0x1e4] sm:$0xf]
        %v2936 = vld [vmem:[#allocation8 + $0x1e8] sm:$0xf]
        %v2937 = vld [vmem:[#allocation8 + $0x1ec] sm:$0xf]
        %v2938 = vld [vmem:[#allocation8 + $0x1f0] sm:$0xf]
        %v2939 = vld [vmem:[#allocation8 + $0x1f4] sm:$0xf]
        %v2940 = vld [vmem:[#allocation8 + $0x1f8] sm:$0xf]
        %v2941 = vld [vmem:[#allocation8 + $0x1fc] sm:$0xf]
        %v2942 = vld [vmem:[#allocation8 + $0x200] sm:$0xf]
        %v2943 = vld [vmem:[#allocation8 + $0x204] sm:$0xf]
        %v2944 = vld [vmem:[#allocation8 + $0x208] sm:$0xf]
        %v2945 = vld [vmem:[#allocation8 + $0x20c] sm:$0xf]
        %v2946 = vld [vmem:[#allocation8 + $0x210] sm:$0xf]
        %v2947 = vld [vmem:[#allocation8 + $0x214] sm:$0xf]
        %v2948 = vld [vmem:[#allocation8 + $0x218] sm:$0xf]
        %v2949 = vld [vmem:[#allocation8 + $0x21c] sm:$0xf]
        %v2950 = vld [vmem:[#allocation8 + $0x220] sm:$0xf]
        %v2951 = vld [vmem:[#allocation8 + $0x224] sm:$0xf]
        %v2952 = vld [vmem:[#allocation8 + $0x228] sm:$0xf]
        %v2953 = vld [vmem:[#allocation8 + $0x22c] sm:$0xf]
        %v2954 = vld [vmem:[#allocation8 + $0x230] sm:$0xf]
        %v2955 = vld [vmem:[#allocation8 + $0x234] sm:$0xf]
        %v2956 = vld [vmem:[#allocation8 + $0x238] sm:$0xf]
        %v2957 = vld [vmem:[#allocation8 + $0x23c] sm:$0xf]
        %v3102 = vunpack.c.l.b16 %v2814
        %v3103 = vunpack.c.l.b16 %v2815
        %v3104 = vunpack.c.l.b16 %v2816
        %v3105 = vunpack.c.l.b16 %v2817
        %v3106 = vunpack.c.l.b16 %v2818
        %v3107 = vunpack.c.l.b16 %v2819
        %v3108 = vunpack.c.l.b16 %v2820
        %v3109 = vunpack.c.l.b16 %v2821
        %v3110 = vunpack.c.l.b16 %v2822
        %v3111 = vunpack.c.l.b16 %v2823
        %v3112 = vunpack.c.l.b16 %v2824
        %v3113 = vunpack.c.l.b16 %v2825
        %v3114 = vunpack.c.l.b16 %v2826
        %v3115 = vunpack.c.l.b16 %v2827
        %v3116 = vunpack.c.l.b16 %v2828
        %v3117 = vunpack.c.l.b16 %v2829
        %v3118 = vunpack.c.l.b16 %v2830
        %v3119 = vunpack.c.l.b16 %v2831
        %v3120 = vunpack.c.l.b16 %v2832
        %v3121 = vunpack.c.l.b16 %v2833
        %v3122 = vunpack.c.l.b16 %v2834
        %v3123 = vunpack.c.l.b16 %v2835
        %v3124 = vunpack.c.l.b16 %v2836
        %v3125 = vunpack.c.l.b16 %v2837
        %v3126 = vunpack.c.l.b16 %v2838
        %v3127 = vunpack.c.l.b16 %v2839
        %v3128 = vunpack.c.l.b16 %v2840
        %v3129 = vunpack.c.l.b16 %v2841
        %v3130 = vunpack.c.l.b16 %v2842
        %v3131 = vunpack.c.l.b16 %v2843
        %v3132 = vunpack.c.l.b16 %v2844
        %v3133 = vunpack.c.l.b16 %v2845
        %v3134 = vunpack.c.l.b16 %v2846
        %v3135 = vunpack.c.l.b16 %v2847
        %v3136 = vunpack.c.l.b16 %v2848
        %v3137 = vunpack.c.l.b16 %v2849
        %v3138 = vunpack.c.l.b16 %v2850
        %v3139 = vunpack.c.l.b16 %v2851
        %v3140 = vunpack.c.l.b16 %v2852
        %v3141 = vunpack.c.l.b16 %v2853
        %v3142 = vunpack.c.l.b16 %v2854
        %v3143 = vunpack.c.l.b16 %v2855
        %v3144 = vunpack.c.l.b16 %v2856
        %v3145 = vunpack.c.l.b16 %v2857
        %v3146 = vunpack.c.l.b16 %v2858
        %v3147 = vunpack.c.l.b16 %v2859
        %v3148 = vunpack.c.l.b16 %v2860
        %v3149 = vunpack.c.l.b16 %v2861
        %v3150 = vunpack.c.l.b16 %v2862
        %v3151 = vunpack.c.l.b16 %v2863
        %v3152 = vunpack.c.l.b16 %v2864
        %v3153 = vunpack.c.l.b16 %v2865
        %v3154 = vunpack.c.l.b16 %v2866
        %v3155 = vunpack.c.l.b16 %v2867
        %v3156 = vunpack.c.l.b16 %v2868
        %v3157 = vunpack.c.l.b16 %v2869
        %v3158 = vunpack.c.l.b16 %v2870
        %v3159 = vunpack.c.l.b16 %v2871
        %v3160 = vunpack.c.l.b16 %v2872
        %v3161 = vunpack.c.l.b16 %v2873
        %v3162 = vunpack.c.l.b16 %v2874
        %v3163 = vunpack.c.l.b16 %v2875
        %v3164 = vunpack.c.l.b16 %v2876
        %v3165 = vunpack.c.l.b16 %v2877
        %v3166 = vunpack.c.l.b16 %v2878
        %v3167 = vunpack.c.l.b16 %v2879
        %v3168 = vunpack.c.l.b16 %v2880
        %v3169 = vunpack.c.l.b16 %v2881
        %v3170 = vunpack.c.l.b16 %v2882
        %v3171 = vunpack.c.l.b16 %v2883
        %v3172 = vunpack.c.l.b16 %v2884
        %v3173 = vunpack.c.l.b16 %v2885
        %v3174 = vunpack.c.l.b16 %v2886
        %v3175 = vunpack.c.l.b16 %v2887
        %v3176 = vunpack.c.l.b16 %v2888
        %v3177 = vunpack.c.l.b16 %v2889
        %v3178 = vunpack.c.l.b16 %v2890
        %v3179 = vunpack.c.l.b16 %v2891
        %v3180 = vunpack.c.l.b16 %v2892
        %v3181 = vunpack.c.l.b16 %v2893
        %v3182 = vunpack.c.l.b16 %v2894
        %v3183 = vunpack.c.l.b16 %v2895
        %v3184 = vunpack.c.l.b16 %v2896
        %v3185 = vunpack.c.l.b16 %v2897
        %v3186 = vunpack.c.l.b16 %v2898
        %v3187 = vunpack.c.l.b16 %v2899
        %v3188 = vunpack.c.l.b16 %v2900
        %v3189 = vunpack.c.l.b16 %v2901
        %v3190 = vunpack.c.l.b16 %v2902
        %v3191 = vunpack.c.l.b16 %v2903
        %v3192 = vunpack.c.l.b16 %v2904
        %v3193 = vunpack.c.l.b16 %v2905
        %v3194 = vunpack.c.l.b16 %v2906
        %v3195 = vunpack.c.l.b16 %v2907
        %v3196 = vunpack.c.l.b16 %v2908
        %v3197 = vunpack.c.l.b16 %v2909
        %v3198 = vunpack.c.l.b16 %v2910
        %v3199 = vunpack.c.l.b16 %v2911
        %v3200 = vunpack.c.l.b16 %v2912
        %v3201 = vunpack.c.l.b16 %v2913
        %v3202 = vunpack.c.l.b16 %v2914
        %v3203 = vunpack.c.l.b16 %v2915
        %v3204 = vunpack.c.l.b16 %v2916
        %v3205 = vunpack.c.l.b16 %v2917
        %v3206 = vunpack.c.l.b16 %v2918
        %v3207 = vunpack.c.l.b16 %v2919
        %v3208 = vunpack.c.l.b16 %v2920
        %v3209 = vunpack.c.l.b16 %v2921
        %v3210 = vunpack.c.l.b16 %v2922
        %v3211 = vunpack.c.l.b16 %v2923
        %v3212 = vunpack.c.l.b16 %v2924
        %v3213 = vunpack.c.l.b16 %v2925
        %v3214 = vunpack.c.l.b16 %v2926
        %v3215 = vunpack.c.l.b16 %v2927
        %v3216 = vunpack.c.l.b16 %v2928
        %v3217 = vunpack.c.l.b16 %v2929
        %v3218 = vunpack.c.l.b16 %v2930
        %v3219 = vunpack.c.l.b16 %v2931
        %v3220 = vunpack.c.l.b16 %v2932
        %v3221 = vunpack.c.l.b16 %v2933
        %v3222 = vunpack.c.l.b16 %v2934
        %v3223 = vunpack.c.l.b16 %v2935
        %v3224 = vunpack.c.l.b16 %v2936
        %v3225 = vunpack.c.l.b16 %v2937
        %v3226 = vunpack.c.l.b16 %v2938
        %v3227 = vunpack.c.l.b16 %v2939
        %v3228 = vunpack.c.l.b16 %v2940
        %v3229 = vunpack.c.l.b16 %v2941
        %v3230 = vunpack.c.l.b16 %v2942
        %v3231 = vunpack.c.l.b16 %v2943
        %v3232 = vunpack.c.l.b16 %v2944
        %v3233 = vunpack.c.l.b16 %v2945
        %v3234 = vunpack.c.l.b16 %v2946
        %v3235 = vunpack.c.l.b16 %v2947
        %v3236 = vunpack.c.l.b16 %v2948
        %v3237 = vunpack.c.l.b16 %v2949
        %v3238 = vunpack.c.l.b16 %v2950
        %v3239 = vunpack.c.l.b16 %v2951
        %v3240 = vunpack.c.l.b16 %v2952
        %v3241 = vunpack.c.l.b16 %v2953
        %v3242 = vunpack.c.l.b16 %v2954
        %v3243 = vunpack.c.l.b16 %v2955
        %v3244 = vunpack.c.l.b16 %v2956
        %v3245 = vunpack.c.l.b16 %v2957
        %v3246 = vpack.c.b16 %v3103, %v3102
        %v3247 = vpack.c.b16 %v3105, %v3104
        %v3248 = vpack.c.b16 %v3107, %v3106
        %v3249 = vpack.c.b16 %v3109, %v3108
        %v3250 = vpack.c.b16 %v3111, %v3110
        %v3251 = vpack.c.b16 %v3113, %v3112
        %v3252 = vpack.c.b16 %v3115, %v3114
        %v3253 = vpack.c.b16 %v3117, %v3116
        %v3254 = vpack.c.b16 %v3119, %v3118
        %v3255 = vpack.c.b16 %v3121, %v3120
        %v3256 = vpack.c.b16 %v3123, %v3122
        %v3257 = vpack.c.b16 %v3125, %v3124
        %v3258 = vpack.c.b16 %v3127, %v3126
        %v3259 = vpack.c.b16 %v3129, %v3128
        %v3260 = vpack.c.b16 %v3131, %v3130
        %v3261 = vpack.c.b16 %v3133, %v3132
        %v3262 = vpack.c.b16 %v3135, %v3134
        %v3263 = vpack.c.b16 %v3137, %v3136
        %v3264 = vpack.c.b16 %v3139, %v3138
        %v3265 = vpack.c.b16 %v3141, %v3140
        %v3266 = vpack.c.b16 %v3143, %v3142
        %v3267 = vpack.c.b16 %v3145, %v3144
        %v3268 = vpack.c.b16 %v3147, %v3146
        %v3269 = vpack.c.b16 %v3149, %v3148
        %v3270 = vpack.c.b16 %v3151, %v3150
        %v3271 = vpack.c.b16 %v3153, %v3152
        %v3272 = vpack.c.b16 %v3155, %v3154
        %v3273 = vpack.c.b16 %v3157, %v3156
        %v3274 = vpack.c.b16 %v3159, %v3158
        %v3275 = vpack.c.b16 %v3161, %v3160
        %v3276 = vpack.c.b16 %v3163, %v3162
        %v3277 = vpack.c.b16 %v3165, %v3164
        %v3278 = vpack.c.b16 %v3167, %v3166
        %v3279 = vpack.c.b16 %v3169, %v3168
        %v3280 = vpack.c.b16 %v3171, %v3170
        %v3281 = vpack.c.b16 %v3173, %v3172
        %v3282 = vpack.c.b16 %v3175, %v3174
        %v3283 = vpack.c.b16 %v3177, %v3176
        %v3284 = vpack.c.b16 %v3179, %v3178
        %v3285 = vpack.c.b16 %v3181, %v3180
        %v3286 = vpack.c.b16 %v3183, %v3182
        %v3287 = vpack.c.b16 %v3185, %v3184
        %v3288 = vpack.c.b16 %v3187, %v3186
        %v3289 = vpack.c.b16 %v3189, %v3188
        %v3290 = vpack.c.b16 %v3191, %v3190
        %v3291 = vpack.c.b16 %v3193, %v3192
        %v3292 = vpack.c.b16 %v3195, %v3194
        %v3293 = vpack.c.b16 %v3197, %v3196
        %v3294 = vpack.c.b16 %v3199, %v3198
        %v3295 = vpack.c.b16 %v3201, %v3200
        %v3296 = vpack.c.b16 %v3203, %v3202
        %v3297 = vpack.c.b16 %v3205, %v3204
        %v3298 = vpack.c.b16 %v3207, %v3206
        %v3299 = vpack.c.b16 %v3209, %v3208
        %v3300 = vpack.c.b16 %v3211, %v3210
        %v3301 = vpack.c.b16 %v3213, %v3212
        %v3302 = vpack.c.b16 %v3215, %v3214
        %v3303 = vpack.c.b16 %v3217, %v3216
        %v3304 = vpack.c.b16 %v3219, %v3218
        %v3305 = vpack.c.b16 %v3221, %v3220
        %v3306 = vpack.c.b16 %v3223, %v3222
        %v3307 = vpack.c.b16 %v3225, %v3224
        %v3308 = vpack.c.b16 %v3227, %v3226
        %v3309 = vpack.c.b16 %v3229, %v3228
        %v3310 = vpack.c.b16 %v3231, %v3230
        %v3311 = vpack.c.b16 %v3233, %v3232
        %v3312 = vpack.c.b16 %v3235, %v3234
        %v3313 = vpack.c.b16 %v3237, %v3236
        %v3314 = vpack.c.b16 %v3239, %v3238
        %v3315 = vpack.c.b16 %v3241, %v3240
        %v3316 = vpack.c.b16 %v3243, %v3242
        %v3317 = vpack.c.b16 %v3245, %v3244
        %3390 = vmatprep.subr.bf16.mxu0 0
        %3391 = vmatpush1.bf16.msra.mxu0 %v3246
        %3392 = vmatprep.subr.bf16.mxu0 0
        %3393 = vmatpush1.bf16.msra.mxu0 %v3247
        %3394 = vmatprep.subr.bf16.mxu0 0
        %3395 = vmatpush1.bf16.msra.mxu0 %v3248
        %3396 = vmatprep.subr.bf16.mxu0 0
        %3397 = vmatpush1.bf16.msra.mxu0 %v3249
        %3398 = vmatprep.subr.bf16.mxu0 0
        %3399 = vmatpush1.bf16.msra.mxu0 %v3250
        %3400 = vmatprep.subr.bf16.mxu0 0
        %3401 = vmatpush1.bf16.msra.mxu0 %v3251
        %3402 = vmatprep.subr.bf16.mxu0 0
        %3403 = vmatpush1.bf16.msra.mxu0 %v3252
        %3404 = vmatprep.subr.bf16.mxu0 0
        %3405 = vmatpush1.bf16.msra.mxu0 %v3253
        %3406 = vmatprep.subr.bf16.mxu0 0
        %3407 = vmatpush1.bf16.msra.mxu0 %v3254
        %3408 = vmatprep.subr.bf16.mxu0 0
        %3409 = vmatpush1.bf16.msra.mxu0 %v3255
        %3410 = vmatprep.subr.bf16.mxu0 0
        %3411 = vmatpush1.bf16.msra.mxu0 %v3256
        %3412 = vmatprep.subr.bf16.mxu0 0
        %3413 = vmatpush1.bf16.msra.mxu0 %v3257
        %3414 = vmatprep.subr.bf16.mxu0 0
        %3415 = vmatpush1.bf16.msra.mxu0 %v3258
        %3416 = vmatprep.subr.bf16.mxu0 0
        %3417 = vmatpush1.bf16.msra.mxu0 %v3259
        %3418 = vmatprep.subr.bf16.mxu0 0
        %3419 = vmatpush1.bf16.msra.mxu0 %v3260
        %3420 = vmatprep.subr.bf16.mxu0 0
        %3421 = vmatpush1.bf16.msra.mxu0 %v3261
        %3422 = vmatprep.mubr.bf16.mxu0 %v2652
        %3423 = vmatmul.mubr.bf16.gmra.mrb[0].mxu0 %v2604
        %v3424 = vpop.f32.mrb[0].mxu0
        %v3425 = vadd.f32 0.0, %v3424
        %v3426 = vpop.f32.mrb[0].mxu0
        %v3427 = vpop.f32.mrb[0].mxu0
        %v3428 = vadd.f32 0.0, %v3427
        %v3429 = vpop.f32.mrb[0].mxu0
        %3430 = vmatprep.mubr.bf16.mxu0 %v2653
        %3431 = vmatmul.mubr.bf16.gmra.mrb[0].mxu0 %v2605
        %v3432 = vpop.f32.mrb[0].mxu0
        %v3433 = vadd.f32 0.0, %v3432
        %v3434 = vpop.f32.mrb[0].mxu0
        %v3435 = vpop.f32.mrb[0].mxu0
        %v3436 = vadd.f32 0.0, %v3435
        %v3437 = vpop.f32.mrb[0].mxu0
        %3438 = vmatprep.mubr.bf16.mxu0 %v2654
        %3439 = vmatmul.mubr.bf16.gmra.mrb[0].mxu0 %v2606
        %v3440 = vpop.f32.mrb[0].mxu0
        %v3441 = vadd.f32 0.0, %v3440
        %v3442 = vpop.f32.mrb[0].mxu0
        %v3443 = vpop.f32.mrb[0].mxu0
        %v3444 = vadd.f32 0.0, %v3443
        %v3445 = vpop.f32.mrb[0].mxu0
        %3446 = vmatprep.mubr.bf16.mxu0 %v2655
        %3447 = vmatmul.mubr.bf16.gmra.mrb[0].mxu0 %v2607
        %v3448 = vpop.f32.mrb[0].mxu0
        %v3449 = vadd.f32 0.0, %v3448
        %v3450 = vpop.f32.mrb[0].mxu0
        %v3451 = vpop.f32.mrb[0].mxu0
        %v3452 = vadd.f32 0.0, %v3451
        %v3453 = vpop.f32.mrb[0].mxu0
        %3454 = vmatprep.mubr.bf16.mxu0 %v2656
        %3455 = vmatmul.mubr.bf16.gmra.mrb[0].mxu0 %v2608
        %v3456 = vpop.f32.mrb[0].mxu0
        %v3457 = vadd.f32 0.0, %v3456
        %v3458 = vpop.f32.mrb[0].mxu0
        %v3459 = vpop.f32.mrb[0].mxu0
        %v3460 = vadd.f32 0.0, %v3459
        %v3461 = vpop.f32.mrb[0].mxu0
        %3462 = vmatprep.mubr.bf16.mxu0 %v2657
        %3463 = vmatmul.mubr.bf16.gmra.mrb[0].mxu0 %v2609
        %v3464 = vpop.f32.mrb[0].mxu0
        %v3465 = vadd.f32 0.0, %v3464
        %v3466 = vpop.f32.mrb[0].mxu0
        %v3467 = vpop.f32.mrb[0].mxu0
        %v3468 = vadd.f32 0.0, %v3467
        %v3469 = vpop.f32.mrb[0].mxu0
        %3470 = vmatprep.mubr.bf16.mxu0 %v2658
        %3471 = vmatmul.mubr.bf16.gmra.mrb[0].mxu0 %v2610
        %v3472 = vpop.f32.mrb[0].mxu0
        %v3473 = vadd.f32 0.0, %v3472
        %v3474 = vpop.f32.mrb[0].mxu0
        %v3475 = vpop.f32.mrb[0].mxu0
        %v3476 = vadd.f32 0.0, %v3475
        %v3477 = vpop.f32.mrb[0].mxu0
        %3478 = vmatprep.mubr.bf16.mxu0 %v2659
        %3479 = vmatmul.mubr.bf16.gmra.mrb[0].mxu0 %v2611
        %v3480 = vpop.f32.mrb[0].mxu0
        %v3481 = vadd.f32 0.0, %v3480
        %v3482 = vpop.f32.mrb[0].mxu0
        %v3483 = vpop.f32.mrb[0].mxu0
        %v3484 = vadd.f32 0.0, %v3483
        %v3485 = vpop.f32.mrb[0].mxu0
        %3486 = vmatprep.mubr.bf16.mxu0 %v2660
        %3487 = vmatmul.mubr.bf16.gmra.mrb[0].mxu0 %v2612
        %v3488 = vpop.f32.mrb[0].mxu0
        %v3489 = vadd.f32 0.0, %v3488
        %v3490 = vpop.f32.mrb[0].mxu0
        %v3491 = vpop.f32.mrb[0].mxu0
        %v3492 = vadd.f32 0.0, %v3491
        %v3493 = vpop.f32.mrb[0].mxu0
        %3494 = vmatprep.mubr.bf16.mxu0 %v2661
        %3495 = vmatmul.mubr.bf16.gmra.mrb[0].mxu0 %v2613
        %v3496 = vpop.f32.mrb[0].mxu0
        %v3497 = vadd.f32 0.0, %v3496
        %v3498 = vpop.f32.mrb[0].mxu0
        %v3499 = vpop.f32.mrb[0].mxu0
        %v3500 = vadd.f32 0.0, %v3499
        %v3501 = vpop.f32.mrb[0].mxu0
        %3502 = vmatprep.mubr.bf16.mxu0 %v2662
        %3503 = vmatmul.mubr.bf16.gmra.mrb[0].mxu0 %v2614
        %v3504 = vpop.f32.mrb[0].mxu0
        %v3505 = vadd.f32 0.0, %v3504
        %v3506 = vpop.f32.mrb[0].mxu0
        %v3507 = vpop.f32.mrb[0].mxu0
        %v3508 = vadd.f32 0.0, %v3507
        %v3509 = vpop.f32.mrb[0].mxu0
        %3510 = vmatprep.mubr.bf16.mxu0 %v2663
        %3511 = vmatmul.mubr.bf16.gmra.mrb[0].mxu0 %v2615
        %v3512 = vpop.f32.mrb[0].mxu0
        %v3513 = vadd.f32 0.0, %v3512
        %v3514 = vpop.f32.mrb[0].mxu0
        %v3515 = vpop.f32.mrb[0].mxu0
        %v3516 = vadd.f32 0.0, %v3515
        %v3517 = vpop.f32.mrb[0].mxu0
        %3518 = vmatprep.mubr.bf16.mxu0 %v2664
        %3519 = vmatmul.mubr.bf16.gmra.mrb[0].mxu0 %v2616
        %v3520 = vpop.f32.mrb[0].mxu0
        %v3521 = vadd.f32 0.0, %v3520
        %v3522 = vpop.f32.mrb[0].mxu0
        %v3523 = vpop.f32.mrb[0].mxu0
        %v3524 = vadd.f32 0.0, %v3523
        %v3525 = vpop.f32.mrb[0].mxu0
        %3526 = vmatprep.mubr.bf16.mxu0 %v2665
        %3527 = vmatmul.mubr.bf16.gmra.mrb[0].mxu0 %v2617
        %v3528 = vpop.f32.mrb[0].mxu0
        %v3529 = vadd.f32 0.0, %v3528
        %v3530 = vpop.f32.mrb[0].mxu0
        %v3531 = vpop.f32.mrb[0].mxu0
        %v3532 = vadd.f32 0.0, %v3531
        %v3533 = vpop.f32.mrb[0].mxu0
        %3534 = vmatprep.mubr.bf16.mxu0 %v2666
        %3535 = vmatmul.mubr.bf16.gmra.mrb[0].mxu0 %v2618
        %v3536 = vpop.f32.mrb[0].mxu0
        %v3537 = vadd.f32 0.0, %v3536
        %v3538 = vpop.f32.mrb[0].mxu0
        %v3539 = vpop.f32.mrb[0].mxu0
        %v3540 = vadd.f32 0.0, %v3539
        %v3541 = vpop.f32.mrb[0].mxu0
        %3542 = vmatprep.mubr.bf16.mxu0 %v2667
        %3543 = vmatmul.mubr.bf16.gmra.mrb[0].mxu0 %v2619
        %v3544 = vpop.f32.mrb[0].mxu0
        %v3545 = vadd.f32 0.0, %v3544
        %v3546 = vpop.f32.mrb[0].mxu0
        %v3547 = vpop.f32.mrb[0].mxu0
        %v3548 = vadd.f32 0.0, %v3547
        %v3549 = vpop.f32.mrb[0].mxu0
        %3550 = vdwg.mxu0
        %3551 = vmatprep.subr.bf16.mxu0 0
        %3552 = vmatpush1.bf16.msra.mxu0 %v3262
        %3553 = vmatprep.subr.bf16.mxu0 0
        %3554 = vmatpush1.bf16.msra.mxu0 %v3263
        %3555 = vmatprep.subr.bf16.mxu0 0
        %3556 = vmatpush1.bf16.msra.mxu0 %v3264
        %3557 = vmatprep.subr.bf16.mxu0 0
        %3558 = vmatpush1.bf16.msra.mxu0 %v3265
        %3559 = vmatprep.subr.bf16.mxu0 0
        %3560 = vmatpush1.bf16.msra.mxu0 %v3266
        %3561 = vmatprep.subr.bf16.mxu0 0
        %3562 = vmatpush1.bf16.msra.mxu0 %v3267
        %3563 = vmatprep.subr.bf16.mxu0 0
        %3564 = vmatpush1.bf16.msra.mxu0 %v3268
        %3565 = vmatprep.subr.bf16.mxu0 0
        %3566 = vmatpush1.bf16.msra.mxu0 %v3269
        %3567 = vmatprep.subr.bf16.mxu0 0
        %3568 = vmatpush1.bf16.msra.mxu0 %v3270
        %3569 = vmatprep.subr.bf16.mxu0 0
        %3570 = vmatpush1.bf16.msra.mxu0 %v3271
        %3571 = vmatprep.subr.bf16.mxu0 0
        %3572 = vmatpush1.bf16.msra.mxu0 %v3272
        %3573 = vmatprep.subr.bf16.mxu0 0
        %3574 = vmatpush1.bf16.msra.mxu0 %v3273
        %3575 = vmatprep.subr.bf16.mxu0 0
        %3576 = vmatpush1.bf16.msra.mxu0 %v3274
        %3577 = vmatprep.subr.bf16.mxu0 0
        %3578 = vmatpush1.bf16.msra.mxu0 %v3275
        %3579 = vmatprep.subr.bf16.mxu0 0
        %3580 = vmatpush1.bf16.msra.mxu0 %v3276
        %3581 = vmatprep.subr.bf16.mxu0 0
        %3582 = vmatpush1.bf16.msra.mxu0 %v3277
        %3583 = vmatprep.mubr.bf16.mxu0 %v2735
        %3584 = vmatmul.mubr.bf16.gmra.mrb[0].mxu0 %v2716
        %v3585 = vpop.f32.mrb[0].mxu0
        %v3586 = vadd.f32 %v3425, %v3585
        %v3587 = vpop.f32.mrb[0].mxu0
        %v3588 = vpop.f32.mrb[0].mxu0
        %v3589 = vadd.f32 %v3428, %v3588
        %v3590 = vpop.f32.mrb[0].mxu0
        %3591 = vmatprep.mubr.bf16.mxu0 %v2736
        %3592 = vmatmul.mubr.bf16.gmra.mrb[0].mxu0 %v2717
        %v3593 = vpop.f32.mrb[0].mxu0
        %v3594 = vadd.f32 %v3433, %v3593
        %v3595 = vpop.f32.mrb[0].mxu0
        %v3596 = vpop.f32.mrb[0].mxu0
        %v3597 = vadd.f32 %v3436, %v3596
        %v3598 = vpop.f32.mrb[0].mxu0
        %3599 = vmatprep.mubr.bf16.mxu0 %v2737
        %3600 = vmatmul.mubr.bf16.gmra.mrb[0].mxu0 %v2718
        %v3601 = vpop.f32.mrb[0].mxu0
        %v3602 = vadd.f32 %v3441, %v3601
        %v3603 = vpop.f32.mrb[0].mxu0
        %v3604 = vpop.f32.mrb[0].mxu0
        %v3605 = vadd.f32 %v3444, %v3604
        %v3606 = vpop.f32.mrb[0].mxu0
        %3607 = vmatprep.mubr.bf16.mxu0 %v2738
        %3608 = vmatmul.mubr.bf16.gmra.mrb[0].mxu0 %v2719
        %v3609 = vpop.f32.mrb[0].mxu0
        %v3610 = vadd.f32 %v3449, %v3609
        %v3611 = vpop.f32.mrb[0].mxu0
        %v3612 = vpop.f32.mrb[0].mxu0
        %v3613 = vadd.f32 %v3452, %v3612
        %v3614 = vpop.f32.mrb[0].mxu0
        %3615 = vmatprep.mubr.bf16.mxu0 %v2739
        %3616 = vmatmul.mubr.bf16.gmra.mrb[0].mxu0 %v2720
        %v3617 = vpop.f32.mrb[0].mxu0
        %v3618 = vadd.f32 %v3457, %v3617
        %v3619 = vpop.f32.mrb[0].mxu0
        %v3620 = vpop.f32.mrb[0].mxu0
        %v3621 = vadd.f32 %v3460, %v3620
        %v3622 = vpop.f32.mrb[0].mxu0
        %3623 = vmatprep.mubr.bf16.mxu0 %v2740
        %3624 = vmatmul.mubr.bf16.gmra.mrb[0].mxu0 %v2721
        %v3625 = vpop.f32.mrb[0].mxu0
        %v3626 = vadd.f32 %v3465, %v3625
        %v3627 = vpop.f32.mrb[0].mxu0
        %v3628 = vpop.f32.mrb[0].mxu0
        %v3629 = vadd.f32 %v3468, %v3628
        %v3630 = vpop.f32.mrb[0].mxu0
        %3631 = vmatprep.mubr.bf16.mxu0 %v2741
        %3632 = vmatmul.mubr.bf16.gmra.mrb[0].mxu0 %v2722
        %v3633 = vpop.f32.mrb[0].mxu0
        %v3634 = vadd.f32 %v3473, %v3633
        %v3635 = vpop.f32.mrb[0].mxu0
        %v3636 = vpop.f32.mrb[0].mxu0
        %v3637 = vadd.f32 %v3476, %v3636
        %v3638 = vpop.f32.mrb[0].mxu0
        %3639 = vmatprep.mubr.bf16.mxu0 %v2742
        %3640 = vmatmul.mubr.bf16.gmra.mrb[0].mxu0 %v2723
        %v3641 = vpop.f32.mrb[0].mxu0
        %v3642 = vadd.f32 %v3481, %v3641
        %v3643 = vpop.f32.mrb[0].mxu0
        %v3644 = vpop.f32.mrb[0].mxu0
        %v3645 = vadd.f32 %v3484, %v3644
        %v3646 = vpop.f32.mrb[0].mxu0
        %3647 = vmatprep.mubr.bf16.mxu0 %v2743
        %3648 = vmatmul.mubr.bf16.gmra.mrb[0].mxu0 %v2724
        %v3649 = vpop.f32.mrb[0].mxu0
        %v3650 = vadd.f32 %v3489, %v3649
        %v3651 = vpop.f32.mrb[0].mxu0
        %v3652 = vpop.f32.mrb[0].mxu0
        %v3653 = vadd.f32 %v3492, %v3652
        %v3654 = vpop.f32.mrb[0].mxu0
        %3655 = vmatprep.mubr.bf16.mxu0 %v2744
        %3656 = vmatmul.mubr.bf16.gmra.mrb[0].mxu0 %v2725
        %v3657 = vpop.f32.mrb[0].mxu0
        %v3658 = vadd.f32 %v3497, %v3657
        %v3659 = vpop.f32.mrb[0].mxu0
        %v3660 = vpop.f32.mrb[0].mxu0
        %v3661 = vadd.f32 %v3500, %v3660
        %v3662 = vpop.f32.mrb[0].mxu0
        %3663 = vmatprep.mubr.bf16.mxu0 %v2745
        %3664 = vmatmul.mubr.bf16.gmra.mrb[0].mxu0 %v2726
        %v3665 = vpop.f32.mrb[0].mxu0
        %v3666 = vadd.f32 %v3505, %v3665
        %v3667 = vpop.f32.mrb[0].mxu0
        %v3668 = vpop.f32.mrb[0].mxu0
        %v3669 = vadd.f32 %v3508, %v3668
        %v3670 = vpop.f32.mrb[0].mxu0
        %3671 = vmatprep.mubr.bf16.mxu0 %v2746
        %3672 = vmatmul.mubr.bf16.gmra.mrb[0].mxu0 %v2727
        %v3673 = vpop.f32.mrb[0].mxu0
        %v3674 = vadd.f32 %v3513, %v3673
        %v3675 = vpop.f32.mrb[0].mxu0
        %v3676 = vpop.f32.mrb[0].mxu0
        %v3677 = vadd.f32 %v3516, %v3676
        %v3678 = vpop.f32.mrb[0].mxu0
        %3679 = vmatprep.mubr.bf16.mxu0 %v2747
        %3680 = vmatmul.mubr.bf16.gmra.mrb[0].mxu0 %v2728
        %v3681 = vpop.f32.mrb[0].mxu0
        %v3682 = vadd.f32 %v3521, %v3681
        %v3683 = vpop.f32.mrb[0].mxu0
        %v3684 = vpop.f32.mrb[0].mxu0
        %v3685 = vadd.f32 %v3524, %v3684
        %v3686 = vpop.f32.mrb[0].mxu0
        %3687 = vmatprep.mubr.bf16.mxu0 %v2748
        %3688 = vmatmul.mubr.bf16.gmra.mrb[0].mxu0 %v2729
        %v3689 = vpop.f32.mrb[0].mxu0
        %v3690 = vadd.f32 %v3529, %v3689
        %v3691 = vpop.f32.mrb[0].mxu0
        %v3692 = vpop.f32.mrb[0].mxu0
        %v3693 = vadd.f32 %v3532, %v3692
        %v3694 = vpop.f32.mrb[0].mxu0
        %3695 = vmatprep.mubr.bf16.mxu0 %v2749
        %3696 = vmatmul.mubr.bf16.gmra.mrb[0].mxu0 %v2730
        %v3697 = vpop.f32.mrb[0].mxu0
        %v3698 = vadd.f32 %v3537, %v3697
        %v3699 = vpop.f32.mrb[0].mxu0
        %v3700 = vpop.f32.mrb[0].mxu0
        %v3701 = vadd.f32 %v3540, %v3700
        %v3702 = vpop.f32.mrb[0].mxu0
        %3703 = vmatprep.mubr.bf16.mxu0 %v2750
        %3704 = vmatmul.mubr.bf16.gmra.mrb[0].mxu0 %v2731
        %v3705 = vpop.f32.mrb[0].mxu0
        %v3706 = vadd.f32 %v3545, %v3705
        %v3707 = vpop.f32.mrb[0].mxu0
        %v3708 = vpop.f32.mrb[0].mxu0
        %v3709 = vadd.f32 %v3548, %v3708
        %v3710 = vpop.f32.mrb[0].mxu0
        %3711 = vdwg.mxu0
        %3712 = vmatprep.subr.bf16.mxu0 0
        %3713 = vmatpush1.bf16.msra.mxu0 %v3278
        %3714 = vmatprep.subr.bf16.mxu0 0
        %3715 = vmatpush1.bf16.msra.mxu0 %v3279
        %3716 = vmatprep.subr.bf16.mxu0 0
        %3717 = vmatpush1.bf16.msra.mxu0 %v3280
        %3718 = vmatprep.subr.bf16.mxu0 0
        %3719 = vmatpush1.bf16.msra.mxu0 %v3281
        %3720 = vmatprep.subr.bf16.mxu0 0
        %3721 = vmatpush1.bf16.msra.mxu0 %v3282
        %3722 = vmatprep.subr.bf16.mxu0 0
        %3723 = vmatpush1.bf16.msra.mxu0 %v3283
        %3724 = vmatprep.subr.bf16.mxu0 0
        %3725 = vmatpush1.bf16.msra.mxu0 %v3284
        %3726 = vmatprep.subr.bf16.mxu0 0
        %3727 = vmatpush1.bf16.msra.mxu0 %v3285
        %3728 = vmatprep.subr.bf16.mxu0 0
        %3729 = vmatpush1.bf16.msra.mxu0 %v3286
        %3730 = vmatprep.subr.bf16.mxu0 0
        %3731 = vmatpush1.bf16.msra.mxu0 %v3287
        %3732 = vmatprep.subr.bf16.mxu0 0
        %3733 = vmatpush1.bf16.msra.mxu0 %v3288
        %3734 = vmatprep.subr.bf16.mxu0 0
        %3735 = vmatpush1.bf16.msra.mxu0 %v3289
        %3736 = vmatprep.subr.bf16.mxu0 0
        %3737 = vmatpush1.bf16.msra.mxu0 %v3290
        %3738 = vmatprep.subr.bf16.mxu0 0
        %3739 = vmatpush1.bf16.msra.mxu0 %v3291
        %3740 = vmatprep.subr.bf16.mxu0 0
        %3741 = vmatpush1.bf16.msra.mxu0 %v3292
        %3742 = vmatprep.subr.bf16.mxu0 0
        %3743 = vmatpush1.bf16.msra.mxu0 %v3293
        %3744 = vmatprep.mubr.bf16.mxu0 %v2757
        %3745 = vmatmul.mubr.bf16.gmra.mrb[0].mxu0 %v2653
        %v3746 = vpop.f32.mrb[0].mxu0
        %v3747 = vadd.f32 %v3586, %v3746
        %v3748 = vpop.f32.mrb[0].mxu0
        %v3749 = vpop.f32.mrb[0].mxu0
        %v3750 = vadd.f32 %v3589, %v3749
        %v3751 = vpop.f32.mrb[0].mxu0
        %3752 = vmatprep.mubr.bf16.mxu0 %v2758
        %3753 = vmatmul.mubr.bf16.gmra.mrb[0].mxu0 %v2654
        %v3754 = vpop.f32.mrb[0].mxu0
        %v3755 = vadd.f32 %v3594, %v3754
        %v3756 = vpop.f32.mrb[0].mxu0
        %v3757 = vpop.f32.mrb[0].mxu0
        %v3758 = vadd.f32 %v3597, %v3757
        %v3759 = vpop.f32.mrb[0].mxu0
        %3760 = vmatprep.mubr.bf16.mxu0 %v2759
        %3761 = vmatmul.mubr.bf16.gmra.mrb[0].mxu0 %v2655
        %v3762 = vpop.f32.mrb[0].mxu0
        %v3763 = vadd.f32 %v3602, %v3762
        %v3764 = vpop.f32.mrb[0].mxu0
        %v3765 = vpop.f32.mrb[0].mxu0
        %v3766 = vadd.f32 %v3605, %v3765
        %v3767 = vpop.f32.mrb[0].mxu0
        %3768 = vmatprep.mubr.bf16.mxu0 %v2760
        %3769 = vmatmul.mubr.bf16.gmra.mrb[0].mxu0 %v2656
        %v3770 = vpop.f32.mrb[0].mxu0
        %v3771 = vadd.f32 %v3610, %v3770
        %v3772 = vpop.f32.mrb[0].mxu0
        %v3773 = vpop.f32.mrb[0].mxu0
        %v3774 = vadd.f32 %v3613, %v3773
        %v3775 = vpop.f32.mrb[0].mxu0
        %3776 = vmatprep.mubr.bf16.mxu0 %v2761
        %3777 = vmatmul.mubr.bf16.gmra.mrb[0].mxu0 %v2657
        %v3778 = vpop.f32.mrb[0].mxu0
        %v3779 = vadd.f32 %v3618, %v3778
        %v3780 = vpop.f32.mrb[0].mxu0
        %v3781 = vpop.f32.mrb[0].mxu0
        %v3782 = vadd.f32 %v3621, %v3781
        %v3783 = vpop.f32.mrb[0].mxu0
        %3784 = vmatprep.mubr.bf16.mxu0 %v2762
        %3785 = vmatmul.mubr.bf16.gmra.mrb[0].mxu0 %v2658
        %v3786 = vpop.f32.mrb[0].mxu0
        %v3787 = vadd.f32 %v3626, %v3786
        %v3788 = vpop.f32.mrb[0].mxu0
        %v3789 = vpop.f32.mrb[0].mxu0
        %v3790 = vadd.f32 %v3629, %v3789
        %v3791 = vpop.f32.mrb[0].mxu0
        %3792 = vmatprep.mubr.bf16.mxu0 %v2763
        %3793 = vmatmul.mubr.bf16.gmra.mrb[0].mxu0 %v2659
        %v3794 = vpop.f32.mrb[0].mxu0
        %v3795 = vadd.f32 %v3634, %v3794
        %v3796 = vpop.f32.mrb[0].mxu0
        %v3797 = vpop.f32.mrb[0].mxu0
        %v3798 = vadd.f32 %v3637, %v3797
        %v3799 = vpop.f32.mrb[0].mxu0
        %3800 = vmatprep.mubr.bf16.mxu0 %v2764
        %3801 = vmatmul.mubr.bf16.gmra.mrb[0].mxu0 %v2660
        %v3802 = vpop.f32.mrb[0].mxu0
        %v3803 = vadd.f32 %v3642, %v3802
        %v3804 = vpop.f32.mrb[0].mxu0
        %v3805 = vpop.f32.mrb[0].mxu0
        %v3806 = vadd.f32 %v3645, %v3805
        %v3807 = vpop.f32.mrb[0].mxu0
        %3808 = vmatprep.mubr.bf16.mxu0 %v2765
        %3809 = vmatmul.mubr.bf16.gmra.mrb[0].mxu0 %v2661
        %v3810 = vpop.f32.mrb[0].mxu0
        %v3811 = vadd.f32 %v3650, %v3810
        %v3812 = vpop.f32.mrb[0].mxu0
        %v3813 = vpop.f32.mrb[0].mxu0
        %v3814 = vadd.f32 %v3653, %v3813
        %v3815 = vpop.f32.mrb[0].mxu0
        %3816 = vmatprep.mubr.bf16.mxu0 %v2766
        %3817 = vmatmul.mubr.bf16.gmra.mrb[0].mxu0 %v2662
        %v3818 = vpop.f32.mrb[0].mxu0
        %v3819 = vadd.f32 %v3658, %v3818
        %v3820 = vpop.f32.mrb[0].mxu0
        %v3821 = vpop.f32.mrb[0].mxu0
        %v3822 = vadd.f32 %v3661, %v3821
        %v3823 = vpop.f32.mrb[0].mxu0
        %3824 = vmatprep.mubr.bf16.mxu0 %v2767
        %3825 = vmatmul.mubr.bf16.gmra.mrb[0].mxu0 %v2663
        %v3826 = vpop.f32.mrb[0].mxu0
        %v3827 = vadd.f32 %v3666, %v3826
        %v3828 = vpop.f32.mrb[0].mxu0
        %v3829 = vpop.f32.mrb[0].mxu0
        %v3830 = vadd.f32 %v3669, %v3829
        %v3831 = vpop.f32.mrb[0].mxu0
        %3832 = vmatprep.mubr.bf16.mxu0 %v2768
        %3833 = vmatmul.mubr.bf16.gmra.mrb[0].mxu0 %v2664
        %v3834 = vpop.f32.mrb[0].mxu0
        %v3835 = vadd.f32 %v3674, %v3834
        %v3836 = vpop.f32.mrb[0].mxu0
        %v3837 = vpop.f32.mrb[0].mxu0
        %v3838 = vadd.f32 %v3677, %v3837
        %v3839 = vpop.f32.mrb[0].mxu0
        %3840 = vmatprep.mubr.bf16.mxu0 %v2769
        %3841 = vmatmul.mubr.bf16.gmra.mrb[0].mxu0 %v2665
        %v3842 = vpop.f32.mrb[0].mxu0
        %v3843 = vadd.f32 %v3682, %v3842
        %v3844 = vpop.f32.mrb[0].mxu0
        %v3845 = vpop.f32.mrb[0].mxu0
        %v3846 = vadd.f32 %v3685, %v3845
        %v3847 = vpop.f32.mrb[0].mxu0
        %3848 = vmatprep.mubr.bf16.mxu0 %v2770
        %3849 = vmatmul.mubr.bf16.gmra.mrb[0].mxu0 %v2666
        %v3850 = vpop.f32.mrb[0].mxu0
        %v3851 = vadd.f32 %v3690, %v3850
        %v3852 = vpop.f32.mrb[0].mxu0
        %v3853 = vpop.f32.mrb[0].mxu0
        %v3854 = vadd.f32 %v3693, %v3853
        %v3855 = vpop.f32.mrb[0].mxu0
        %3856 = vmatprep.mubr.bf16.mxu0 %v2771
        %3857 = vmatmul.mubr.bf16.gmra.mrb[0].mxu0 %v2667
        %v3858 = vpop.f32.mrb[0].mxu0
        %v3859 = vadd.f32 %v3698, %v3858
        %v3860 = vpop.f32.mrb[0].mxu0
        %v3861 = vpop.f32.mrb[0].mxu0
        %v3862 = vadd.f32 %v3701, %v3861
        %v3863 = vpop.f32.mrb[0].mxu0
        %3864 = vmatprep.mubr.bf16.mxu0 %v2772
        %3865 = vmatmul.mubr.bf16.gmra.mrb[0].mxu0 %v2753
        %v3866 = vpop.f32.mrb[0].mxu0
        %v3867 = vadd.f32 %v3706, %v3866
        %v3868 = vpop.f32.mrb[0].mxu0
        %v3869 = vpop.f32.mrb[0].mxu0
        %v3870 = vadd.f32 %v3709, %v3869
        %v3871 = vpop.f32.mrb[0].mxu0
        %3872 = vdwg.mxu0
        %3873 = vmatprep.subr.bf16.mxu0 0
        %3874 = vmatpush1.bf16.msra.mxu0 %v3294
        %3875 = vmatprep.subr.bf16.mxu0 0
        %3876 = vmatpush1.bf16.msra.mxu0 %v3295
        %3877 = vmatprep.subr.bf16.mxu0 0
        %3878 = vmatpush1.bf16.msra.mxu0 %v3296
        %3879 = vmatprep.subr.bf16.mxu0 0
        %3880 = vmatpush1.bf16.msra.mxu0 %v3297
        %3881 = vmatprep.subr.bf16.mxu0 0
        %3882 = vmatpush1.bf16.msra.mxu0 %v3298
        %3883 = vmatprep.subr.bf16.mxu0 0
        %3884 = vmatpush1.bf16.msra.mxu0 %v3299
        %3885 = vmatprep.subr.bf16.mxu0 0
        %3886 = vmatpush1.bf16.msra.mxu0 %v3300
        %3887 = vmatprep.subr.bf16.mxu0 0
        %3888 = vmatpush1.bf16.msra.mxu0 %v3301
        %3889 = vmatprep.subr.bf16.mxu0 0
        %3890 = vmatpush1.bf16.msra.mxu0 %v3302
        %3891 = vmatprep.subr.bf16.mxu0 0
        %3892 = vmatpush1.bf16.msra.mxu0 %v3303
        %3893 = vmatprep.subr.bf16.mxu0 0
        %3894 = vmatpush1.bf16.msra.mxu0 %v3304
        %3895 = vmatprep.subr.bf16.mxu0 0
        %3896 = vmatpush1.bf16.msra.mxu0 %v3305
        %3897 = vmatprep.subr.bf16.mxu0 0
        %3898 = vmatpush1.bf16.msra.mxu0 %v3306
        %3899 = vmatprep.subr.bf16.mxu0 0
        %3900 = vmatpush1.bf16.msra.mxu0 %v3307
        %3901 = vmatprep.subr.bf16.mxu0 0
        %3902 = vmatpush1.bf16.msra.mxu0 %v3308
        %3903 = vmatprep.subr.bf16.mxu0 0
        %3904 = vmatpush1.bf16.msra.mxu0 %v3309
        %3905 = vmatprep.mubr.bf16.mxu0 %v2654
        %3906 = vmatmul.mubr.bf16.gmra.mrb[0].mxu0 %v2776
        %v3907 = vpop.f32.mrb[0].mxu0
        %v3908 = vadd.f32 %v3747, %v3907
        %v3909 = vpop.f32.mrb[0].mxu0
        %v3910 = vpop.f32.mrb[0].mxu0
        %v3911 = vadd.f32 %v3750, %v3910
        %v3912 = vpop.f32.mrb[0].mxu0
        %3913 = vmatprep.mubr.bf16.mxu0 %v2655
        %3914 = vmatmul.mubr.bf16.gmra.mrb[0].mxu0 %v2777
        %v3915 = vpop.f32.mrb[0].mxu0
        %v3916 = vadd.f32 %v3755, %v3915
        %v3917 = vpop.f32.mrb[0].mxu0
        %v3918 = vpop.f32.mrb[0].mxu0
        %v3919 = vadd.f32 %v3758, %v3918
        %v3920 = vpop.f32.mrb[0].mxu0
        %3921 = vmatprep.mubr.bf16.mxu0 %v2656
        %3922 = vmatmul.mubr.bf16.gmra.mrb[0].mxu0 %v2778
        %v3923 = vpop.f32.mrb[0].mxu0
        %v3924 = vadd.f32 %v3763, %v3923
        %v3925 = vpop.f32.mrb[0].mxu0
        %v3926 = vpop.f32.mrb[0].mxu0
        %v3927 = vadd.f32 %v3766, %v3926
        %v3928 = vpop.f32.mrb[0].mxu0
        %3929 = vmatprep.mubr.bf16.mxu0 %v2657
        %3930 = vmatmul.mubr.bf16.gmra.mrb[0].mxu0 %v2779
        %v3931 = vpop.f32.mrb[0].mxu0
        %v3932 = vadd.f32 %v3771, %v3931
        %v3933 = vpop.f32.mrb[0].mxu0
        %v3934 = vpop.f32.mrb[0].mxu0
        %v3935 = vadd.f32 %v3774, %v3934
        %v3936 = vpop.f32.mrb[0].mxu0
        %3937 = vmatprep.mubr.bf16.mxu0 %v2658
        %3938 = vmatmul.mubr.bf16.gmra.mrb[0].mxu0 %v2780
        %v3939 = vpop.f32.mrb[0].mxu0
        %v3940 = vadd.f32 %v3779, %v3939
        %v3941 = vpop.f32.mrb[0].mxu0
        %v3942 = vpop.f32.mrb[0].mxu0
        %v3943 = vadd.f32 %v3782, %v3942
        %v3944 = vpop.f32.mrb[0].mxu0
        %3945 = vmatprep.mubr.bf16.mxu0 %v2659
        %3946 = vmatmul.mubr.bf16.gmra.mrb[0].mxu0 %v2781
        %v3947 = vpop.f32.mrb[0].mxu0
        %v3948 = vadd.f32 %v3787, %v3947
        %v3949 = vpop.f32.mrb[0].mxu0
        %v3950 = vpop.f32.mrb[0].mxu0
        %v3951 = vadd.f32 %v3790, %v3950
        %v3952 = vpop.f32.mrb[0].mxu0
        %3953 = vmatprep.mubr.bf16.mxu0 %v2660
        %3954 = vmatmul.mubr.bf16.gmra.mrb[0].mxu0 %v2782
        %v3955 = vpop.f32.mrb[0].mxu0
        %v3956 = vadd.f32 %v3795, %v3955
        %v3957 = vpop.f32.mrb[0].mxu0
        %v3958 = vpop.f32.mrb[0].mxu0
        %v3959 = vadd.f32 %v3798, %v3958
        %v3960 = vpop.f32.mrb[0].mxu0
        %3961 = vmatprep.mubr.bf16.mxu0 %v2661
        %3962 = vmatmul.mubr.bf16.gmra.mrb[0].mxu0 %v2783
        %v3963 = vpop.f32.mrb[0].mxu0
        %v3964 = vadd.f32 %v3803, %v3963
        %v3965 = vpop.f32.mrb[0].mxu0
        %v3966 = vpop.f32.mrb[0].mxu0
        %v3967 = vadd.f32 %v3806, %v3966
        %v3968 = vpop.f32.mrb[0].mxu0
        %3969 = vmatprep.mubr.bf16.mxu0 %v2662
        %3970 = vmatmul.mubr.bf16.gmra.mrb[0].mxu0 %v2784
        %v3971 = vpop.f32.mrb[0].mxu0
        %v3972 = vadd.f32 %v3811, %v3971
        %v3973 = vpop.f32.mrb[0].mxu0
        %v3974 = vpop.f32.mrb[0].mxu0
        %v3975 = vadd.f32 %v3814, %v3974
        %v3976 = vpop.f32.mrb[0].mxu0
        %3977 = vmatprep.mubr.bf16.mxu0 %v2663
        %3978 = vmatmul.mubr.bf16.gmra.mrb[0].mxu0 %v2785
        %v3979 = vpop.f32.mrb[0].mxu0
        %v3980 = vadd.f32 %v3819, %v3979
        %v3981 = vpop.f32.mrb[0].mxu0
        %v3982 = vpop.f32.mrb[0].mxu0
        %v3983 = vadd.f32 %v3822, %v3982
        %v3984 = vpop.f32.mrb[0].mxu0
        %3985 = vmatprep.mubr.bf16.mxu0 %v2664
        %3986 = vmatmul.mubr.bf16.gmra.mrb[0].mxu0 %v2786
        %v3987 = vpop.f32.mrb[0].mxu0
        %v3988 = vadd.f32 %v3827, %v3987
        %v3989 = vpop.f32.mrb[0].mxu0
        %v3990 = vpop.f32.mrb[0].mxu0
        %v3991 = vadd.f32 %v3830, %v3990
        %v3992 = vpop.f32.mrb[0].mxu0
        %3993 = vmatprep.mubr.bf16.mxu0 %v2665
        %3994 = vmatmul.mubr.bf16.gmra.mrb[0].mxu0 %v2787
        %v3995 = vpop.f32.mrb[0].mxu0
        %v3996 = vadd.f32 %v3835, %v3995
        %v3997 = vpop.f32.mrb[0].mxu0
        %v3998 = vpop.f32.mrb[0].mxu0
        %v3999 = vadd.f32 %v3838, %v3998
        %v4000 = vpop.f32.mrb[0].mxu0
        %4001 = vmatprep.mubr.bf16.mxu0 %v2666
        %4002 = vmatmul.mubr.bf16.gmra.mrb[0].mxu0 %v2788
        %v4003 = vpop.f32.mrb[0].mxu0
        %v4004 = vadd.f32 %v3843, %v4003
        %v4005 = vpop.f32.mrb[0].mxu0
        %v4006 = vpop.f32.mrb[0].mxu0
        %v4007 = vadd.f32 %v3846, %v4006
        %v4008 = vpop.f32.mrb[0].mxu0
        %4009 = vmatprep.mubr.bf16.mxu0 %v2667
        %4010 = vmatmul.mubr.bf16.gmra.mrb[0].mxu0 %v2789
        %v4011 = vpop.f32.mrb[0].mxu0
        %v4012 = vadd.f32 %v3851, %v4011
        %v4013 = vpop.f32.mrb[0].mxu0
        %v4014 = vpop.f32.mrb[0].mxu0
        %v4015 = vadd.f32 %v3854, %v4014
        %v4016 = vpop.f32.mrb[0].mxu0
        %4017 = vmatprep.mubr.bf16.mxu0 %v2753
        %4018 = vmatmul.mubr.bf16.gmra.mrb[0].mxu0 %v2790
        %v4019 = vpop.f32.mrb[0].mxu0
        %v4020 = vadd.f32 %v3859, %v4019
        %v4021 = vpop.f32.mrb[0].mxu0
        %v4022 = vpop.f32.mrb[0].mxu0
        %v4023 = vadd.f32 %v3862, %v4022
        %v4024 = vpop.f32.mrb[0].mxu0
        %4025 = vmatprep.mubr.bf16.mxu0 %v2794
        %4026 = vmatmul.mubr.bf16.gmra.mrb[0].mxu0 %v2791
        %v4027 = vpop.f32.mrb[0].mxu0
        %v4028 = vadd.f32 %v3867, %v4027
        %v4029 = vpop.f32.mrb[0].mxu0
        %v4030 = vpop.f32.mrb[0].mxu0
        %v4031 = vadd.f32 %v3870, %v4030
        %v4032 = vpop.f32.mrb[0].mxu0
        %4033 = vdwg.mxu0
        %4034 = vmatprep.subr.bf16.mxu0 0
        %4035 = vmatpush1.bf16.msra.mxu0 %v3310
        %4036 = vmatprep.subr.bf16.mxu0 0
        %4037 = vmatpush1.bf16.msra.mxu0 %v3311
        %4038 = vmatprep.subr.bf16.mxu0 0
        %4039 = vmatpush1.bf16.msra.mxu0 %v3312
        %4040 = vmatprep.subr.bf16.mxu0 0
        %4041 = vmatpush1.bf16.msra.mxu0 %v3313
        %4042 = vmatprep.subr.bf16.mxu0 0
        %4043 = vmatpush1.bf16.msra.mxu0 %v3314
        %4044 = vmatprep.subr.bf16.mxu0 0
        %4045 = vmatpush1.bf16.msra.mxu0 %v3315
        %4046 = vmatprep.subr.bf16.mxu0 0
        %4047 = vmatpush1.bf16.msra.mxu0 %v3316
        %4048 = vmatprep.subr.bf16.mxu0 0
        %4049 = vmatpush1.bf16.msra.mxu0 %v3317
        %4050 = vmatprep.subr.bf16.mxu0 0
        %4051 = vmatpush1.bf16.msra.mxu0 0
        %4052 = vmatprep.subr.bf16.mxu0 0
        %4053 = vmatpush1.bf16.msra.mxu0 0
        %4054 = vmatprep.subr.bf16.mxu0 0
        %4055 = vmatpush1.bf16.msra.mxu0 0
        %4056 = vmatprep.subr.bf16.mxu0 0
        %4057 = vmatpush1.bf16.msra.mxu0 0
        %4058 = vmatprep.subr.bf16.mxu0 0
        %4059 = vmatpush1.bf16.msra.mxu0 0
        %4060 = vmatprep.subr.bf16.mxu0 0
        %4061 = vmatpush1.bf16.msra.mxu0 0
        %4062 = vmatprep.subr.bf16.mxu0 0
        %4063 = vmatpush1.bf16.msra.mxu0 0
        %4064 = vmatprep.subr.bf16.mxu0 0
        %4065 = vmatpush1.bf16.msra.mxu0 0
        %4066 = vmatprep.mubr.bf16.mxu0 0
        %4067 = vmatmul.mubr.bf16.gmra.mrb[0].mxu0 %v2798
        %v4068 = vpop.f32.mrb[0].mxu0
        %v4069 = vadd.f32 %v3908, %v4068
        %v4070 = vpop.f32.mrb[0].mxu0
        %v4071 = vpop.f32.mrb[0].mxu0
        %v4072 = vadd.f32 %v3911, %v4071
        %v4073 = vpop.f32.mrb[0].mxu0
        %4074 = vmatprep.mubr.bf16.mxu0 0
        %4075 = vmatmul.mubr.bf16.gmra.mrb[0].mxu0 %v2799
        %v4076 = vpop.f32.mrb[0].mxu0
        %v4077 = vadd.f32 %v3916, %v4076
        %v4078 = vpop.f32.mrb[0].mxu0
        %v4079 = vpop.f32.mrb[0].mxu0
        %v4080 = vadd.f32 %v3919, %v4079
        %v4081 = vpop.f32.mrb[0].mxu0
        %4082 = vmatprep.mubr.bf16.mxu0 0
        %4083 = vmatmul.mubr.bf16.gmra.mrb[0].mxu0 %v2800
        %v4084 = vpop.f32.mrb[0].mxu0
        %v4085 = vadd.f32 %v3924, %v4084
        %v4086 = vpop.f32.mrb[0].mxu0
        %v4087 = vpop.f32.mrb[0].mxu0
        %v4088 = vadd.f32 %v3927, %v4087
        %v4089 = vpop.f32.mrb[0].mxu0
        %4090 = vmatprep.mubr.bf16.mxu0 0
        %4091 = vmatmul.mubr.bf16.gmra.mrb[0].mxu0 %v2801
        %v4092 = vpop.f32.mrb[0].mxu0
        %v4093 = vadd.f32 %v3932, %v4092
        %v4094 = vpop.f32.mrb[0].mxu0
        %v4095 = vpop.f32.mrb[0].mxu0
        %v4096 = vadd.f32 %v3935, %v4095
        %v4097 = vpop.f32.mrb[0].mxu0
        %4098 = vmatprep.mubr.bf16.mxu0 0
        %4099 = vmatmul.mubr.bf16.gmra.mrb[0].mxu0 %v2802
        %v4100 = vpop.f32.mrb[0].mxu0
        %v4101 = vadd.f32 %v3940, %v4100
        %v4102 = vpop.f32.mrb[0].mxu0
        %v4103 = vpop.f32.mrb[0].mxu0
        %v4104 = vadd.f32 %v3943, %v4103
        %v4105 = vpop.f32.mrb[0].mxu0
        %4106 = vmatprep.mubr.bf16.mxu0 0
        %4107 = vmatmul.mubr.bf16.gmra.mrb[0].mxu0 %v2803
        %v4108 = vpop.f32.mrb[0].mxu0
        %v4109 = vadd.f32 %v3948, %v4108
        %v4110 = vpop.f32.mrb[0].mxu0
        %v4111 = vpop.f32.mrb[0].mxu0
        %v4112 = vadd.f32 %v3951, %v4111
        %v4113 = vpop.f32.mrb[0].mxu0
        %4114 = vmatprep.mubr.bf16.mxu0 0
        %4115 = vmatmul.mubr.bf16.gmra.mrb[0].mxu0 %v2804
        %v4116 = vpop.f32.mrb[0].mxu0
        %v4117 = vadd.f32 %v3956, %v4116
        %v4118 = vpop.f32.mrb[0].mxu0
        %v4119 = vpop.f32.mrb[0].mxu0
        %v4120 = vadd.f32 %v3959, %v4119
        %v4121 = vpop.f32.mrb[0].mxu0
        %4122 = vmatprep.mubr.bf16.mxu0 0
        %4123 = vmatmul.mubr.bf16.gmra.mrb[0].mxu0 %v2805
        %v4124 = vpop.f32.mrb[0].mxu0
        %v4125 = vadd.f32 %v3964, %v4124
        %v4126 = vpop.f32.mrb[0].mxu0
        %v4127 = vpop.f32.mrb[0].mxu0
        %v4128 = vadd.f32 %v3967, %v4127
        %v4129 = vpop.f32.mrb[0].mxu0
        %4130 = vmatprep.mubr.bf16.mxu0 0
        %4131 = vmatmul.mubr.bf16.gmra.mrb[0].mxu0 %v2806
        %v4132 = vpop.f32.mrb[0].mxu0
        %v4133 = vadd.f32 %v3972, %v4132
        %v4134 = vpop.f32.mrb[0].mxu0
        %v4135 = vpop.f32.mrb[0].mxu0
        %v4136 = vadd.f32 %v3975, %v4135
        %v4137 = vpop.f32.mrb[0].mxu0
        %4138 = vmatprep.mubr.bf16.mxu0 0
        %4139 = vmatmul.mubr.bf16.gmra.mrb[0].mxu0 %v2807
        %v4140 = vpop.f32.mrb[0].mxu0
        %v4141 = vadd.f32 %v3980, %v4140
        %v4142 = vpop.f32.mrb[0].mxu0
        %v4143 = vpop.f32.mrb[0].mxu0
        %v4144 = vadd.f32 %v3983, %v4143
        %v4145 = vpop.f32.mrb[0].mxu0
        %4146 = vmatprep.mubr.bf16.mxu0 0
        %4147 = vmatmul.mubr.bf16.gmra.mrb[0].mxu0 %v2808
        %v4148 = vpop.f32.mrb[0].mxu0
        %v4149 = vadd.f32 %v3988, %v4148
        %v4150 = vpop.f32.mrb[0].mxu0
        %v4151 = vpop.f32.mrb[0].mxu0
        %v4152 = vadd.f32 %v3991, %v4151
        %v4153 = vpop.f32.mrb[0].mxu0
        %4154 = vmatprep.mubr.bf16.mxu0 0
        %4155 = vmatmul.mubr.bf16.gmra.mrb[0].mxu0 %v2809
        %v4156 = vpop.f32.mrb[0].mxu0
        %v4157 = vadd.f32 %v3996, %v4156
        %v4158 = vpop.f32.mrb[0].mxu0
        %v4159 = vpop.f32.mrb[0].mxu0
        %v4160 = vadd.f32 %v3999, %v4159
        %v4161 = vpop.f32.mrb[0].mxu0
        %4162 = vmatprep.mubr.bf16.mxu0 0
        %4163 = vmatmul.mubr.bf16.gmra.mrb[0].mxu0 %v2810
        %v4164 = vpop.f32.mrb[0].mxu0
        %v4165 = vadd.f32 %v4004, %v4164
        %v4166 = vpop.f32.mrb[0].mxu0
        %v4167 = vpop.f32.mrb[0].mxu0
        %v4168 = vadd.f32 %v4007, %v4167
        %v4169 = vpop.f32.mrb[0].mxu0
        %4170 = vmatprep.mubr.bf16.mxu0 0
        %4171 = vmatmul.mubr.bf16.gmra.mrb[0].mxu0 %v2811
        %v4172 = vpop.f32.mrb[0].mxu0
        %v4173 = vadd.f32 %v4012, %v4172
        %v4174 = vpop.f32.mrb[0].mxu0
        %v4175 = vpop.f32.mrb[0].mxu0
        %v4176 = vadd.f32 %v4015, %v4175
        %v4177 = vpop.f32.mrb[0].mxu0
        %4178 = vmatprep.mubr.bf16.mxu0 0
        %4179 = vmatmul.mubr.bf16.gmra.mrb[0].mxu0 %v2812
        %v4180 = vpop.f32.mrb[0].mxu0
        %v4181 = vadd.f32 %v4020, %v4180
        %v4182 = vpop.f32.mrb[0].mxu0
        %v4183 = vpop.f32.mrb[0].mxu0
        %v4184 = vadd.f32 %v4023, %v4183
        %v4185 = vpop.f32.mrb[0].mxu0
        %4186 = vmatprep.mubr.bf16.mxu0 0
        %4187 = vmatmul.mubr.bf16.gmra.mrb[0].mxu0 %v2813
        %v4188 = vpop.f32.mrb[0].mxu0
        %v4189 = vadd.f32 %v4028, %v4188
        %v4190 = vpop.f32.mrb[0].mxu0
        %v4191 = vpop.f32.mrb[0].mxu0
        %v4192 = vadd.f32 %v4031, %v4191
        %v4193 = vpop.f32.mrb[0].mxu0
        %4194 = vdwg.mxu0
        %v4195 = vadd.f32 %v4069, %v4072
        %v4196 = vadd.f32 %v4195, %v4077
        %v4197 = vadd.f32 %v4196, %v4080
        %v4198 = vadd.f32 %v4197, %v4085
        %v4199 = vadd.f32 %v4198, %v4088
        %v4200 = vadd.f32 %v4199, %v4093
        %v4201 = vadd.f32 %v4200, %v4096
        %v4202 = vadd.f32 %v4201, %v4101
        %v4203 = vadd.f32 %v4202, %v4104
        %v4204 = vadd.f32 %v4203, %v4109
        %v4205 = vadd.f32 %v4204, %v4112
        %v4206 = vadd.f32 %v4205, %v4117
        %v4207 = vadd.f32 %v4206, %v4120
        %v4208 = vadd.f32 %v4207, %v4125
        %v4209 = vadd.f32 %v4208, %v4128
        %v4210 = vadd.f32 %v4209, %v4133
        %v4211 = vadd.f32 %v4210, %v4136
        %v4212 = vadd.f32 %v4211, %v4141
        %v4213 = vadd.f32 %v4212, %v4144
        %v4214 = vadd.f32 %v4213, %v4149
        %v4215 = vadd.f32 %v4214, %v4152
        %v4216 = vadd.f32 %v4215, %v4157
        %v4217 = vadd.f32 %v4216, %v4160
        %v4218 = vadd.f32 %v4217, %v4165
        %v4219 = vadd.f32 %v4218, %v4168
        %v4220 = vadd.f32 %v4219, %v4173
        %v4221 = vadd.f32 %v4220, %v4176
        %v4222 = vadd.f32 %v4221, %v4181
        %v4223 = vadd.f32 %v4222, %v4184
        %v4224 = vadd.f32 %v4223, %v4189
        %v4225 = vadd.f32 %v4224, %v4192
        %v4226 = vrot.slane %v4225, 4
        %v4227 = vadd.f32 %v4225, %v4226
        %v4228 = vrot.slane %v4227, 2
        %v4229 = vadd.f32 %v4227, %v4228
        %v4230 = vrot.slane %v4229, 1
        %v4231 = vadd.f32 %v4229, %v4230
        %v4232 = vmul.f32 %v4231, %v2354
        %v4233 = vsub.f32 %v4069, %v4232
        %v4234 = vsub.f32 %v4072, %v4232
        %v4235 = vsub.f32 %v4077, %v4232
        %v4236 = vsub.f32 %v4080, %v4232
        %v4237 = vsub.f32 %v4085, %v4232
        %v4238 = vsub.f32 %v4088, %v4232
        %v4239 = vsub.f32 %v4093, %v4232
        %v4240 = vsub.f32 %v4096, %v4232
        %v4241 = vsub.f32 %v4101, %v4232
        %v4242 = vsub.f32 %v4104, %v4232
        %v4243 = vsub.f32 %v4109, %v4232
        %v4244 = vsub.f32 %v4112, %v4232
        %v4245 = vsub.f32 %v4117, %v4232
        %v4246 = vsub.f32 %v4120, %v4232
        %v4247 = vsub.f32 %v4125, %v4232
        %v4248 = vsub.f32 %v4128, %v4232
        %v4249 = vsub.f32 %v4133, %v4232
        %v4250 = vsub.f32 %v4136, %v4232
        %v4251 = vsub.f32 %v4141, %v4232
        %v4252 = vsub.f32 %v4144, %v4232
        %v4253 = vsub.f32 %v4149, %v4232
        %v4254 = vsub.f32 %v4152, %v4232
        %v4255 = vsub.f32 %v4157, %v4232
        %v4256 = vsub.f32 %v4160, %v4232
        %v4257 = vsub.f32 %v4165, %v4232
        %v4258 = vsub.f32 %v4168, %v4232
        %v4259 = vsub.f32 %v4173, %v4232
        %v4260 = vsub.f32 %v4176, %v4232
        %v4261 = vsub.f32 %v4181, %v4232
        %v4262 = vsub.f32 %v4184, %v4232
        %v4263 = vsub.f32 %v4189, %v4232
        %v4264 = vsub.f32 %v4192, %v4232
        %v4265 = vmul.f32 %v4233, %v4233
        %v4266 = vmul.f32 %v4234, %v4234
        %v4267 = vmul.f32 %v4235, %v4235
        %v4268 = vmul.f32 %v4236, %v4236
        %v4269 = vmul.f32 %v4237, %v4237
        %v4270 = vmul.f32 %v4238, %v4238
        %v4271 = vmul.f32 %v4239, %v4239
        %v4272 = vmul.f32 %v4240, %v4240
        %v4273 = vmul.f32 %v4241, %v4241
        %v4274 = vmul.f32 %v4242, %v4242
        %v4275 = vmul.f32 %v4243, %v4243
        %v4276 = vmul.f32 %v4244, %v4244
        %v4277 = vmul.f32 %v4245, %v4245
        %v4278 = vmul.f32 %v4246, %v4246
        %v4279 = vmul.f32 %v4247, %v4247
        %v4280 = vmul.f32 %v4248, %v4248
        %v4281 = vmul.f32 %v4249, %v4249
        %v4282 = vmul.f32 %v4250, %v4250
        %v4283 = vmul.f32 %v4251, %v4251
        %v4284 = vmul.f32 %v4252, %v4252
        %v4285 = vmul.f32 %v4253, %v4253
        %v4286 = vmul.f32 %v4254, %v4254
        %v4287 = vmul.f32 %v4255, %v4255
        %v4288 = vmul.f32 %v4256, %v4256
        %v4289 = vmul.f32 %v4257, %v4257
        %v4290 = vmul.f32 %v4258, %v4258
        %v4291 = vmul.f32 %v4259, %v4259
        %v4292 = vmul.f32 %v4260, %v4260
        %v4293 = vmul.f32 %v4261, %v4261
        %v4294 = vmul.f32 %v4262, %v4262
        %v4295 = vmul.f32 %v4263, %v4263
        %v4296 = vmul.f32 %v4264, %v4264
        %v4297 = vadd.f32 %v4265, %v4266
        %v4298 = vadd.f32 %v4297, %v4267
        %v4299 = vadd.f32 %v4298, %v4268
        %v4300 = vadd.f32 %v4299, %v4269
        %v4301 = vadd.f32 %v4300, %v4270
        %v4302 = vadd.f32 %v4301, %v4271
        %v4303 = vadd.f32 %v4302, %v4272
        %v4304 = vadd.f32 %v4303, %v4273
        %v4305 = vadd.f32 %v4304, %v4274
        %v4306 = vadd.f32 %v4305, %v4275
        %v4307 = vadd.f32 %v4306, %v4276
        %v4308 = vadd.f32 %v4307, %v4277
        %v4309 = vadd.f32 %v4308, %v4278
        %v4310 = vadd.f32 %v4309, %v4279
        %v4311 = vadd.f32 %v4310, %v4280
        %v4312 = vadd.f32 %v4311, %v4281
        %v4313 = vadd.f32 %v4312, %v4282
        %v4314 = vadd.f32 %v4313, %v4283
        %v4315 = vadd.f32 %v4314, %v4284
        %v4316 = vadd.f32 %v4315, %v4285
        %v4317 = vadd.f32 %v4316, %v4286
        %v4318 = vadd.f32 %v4317, %v4287
        %v4319 = vadd.f32 %v4318, %v4288
        %v4320 = vadd.f32 %v4319, %v4289
        %v4321 = vadd.f32 %v4320, %v4290
        %v4322 = vadd.f32 %v4321, %v4291
        %v4323 = vadd.f32 %v4322, %v4292
        %v4324 = vadd.f32 %v4323, %v4293
        %v4325 = vadd.f32 %v4324, %v4294
        %v4326 = vadd.f32 %v4325, %v4295
        %v4327 = vadd.f32 %v4326, %v4296
        %v4328 = vrot.slane %v4327, 4
        %v4329 = vadd.f32 %v4327, %v4328
        %v4330 = vrot.slane %v4329, 2
        %v4331 = vadd.f32 %v4329, %v4330
        %v4332 = vrot.slane %v4331, 1
        %v4333 = vadd.f32 %v4331, %v4332
        %v4334 = vmul.f32 %v4333, %v2354
        %v4335 = vadd.f32 %v4334, 1e-05
        %v4336 = vrsqrt.pop %v4335
        %v4337 = vmul.f32 %v4233, %v4336
        %v4338 = vmul.f32 %v4234, %v4336
        %v4339 = vmul.f32 %v4235, %v4336
        %v4340 = vmul.f32 %v4236, %v4336
        %v4341 = vmul.f32 %v4237, %v4336
        %v4342 = vmul.f32 %v4238, %v4336
        %v4343 = vmul.f32 %v4239, %v4336
        %v4344 = vmul.f32 %v4240, %v4336
        %v4345 = vmul.f32 %v4241, %v4336
        %v4346 = vmul.f32 %v4242, %v4336
        %v4347 = vmul.f32 %v4243, %v4336
        %v4348 = vmul.f32 %v4244, %v4336
        %v4349 = vmul.f32 %v4245, %v4336
        %v4350 = vmul.f32 %v4246, %v4336
        %v4351 = vmul.f32 %v4247, %v4336
        %v4352 = vmul.f32 %v4248, %v4336
        %v4353 = vmul.f32 %v4249, %v4336
        %v4354 = vmul.f32 %v4250, %v4336
        %v4355 = vmul.f32 %v4251, %v4336
        %v4356 = vmul.f32 %v4252, %v4336
        %v4357 = vmul.f32 %v4253, %v4336
        %v4358 = vmul.f32 %v4254, %v4336
        %v4359 = vmul.f32 %v4255, %v4336
        %v4360 = vmul.f32 %v4256, %v4336
        %v4361 = vmul.f32 %v4257, %v4336
        %v4362 = vmul.f32 %v4258, %v4336
        %v4363 = vmul.f32 %v4259, %v4336
        %v4364 = vmul.f32 %v4260, %v4336
        %v4365 = vmul.f32 %v4261, %v4336
        %v4366 = vmul.f32 %v4262, %v4336
        %v4367 = vmul.f32 %v4263, %v4336
        %v4368 = vmul.f32 %v4264, %v4336
        %v4369 = vadd.f32 %v4337, %v358
        %v4370 = vadd.f32 %v4338, %v359
        %v4371 = vadd.f32 %v4339, %v360
        %v4372 = vadd.f32 %v4340, %v361
        %v4373 = vadd.f32 %v4341, %v362
        %v4374 = vadd.f32 %v4342, %v363
        %v4375 = vadd.f32 %v4343, %v364
        %v4376 = vadd.f32 %v4344, %v365
        %v4377 = vadd.f32 %v4345, %v366
        %v4378 = vadd.f32 %v4346, %v367
        %v4379 = vadd.f32 %v4347, %v368
        %v4380 = vadd.f32 %v4348, %v369
        %v4381 = vadd.f32 %v4349, %v370
        %v4382 = vadd.f32 %v4350, %v371
        %v4383 = vadd.f32 %v4351, %v372
        %v4384 = vadd.f32 %v4352, %v373
        %v4385 = vadd.f32 %v4353, %v374
        %v4386 = vadd.f32 %v4354, %v375
        %v4387 = vadd.f32 %v4355, %v376
        %v4388 = vadd.f32 %v4356, %v377
        %v4389 = vadd.f32 %v4357, %v378
        %v4390 = vadd.f32 %v4358, %v379
        %v4391 = vadd.f32 %v4359, %v380
        %v4392 = vadd.f32 %v4360, %v381
        %v4393 = vadd.f32 %v4361, %v382
        %v4394 = vadd.f32 %v4362, %v383
        %v4395 = vadd.f32 %v4363, %v384
        %v4396 = vadd.f32 %v4364, %v385
        %v4397 = vadd.f32 %v4365, %v386
        %v4398 = vadd.f32 %v4366, %v387
        %v4399 = vadd.f32 %v4367, %v388
        %v4400 = vadd.f32 %v4368, %v389
        %4401 = vst [vmem:[#allocation2 + $0x20] sm:$0xff] %v4369
        %4402 = vst [vmem:[#allocation2 + $0x28] sm:$0xff] %v4370
        %4403 = vst [vmem:[#allocation2 + $0x30] sm:$0xff] %v4371
        %4404 = vst [vmem:[#allocation2 + $0x38] sm:$0xff] %v4372
        %4405 = vst [vmem:[#allocation2 + $0x40] sm:$0xff] %v4373
        %4406 = vst [vmem:[#allocation2 + $0x48] sm:$0xff] %v4374
        %4407 = vst [vmem:[#allocation2 + $0x50] sm:$0xff] %v4375
        %4408 = vst [vmem:[#allocation2 + $0x58] sm:$0xff] %v4376
        %4409 = vst [vmem:[#allocation2 + $0x60] sm:$0xff] %v4377
        %4410 = vst [vmem:[#allocation2 + $0x68] sm:$0xff] %v4378
        %4411 = vst [vmem:[#allocation2 + $0x70] sm:$0xff] %v4379
        %4412 = vst [vmem:[#allocation2 + $0x78] sm:$0xff] %v4380
        %4413 = vst [vmem:[#allocation2 + $0x80] sm:$0xff] %v4381
        %4414 = vst [vmem:[#allocation2 + $0x88] sm:$0xff] %v4382
        %4415 = vst [vmem:[#allocation2 + $0x90] sm:$0xff] %v4383
        %4416 = vst [vmem:[#allocation2 + $0x98] sm:$0xff] %v4384
        %4417 = vst [vmem:[#allocation2 + $0xa0] sm:$0xff] %v4385
        %4418 = vst [vmem:[#allocation2 + $0xa8] sm:$0xff] %v4386
        %4419 = vst [vmem:[#allocation2 + $0xb0] sm:$0xff] %v4387
        %4420 = vst [vmem:[#allocation2 + $0xb8] sm:$0xff] %v4388
        %4421 = vst [vmem:[#allocation2 + $0xc0] sm:$0xff] %v4389
        %4422 = vst [vmem:[#allocation2 + $0xc8] sm:$0xff] %v4390
        %4423 = vst [vmem:[#allocation2 + $0xd0] sm:$0xff] %v4391
        %4424 = vst [vmem:[#allocation2 + $0xd8] sm:$0xff] %v4392
        %4425 = vst [vmem:[#allocation2 + $0xe0] sm:$0xff] %v4393
        %4426 = vst [vmem:[#allocation2 + $0xe8] sm:$0xff] %v4394
        %4427 = vst [vmem:[#allocation2 + $0xf0] sm:$0xff] %v4395
        %4428 = vst [vmem:[#allocation2 + $0xf8] sm:$0xff] %v4396
        %4429 = vst [vmem:[#allocation2 + $0x100] sm:$0xff] %v4397
        %4430 = vst [vmem:[#allocation2 + $0x108] sm:$0xff] %v4398
        %4431 = vst [vmem:[#allocation2 + $0x110] sm:$0xff] %v4399
        %4432 = vst [vmem:[#allocation2 + $0x118] sm:$0xff] %v4400
        %v4433 = vld [vmem:[#allocation2 + $0xf] sm:$0xff]
        %v4434 = vld [vmem:[#allocation2 + $0x17] sm:$0xff]
        %v4435 = vld [vmem:[#allocation2 + $0x1f] sm:$0xff]
        %v4436 = vld [vmem:[#allocation2 + $0x27] sm:$0xff]
        %v4437 = vld [vmem:[#allocation2 + $0x2f] sm:$0xff]
        %v4438 = vld [vmem:[#allocation2 + $0x37] sm:$0xff]
        %v4439 = vld [vmem:[#allocation2 + $0x3f] sm:$0xff]
        %v4440 = vld [vmem:[#allocation2 + $0x47] sm:$0xff]
        %v4441 = vld [vmem:[#allocation2 + $0x4f] sm:$0xff]
        %v4442 = vld [vmem:[#allocation2 + $0x57] sm:$0xff]
        %v4443 = vld [vmem:[#allocation2 + $0x5f] sm:$0xff]
        %v4444 = vld [vmem:[#allocation2 + $0x67] sm:$0xff]
        %v4445 = vld [vmem:[#allocation2 + $0x6f] sm:$0xff]
        %v4446 = vld [vmem:[#allocation2 + $0x77] sm:$0xff]
        %v4447 = vld [vmem:[#allocation2 + $0x7f] sm:$0xff]
        %v4448 = vld [vmem:[#allocation2 + $0x87] sm:$0xff]
        %v4449 = vld [vmem:[#allocation2 + $0x8f] sm:$0xff]
        %v4450 = vld [vmem:[#allocation2 + $0x97] sm:$0xff]
        %v4451 = vld [vmem:[#allocation2 + $0x9f] sm:$0xff]
        %v4452 = vld [vmem:[#allocation2 + $0xa7] sm:$0xff]
        %v4453 = vld [vmem:[#allocation2 + $0xaf] sm:$0xff]
        %v4454 = vld [vmem:[#allocation2 + $0xb7] sm:$0xff]
        %v4455 = vld [vmem:[#allocation2 + $0xbf] sm:$0xff]
        %v4456 = vld [vmem:[#allocation2 + $0xc7] sm:$0xff]
        %v4457 = vld [vmem:[#allocation2 + $0xcf] sm:$0xff]
        %v4458 = vld [vmem:[#allocation2 + $0xd7] sm:$0xff]
        %v4459 = vld [vmem:[#allocation2 + $0xdf] sm:$0xff]
        %v4460 = vld [vmem:[#allocation2 + $0xe7] sm:$0xff]
        %v4461 = vld [vmem:[#allocation2 + $0xef] sm:$0xff]
        %v4462 = vld [vmem:[#allocation2 + $0xf7] sm:$0xff]
        %v4463 = vld [vmem:[#allocation2 + $0xff] sm:$0xff]
        %v4464 = vld [vmem:[#allocation2 + $0x107] sm:$0xff]
        %v4465 = vpack.c.bf16 %v4434, %v4433
        %v4466 = vpack.c.bf16 %v4436, %v4435
        %v4467 = vpack.c.bf16 %v4438, %v4437
        %v4468 = vpack.c.bf16 %v4440, %v4439
        %v4469 = vpack.c.bf16 %v4442, %v4441
        %v4470 = vpack.c.bf16 %v4444, %v4443
        %v4471 = vpack.c.bf16 %v4446, %v4445
        %v4472 = vpack.c.bf16 %v4448, %v4447
        %v4473 = vpack.c.bf16 %v4450, %v4449
        %v4474 = vpack.c.bf16 %v4452, %v4451
        %v4475 = vpack.c.bf16 %v4454, %v4453
        %v4476 = vpack.c.bf16 %v4456, %v4455
        %v4477 = vpack.c.bf16 %v4458, %v4457
        %v4478 = vpack.c.bf16 %v4460, %v4459
        %v4479 = vpack.c.bf16 %v4462, %v4461
        %v4480 = vpack.c.bf16 %v4464, %v4463
        %v4481 = vsel %vm582, %v4465, 0
        %v4482 = vsel %vm583, %v4466, 0
        %v4483 = vsel %vm584, %v4467, 0
        %v4484 = vsel %vm585, %v4468, 0
        %v4485 = vsel %vm586, %v4469, 0
        %v4486 = vsel %vm587, %v4470, 0
        %v4487 = vsel %vm588, %v4471, 0
        %v4488 = vsel %vm589, %v4472, 0
        %v4489 = vsel %vm590, %v4473, 0
        %v4490 = vsel %vm591, %v4474, 0
        %v4491 = vsel %vm592, %v4475, 0
        %v4492 = vsel %vm593, %v4476, 0
        %v4493 = vsel %vm594, %v4477, 0
        %v4494 = vsel %vm595, %v4478, 0
        %v4495 = vsel %vm596, %v4479, 0
        %v4496 = vsel %vm597, %v4480, 0
        %v4497 = vld [vmem:[#allocation2 + $0x10] sm:$0xff]
        %v4498 = vld [vmem:[#allocation2 + $0x18] sm:$0xff]
        %v4499 = vld [vmem:[#allocation2 + $0x20] sm:$0xff]
        %v4500 = vld [vmem:[#allocation2 + $0x28] sm:$0xff]
        %v4501 = vld [vmem:[#allocation2 + $0x30] sm:$0xff]
        %v4502 = vld [vmem:[#allocation2 + $0x38] sm:$0xff]
        %v4503 = vld [vmem:[#allocation2 + $0x40] sm:$0xff]
        %v4504 = vld [vmem:[#allocation2 + $0x48] sm:$0xff]
        %v4505 = vld [vmem:[#allocation2 + $0x50] sm:$0xff]
        %v4506 = vld [vmem:[#allocation2 + $0x58] sm:$0xff]
        %v4507 = vld [vmem:[#allocation2 + $0x60] sm:$0xff]
        %v4508 = vld [vmem:[#allocation2 + $0x68] sm:$0xff]
        %v4509 = vld [vmem:[#allocation2 + $0x70] sm:$0xff]
        %v4510 = vld [vmem:[#allocation2 + $0x78] sm:$0xff]
        %v4511 = vld [vmem:[#allocation2 + $0x80] sm:$0xff]
        %v4512 = vld [vmem:[#allocation2 + $0x88] sm:$0xff]
        %v4513 = vld [vmem:[#allocation2 + $0x90] sm:$0xff]
        %v4514 = vld [vmem:[#allocation2 + $0x98] sm:$0xff]
        %v4515 = vld [vmem:[#allocation2 + $0xa0] sm:$0xff]
        %v4516 = vld [vmem:[#allocation2 + $0xa8] sm:$0xff]
        %v4517 = vld [vmem:[#allocation2 + $0xb0] sm:$0xff]
        %v4518 = vld [vmem:[#allocation2 + $0xb8] sm:$0xff]
        %v4519 = vld [vmem:[#allocation2 + $0xc0] sm:$0xff]
        %v4520 = vld [vmem:[#allocation2 + $0xc8] sm:$0xff]
        %v4521 = vld [vmem:[#allocation2 + $0xd0] sm:$0xff]
        %v4522 = vld [vmem:[#allocation2 + $0xd8] sm:$0xff]
        %v4523 = vld [vmem:[#allocation2 + $0xe0] sm:$0xff]
        %v4524 = vld [vmem:[#allocation2 + $0xe8] sm:$0xff]
        %v4525 = vld [vmem:[#allocation2 + $0xf0] sm:$0xff]
        %v4526 = vld [vmem:[#allocation2 + $0xf8] sm:$0xff]
        %v4527 = vld [vmem:[#allocation2 + $0x100] sm:$0xff]
        %v4528 = vld [vmem:[#allocation2 + $0x108] sm:$0xff]
        %v4529 = vpack.c.bf16 %v4498, %v4497
        %v4530 = vpack.c.bf16 %v4500, %v4499
        %v4531 = vpack.c.bf16 %v4502, %v4501
        %v4532 = vpack.c.bf16 %v4504, %v4503
        %v4533 = vpack.c.bf16 %v4506, %v4505
        %v4534 = vpack.c.bf16 %v4508, %v4507
        %v4535 = vpack.c.bf16 %v4510, %v4509
        %v4536 = vpack.c.bf16 %v4512, %v4511
        %v4537 = vpack.c.bf16 %v4514, %v4513
        %v4538 = vpack.c.bf16 %v4516, %v4515
        %v4539 = vpack.c.bf16 %v4518, %v4517
        %v4540 = vpack.c.bf16 %v4520, %v4519
        %v4541 = vpack.c.bf16 %v4522, %v4521
        %v4542 = vpack.c.bf16 %v4524, %v4523
        %v4543 = vpack.c.bf16 %v4526, %v4525
        %v4544 = vpack.c.bf16 %v4528, %v4527
        %v4545 = vld [vmem:[#allocation2 + $0x11] sm:$0xff]
        %v4546 = vld [vmem:[#allocation2 + $0x19] sm:$0xff]
        %v4547 = vld [vmem:[#allocation2 + $0x21] sm:$0xff]
        %v4548 = vld [vmem:[#allocation2 + $0x29] sm:$0xff]
        %v4549 = vld [vmem:[#allocation2 + $0x31] sm:$0xff]
        %v4550 = vld [vmem:[#allocation2 + $0x39] sm:$0xff]
        %v4551 = vld [vmem:[#allocation2 + $0x41] sm:$0xff]
        %v4552 = vld [vmem:[#allocation2 + $0x49] sm:$0xff]
        %v4553 = vld [vmem:[#allocation2 + $0x51] sm:$0xff]
        %v4554 = vld [vmem:[#allocation2 + $0x59] sm:$0xff]
        %v4555 = vld [vmem:[#allocation2 + $0x61] sm:$0xff]
        %v4556 = vld [vmem:[#allocation2 + $0x69] sm:$0xff]
        %v4557 = vld [vmem:[#allocation2 + $0x71] sm:$0xff]
        %v4558 = vld [vmem:[#allocation2 + $0x79] sm:$0xff]
        %v4559 = vld [vmem:[#allocation2 + $0x81] sm:$0xff]
        %v4560 = vld [vmem:[#allocation2 + $0x89] sm:$0xff]
        %v4561 = vld [vmem:[#allocation2 + $0x91] sm:$0xff]
        %v4562 = vld [vmem:[#allocation2 + $0x99] sm:$0xff]
        %v4563 = vld [vmem:[#allocation2 + $0xa1] sm:$0xff]
        %v4564 = vld [vmem:[#allocation2 + $0xa9] sm:$0xff]
        %v4565 = vld [vmem:[#allocation2 + $0xb1] sm:$0xff]
        %v4566 = vld [vmem:[#allocation2 + $0xb9] sm:$0xff]
        %v4567 = vld [vmem:[#allocation2 + $0xc1] sm:$0xff]
        %v4568 = vld [vmem:[#allocation2 + $0xc9] sm:$0xff]
        %v4569 = vld [vmem:[#allocation2 + $0xd1] sm:$0xff]
        %v4570 = vld [vmem:[#allocation2 + $0xd9] sm:$0xff]
        %v4571 = vld [vmem:[#allocation2 + $0xe1] sm:$0xff]
        %v4572 = vld [vmem:[#allocation2 + $0xe9] sm:$0xff]
        %v4573 = vld [vmem:[#allocation2 + $0xf1] sm:$0xff]
        %v4574 = vld [vmem:[#allocation2 + $0xf9] sm:$0xff]
        %v4575 = vld [vmem:[#allocation2 + $0x101] sm:$0xff]
        %v4576 = vld [vmem:[#allocation2 + $0x109] sm:$0xff]
        %v4577 = vpack.c.bf16 %v4546, %v4545
        %v4578 = vpack.c.bf16 %v4548, %v4547
        %v4579 = vpack.c.bf16 %v4550, %v4549
        %v4580 = vpack.c.bf16 %v4552, %v4551
        %v4581 = vpack.c.bf16 %v4554, %v4553
        %v4582 = vpack.c.bf16 %v4556, %v4555
        %v4583 = vpack.c.bf16 %v4558, %v4557
        %v4584 = vpack.c.bf16 %v4560, %v4559
        %v4585 = vpack.c.bf16 %v4562, %v4561
        %v4586 = vpack.c.bf16 %v4564, %v4563
        %v4587 = vpack.c.bf16 %v4566, %v4565
        %v4588 = vpack.c.bf16 %v4568, %v4567
        %v4589 = vpack.c.bf16 %v4570, %v4569
        %v4590 = vpack.c.bf16 %v4572, %v4571
        %v4591 = vpack.c.bf16 %v4574, %v4573
        %v4592 = vpack.c.bf16 %v4576, %v4575
        %v4593 = vsel %vm822, %v4577, 0
        %v4594 = vsel %vm823, %v4578, 0
        %v4595 = vsel %vm824, %v4579, 0
        %v4596 = vsel %vm825, %v4580, 0
        %v4597 = vsel %vm826, %v4581, 0
        %v4598 = vsel %vm827, %v4582, 0
        %v4599 = vsel %vm828, %v4583, 0
        %v4600 = vsel %vm829, %v4584, 0
        %v4601 = vsel %vm830, %v4585, 0
        %v4602 = vsel %vm831, %v4586, 0
        %v4603 = vsel %vm832, %v4587, 0
        %v4604 = vsel %vm833, %v4588, 0
        %v4605 = vsel %vm834, %v4589, 0
        %v4606 = vsel %vm835, %v4590, 0
        %v4607 = vsel %vm836, %v4591, 0
        %v4608 = vsel %vm837, %v4592, 0
        %v4609 = vld [vmem:[#allocation2 + $0x10f] sm:$0xff]
        %v4610 = vld [vmem:[#allocation2 + $0x117] sm:$0xff]
        %v4611 = vpack.c.bf16 %v4610, %v4609
        %v4612 = vsel %vm582, %v4466, 0
        %v4613 = vsel %vm583, %v4467, 0
        %v4614 = vsel %vm584, %v4468, 0
        %v4615 = vsel %vm585, %v4469, 0
        %v4616 = vsel %vm586, %v4470, 0
        %v4617 = vsel %vm587, %v4471, 0
        %v4618 = vsel %vm588, %v4472, 0
        %v4619 = vsel %vm589, %v4473, 0
        %v4620 = vsel %vm590, %v4474, 0
        %v4621 = vsel %vm591, %v4475, 0
        %v4622 = vsel %vm592, %v4476, 0
        %v4623 = vsel %vm593, %v4477, 0
        %v4624 = vsel %vm594, %v4478, 0
        %v4625 = vsel %vm595, %v4479, 0
        %v4626 = vsel %vm596, %v4480, 0
        %v4627 = vsel %vm597, %v4611, 0
        %v4628 = vld [vmem:[#allocation2 + $0x110] sm:$0xff]
        %v4629 = vld [vmem:[#allocation2 + $0x118] sm:$0xff]
        %v4630 = vpack.c.bf16 %v4629, %v4628
        %v4631 = vld [vmem:[#allocation2 + $0x111] sm:$0xff]
        %v4632 = vld [vmem:[#allocation2 + $0x119] sm:$0xff]
        %v4633 = vpack.c.bf16 %v4632, %v4631
        %v4634 = vsel %vm822, %v4578, 0
        %v4635 = vsel %vm823, %v4579, 0
        %v4636 = vsel %vm824, %v4580, 0
        %v4637 = vsel %vm825, %v4581, 0
        %v4638 = vsel %vm826, %v4582, 0
        %v4639 = vsel %vm827, %v4583, 0
        %v4640 = vsel %vm828, %v4584, 0
        %v4641 = vsel %vm829, %v4585, 0
        %v4642 = vsel %vm830, %v4586, 0
        %v4643 = vsel %vm831, %v4587, 0
        %v4644 = vsel %vm832, %v4588, 0
        %v4645 = vsel %vm833, %v4589, 0
        %v4646 = vsel %vm834, %v4590, 0
        %v4647 = vsel %vm835, %v4591, 0
        %v4648 = vsel %vm836, %v4592, 0
        %v4649 = vsel %vm837, %v4633, 0
        %v4650 = vld [vmem:[#allocation2 + $0x11f] sm:$0xff]
        %v4651 = vld [vmem:[#allocation2 + $0x127] sm:$0xff]
        %v4652 = vpack.c.bf16 %v4651, %v4650
        %v4653 = vsel %vm582, %v4467, 0
        %v4654 = vsel %vm583, %v4468, 0
        %v4655 = vsel %vm584, %v4469, 0
        %v4656 = vsel %vm585, %v4470, 0
        %v4657 = vsel %vm586, %v4471, 0
        %v4658 = vsel %vm587, %v4472, 0
        %v4659 = vsel %vm588, %v4473, 0
        %v4660 = vsel %vm589, %v4474, 0
        %v4661 = vsel %vm590, %v4475, 0
        %v4662 = vsel %vm591, %v4476, 0
        %v4663 = vsel %vm592, %v4477, 0
        %v4664 = vsel %vm593, %v4478, 0
        %v4665 = vsel %vm594, %v4479, 0
        %v4666 = vsel %vm595, %v4480, 0
        %v4667 = vsel %vm596, %v4611, 0
        %v4668 = vsel %vm597, %v4652, 0
        %v4669 = vld [vmem:[#allocation2 + $0x120] sm:$0xff]
        %v4670 = vld [vmem:[#allocation2 + $0x128] sm:$0xff]
        %v4671 = vpack.c.bf16 %v4670, %v4669
        %v4672 = vld [vmem:[#allocation2 + $0x121] sm:$0xff]
        %v4673 = vld [vmem:[#allocation2 + $0x129] sm:$0xff]
        %v4674 = vpack.c.bf16 %v4673, %v4672
        %v4675 = vsel %vm822, %v4579, 0
        %v4676 = vsel %vm823, %v4580, 0
        %v4677 = vsel %vm824, %v4581, 0
        %v4678 = vsel %vm825, %v4582, 0
        %v4679 = vsel %vm826, %v4583, 0
        %v4680 = vsel %vm827, %v4584, 0
        %v4681 = vsel %vm828, %v4585, 0
        %v4682 = vsel %vm829, %v4586, 0
        %v4683 = vsel %vm830, %v4587, 0
        %v4684 = vsel %vm831, %v4588, 0
        %v4685 = vsel %vm832, %v4589, 0
        %v4686 = vsel %vm833, %v4590, 0
        %v4687 = vsel %vm834, %v4591, 0
        %v4688 = vsel %vm835, %v4592, 0
        %v4689 = vsel %vm836, %v4633, 0
        %v4690 = vsel %vm837, %v4674, 0
        %s4691 = scalar_lea.vmem [#allocation6], 576
        %v4692 = vld [vmem:[%s4691] sm:$0xf]
        %v4693 = vld [vmem:[%s4691 + $0x4] sm:$0xf]
        %v4694 = vld [vmem:[%s4691 + $0x8] sm:$0xf]
        %v4695 = vld [vmem:[%s4691 + $0xc] sm:$0xf]
        %v4696 = vld [vmem:[%s4691 + $0x10] sm:$0xf]
        %v4697 = vld [vmem:[%s4691 + $0x14] sm:$0xf]
        %v4698 = vld [vmem:[%s4691 + $0x18] sm:$0xf]
        %v4699 = vld [vmem:[%s4691 + $0x1c] sm:$0xf]
        %v4700 = vld [vmem:[%s4691 + $0x20] sm:$0xf]
        %v4701 = vld [vmem:[%s4691 + $0x24] sm:$0xf]
        %v4702 = vld [vmem:[%s4691 + $0x28] sm:$0xf]
        %v4703 = vld [vmem:[%s4691 + $0x2c] sm:$0xf]
        %v4704 = vld [vmem:[%s4691 + $0x30] sm:$0xf]
        %v4705 = vld [vmem:[%s4691 + $0x34] sm:$0xf]
        %v4706 = vld [vmem:[%s4691 + $0x38] sm:$0xf]
        %v4707 = vld [vmem:[%s4691 + $0x3c] sm:$0xf]
        %v4708 = vld [vmem:[%s4691 + $0x40] sm:$0xf]
        %v4709 = vld [vmem:[%s4691 + $0x44] sm:$0xf]
        %v4710 = vld [vmem:[%s4691 + $0x48] sm:$0xf]
        %v4711 = vld [vmem:[%s4691 + $0x4c] sm:$0xf]
        %v4712 = vld [vmem:[%s4691 + $0x50] sm:$0xf]
        %v4713 = vld [vmem:[%s4691 + $0x54] sm:$0xf]
        %v4714 = vld [vmem:[%s4691 + $0x58] sm:$0xf]
        %v4715 = vld [vmem:[%s4691 + $0x5c] sm:$0xf]
        %v4716 = vld [vmem:[%s4691 + $0x60] sm:$0xf]
        %v4717 = vld [vmem:[%s4691 + $0x64] sm:$0xf]
        %v4718 = vld [vmem:[%s4691 + $0x68] sm:$0xf]
        %v4719 = vld [vmem:[%s4691 + $0x6c] sm:$0xf]
        %v4720 = vld [vmem:[%s4691 + $0x70] sm:$0xf]
        %v4721 = vld [vmem:[%s4691 + $0x74] sm:$0xf]
        %v4722 = vld [vmem:[%s4691 + $0x78] sm:$0xf]
        %v4723 = vld [vmem:[%s4691 + $0x7c] sm:$0xf]
        %v4724 = vld [vmem:[%s4691 + $0x80] sm:$0xf]
        %v4725 = vld [vmem:[%s4691 + $0x84] sm:$0xf]
        %v4726 = vld [vmem:[%s4691 + $0x88] sm:$0xf]
        %v4727 = vld [vmem:[%s4691 + $0x8c] sm:$0xf]
        %v4728 = vld [vmem:[%s4691 + $0x90] sm:$0xf]
        %v4729 = vld [vmem:[%s4691 + $0x94] sm:$0xf]
        %v4730 = vld [vmem:[%s4691 + $0x98] sm:$0xf]
        %v4731 = vld [vmem:[%s4691 + $0x9c] sm:$0xf]
        %v4732 = vld [vmem:[%s4691 + $0xa0] sm:$0xf]
        %v4733 = vld [vmem:[%s4691 + $0xa4] sm:$0xf]
        %v4734 = vld [vmem:[%s4691 + $0xa8] sm:$0xf]
        %v4735 = vld [vmem:[%s4691 + $0xac] sm:$0xf]
        %v4736 = vld [vmem:[%s4691 + $0xb0] sm:$0xf]
        %v4737 = vld [vmem:[%s4691 + $0xb4] sm:$0xf]
        %v4738 = vld [vmem:[%s4691 + $0xb8] sm:$0xf]
        %v4739 = vld [vmem:[%s4691 + $0xbc] sm:$0xf]
        %v4740 = vld [vmem:[%s4691 + $0xc0] sm:$0xf]
        %v4741 = vld [vmem:[%s4691 + $0xc4] sm:$0xf]
        %v4742 = vld [vmem:[%s4691 + $0xc8] sm:$0xf]
        %v4743 = vld [vmem:[%s4691 + $0xcc] sm:$0xf]
        %v4744 = vld [vmem:[%s4691 + $0xd0] sm:$0xf]
        %v4745 = vld [vmem:[%s4691 + $0xd4] sm:$0xf]
        %v4746 = vld [vmem:[%s4691 + $0xd8] sm:$0xf]
        %v4747 = vld [vmem:[%s4691 + $0xdc] sm:$0xf]
        %v4748 = vld [vmem:[%s4691 + $0xe0] sm:$0xf]
        %v4749 = vld [vmem:[%s4691 + $0xe4] sm:$0xf]
        %v4750 = vld [vmem:[%s4691 + $0xe8] sm:$0xf]
        %v4751 = vld [vmem:[%s4691 + $0xec] sm:$0xf]
        %v4752 = vld [vmem:[%s4691 + $0xf0] sm:$0xf]
        %v4753 = vld [vmem:[%s4691 + $0xf4] sm:$0xf]
        %v4754 = vld [vmem:[%s4691 + $0xf8] sm:$0xf]
        %v4755 = vld [vmem:[%s4691 + $0xfc] sm:$0xf]
        %v4756 = vld [vmem:[%s4691 + $0x100] sm:$0xf]
        %v4757 = vld [vmem:[%s4691 + $0x104] sm:$0xf]
        %v4758 = vld [vmem:[%s4691 + $0x108] sm:$0xf]
        %v4759 = vld [vmem:[%s4691 + $0x10c] sm:$0xf]
        %v4760 = vld [vmem:[%s4691 + $0x110] sm:$0xf]
        %v4761 = vld [vmem:[%s4691 + $0x114] sm:$0xf]
        %v4762 = vld [vmem:[%s4691 + $0x118] sm:$0xf]
        %v4763 = vld [vmem:[%s4691 + $0x11c] sm:$0xf]
        %v4764 = vld [vmem:[%s4691 + $0x120] sm:$0xf]
        %v4765 = vld [vmem:[%s4691 + $0x124] sm:$0xf]
        %v4766 = vld [vmem:[%s4691 + $0x128] sm:$0xf]
        %v4767 = vld [vmem:[%s4691 + $0x12c] sm:$0xf]
        %v4768 = vld [vmem:[%s4691 + $0x130] sm:$0xf]
        %v4769 = vld [vmem:[%s4691 + $0x134] sm:$0xf]
        %v4770 = vld [vmem:[%s4691 + $0x138] sm:$0xf]
        %v4771 = vld [vmem:[%s4691 + $0x13c] sm:$0xf]
        %v4772 = vld [vmem:[%s4691 + $0x140] sm:$0xf]
        %v4773 = vld [vmem:[%s4691 + $0x144] sm:$0xf]
        %v4774 = vld [vmem:[%s4691 + $0x148] sm:$0xf]
        %v4775 = vld [vmem:[%s4691 + $0x14c] sm:$0xf]
        %v4776 = vld [vmem:[%s4691 + $0x150] sm:$0xf]
        %v4777 = vld [vmem:[%s4691 + $0x154] sm:$0xf]
        %v4778 = vld [vmem:[%s4691 + $0x158] sm:$0xf]
        %v4779 = vld [vmem:[%s4691 + $0x15c] sm:$0xf]
        %v4780 = vld [vmem:[%s4691 + $0x160] sm:$0xf]
        %v4781 = vld [vmem:[%s4691 + $0x164] sm:$0xf]
        %v4782 = vld [vmem:[%s4691 + $0x168] sm:$0xf]
        %v4783 = vld [vmem:[%s4691 + $0x16c] sm:$0xf]
        %v4784 = vld [vmem:[%s4691 + $0x170] sm:$0xf]
        %v4785 = vld [vmem:[%s4691 + $0x174] sm:$0xf]
        %v4786 = vld [vmem:[%s4691 + $0x178] sm:$0xf]
        %v4787 = vld [vmem:[%s4691 + $0x17c] sm:$0xf]
        %v4788 = vld [vmem:[%s4691 + $0x180] sm:$0xf]
        %v4789 = vld [vmem:[%s4691 + $0x184] sm:$0xf]
        %v4790 = vld [vmem:[%s4691 + $0x188] sm:$0xf]
        %v4791 = vld [vmem:[%s4691 + $0x18c] sm:$0xf]
        %v4792 = vld [vmem:[%s4691 + $0x190] sm:$0xf]
        %v4793 = vld [vmem:[%s4691 + $0x194] sm:$0xf]
        %v4794 = vld [vmem:[%s4691 + $0x198] sm:$0xf]
        %v4795 = vld [vmem:[%s4691 + $0x19c] sm:$0xf]
        %v4796 = vld [vmem:[%s4691 + $0x1a0] sm:$0xf]
        %v4797 = vld [vmem:[%s4691 + $0x1a4] sm:$0xf]
        %v4798 = vld [vmem:[%s4691 + $0x1a8] sm:$0xf]
        %v4799 = vld [vmem:[%s4691 + $0x1ac] sm:$0xf]
        %v4800 = vld [vmem:[%s4691 + $0x1b0] sm:$0xf]
        %v4801 = vld [vmem:[%s4691 + $0x1b4] sm:$0xf]
        %v4802 = vld [vmem:[%s4691 + $0x1b8] sm:$0xf]
        %v4803 = vld [vmem:[%s4691 + $0x1bc] sm:$0xf]
        %v4804 = vld [vmem:[%s4691 + $0x1c0] sm:$0xf]
        %v4805 = vld [vmem:[%s4691 + $0x1c4] sm:$0xf]
        %v4806 = vld [vmem:[%s4691 + $0x1c8] sm:$0xf]
        %v4807 = vld [vmem:[%s4691 + $0x1cc] sm:$0xf]
        %v4808 = vld [vmem:[%s4691 + $0x1d0] sm:$0xf]
        %v4809 = vld [vmem:[%s4691 + $0x1d4] sm:$0xf]
        %v4810 = vld [vmem:[%s4691 + $0x1d8] sm:$0xf]
        %v4811 = vld [vmem:[%s4691 + $0x1dc] sm:$0xf]
        %v4812 = vld [vmem:[%s4691 + $0x1e0] sm:$0xf]
        %v4813 = vld [vmem:[%s4691 + $0x1e4] sm:$0xf]
        %v4814 = vld [vmem:[%s4691 + $0x1e8] sm:$0xf]
        %v4815 = vld [vmem:[%s4691 + $0x1ec] sm:$0xf]
        %v4816 = vld [vmem:[%s4691 + $0x1f0] sm:$0xf]
        %v4817 = vld [vmem:[%s4691 + $0x1f4] sm:$0xf]
        %v4818 = vld [vmem:[%s4691 + $0x1f8] sm:$0xf]
        %v4819 = vld [vmem:[%s4691 + $0x1fc] sm:$0xf]
        %v4820 = vld [vmem:[%s4691 + $0x200] sm:$0xf]
        %v4821 = vld [vmem:[%s4691 + $0x204] sm:$0xf]
        %v4822 = vld [vmem:[%s4691 + $0x208] sm:$0xf]
        %v4823 = vld [vmem:[%s4691 + $0x20c] sm:$0xf]
        %v4824 = vld [vmem:[%s4691 + $0x210] sm:$0xf]
        %v4825 = vld [vmem:[%s4691 + $0x214] sm:$0xf]
        %v4826 = vld [vmem:[%s4691 + $0x218] sm:$0xf]
        %v4827 = vld [vmem:[%s4691 + $0x21c] sm:$0xf]
        %v4828 = vld [vmem:[%s4691 + $0x220] sm:$0xf]
        %v4829 = vld [vmem:[%s4691 + $0x224] sm:$0xf]
        %v4830 = vld [vmem:[%s4691 + $0x228] sm:$0xf]
        %v4831 = vld [vmem:[%s4691 + $0x22c] sm:$0xf]
        %v4832 = vld [vmem:[%s4691 + $0x230] sm:$0xf]
        %v4833 = vld [vmem:[%s4691 + $0x234] sm:$0xf]
        %v4834 = vld [vmem:[%s4691 + $0x238] sm:$0xf]
        %v4835 = vld [vmem:[%s4691 + $0x23c] sm:$0xf]
        %v4980 = vunpack.c.l.b16 %v4692
        %v4981 = vunpack.c.l.b16 %v4693
        %v4982 = vunpack.c.l.b16 %v4694
        %v4983 = vunpack.c.l.b16 %v4695
        %v4984 = vunpack.c.l.b16 %v4696
        %v4985 = vunpack.c.l.b16 %v4697
        %v4986 = vunpack.c.l.b16 %v4698
        %v4987 = vunpack.c.l.b16 %v4699
        %v4988 = vunpack.c.l.b16 %v4700
        %v4989 = vunpack.c.l.b16 %v4701
        %v4990 = vunpack.c.l.b16 %v4702
        %v4991 = vunpack.c.l.b16 %v4703
        %v4992 = vunpack.c.l.b16 %v4704
        %v4993 = vunpack.c.l.b16 %v4705
        %v4994 = vunpack.c.l.b16 %v4706
        %v4995 = vunpack.c.l.b16 %v4707
        %v4996 = vunpack.c.l.b16 %v4708
        %v4997 = vunpack.c.l.b16 %v4709
        %v4998 = vunpack.c.l.b16 %v4710
        %v4999 = vunpack.c.l.b16 %v4711
        %v5000 = vunpack.c.l.b16 %v4712
        %v5001 = vunpack.c.l.b16 %v4713
        %v5002 = vunpack.c.l.b16 %v4714
        %v5003 = vunpack.c.l.b16 %v4715
        %v5004 = vunpack.c.l.b16 %v4716
        %v5005 = vunpack.c.l.b16 %v4717
        %v5006 = vunpack.c.l.b16 %v4718
        %v5007 = vunpack.c.l.b16 %v4719
        %v5008 = vunpack.c.l.b16 %v4720
        %v5009 = vunpack.c.l.b16 %v4721
        %v5010 = vunpack.c.l.b16 %v4722
        %v5011 = vunpack.c.l.b16 %v4723
        %v5012 = vunpack.c.l.b16 %v4724
        %v5013 = vunpack.c.l.b16 %v4725
        %v5014 = vunpack.c.l.b16 %v4726
        %v5015 = vunpack.c.l.b16 %v4727
        %v5016 = vunpack.c.l.b16 %v4728
        %v5017 = vunpack.c.l.b16 %v4729
        %v5018 = vunpack.c.l.b16 %v4730
        %v5019 = vunpack.c.l.b16 %v4731
        %v5020 = vunpack.c.l.b16 %v4732
        %v5021 = vunpack.c.l.b16 %v4733
        %v5022 = vunpack.c.l.b16 %v4734
        %v5023 = vunpack.c.l.b16 %v4735
        %v5024 = vunpack.c.l.b16 %v4736
        %v5025 = vunpack.c.l.b16 %v4737
        %v5026 = vunpack.c.l.b16 %v4738
        %v5027 = vunpack.c.l.b16 %v4739
        %v5028 = vunpack.c.l.b16 %v4740
        %v5029 = vunpack.c.l.b16 %v4741
        %v5030 = vunpack.c.l.b16 %v4742
        %v5031 = vunpack.c.l.b16 %v4743
        %v5032 = vunpack.c.l.b16 %v4744
        %v5033 = vunpack.c.l.b16 %v4745
        %v5034 = vunpack.c.l.b16 %v4746
        %v5035 = vunpack.c.l.b16 %v4747
        %v5036 = vunpack.c.l.b16 %v4748
        %v5037 = vunpack.c.l.b16 %v4749
        %v5038 = vunpack.c.l.b16 %v4750
        %v5039 = vunpack.c.l.b16 %v4751
        %v5040 = vunpack.c.l.b16 %v4752
        %v5041 = vunpack.c.l.b16 %v4753
        %v5042 = vunpack.c.l.b16 %v4754
        %v5043 = vunpack.c.l.b16 %v4755
        %v5044 = vunpack.c.l.b16 %v4756
        %v5045 = vunpack.c.l.b16 %v4757
        %v5046 = vunpack.c.l.b16 %v4758
        %v5047 = vunpack.c.l.b16 %v4759
        %v5048 = vunpack.c.l.b16 %v4760
        %v5049 = vunpack.c.l.b16 %v4761
        %v5050 = vunpack.c.l.b16 %v4762
        %v5051 = vunpack.c.l.b16 %v4763
        %v5052 = vunpack.c.l.b16 %v4764
        %v5053 = vunpack.c.l.b16 %v4765
        %v5054 = vunpack.c.l.b16 %v4766
        %v5055 = vunpack.c.l.b16 %v4767
        %v5056 = vunpack.c.l.b16 %v4768
        %v5057 = vunpack.c.l.b16 %v4769
        %v5058 = vunpack.c.l.b16 %v4770
        %v5059 = vunpack.c.l.b16 %v4771
        %v5060 = vunpack.c.l.b16 %v4772
        %v5061 = vunpack.c.l.b16 %v4773
        %v5062 = vunpack.c.l.b16 %v4774
        %v5063 = vunpack.c.l.b16 %v4775
        %v5064 = vunpack.c.l.b16 %v4776
        %v5065 = vunpack.c.l.b16 %v4777
        %v5066 = vunpack.c.l.b16 %v4778
        %v5067 = vunpack.c.l.b16 %v4779
        %v5068 = vunpack.c.l.b16 %v4780
        %v5069 = vunpack.c.l.b16 %v4781
        %v5070 = vunpack.c.l.b16 %v4782
        %v5071 = vunpack.c.l.b16 %v4783
        %v5072 = vunpack.c.l.b16 %v4784
        %v5073 = vunpack.c.l.b16 %v4785
        %v5074 = vunpack.c.l.b16 %v4786
        %v5075 = vunpack.c.l.b16 %v4787
        %v5076 = vunpack.c.l.b16 %v4788
        %v5077 = vunpack.c.l.b16 %v4789
        %v5078 = vunpack.c.l.b16 %v4790
        %v5079 = vunpack.c.l.b16 %v4791
        %v5080 = vunpack.c.l.b16 %v4792
        %v5081 = vunpack.c.l.b16 %v4793
        %v5082 = vunpack.c.l.b16 %v4794
        %v5083 = vunpack.c.l.b16 %v4795
        %v5084 = vunpack.c.l.b16 %v4796
        %v5085 = vunpack.c.l.b16 %v4797
        %v5086 = vunpack.c.l.b16 %v4798
        %v5087 = vunpack.c.l.b16 %v4799
        %v5088 = vunpack.c.l.b16 %v4800
        %v5089 = vunpack.c.l.b16 %v4801
        %v5090 = vunpack.c.l.b16 %v4802
        %v5091 = vunpack.c.l.b16 %v4803
        %v5092 = vunpack.c.l.b16 %v4804
        %v5093 = vunpack.c.l.b16 %v4805
        %v5094 = vunpack.c.l.b16 %v4806
        %v5095 = vunpack.c.l.b16 %v4807
        %v5096 = vunpack.c.l.b16 %v4808
        %v5097 = vunpack.c.l.b16 %v4809
        %v5098 = vunpack.c.l.b16 %v4810
        %v5099 = vunpack.c.l.b16 %v4811
        %v5100 = vunpack.c.l.b16 %v4812
        %v5101 = vunpack.c.l.b16 %v4813
        %v5102 = vunpack.c.l.b16 %v4814
        %v5103 = vunpack.c.l.b16 %v4815
        %v5104 = vunpack.c.l.b16 %v4816
        %v5105 = vunpack.c.l.b16 %v4817
        %v5106 = vunpack.c.l.b16 %v4818
        %v5107 = vunpack.c.l.b16 %v4819
        %v5108 = vunpack.c.l.b16 %v4820
        %v5109 = vunpack.c.l.b16 %v4821
        %v5110 = vunpack.c.l.b16 %v4822
        %v5111 = vunpack.c.l.b16 %v4823
        %v5112 = vunpack.c.l.b16 %v4824
        %v5113 = vunpack.c.l.b16 %v4825
        %v5114 = vunpack.c.l.b16 %v4826
        %v5115 = vunpack.c.l.b16 %v4827
        %v5116 = vunpack.c.l.b16 %v4828
        %v5117 = vunpack.c.l.b16 %v4829
        %v5118 = vunpack.c.l.b16 %v4830
        %v5119 = vunpack.c.l.b16 %v4831
        %v5120 = vunpack.c.l.b16 %v4832
        %v5121 = vunpack.c.l.b16 %v4833
        %v5122 = vunpack.c.l.b16 %v4834
        %v5123 = vunpack.c.l.b16 %v4835
        %v5124 = vpack.c.b16 %v4981, %v4980
        %v5125 = vpack.c.b16 %v4983, %v4982
        %v5126 = vpack.c.b16 %v4985, %v4984
        %v5127 = vpack.c.b16 %v4987, %v4986
        %v5128 = vpack.c.b16 %v4989, %v4988
        %v5129 = vpack.c.b16 %v4991, %v4990
        %v5130 = vpack.c.b16 %v4993, %v4992
        %v5131 = vpack.c.b16 %v4995, %v4994
        %v5132 = vpack.c.b16 %v4997, %v4996
        %v5133 = vpack.c.b16 %v4999, %v4998
        %v5134 = vpack.c.b16 %v5001, %v5000
        %v5135 = vpack.c.b16 %v5003, %v5002
        %v5136 = vpack.c.b16 %v5005, %v5004
        %v5137 = vpack.c.b16 %v5007, %v5006
        %v5138 = vpack.c.b16 %v5009, %v5008
        %v5139 = vpack.c.b16 %v5011, %v5010
        %v5140 = vpack.c.b16 %v5013, %v5012
        %v5141 = vpack.c.b16 %v5015, %v5014
        %v5142 = vpack.c.b16 %v5017, %v5016
        %v5143 = vpack.c.b16 %v5019, %v5018
        %v5144 = vpack.c.b16 %v5021, %v5020
        %v5145 = vpack.c.b16 %v5023, %v5022
        %v5146 = vpack.c.b16 %v5025, %v5024
        %v5147 = vpack.c.b16 %v5027, %v5026
        %v5148 = vpack.c.b16 %v5029, %v5028
        %v5149 = vpack.c.b16 %v5031, %v5030
        %v5150 = vpack.c.b16 %v5033, %v5032
        %v5151 = vpack.c.b16 %v5035, %v5034
        %v5152 = vpack.c.b16 %v5037, %v5036
        %v5153 = vpack.c.b16 %v5039, %v5038
        %v5154 = vpack.c.b16 %v5041, %v5040
        %v5155 = vpack.c.b16 %v5043, %v5042
        %v5156 = vpack.c.b16 %v5045, %v5044
        %v5157 = vpack.c.b16 %v5047, %v5046
        %v5158 = vpack.c.b16 %v5049, %v5048
        %v5159 = vpack.c.b16 %v5051, %v5050
        %v5160 = vpack.c.b16 %v5053, %v5052
        %v5161 = vpack.c.b16 %v5055, %v5054
        %v5162 = vpack.c.b16 %v5057, %v5056
        %v5163 = vpack.c.b16 %v5059, %v5058
        %v5164 = vpack.c.b16 %v5061, %v5060
        %v5165 = vpack.c.b16 %v5063, %v5062
        %v5166 = vpack.c.b16 %v5065, %v5064
        %v5167 = vpack.c.b16 %v5067, %v5066
        %v5168 = vpack.c.b16 %v5069, %v5068
        %v5169 = vpack.c.b16 %v5071, %v5070
        %v5170 = vpack.c.b16 %v5073, %v5072
        %v5171 = vpack.c.b16 %v5075, %v5074
        %v5172 = vpack.c.b16 %v5077, %v5076
        %v5173 = vpack.c.b16 %v5079, %v5078
        %v5174 = vpack.c.b16 %v5081, %v5080
        %v5175 = vpack.c.b16 %v5083, %v5082
        %v5176 = vpack.c.b16 %v5085, %v5084
        %v5177 = vpack.c.b16 %v5087, %v5086
        %v5178 = vpack.c.b16 %v5089, %v5088
        %v5179 = vpack.c.b16 %v5091, %v5090
        %v5180 = vpack.c.b16 %v5093, %v5092
        %v5181 = vpack.c.b16 %v5095, %v5094
        %v5182 = vpack.c.b16 %v5097, %v5096
        %v5183 = vpack.c.b16 %v5099, %v5098
        %v5184 = vpack.c.b16 %v5101, %v5100
        %v5185 = vpack.c.b16 %v5103, %v5102
        %v5186 = vpack.c.b16 %v5105, %v5104
        %v5187 = vpack.c.b16 %v5107, %v5106
        %v5188 = vpack.c.b16 %v5109, %v5108
        %v5189 = vpack.c.b16 %v5111, %v5110
        %v5190 = vpack.c.b16 %v5113, %v5112
        %v5191 = vpack.c.b16 %v5115, %v5114
        %v5192 = vpack.c.b16 %v5117, %v5116
        %v5193 = vpack.c.b16 %v5119, %v5118
        %v5194 = vpack.c.b16 %v5121, %v5120
        %v5195 = vpack.c.b16 %v5123, %v5122
        %5268 = vmatprep.subr.bf16.mxu0 0
        %5269 = vmatpush1.bf16.msra.mxu0 %v5124
        %5270 = vmatprep.subr.bf16.mxu0 0
        %5271 = vmatpush1.bf16.msra.mxu0 %v5125
        %5272 = vmatprep.subr.bf16.mxu0 0
        %5273 = vmatpush1.bf16.msra.mxu0 %v5126
        %5274 = vmatprep.subr.bf16.mxu0 0
        %5275 = vmatpush1.bf16.msra.mxu0 %v5127
        %5276 = vmatprep.subr.bf16.mxu0 0
        %5277 = vmatpush1.bf16.msra.mxu0 %v5128
        %5278 = vmatprep.subr.bf16.mxu0 0
        %5279 = vmatpush1.bf16.msra.mxu0 %v5129
        %5280 = vmatprep.subr.bf16.mxu0 0
        %5281 = vmatpush1.bf16.msra.mxu0 %v5130
        %5282 = vmatprep.subr.bf16.mxu0 0
        %5283 = vmatpush1.bf16.msra.mxu0 %v5131
        %5284 = vmatprep.subr.bf16.mxu0 0
        %5285 = vmatpush1.bf16.msra.mxu0 %v5132
        %5286 = vmatprep.subr.bf16.mxu0 0
        %5287 = vmatpush1.bf16.msra.mxu0 %v5133
        %5288 = vmatprep.subr.bf16.mxu0 0
        %5289 = vmatpush1.bf16.msra.mxu0 %v5134
        %5290 = vmatprep.subr.bf16.mxu0 0
        %5291 = vmatpush1.bf16.msra.mxu0 %v5135
        %5292 = vmatprep.subr.bf16.mxu0 0
        %5293 = vmatpush1.bf16.msra.mxu0 %v5136
        %5294 = vmatprep.subr.bf16.mxu0 0
        %5295 = vmatpush1.bf16.msra.mxu0 %v5137
        %5296 = vmatprep.subr.bf16.mxu0 0
        %5297 = vmatpush1.bf16.msra.mxu0 %v5138
        %5298 = vmatprep.subr.bf16.mxu0 0
        %5299 = vmatpush1.bf16.msra.mxu0 %v5139
        %5300 = vmatprep.mubr.bf16.mxu0 %v4529
        %5301 = vmatmul.mubr.bf16.gmra.mrb[0].mxu0 %v4481
        %v5302 = vpop.f32.mrb[0].mxu0
        %v5303 = vadd.f32 0.0, %v5302
        %v5304 = vpop.f32.mrb[0].mxu0
        %v5305 = vpop.f32.mrb[0].mxu0
        %v5306 = vadd.f32 0.0, %v5305
        %v5307 = vpop.f32.mrb[0].mxu0
        %5308 = vmatprep.mubr.bf16.mxu0 %v4530
        %5309 = vmatmul.mubr.bf16.gmra.mrb[0].mxu0 %v4482
        %v5310 = vpop.f32.mrb[0].mxu0
        %v5311 = vadd.f32 0.0, %v5310
        %v5312 = vpop.f32.mrb[0].mxu0
        %v5313 = vpop.f32.mrb[0].mxu0
        %v5314 = vadd.f32 0.0, %v5313
        %v5315 = vpop.f32.mrb[0].mxu0
        %5316 = vmatprep.mubr.bf16.mxu0 %v4531
        %5317 = vmatmul.mubr.bf16.gmra.mrb[0].mxu0 %v4483
        %v5318 = vpop.f32.mrb[0].mxu0
        %v5319 = vadd.f32 0.0, %v5318
        %v5320 = vpop.f32.mrb[0].mxu0
        %v5321 = vpop.f32.mrb[0].mxu0
        %v5322 = vadd.f32 0.0, %v5321
        %v5323 = vpop.f32.mrb[0].mxu0
        %5324 = vmatprep.mubr.bf16.mxu0 %v4532
        %5325 = vmatmul.mubr.bf16.gmra.mrb[0].mxu0 %v4484
        %v5326 = vpop.f32.mrb[0].mxu0
        %v5327 = vadd.f32 0.0, %v5326
        %v5328 = vpop.f32.mrb[0].mxu0
        %v5329 = vpop.f32.mrb[0].mxu0
        %v5330 = vadd.f32 0.0, %v5329
        %v5331 = vpop.f32.mrb[0].mxu0
        %5332 = vmatprep.mubr.bf16.mxu0 %v4533
        %5333 = vmatmul.mubr.bf16.gmra.mrb[0].mxu0 %v4485
        %v5334 = vpop.f32.mrb[0].mxu0
        %v5335 = vadd.f32 0.0, %v5334
        %v5336 = vpop.f32.mrb[0].mxu0
        %v5337 = vpop.f32.mrb[0].mxu0
        %v5338 = vadd.f32 0.0, %v5337
        %v5339 = vpop.f32.mrb[0].mxu0
        %5340 = vmatprep.mubr.bf16.mxu0 %v4534
        %5341 = vmatmul.mubr.bf16.gmra.mrb[0].mxu0 %v4486
        %v5342 = vpop.f32.mrb[0].mxu0
        %v5343 = vadd.f32 0.0, %v5342
        %v5344 = vpop.f32.mrb[0].mxu0
        %v5345 = vpop.f32.mrb[0].mxu0
        %v5346 = vadd.f32 0.0, %v5345
        %v5347 = vpop.f32.mrb[0].mxu0
        %5348 = vmatprep.mubr.bf16.mxu0 %v4535
        %5349 = vmatmul.mubr.bf16.gmra.mrb[0].mxu0 %v4487
        %v5350 = vpop.f32.mrb[0].mxu0
        %v5351 = vadd.f32 0.0, %v5350
        %v5352 = vpop.f32.mrb[0].mxu0
        %v5353 = vpop.f32.mrb[0].mxu0
        %v5354 = vadd.f32 0.0, %v5353
        %v5355 = vpop.f32.mrb[0].mxu0
        %5356 = vmatprep.mubr.bf16.mxu0 %v4536
        %5357 = vmatmul.mubr.bf16.gmra.mrb[0].mxu0 %v4488
        %v5358 = vpop.f32.mrb[0].mxu0
        %v5359 = vadd.f32 0.0, %v5358
        %v5360 = vpop.f32.mrb[0].mxu0
        %v5361 = vpop.f32.mrb[0].mxu0
        %v5362 = vadd.f32 0.0, %v5361
        %v5363 = vpop.f32.mrb[0].mxu0
        %5364 = vmatprep.mubr.bf16.mxu0 %v4537
        %5365 = vmatmul.mubr.bf16.gmra.mrb[0].mxu0 %v4489
        %v5366 = vpop.f32.mrb[0].mxu0
        %v5367 = vadd.f32 0.0, %v5366
        %v5368 = vpop.f32.mrb[0].mxu0
        %v5369 = vpop.f32.mrb[0].mxu0
        %v5370 = vadd.f32 0.0, %v5369
        %v5371 = vpop.f32.mrb[0].mxu0
        %5372 = vmatprep.mubr.bf16.mxu0 %v4538
        %5373 = vmatmul.mubr.bf16.gmra.mrb[0].mxu0 %v4490
        %v5374 = vpop.f32.mrb[0].mxu0
        %v5375 = vadd.f32 0.0, %v5374
        %v5376 = vpop.f32.mrb[0].mxu0
        %v5377 = vpop.f32.mrb[0].mxu0
        %v5378 = vadd.f32 0.0, %v5377
        %v5379 = vpop.f32.mrb[0].mxu0
        %5380 = vmatprep.mubr.bf16.mxu0 %v4539
        %5381 = vmatmul.mubr.bf16.gmra.mrb[0].mxu0 %v4491
        %v5382 = vpop.f32.mrb[0].mxu0
        %v5383 = vadd.f32 0.0, %v5382
        %v5384 = vpop.f32.mrb[0].mxu0
        %v5385 = vpop.f32.mrb[0].mxu0
        %v5386 = vadd.f32 0.0, %v5385
        %v5387 = vpop.f32.mrb[0].mxu0
        %5388 = vmatprep.mubr.bf16.mxu0 %v4540
        %5389 = vmatmul.mubr.bf16.gmra.mrb[0].mxu0 %v4492
        %v5390 = vpop.f32.mrb[0].mxu0
        %v5391 = vadd.f32 0.0, %v5390
        %v5392 = vpop.f32.mrb[0].mxu0
        %v5393 = vpop.f32.mrb[0].mxu0
        %v5394 = vadd.f32 0.0, %v5393
        %v5395 = vpop.f32.mrb[0].mxu0
        %5396 = vmatprep.mubr.bf16.mxu0 %v4541
        %5397 = vmatmul.mubr.bf16.gmra.mrb[0].mxu0 %v4493
        %v5398 = vpop.f32.mrb[0].mxu0
        %v5399 = vadd.f32 0.0, %v5398
        %v5400 = vpop.f32.mrb[0].mxu0
        %v5401 = vpop.f32.mrb[0].mxu0
        %v5402 = vadd.f32 0.0, %v5401
        %v5403 = vpop.f32.mrb[0].mxu0
        %5404 = vmatprep.mubr.bf16.mxu0 %v4542
        %5405 = vmatmul.mubr.bf16.gmra.mrb[0].mxu0 %v4494
        %v5406 = vpop.f32.mrb[0].mxu0
        %v5407 = vadd.f32 0.0, %v5406
        %v5408 = vpop.f32.mrb[0].mxu0
        %v5409 = vpop.f32.mrb[0].mxu0
        %v5410 = vadd.f32 0.0, %v5409
        %v5411 = vpop.f32.mrb[0].mxu0
        %5412 = vmatprep.mubr.bf16.mxu0 %v4543
        %5413 = vmatmul.mubr.bf16.gmra.mrb[0].mxu0 %v4495
        %v5414 = vpop.f32.mrb[0].mxu0
        %v5415 = vadd.f32 0.0, %v5414
        %v5416 = vpop.f32.mrb[0].mxu0
        %v5417 = vpop.f32.mrb[0].mxu0
        %v5418 = vadd.f32 0.0, %v5417
        %v5419 = vpop.f32.mrb[0].mxu0
        %5420 = vmatprep.mubr.bf16.mxu0 %v4544
        %5421 = vmatmul.mubr.bf16.gmra.mrb[0].mxu0 %v4496
        %v5422 = vpop.f32.mrb[0].mxu0
        %v5423 = vadd.f32 0.0, %v5422
        %v5424 = vpop.f32.mrb[0].mxu0
        %v5425 = vpop.f32.mrb[0].mxu0
        %v5426 = vadd.f32 0.0, %v5425
        %v5427 = vpop.f32.mrb[0].mxu0
        %5428 = vdwg.mxu0
        %5429 = vmatprep.subr.bf16.mxu0 0
        %5430 = vmatpush1.bf16.msra.mxu0 %v5140
        %5431 = vmatprep.subr.bf16.mxu0 0
        %5432 = vmatpush1.bf16.msra.mxu0 %v5141
        %5433 = vmatprep.subr.bf16.mxu0 0
        %5434 = vmatpush1.bf16.msra.mxu0 %v5142
        %5435 = vmatprep.subr.bf16.mxu0 0
        %5436 = vmatpush1.bf16.msra.mxu0 %v5143
        %5437 = vmatprep.subr.bf16.mxu0 0
        %5438 = vmatpush1.bf16.msra.mxu0 %v5144
        %5439 = vmatprep.subr.bf16.mxu0 0
        %5440 = vmatpush1.bf16.msra.mxu0 %v5145
        %5441 = vmatprep.subr.bf16.mxu0 0
        %5442 = vmatpush1.bf16.msra.mxu0 %v5146
        %5443 = vmatprep.subr.bf16.mxu0 0
        %5444 = vmatpush1.bf16.msra.mxu0 %v5147
        %5445 = vmatprep.subr.bf16.mxu0 0
        %5446 = vmatpush1.bf16.msra.mxu0 %v5148
        %5447 = vmatprep.subr.bf16.mxu0 0
        %5448 = vmatpush1.bf16.msra.mxu0 %v5149
        %5449 = vmatprep.subr.bf16.mxu0 0
        %5450 = vmatpush1.bf16.msra.mxu0 %v5150
        %5451 = vmatprep.subr.bf16.mxu0 0
        %5452 = vmatpush1.bf16.msra.mxu0 %v5151
        %5453 = vmatprep.subr.bf16.mxu0 0
        %5454 = vmatpush1.bf16.msra.mxu0 %v5152
        %5455 = vmatprep.subr.bf16.mxu0 0
        %5456 = vmatpush1.bf16.msra.mxu0 %v5153
        %5457 = vmatprep.subr.bf16.mxu0 0
        %5458 = vmatpush1.bf16.msra.mxu0 %v5154
        %5459 = vmatprep.subr.bf16.mxu0 0
        %5460 = vmatpush1.bf16.msra.mxu0 %v5155
        %5461 = vmatprep.mubr.bf16.mxu0 %v4612
        %5462 = vmatmul.mubr.bf16.gmra.mrb[0].mxu0 %v4593
        %v5463 = vpop.f32.mrb[0].mxu0
        %v5464 = vadd.f32 %v5303, %v5463
        %v5465 = vpop.f32.mrb[0].mxu0
        %v5466 = vpop.f32.mrb[0].mxu0
        %v5467 = vadd.f32 %v5306, %v5466
        %v5468 = vpop.f32.mrb[0].mxu0
        %5469 = vmatprep.mubr.bf16.mxu0 %v4613
        %5470 = vmatmul.mubr.bf16.gmra.mrb[0].mxu0 %v4594
        %v5471 = vpop.f32.mrb[0].mxu0
        %v5472 = vadd.f32 %v5311, %v5471
        %v5473 = vpop.f32.mrb[0].mxu0
        %v5474 = vpop.f32.mrb[0].mxu0
        %v5475 = vadd.f32 %v5314, %v5474
        %v5476 = vpop.f32.mrb[0].mxu0
        %5477 = vmatprep.mubr.bf16.mxu0 %v4614
        %5478 = vmatmul.mubr.bf16.gmra.mrb[0].mxu0 %v4595
        %v5479 = vpop.f32.mrb[0].mxu0
        %v5480 = vadd.f32 %v5319, %v5479
        %v5481 = vpop.f32.mrb[0].mxu0
        %v5482 = vpop.f32.mrb[0].mxu0
        %v5483 = vadd.f32 %v5322, %v5482
        %v5484 = vpop.f32.mrb[0].mxu0
        %5485 = vmatprep.mubr.bf16.mxu0 %v4615
        %5486 = vmatmul.mubr.bf16.gmra.mrb[0].mxu0 %v4596
        %v5487 = vpop.f32.mrb[0].mxu0
        %v5488 = vadd.f32 %v5327, %v5487
        %v5489 = vpop.f32.mrb[0].mxu0
        %v5490 = vpop.f32.mrb[0].mxu0
        %v5491 = vadd.f32 %v5330, %v5490
        %v5492 = vpop.f32.mrb[0].mxu0
        %5493 = vmatprep.mubr.bf16.mxu0 %v4616
        %5494 = vmatmul.mubr.bf16.gmra.mrb[0].mxu0 %v4597
        %v5495 = vpop.f32.mrb[0].mxu0
        %v5496 = vadd.f32 %v5335, %v5495
        %v5497 = vpop.f32.mrb[0].mxu0
        %v5498 = vpop.f32.mrb[0].mxu0
        %v5499 = vadd.f32 %v5338, %v5498
        %v5500 = vpop.f32.mrb[0].mxu0
        %5501 = vmatprep.mubr.bf16.mxu0 %v4617
        %5502 = vmatmul.mubr.bf16.gmra.mrb[0].mxu0 %v4598
        %v5503 = vpop.f32.mrb[0].mxu0
        %v5504 = vadd.f32 %v5343, %v5503
        %v5505 = vpop.f32.mrb[0].mxu0
        %v5506 = vpop.f32.mrb[0].mxu0
        %v5507 = vadd.f32 %v5346, %v5506
        %v5508 = vpop.f32.mrb[0].mxu0
        %5509 = vmatprep.mubr.bf16.mxu0 %v4618
        %5510 = vmatmul.mubr.bf16.gmra.mrb[0].mxu0 %v4599
        %v5511 = vpop.f32.mrb[0].mxu0
        %v5512 = vadd.f32 %v5351, %v5511
        %v5513 = vpop.f32.mrb[0].mxu0
        %v5514 = vpop.f32.mrb[0].mxu0
        %v5515 = vadd.f32 %v5354, %v5514
        %v5516 = vpop.f32.mrb[0].mxu0
        %5517 = vmatprep.mubr.bf16.mxu0 %v4619
        %5518 = vmatmul.mubr.bf16.gmra.mrb[0].mxu0 %v4600
        %v5519 = vpop.f32.mrb[0].mxu0
        %v5520 = vadd.f32 %v5359, %v5519
        %v5521 = vpop.f32.mrb[0].mxu0
        %v5522 = vpop.f32.mrb[0].mxu0
        %v5523 = vadd.f32 %v5362, %v5522
        %v5524 = vpop.f32.mrb[0].mxu0
        %5525 = vmatprep.mubr.bf16.mxu0 %v4620
        %5526 = vmatmul.mubr.bf16.gmra.mrb[0].mxu0 %v4601
        %v5527 = vpop.f32.mrb[0].mxu0
        %v5528 = vadd.f32 %v5367, %v5527
        %v5529 = vpop.f32.mrb[0].mxu0
        %v5530 = vpop.f32.mrb[0].mxu0
        %v5531 = vadd.f32 %v5370, %v5530
        %v5532 = vpop.f32.mrb[0].mxu0
        %5533 = vmatprep.mubr.bf16.mxu0 %v4621
        %5534 = vmatmul.mubr.bf16.gmra.mrb[0].mxu0 %v4602
        %v5535 = vpop.f32.mrb[0].mxu0
        %v5536 = vadd.f32 %v5375, %v5535
        %v5537 = vpop.f32.mrb[0].mxu0
        %v5538 = vpop.f32.mrb[0].mxu0
        %v5539 = vadd.f32 %v5378, %v5538
        %v5540 = vpop.f32.mrb[0].mxu0
        %5541 = vmatprep.mubr.bf16.mxu0 %v4622
        %5542 = vmatmul.mubr.bf16.gmra.mrb[0].mxu0 %v4603
        %v5543 = vpop.f32.mrb[0].mxu0
        %v5544 = vadd.f32 %v5383, %v5543
        %v5545 = vpop.f32.mrb[0].mxu0
        %v5546 = vpop.f32.mrb[0].mxu0
        %v5547 = vadd.f32 %v5386, %v5546
        %v5548 = vpop.f32.mrb[0].mxu0
        %5549 = vmatprep.mubr.bf16.mxu0 %v4623
        %5550 = vmatmul.mubr.bf16.gmra.mrb[0].mxu0 %v4604
        %v5551 = vpop.f32.mrb[0].mxu0
        %v5552 = vadd.f32 %v5391, %v5551
        %v5553 = vpop.f32.mrb[0].mxu0
        %v5554 = vpop.f32.mrb[0].mxu0
        %v5555 = vadd.f32 %v5394, %v5554
        %v5556 = vpop.f32.mrb[0].mxu0
        %5557 = vmatprep.mubr.bf16.mxu0 %v4624
        %5558 = vmatmul.mubr.bf16.gmra.mrb[0].mxu0 %v4605
        %v5559 = vpop.f32.mrb[0].mxu0
        %v5560 = vadd.f32 %v5399, %v5559
        %v5561 = vpop.f32.mrb[0].mxu0
        %v5562 = vpop.f32.mrb[0].mxu0
        %v5563 = vadd.f32 %v5402, %v5562
        %v5564 = vpop.f32.mrb[0].mxu0
        %5565 = vmatprep.mubr.bf16.mxu0 %v4625
        %5566 = vmatmul.mubr.bf16.gmra.mrb[0].mxu0 %v4606
        %v5567 = vpop.f32.mrb[0].mxu0
        %v5568 = vadd.f32 %v5407, %v5567
        %v5569 = vpop.f32.mrb[0].mxu0
        %v5570 = vpop.f32.mrb[0].mxu0
        %v5571 = vadd.f32 %v5410, %v5570
        %v5572 = vpop.f32.mrb[0].mxu0
        %5573 = vmatprep.mubr.bf16.mxu0 %v4626
        %5574 = vmatmul.mubr.bf16.gmra.mrb[0].mxu0 %v4607
        %v5575 = vpop.f32.mrb[0].mxu0
        %v5576 = vadd.f32 %v5415, %v5575
        %v5577 = vpop.f32.mrb[0].mxu0
        %v5578 = vpop.f32.mrb[0].mxu0
        %v5579 = vadd.f32 %v5418, %v5578
        %v5580 = vpop.f32.mrb[0].mxu0
        %5581 = vmatprep.mubr.bf16.mxu0 %v4627
        %5582 = vmatmul.mubr.bf16.gmra.mrb[0].mxu0 %v4608
        %v5583 = vpop.f32.mrb[0].mxu0
        %v5584 = vadd.f32 %v5423, %v5583
        %v5585 = vpop.f32.mrb[0].mxu0
        %v5586 = vpop.f32.mrb[0].mxu0
        %v5587 = vadd.f32 %v5426, %v5586
        %v5588 = vpop.f32.mrb[0].mxu0
        %5589 = vdwg.mxu0
        %5590 = vmatprep.subr.bf16.mxu0 0
        %5591 = vmatpush1.bf16.msra.mxu0 %v5156
        %5592 = vmatprep.subr.bf16.mxu0 0
        %5593 = vmatpush1.bf16.msra.mxu0 %v5157
        %5594 = vmatprep.subr.bf16.mxu0 0
        %5595 = vmatpush1.bf16.msra.mxu0 %v5158
        %5596 = vmatprep.subr.bf16.mxu0 0
        %5597 = vmatpush1.bf16.msra.mxu0 %v5159
        %5598 = vmatprep.subr.bf16.mxu0 0
        %5599 = vmatpush1.bf16.msra.mxu0 %v5160
        %5600 = vmatprep.subr.bf16.mxu0 0
        %5601 = vmatpush1.bf16.msra.mxu0 %v5161
        %5602 = vmatprep.subr.bf16.mxu0 0
        %5603 = vmatpush1.bf16.msra.mxu0 %v5162
        %5604 = vmatprep.subr.bf16.mxu0 0
        %5605 = vmatpush1.bf16.msra.mxu0 %v5163
        %5606 = vmatprep.subr.bf16.mxu0 0
        %5607 = vmatpush1.bf16.msra.mxu0 %v5164
        %5608 = vmatprep.subr.bf16.mxu0 0
        %5609 = vmatpush1.bf16.msra.mxu0 %v5165
        %5610 = vmatprep.subr.bf16.mxu0 0
        %5611 = vmatpush1.bf16.msra.mxu0 %v5166
        %5612 = vmatprep.subr.bf16.mxu0 0
        %5613 = vmatpush1.bf16.msra.mxu0 %v5167
        %5614 = vmatprep.subr.bf16.mxu0 0
        %5615 = vmatpush1.bf16.msra.mxu0 %v5168
        %5616 = vmatprep.subr.bf16.mxu0 0
        %5617 = vmatpush1.bf16.msra.mxu0 %v5169
        %5618 = vmatprep.subr.bf16.mxu0 0
        %5619 = vmatpush1.bf16.msra.mxu0 %v5170
        %5620 = vmatprep.subr.bf16.mxu0 0
        %5621 = vmatpush1.bf16.msra.mxu0 %v5171
        %5622 = vmatprep.mubr.bf16.mxu0 %v4634
        %5623 = vmatmul.mubr.bf16.gmra.mrb[0].mxu0 %v4530
        %v5624 = vpop.f32.mrb[0].mxu0
        %v5625 = vadd.f32 %v5464, %v5624
        %v5626 = vpop.f32.mrb[0].mxu0
        %v5627 = vpop.f32.mrb[0].mxu0
        %v5628 = vadd.f32 %v5467, %v5627
        %v5629 = vpop.f32.mrb[0].mxu0
        %5630 = vmatprep.mubr.bf16.mxu0 %v4635
        %5631 = vmatmul.mubr.bf16.gmra.mrb[0].mxu0 %v4531
        %v5632 = vpop.f32.mrb[0].mxu0
        %v5633 = vadd.f32 %v5472, %v5632
        %v5634 = vpop.f32.mrb[0].mxu0
        %v5635 = vpop.f32.mrb[0].mxu0
        %v5636 = vadd.f32 %v5475, %v5635
        %v5637 = vpop.f32.mrb[0].mxu0
        %5638 = vmatprep.mubr.bf16.mxu0 %v4636
        %5639 = vmatmul.mubr.bf16.gmra.mrb[0].mxu0 %v4532
        %v5640 = vpop.f32.mrb[0].mxu0
        %v5641 = vadd.f32 %v5480, %v5640
        %v5642 = vpop.f32.mrb[0].mxu0
        %v5643 = vpop.f32.mrb[0].mxu0
        %v5644 = vadd.f32 %v5483, %v5643
        %v5645 = vpop.f32.mrb[0].mxu0
        %5646 = vmatprep.mubr.bf16.mxu0 %v4637
        %5647 = vmatmul.mubr.bf16.gmra.mrb[0].mxu0 %v4533
        %v5648 = vpop.f32.mrb[0].mxu0
        %v5649 = vadd.f32 %v5488, %v5648
        %v5650 = vpop.f32.mrb[0].mxu0
        %v5651 = vpop.f32.mrb[0].mxu0
        %v5652 = vadd.f32 %v5491, %v5651
        %v5653 = vpop.f32.mrb[0].mxu0
        %5654 = vmatprep.mubr.bf16.mxu0 %v4638
        %5655 = vmatmul.mubr.bf16.gmra.mrb[0].mxu0 %v4534
        %v5656 = vpop.f32.mrb[0].mxu0
        %v5657 = vadd.f32 %v5496, %v5656
        %v5658 = vpop.f32.mrb[0].mxu0
        %v5659 = vpop.f32.mrb[0].mxu0
        %v5660 = vadd.f32 %v5499, %v5659
        %v5661 = vpop.f32.mrb[0].mxu0
        %5662 = vmatprep.mubr.bf16.mxu0 %v4639
        %5663 = vmatmul.mubr.bf16.gmra.mrb[0].mxu0 %v4535
        %v5664 = vpop.f32.mrb[0].mxu0
        %v5665 = vadd.f32 %v5504, %v5664
        %v5666 = vpop.f32.mrb[0].mxu0
        %v5667 = vpop.f32.mrb[0].mxu0
        %v5668 = vadd.f32 %v5507, %v5667
        %v5669 = vpop.f32.mrb[0].mxu0
        %5670 = vmatprep.mubr.bf16.mxu0 %v4640
        %5671 = vmatmul.mubr.bf16.gmra.mrb[0].mxu0 %v4536
        %v5672 = vpop.f32.mrb[0].mxu0
        %v5673 = vadd.f32 %v5512, %v5672
        %v5674 = vpop.f32.mrb[0].mxu0
        %v5675 = vpop.f32.mrb[0].mxu0
        %v5676 = vadd.f32 %v5515, %v5675
        %v5677 = vpop.f32.mrb[0].mxu0
        %5678 = vmatprep.mubr.bf16.mxu0 %v4641
        %5679 = vmatmul.mubr.bf16.gmra.mrb[0].mxu0 %v4537
        %v5680 = vpop.f32.mrb[0].mxu0
        %v5681 = vadd.f32 %v5520, %v5680
        %v5682 = vpop.f32.mrb[0].mxu0
        %v5683 = vpop.f32.mrb[0].mxu0
        %v5684 = vadd.f32 %v5523, %v5683
        %v5685 = vpop.f32.mrb[0].mxu0
        %5686 = vmatprep.mubr.bf16.mxu0 %v4642
        %5687 = vmatmul.mubr.bf16.gmra.mrb[0].mxu0 %v4538
        %v5688 = vpop.f32.mrb[0].mxu0
        %v5689 = vadd.f32 %v5528, %v5688
        %v5690 = vpop.f32.mrb[0].mxu0
        %v5691 = vpop.f32.mrb[0].mxu0
        %v5692 = vadd.f32 %v5531, %v5691
        %v5693 = vpop.f32.mrb[0].mxu0
        %5694 = vmatprep.mubr.bf16.mxu0 %v4643
        %5695 = vmatmul.mubr.bf16.gmra.mrb[0].mxu0 %v4539
        %v5696 = vpop.f32.mrb[0].mxu0
        %v5697 = vadd.f32 %v5536, %v5696
        %v5698 = vpop.f32.mrb[0].mxu0
        %v5699 = vpop.f32.mrb[0].mxu0
        %v5700 = vadd.f32 %v5539, %v5699
        %v5701 = vpop.f32.mrb[0].mxu0
        %5702 = vmatprep.mubr.bf16.mxu0 %v4644
        %5703 = vmatmul.mubr.bf16.gmra.mrb[0].mxu0 %v4540
        %v5704 = vpop.f32.mrb[0].mxu0
        %v5705 = vadd.f32 %v5544, %v5704
        %v5706 = vpop.f32.mrb[0].mxu0
        %v5707 = vpop.f32.mrb[0].mxu0
        %v5708 = vadd.f32 %v5547, %v5707
        %v5709 = vpop.f32.mrb[0].mxu0
        %5710 = vmatprep.mubr.bf16.mxu0 %v4645
        %5711 = vmatmul.mubr.bf16.gmra.mrb[0].mxu0 %v4541
        %v5712 = vpop.f32.mrb[0].mxu0
        %v5713 = vadd.f32 %v5552, %v5712
        %v5714 = vpop.f32.mrb[0].mxu0
        %v5715 = vpop.f32.mrb[0].mxu0
        %v5716 = vadd.f32 %v5555, %v5715
        %v5717 = vpop.f32.mrb[0].mxu0
        %5718 = vmatprep.mubr.bf16.mxu0 %v4646
        %5719 = vmatmul.mubr.bf16.gmra.mrb[0].mxu0 %v4542
        %v5720 = vpop.f32.mrb[0].mxu0
        %v5721 = vadd.f32 %v5560, %v5720
        %v5722 = vpop.f32.mrb[0].mxu0
        %v5723 = vpop.f32.mrb[0].mxu0
        %v5724 = vadd.f32 %v5563, %v5723
        %v5725 = vpop.f32.mrb[0].mxu0
        %5726 = vmatprep.mubr.bf16.mxu0 %v4647
        %5727 = vmatmul.mubr.bf16.gmra.mrb[0].mxu0 %v4543
        %v5728 = vpop.f32.mrb[0].mxu0
        %v5729 = vadd.f32 %v5568, %v5728
        %v5730 = vpop.f32.mrb[0].mxu0
        %v5731 = vpop.f32.mrb[0].mxu0
        %v5732 = vadd.f32 %v5571, %v5731
        %v5733 = vpop.f32.mrb[0].mxu0
        %5734 = vmatprep.mubr.bf16.mxu0 %v4648
        %5735 = vmatmul.mubr.bf16.gmra.mrb[0].mxu0 %v4544
        %v5736 = vpop.f32.mrb[0].mxu0
        %v5737 = vadd.f32 %v5576, %v5736
        %v5738 = vpop.f32.mrb[0].mxu0
        %v5739 = vpop.f32.mrb[0].mxu0
        %v5740 = vadd.f32 %v5579, %v5739
        %v5741 = vpop.f32.mrb[0].mxu0
        %5742 = vmatprep.mubr.bf16.mxu0 %v4649
        %5743 = vmatmul.mubr.bf16.gmra.mrb[0].mxu0 %v4630
        %v5744 = vpop.f32.mrb[0].mxu0
        %v5745 = vadd.f32 %v5584, %v5744
        %v5746 = vpop.f32.mrb[0].mxu0
        %v5747 = vpop.f32.mrb[0].mxu0
        %v5748 = vadd.f32 %v5587, %v5747
        %v5749 = vpop.f32.mrb[0].mxu0
        %5750 = vdwg.mxu0
        %5751 = vmatprep.subr.bf16.mxu0 0
        %5752 = vmatpush1.bf16.msra.mxu0 %v5172
        %5753 = vmatprep.subr.bf16.mxu0 0
        %5754 = vmatpush1.bf16.msra.mxu0 %v5173
        %5755 = vmatprep.subr.bf16.mxu0 0
        %5756 = vmatpush1.bf16.msra.mxu0 %v5174
        %5757 = vmatprep.subr.bf16.mxu0 0
        %5758 = vmatpush1.bf16.msra.mxu0 %v5175
        %5759 = vmatprep.subr.bf16.mxu0 0
        %5760 = vmatpush1.bf16.msra.mxu0 %v5176
        %5761 = vmatprep.subr.bf16.mxu0 0
        %5762 = vmatpush1.bf16.msra.mxu0 %v5177
        %5763 = vmatprep.subr.bf16.mxu0 0
        %5764 = vmatpush1.bf16.msra.mxu0 %v5178
        %5765 = vmatprep.subr.bf16.mxu0 0
        %5766 = vmatpush1.bf16.msra.mxu0 %v5179
        %5767 = vmatprep.subr.bf16.mxu0 0
        %5768 = vmatpush1.bf16.msra.mxu0 %v5180
        %5769 = vmatprep.subr.bf16.mxu0 0
        %5770 = vmatpush1.bf16.msra.mxu0 %v5181
        %5771 = vmatprep.subr.bf16.mxu0 0
        %5772 = vmatpush1.bf16.msra.mxu0 %v5182
        %5773 = vmatprep.subr.bf16.mxu0 0
        %5774 = vmatpush1.bf16.msra.mxu0 %v5183
        %5775 = vmatprep.subr.bf16.mxu0 0
        %5776 = vmatpush1.bf16.msra.mxu0 %v5184
        %5777 = vmatprep.subr.bf16.mxu0 0
        %5778 = vmatpush1.bf16.msra.mxu0 %v5185
        %5779 = vmatprep.subr.bf16.mxu0 0
        %5780 = vmatpush1.bf16.msra.mxu0 %v5186
        %5781 = vmatprep.subr.bf16.mxu0 0
        %5782 = vmatpush1.bf16.msra.mxu0 %v5187
        %5783 = vmatprep.mubr.bf16.mxu0 %v4531
        %5784 = vmatmul.mubr.bf16.gmra.mrb[0].mxu0 %v4653
        %v5785 = vpop.f32.mrb[0].mxu0
        %v5786 = vadd.f32 %v5625, %v5785
        %v5787 = vpop.f32.mrb[0].mxu0
        %v5788 = vpop.f32.mrb[0].mxu0
        %v5789 = vadd.f32 %v5628, %v5788
        %v5790 = vpop.f32.mrb[0].mxu0
        %5791 = vmatprep.mubr.bf16.mxu0 %v4532
        %5792 = vmatmul.mubr.bf16.gmra.mrb[0].mxu0 %v4654
        %v5793 = vpop.f32.mrb[0].mxu0
        %v5794 = vadd.f32 %v5633, %v5793
        %v5795 = vpop.f32.mrb[0].mxu0
        %v5796 = vpop.f32.mrb[0].mxu0
        %v5797 = vadd.f32 %v5636, %v5796
        %v5798 = vpop.f32.mrb[0].mxu0
        %5799 = vmatprep.mubr.bf16.mxu0 %v4533
        %5800 = vmatmul.mubr.bf16.gmra.mrb[0].mxu0 %v4655
        %v5801 = vpop.f32.mrb[0].mxu0
        %v5802 = vadd.f32 %v5641, %v5801
        %v5803 = vpop.f32.mrb[0].mxu0
        %v5804 = vpop.f32.mrb[0].mxu0
        %v5805 = vadd.f32 %v5644, %v5804
        %v5806 = vpop.f32.mrb[0].mxu0
        %5807 = vmatprep.mubr.bf16.mxu0 %v4534
        %5808 = vmatmul.mubr.bf16.gmra.mrb[0].mxu0 %v4656
        %v5809 = vpop.f32.mrb[0].mxu0
        %v5810 = vadd.f32 %v5649, %v5809
        %v5811 = vpop.f32.mrb[0].mxu0
        %v5812 = vpop.f32.mrb[0].mxu0
        %v5813 = vadd.f32 %v5652, %v5812
        %v5814 = vpop.f32.mrb[0].mxu0
        %5815 = vmatprep.mubr.bf16.mxu0 %v4535
        %5816 = vmatmul.mubr.bf16.gmra.mrb[0].mxu0 %v4657
        %v5817 = vpop.f32.mrb[0].mxu0
        %v5818 = vadd.f32 %v5657, %v5817
        %v5819 = vpop.f32.mrb[0].mxu0
        %v5820 = vpop.f32.mrb[0].mxu0
        %v5821 = vadd.f32 %v5660, %v5820
        %v5822 = vpop.f32.mrb[0].mxu0
        %5823 = vmatprep.mubr.bf16.mxu0 %v4536
        %5824 = vmatmul.mubr.bf16.gmra.mrb[0].mxu0 %v4658
        %v5825 = vpop.f32.mrb[0].mxu0
        %v5826 = vadd.f32 %v5665, %v5825
        %v5827 = vpop.f32.mrb[0].mxu0
        %v5828 = vpop.f32.mrb[0].mxu0
        %v5829 = vadd.f32 %v5668, %v5828
        %v5830 = vpop.f32.mrb[0].mxu0
        %5831 = vmatprep.mubr.bf16.mxu0 %v4537
        %5832 = vmatmul.mubr.bf16.gmra.mrb[0].mxu0 %v4659
        %v5833 = vpop.f32.mrb[0].mxu0
        %v5834 = vadd.f32 %v5673, %v5833
        %v5835 = vpop.f32.mrb[0].mxu0
        %v5836 = vpop.f32.mrb[0].mxu0
        %v5837 = vadd.f32 %v5676, %v5836
        %v5838 = vpop.f32.mrb[0].mxu0
        %5839 = vmatprep.mubr.bf16.mxu0 %v4538
        %5840 = vmatmul.mubr.bf16.gmra.mrb[0].mxu0 %v4660
        %v5841 = vpop.f32.mrb[0].mxu0
        %v5842 = vadd.f32 %v5681, %v5841
        %v5843 = vpop.f32.mrb[0].mxu0
        %v5844 = vpop.f32.mrb[0].mxu0
        %v5845 = vadd.f32 %v5684, %v5844
        %v5846 = vpop.f32.mrb[0].mxu0
        %5847 = vmatprep.mubr.bf16.mxu0 %v4539
        %5848 = vmatmul.mubr.bf16.gmra.mrb[0].mxu0 %v4661
        %v5849 = vpop.f32.mrb[0].mxu0
        %v5850 = vadd.f32 %v5689, %v5849
        %v5851 = vpop.f32.mrb[0].mxu0
        %v5852 = vpop.f32.mrb[0].mxu0
        %v5853 = vadd.f32 %v5692, %v5852
        %v5854 = vpop.f32.mrb[0].mxu0
        %5855 = vmatprep.mubr.bf16.mxu0 %v4540
        %5856 = vmatmul.mubr.bf16.gmra.mrb[0].mxu0 %v4662
        %v5857 = vpop.f32.mrb[0].mxu0
        %v5858 = vadd.f32 %v5697, %v5857
        %v5859 = vpop.f32.mrb[0].mxu0
        %v5860 = vpop.f32.mrb[0].mxu0
        %v5861 = vadd.f32 %v5700, %v5860
        %v5862 = vpop.f32.mrb[0].mxu0
        %5863 = vmatprep.mubr.bf16.mxu0 %v4541
        %5864 = vmatmul.mubr.bf16.gmra.mrb[0].mxu0 %v4663
        %v5865 = vpop.f32.mrb[0].mxu0
        %v5866 = vadd.f32 %v5705, %v5865
        %v5867 = vpop.f32.mrb[0].mxu0
        %v5868 = vpop.f32.mrb[0].mxu0
        %v5869 = vadd.f32 %v5708, %v5868
        %v5870 = vpop.f32.mrb[0].mxu0
        %5871 = vmatprep.mubr.bf16.mxu0 %v4542
        %5872 = vmatmul.mubr.bf16.gmra.mrb[0].mxu0 %v4664
        %v5873 = vpop.f32.mrb[0].mxu0
        %v5874 = vadd.f32 %v5713, %v5873
        %v5875 = vpop.f32.mrb[0].mxu0
        %v5876 = vpop.f32.mrb[0].mxu0
        %v5877 = vadd.f32 %v5716, %v5876
        %v5878 = vpop.f32.mrb[0].mxu0
        %5879 = vmatprep.mubr.bf16.mxu0 %v4543
        %5880 = vmatmul.mubr.bf16.gmra.mrb[0].mxu0 %v4665
        %v5881 = vpop.f32.mrb[0].mxu0
        %v5882 = vadd.f32 %v5721, %v5881
        %v5883 = vpop.f32.mrb[0].mxu0
        %v5884 = vpop.f32.mrb[0].mxu0
        %v5885 = vadd.f32 %v5724, %v5884
        %v5886 = vpop.f32.mrb[0].mxu0
        %5887 = vmatprep.mubr.bf16.mxu0 %v4544
        %5888 = vmatmul.mubr.bf16.gmra.mrb[0].mxu0 %v4666
        %v5889 = vpop.f32.mrb[0].mxu0
        %v5890 = vadd.f32 %v5729, %v5889
        %v5891 = vpop.f32.mrb[0].mxu0
        %v5892 = vpop.f32.mrb[0].mxu0
        %v5893 = vadd.f32 %v5732, %v5892
        %v5894 = vpop.f32.mrb[0].mxu0
        %5895 = vmatprep.mubr.bf16.mxu0 %v4630
        %5896 = vmatmul.mubr.bf16.gmra.mrb[0].mxu0 %v4667
        %v5897 = vpop.f32.mrb[0].mxu0
        %v5898 = vadd.f32 %v5737, %v5897
        %v5899 = vpop.f32.mrb[0].mxu0
        %v5900 = vpop.f32.mrb[0].mxu0
        %v5901 = vadd.f32 %v5740, %v5900
        %v5902 = vpop.f32.mrb[0].mxu0
        %5903 = vmatprep.mubr.bf16.mxu0 %v4671
        %5904 = vmatmul.mubr.bf16.gmra.mrb[0].mxu0 %v4668
        %v5905 = vpop.f32.mrb[0].mxu0
        %v5906 = vadd.f32 %v5745, %v5905
        %v5907 = vpop.f32.mrb[0].mxu0
        %v5908 = vpop.f32.mrb[0].mxu0
        %v5909 = vadd.f32 %v5748, %v5908
        %v5910 = vpop.f32.mrb[0].mxu0
        %5911 = vdwg.mxu0
        %5912 = vmatprep.subr.bf16.mxu0 0
        %5913 = vmatpush1.bf16.msra.mxu0 %v5188
        %5914 = vmatprep.subr.bf16.mxu0 0
        %5915 = vmatpush1.bf16.msra.mxu0 %v5189
        %5916 = vmatprep.subr.bf16.mxu0 0
        %5917 = vmatpush1.bf16.msra.mxu0 %v5190
        %5918 = vmatprep.subr.bf16.mxu0 0
        %5919 = vmatpush1.bf16.msra.mxu0 %v5191
        %5920 = vmatprep.subr.bf16.mxu0 0
        %5921 = vmatpush1.bf16.msra.mxu0 %v5192
        %5922 = vmatprep.subr.bf16.mxu0 0
        %5923 = vmatpush1.bf16.msra.mxu0 %v5193
        %5924 = vmatprep.subr.bf16.mxu0 0
        %5925 = vmatpush1.bf16.msra.mxu0 %v5194
        %5926 = vmatprep.subr.bf16.mxu0 0
        %5927 = vmatpush1.bf16.msra.mxu0 %v5195
        %5928 = vmatprep.subr.bf16.mxu0 0
        %5929 = vmatpush1.bf16.msra.mxu0 0
        %5930 = vmatprep.subr.bf16.mxu0 0
        %5931 = vmatpush1.bf16.msra.mxu0 0
        %5932 = vmatprep.subr.bf16.mxu0 0
        %5933 = vmatpush1.bf16.msra.mxu0 0
        %5934 = vmatprep.subr.bf16.mxu0 0
        %5935 = vmatpush1.bf16.msra.mxu0 0
        %5936 = vmatprep.subr.bf16.mxu0 0
        %5937 = vmatpush1.bf16.msra.mxu0 0
        %5938 = vmatprep.subr.bf16.mxu0 0
        %5939 = vmatpush1.bf16.msra.mxu0 0
        %5940 = vmatprep.subr.bf16.mxu0 0
        %5941 = vmatpush1.bf16.msra.mxu0 0
        %5942 = vmatprep.subr.bf16.mxu0 0
        %5943 = vmatpush1.bf16.msra.mxu0 0
        %5944 = vmatprep.mubr.bf16.mxu0 0
        %5945 = vmatmul.mubr.bf16.gmra.mrb[0].mxu0 %v4675
        %v5946 = vpop.f32.mrb[0].mxu0
        %v5947 = vadd.f32 %v5786, %v5946
        %v5948 = vpop.f32.mrb[0].mxu0
        %v5949 = vpop.f32.mrb[0].mxu0
        %v5950 = vadd.f32 %v5789, %v5949
        %v5951 = vpop.f32.mrb[0].mxu0
        %5952 = vmatprep.mubr.bf16.mxu0 0
        %5953 = vmatmul.mubr.bf16.gmra.mrb[0].mxu0 %v4676
        %v5954 = vpop.f32.mrb[0].mxu0
        %v5955 = vadd.f32 %v5794, %v5954
        %v5956 = vpop.f32.mrb[0].mxu0
        %v5957 = vpop.f32.mrb[0].mxu0
        %v5958 = vadd.f32 %v5797, %v5957
        %v5959 = vpop.f32.mrb[0].mxu0
        %5960 = vmatprep.mubr.bf16.mxu0 0
        %5961 = vmatmul.mubr.bf16.gmra.mrb[0].mxu0 %v4677
        %v5962 = vpop.f32.mrb[0].mxu0
        %v5963 = vadd.f32 %v5802, %v5962
        %v5964 = vpop.f32.mrb[0].mxu0
        %v5965 = vpop.f32.mrb[0].mxu0
        %v5966 = vadd.f32 %v5805, %v5965
        %v5967 = vpop.f32.mrb[0].mxu0
        %5968 = vmatprep.mubr.bf16.mxu0 0
        %5969 = vmatmul.mubr.bf16.gmra.mrb[0].mxu0 %v4678
        %v5970 = vpop.f32.mrb[0].mxu0
        %v5971 = vadd.f32 %v5810, %v5970
        %v5972 = vpop.f32.mrb[0].mxu0
        %v5973 = vpop.f32.mrb[0].mxu0
        %v5974 = vadd.f32 %v5813, %v5973
        %v5975 = vpop.f32.mrb[0].mxu0
        %5976 = vmatprep.mubr.bf16.mxu0 0
        %5977 = vmatmul.mubr.bf16.gmra.mrb[0].mxu0 %v4679
        %v5978 = vpop.f32.mrb[0].mxu0
        %v5979 = vadd.f32 %v5818, %v5978
        %v5980 = vpop.f32.mrb[0].mxu0
        %v5981 = vpop.f32.mrb[0].mxu0
        %v5982 = vadd.f32 %v5821, %v5981
        %v5983 = vpop.f32.mrb[0].mxu0
        %5984 = vmatprep.mubr.bf16.mxu0 0
        %5985 = vmatmul.mubr.bf16.gmra.mrb[0].mxu0 %v4680
        %v5986 = vpop.f32.mrb[0].mxu0
        %v5987 = vadd.f32 %v5826, %v5986
        %v5988 = vpop.f32.mrb[0].mxu0
        %v5989 = vpop.f32.mrb[0].mxu0
        %v5990 = vadd.f32 %v5829, %v5989
        %v5991 = vpop.f32.mrb[0].mxu0
        %5992 = vmatprep.mubr.bf16.mxu0 0
        %5993 = vmatmul.mubr.bf16.gmra.mrb[0].mxu0 %v4681
        %v5994 = vpop.f32.mrb[0].mxu0
        %v5995 = vadd.f32 %v5834, %v5994
        %v5996 = vpop.f32.mrb[0].mxu0
        %v5997 = vpop.f32.mrb[0].mxu0
        %v5998 = vadd.f32 %v5837, %v5997
        %v5999 = vpop.f32.mrb[0].mxu0
        %6000 = vmatprep.mubr.bf16.mxu0 0
        %6001 = vmatmul.mubr.bf16.gmra.mrb[0].mxu0 %v4682
        %v6002 = vpop.f32.mrb[0].mxu0
        %v6003 = vadd.f32 %v5842, %v6002
        %v6004 = vpop.f32.mrb[0].mxu0
        %v6005 = vpop.f32.mrb[0].mxu0
        %v6006 = vadd.f32 %v5845, %v6005
        %v6007 = vpop.f32.mrb[0].mxu0
        %6008 = vmatprep.mubr.bf16.mxu0 0
        %6009 = vmatmul.mubr.bf16.gmra.mrb[0].mxu0 %v4683
        %v6010 = vpop.f32.mrb[0].mxu0
        %v6011 = vadd.f32 %v5850, %v6010
        %v6012 = vpop.f32.mrb[0].mxu0
        %v6013 = vpop.f32.mrb[0].mxu0
        %v6014 = vadd.f32 %v5853, %v6013
        %v6015 = vpop.f32.mrb[0].mxu0
        %6016 = vmatprep.mubr.bf16.mxu0 0
        %6017 = vmatmul.mubr.bf16.gmra.mrb[0].mxu0 %v4684
        %v6018 = vpop.f32.mrb[0].mxu0
        %v6019 = vadd.f32 %v5858, %v6018
        %v6020 = vpop.f32.mrb[0].mxu0
        %v6021 = vpop.f32.mrb[0].mxu0
        %v6022 = vadd.f32 %v5861, %v6021
        %v6023 = vpop.f32.mrb[0].mxu0
        %6024 = vmatprep.mubr.bf16.mxu0 0
        %6025 = vmatmul.mubr.bf16.gmra.mrb[0].mxu0 %v4685
        %v6026 = vpop.f32.mrb[0].mxu0
        %v6027 = vadd.f32 %v5866, %v6026
        %v6028 = vpop.f32.mrb[0].mxu0
        %v6029 = vpop.f32.mrb[0].mxu0
        %v6030 = vadd.f32 %v5869, %v6029
        %v6031 = vpop.f32.mrb[0].mxu0
        %6032 = vmatprep.mubr.bf16.mxu0 0
        %6033 = vmatmul.mubr.bf16.gmra.mrb[0].mxu0 %v4686
        %v6034 = vpop.f32.mrb[0].mxu0
        %v6035 = vadd.f32 %v5874, %v6034
        %v6036 = vpop.f32.mrb[0].mxu0
        %v6037 = vpop.f32.mrb[0].mxu0
        %v6038 = vadd.f32 %v5877, %v6037
        %v6039 = vpop.f32.mrb[0].mxu0
        %6040 = vmatprep.mubr.bf16.mxu0 0
        %6041 = vmatmul.mubr.bf16.gmra.mrb[0].mxu0 %v4687
        %v6042 = vpop.f32.mrb[0].mxu0
        %v6043 = vadd.f32 %v5882, %v6042
        %v6044 = vpop.f32.mrb[0].mxu0
        %v6045 = vpop.f32.mrb[0].mxu0
        %v6046 = vadd.f32 %v5885, %v6045
        %v6047 = vpop.f32.mrb[0].mxu0
        %6048 = vmatprep.mubr.bf16.mxu0 0
        %6049 = vmatmul.mubr.bf16.gmra.mrb[0].mxu0 %v4688
        %v6050 = vpop.f32.mrb[0].mxu0
        %v6051 = vadd.f32 %v5890, %v6050
        %v6052 = vpop.f32.mrb[0].mxu0
        %v6053 = vpop.f32.mrb[0].mxu0
        %v6054 = vadd.f32 %v5893, %v6053
        %v6055 = vpop.f32.mrb[0].mxu0
        %6056 = vmatprep.mubr.bf16.mxu0 0
        %6057 = vmatmul.mubr.bf16.gmra.mrb[0].mxu0 %v4689
        %v6058 = vpop.f32.mrb[0].mxu0
        %v6059 = vadd.f32 %v5898, %v6058
        %v6060 = vpop.f32.mrb[0].mxu0
        %v6061 = vpop.f32.mrb[0].mxu0
        %v6062 = vadd.f32 %v5901, %v6061
        %v6063 = vpop.f32.mrb[0].mxu0
        %6064 = vmatprep.mubr.bf16.mxu0 0
        %6065 = vmatmul.mubr.bf16.gmra.mrb[0].mxu0 %v4690
        %v6066 = vpop.f32.mrb[0].mxu0
        %v6067 = vadd.f32 %v5906, %v6066
        %v6068 = vpop.f32.mrb[0].mxu0
        %v6069 = vpop.f32.mrb[0].mxu0
        %v6070 = vadd.f32 %v5909, %v6069
        %v6071 = vpop.f32.mrb[0].mxu0
        %6072 = vdwg.mxu0
        %v6073 = vadd.f32 %v5947, %v5950
        %v6074 = vadd.f32 %v6073, %v5955
        %v6075 = vadd.f32 %v6074, %v5958
        %v6076 = vadd.f32 %v6075, %v5963
        %v6077 = vadd.f32 %v6076, %v5966
        %v6078 = vadd.f32 %v6077, %v5971
        %v6079 = vadd.f32 %v6078, %v5974
        %v6080 = vadd.f32 %v6079, %v5979
        %v6081 = vadd.f32 %v6080, %v5982
        %v6082 = vadd.f32 %v6081, %v5987
        %v6083 = vadd.f32 %v6082, %v5990
        %v6084 = vadd.f32 %v6083, %v5995
        %v6085 = vadd.f32 %v6084, %v5998
        %v6086 = vadd.f32 %v6085, %v6003
        %v6087 = vadd.f32 %v6086, %v6006
        %v6088 = vadd.f32 %v6087, %v6011
        %v6089 = vadd.f32 %v6088, %v6014
        %v6090 = vadd.f32 %v6089, %v6019
        %v6091 = vadd.f32 %v6090, %v6022
        %v6092 = vadd.f32 %v6091, %v6027
        %v6093 = vadd.f32 %v6092, %v6030
        %v6094 = vadd.f32 %v6093, %v6035
        %v6095 = vadd.f32 %v6094, %v6038
        %v6096 = vadd.f32 %v6095, %v6043
        %v6097 = vadd.f32 %v6096, %v6046
        %v6098 = vadd.f32 %v6097, %v6051
        %v6099 = vadd.f32 %v6098, %v6054
        %v6100 = vadd.f32 %v6099, %v6059
        %v6101 = vadd.f32 %v6100, %v6062
        %v6102 = vadd.f32 %v6101, %v6067
        %v6103 = vadd.f32 %v6102, %v6070
        %v6104 = vrot.slane %v6103, 4
        %v6105 = vadd.f32 %v6103, %v6104
        %v6106 = vrot.slane %v6105, 2
        %v6107 = vadd.f32 %v6105, %v6106
        %v6108 = vrot.slane %v6107, 1
        %v6109 = vadd.f32 %v6107, %v6108
        %v6110 = vmul.f32 %v6109, %v2354
        %v6111 = vsub.f32 %v5947, %v6110
        %v6112 = vsub.f32 %v5950, %v6110
        %v6113 = vsub.f32 %v5955, %v6110
        %v6114 = vsub.f32 %v5958, %v6110
        %v6115 = vsub.f32 %v5963, %v6110
        %v6116 = vsub.f32 %v5966, %v6110
        %v6117 = vsub.f32 %v5971, %v6110
        %v6118 = vsub.f32 %v5974, %v6110
        %v6119 = vsub.f32 %v5979, %v6110
        %v6120 = vsub.f32 %v5982, %v6110
        %v6121 = vsub.f32 %v5987, %v6110
        %v6122 = vsub.f32 %v5990, %v6110
        %v6123 = vsub.f32 %v5995, %v6110
        %v6124 = vsub.f32 %v5998, %v6110
        %v6125 = vsub.f32 %v6003, %v6110
        %v6126 = vsub.f32 %v6006, %v6110
        %v6127 = vsub.f32 %v6011, %v6110
        %v6128 = vsub.f32 %v6014, %v6110
        %v6129 = vsub.f32 %v6019, %v6110
        %v6130 = vsub.f32 %v6022, %v6110
        %v6131 = vsub.f32 %v6027, %v6110
        %v6132 = vsub.f32 %v6030, %v6110
        %v6133 = vsub.f32 %v6035, %v6110
        %v6134 = vsub.f32 %v6038, %v6110
        %v6135 = vsub.f32 %v6043, %v6110
        %v6136 = vsub.f32 %v6046, %v6110
        %v6137 = vsub.f32 %v6051, %v6110
        %v6138 = vsub.f32 %v6054, %v6110
        %v6139 = vsub.f32 %v6059, %v6110
        %v6140 = vsub.f32 %v6062, %v6110
        %v6141 = vsub.f32 %v6067, %v6110
        %v6142 = vsub.f32 %v6070, %v6110
        %v6143 = vmul.f32 %v6111, %v6111
        %v6144 = vmul.f32 %v6112, %v6112
        %v6145 = vmul.f32 %v6113, %v6113
        %v6146 = vmul.f32 %v6114, %v6114
        %v6147 = vmul.f32 %v6115, %v6115
        %v6148 = vmul.f32 %v6116, %v6116
        %v6149 = vmul.f32 %v6117, %v6117
        %v6150 = vmul.f32 %v6118, %v6118
        %v6151 = vmul.f32 %v6119, %v6119
        %v6152 = vmul.f32 %v6120, %v6120
        %v6153 = vmul.f32 %v6121, %v6121
        %v6154 = vmul.f32 %v6122, %v6122
        %v6155 = vmul.f32 %v6123, %v6123
        %v6156 = vmul.f32 %v6124, %v6124
        %v6157 = vmul.f32 %v6125, %v6125
        %v6158 = vmul.f32 %v6126, %v6126
        %v6159 = vmul.f32 %v6127, %v6127
        %v6160 = vmul.f32 %v6128, %v6128
        %v6161 = vmul.f32 %v6129, %v6129
        %v6162 = vmul.f32 %v6130, %v6130
        %v6163 = vmul.f32 %v6131, %v6131
        %v6164 = vmul.f32 %v6132, %v6132
        %v6165 = vmul.f32 %v6133, %v6133
        %v6166 = vmul.f32 %v6134, %v6134
        %v6167 = vmul.f32 %v6135, %v6135
        %v6168 = vmul.f32 %v6136, %v6136
        %v6169 = vmul.f32 %v6137, %v6137
        %v6170 = vmul.f32 %v6138, %v6138
        %v6171 = vmul.f32 %v6139, %v6139
        %v6172 = vmul.f32 %v6140, %v6140
        %v6173 = vmul.f32 %v6141, %v6141
        %v6174 = vmul.f32 %v6142, %v6142
        %v6175 = vadd.f32 %v6143, %v6144
        %v6176 = vadd.f32 %v6175, %v6145
        %v6177 = vadd.f32 %v6176, %v6146
        %v6178 = vadd.f32 %v6177, %v6147
        %v6179 = vadd.f32 %v6178, %v6148
        %v6180 = vadd.f32 %v6179, %v6149
        %v6181 = vadd.f32 %v6180, %v6150
        %v6182 = vadd.f32 %v6181, %v6151
        %v6183 = vadd.f32 %v6182, %v6152
        %v6184 = vadd.f32 %v6183, %v6153
        %v6185 = vadd.f32 %v6184, %v6154
        %v6186 = vadd.f32 %v6185, %v6155
        %v6187 = vadd.f32 %v6186, %v6156
        %v6188 = vadd.f32 %v6187, %v6157
        %v6189 = vadd.f32 %v6188, %v6158
        %v6190 = vadd.f32 %v6189, %v6159
        %v6191 = vadd.f32 %v6190, %v6160
        %v6192 = vadd.f32 %v6191, %v6161
        %v6193 = vadd.f32 %v6192, %v6162
        %v6194 = vadd.f32 %v6193, %v6163
        %v6195 = vadd.f32 %v6194, %v6164
        %v6196 = vadd.f32 %v6195, %v6165
        %v6197 = vadd.f32 %v6196, %v6166
        %v6198 = vadd.f32 %v6197, %v6167
        %v6199 = vadd.f32 %v6198, %v6168
        %v6200 = vadd.f32 %v6199, %v6169
        %v6201 = vadd.f32 %v6200, %v6170
        %v6202 = vadd.f32 %v6201, %v6171
        %v6203 = vadd.f32 %v6202, %v6172
        %v6204 = vadd.f32 %v6203, %v6173
        %v6205 = vadd.f32 %v6204, %v6174
        %v6206 = vrot.slane %v6205, 4
        %v6207 = vadd.f32 %v6205, %v6206
        %v6208 = vrot.slane %v6207, 2
        %v6209 = vadd.f32 %v6207, %v6208
        %v6210 = vrot.slane %v6209, 1
        %v6211 = vadd.f32 %v6209, %v6210
        %v6212 = vmul.f32 %v6211, %v2354
        %v6213 = vadd.f32 %v6212, 1e-05
        %v6214 = vrsqrt.pop %v6213
        %v6215 = vmul.f32 %v6111, %v6214
        %v6216 = vmul.f32 %v6112, %v6214
        %v6217 = vmul.f32 %v6113, %v6214
        %v6218 = vmul.f32 %v6114, %v6214
        %v6219 = vmul.f32 %v6115, %v6214
        %v6220 = vmul.f32 %v6116, %v6214
        %v6221 = vmul.f32 %v6117, %v6214
        %v6222 = vmul.f32 %v6118, %v6214
        %v6223 = vmul.f32 %v6119, %v6214
        %v6224 = vmul.f32 %v6120, %v6214
        %v6225 = vmul.f32 %v6121, %v6214
        %v6226 = vmul.f32 %v6122, %v6214
        %v6227 = vmul.f32 %v6123, %v6214
        %v6228 = vmul.f32 %v6124, %v6214
        %v6229 = vmul.f32 %v6125, %v6214
        %v6230 = vmul.f32 %v6126, %v6214
        %v6231 = vmul.f32 %v6127, %v6214
        %v6232 = vmul.f32 %v6128, %v6214
        %v6233 = vmul.f32 %v6129, %v6214
        %v6234 = vmul.f32 %v6130, %v6214
        %v6235 = vmul.f32 %v6131, %v6214
        %v6236 = vmul.f32 %v6132, %v6214
        %v6237 = vmul.f32 %v6133, %v6214
        %v6238 = vmul.f32 %v6134, %v6214
        %v6239 = vmul.f32 %v6135, %v6214
        %v6240 = vmul.f32 %v6136, %v6214
        %v6241 = vmul.f32 %v6137, %v6214
        %v6242 = vmul.f32 %v6138, %v6214
        %v6243 = vmul.f32 %v6139, %v6214
        %v6244 = vmul.f32 %v6140, %v6214
        %v6245 = vmul.f32 %v6141, %v6214
        %v6246 = vmul.f32 %v6142, %v6214
        %v6247 = vmax.f32 %v6215, 0.0
        %v6248 = vmax.f32 %v6216, 0.0
        %v6249 = vmax.f32 %v6217, 0.0
        %v6250 = vmax.f32 %v6218, 0.0
        %v6251 = vmax.f32 %v6219, 0.0
        %v6252 = vmax.f32 %v6220, 0.0
        %v6253 = vmax.f32 %v6221, 0.0
        %v6254 = vmax.f32 %v6222, 0.0
        %v6255 = vmax.f32 %v6223, 0.0
        %v6256 = vmax.f32 %v6224, 0.0
        %v6257 = vmax.f32 %v6225, 0.0
        %v6258 = vmax.f32 %v6226, 0.0
        %v6259 = vmax.f32 %v6227, 0.0
        %v6260 = vmax.f32 %v6228, 0.0
        %v6261 = vmax.f32 %v6229, 0.0
        %v6262 = vmax.f32 %v6230, 0.0
        %v6263 = vmax.f32 %v6231, 0.0
        %v6264 = vmax.f32 %v6232, 0.0
        %v6265 = vmax.f32 %v6233, 0.0
        %v6266 = vmax.f32 %v6234, 0.0
        %v6267 = vmax.f32 %v6235, 0.0
        %v6268 = vmax.f32 %v6236, 0.0
        %v6269 = vmax.f32 %v6237, 0.0
        %v6270 = vmax.f32 %v6238, 0.0
        %v6271 = vmax.f32 %v6239, 0.0
        %v6272 = vmax.f32 %v6240, 0.0
        %v6273 = vmax.f32 %v6241, 0.0
        %v6274 = vmax.f32 %v6242, 0.0
        %v6275 = vmax.f32 %v6243, 0.0
        %v6276 = vmax.f32 %v6244, 0.0
        %v6277 = vmax.f32 %v6245, 0.0
        %v6278 = vmax.f32 %v6246, 0.0
        %6279 = vst [vmem:[#allocation2 + $0x20] sm:$0xff] %v6247
        %6280 = vst [vmem:[#allocation2 + $0x28] sm:$0xff] %v6248
        %6281 = vst [vmem:[#allocation2 + $0x30] sm:$0xff] %v6249
        %6282 = vst [vmem:[#allocation2 + $0x38] sm:$0xff] %v6250
        %6283 = vst [vmem:[#allocation2 + $0x40] sm:$0xff] %v6251
        %6284 = vst [vmem:[#allocation2 + $0x48] sm:$0xff] %v6252
        %6285 = vst [vmem:[#allocation2 + $0x50] sm:$0xff] %v6253
        %6286 = vst [vmem:[#allocation2 + $0x58] sm:$0xff] %v6254
        %6287 = vst [vmem:[#allocation2 + $0x60] sm:$0xff] %v6255
        %6288 = vst [vmem:[#allocation2 + $0x68] sm:$0xff] %v6256
        %6289 = vst [vmem:[#allocation2 + $0x70] sm:$0xff] %v6257
        %6290 = vst [vmem:[#allocation2 + $0x78] sm:$0xff] %v6258
        %6291 = vst [vmem:[#allocation2 + $0x80] sm:$0xff] %v6259
        %6292 = vst [vmem:[#allocation2 + $0x88] sm:$0xff] %v6260
        %6293 = vst [vmem:[#allocation2 + $0x90] sm:$0xff] %v6261
        %6294 = vst [vmem:[#allocation2 + $0x98] sm:$0xff] %v6262
        %6295 = vst [vmem:[#allocation2 + $0xa0] sm:$0xff] %v6263
        %6296 = vst [vmem:[#allocation2 + $0xa8] sm:$0xff] %v6264
        %6297 = vst [vmem:[#allocation2 + $0xb0] sm:$0xff] %v6265
        %6298 = vst [vmem:[#allocation2 + $0xb8] sm:$0xff] %v6266
        %6299 = vst [vmem:[#allocation2 + $0xc0] sm:$0xff] %v6267
        %6300 = vst [vmem:[#allocation2 + $0xc8] sm:$0xff] %v6268
        %6301 = vst [vmem:[#allocation2 + $0xd0] sm:$0xff] %v6269
        %6302 = vst [vmem:[#allocation2 + $0xd8] sm:$0xff] %v6270
        %6303 = vst [vmem:[#allocation2 + $0xe0] sm:$0xff] %v6271
        %6304 = vst [vmem:[#allocation2 + $0xe8] sm:$0xff] %v6272
        %6305 = vst [vmem:[#allocation2 + $0xf0] sm:$0xff] %v6273
        %6306 = vst [vmem:[#allocation2 + $0xf8] sm:$0xff] %v6274
        %6307 = vst [vmem:[#allocation2 + $0x100] sm:$0xff] %v6275
        %6308 = vst [vmem:[#allocation2 + $0x108] sm:$0xff] %v6276
        %6309 = vst [vmem:[#allocation2 + $0x110] sm:$0xff] %v6277
        %6310 = vst [vmem:[#allocation2 + $0x118] sm:$0xff] %v6278
        %v6311 = vld [vmem:[#allocation2 + $0xf] sm:$0xff]
        %v6312 = vld [vmem:[#allocation2 + $0x17] sm:$0xff]
        %v6313 = vld [vmem:[#allocation2 + $0x1f] sm:$0xff]
        %v6314 = vld [vmem:[#allocation2 + $0x27] sm:$0xff]
        %v6315 = vld [vmem:[#allocation2 + $0x2f] sm:$0xff]
        %v6316 = vld [vmem:[#allocation2 + $0x37] sm:$0xff]
        %v6317 = vld [vmem:[#allocation2 + $0x3f] sm:$0xff]
        %v6318 = vld [vmem:[#allocation2 + $0x47] sm:$0xff]
        %v6319 = vld [vmem:[#allocation2 + $0x4f] sm:$0xff]
        %v6320 = vld [vmem:[#allocation2 + $0x57] sm:$0xff]
        %v6321 = vld [vmem:[#allocation2 + $0x5f] sm:$0xff]
        %v6322 = vld [vmem:[#allocation2 + $0x67] sm:$0xff]
        %v6323 = vld [vmem:[#allocation2 + $0x6f] sm:$0xff]
        %v6324 = vld [vmem:[#allocation2 + $0x77] sm:$0xff]
        %v6325 = vld [vmem:[#allocation2 + $0x7f] sm:$0xff]
        %v6326 = vld [vmem:[#allocation2 + $0x87] sm:$0xff]
        %v6327 = vld [vmem:[#allocation2 + $0x8f] sm:$0xff]
        %v6328 = vld [vmem:[#allocation2 + $0x97] sm:$0xff]
        %v6329 = vld [vmem:[#allocation2 + $0x9f] sm:$0xff]
        %v6330 = vld [vmem:[#allocation2 + $0xa7] sm:$0xff]
        %v6331 = vld [vmem:[#allocation2 + $0xaf] sm:$0xff]
        %v6332 = vld [vmem:[#allocation2 + $0xb7] sm:$0xff]
        %v6333 = vld [vmem:[#allocation2 + $0xbf] sm:$0xff]
        %v6334 = vld [vmem:[#allocation2 + $0xc7] sm:$0xff]
        %v6335 = vld [vmem:[#allocation2 + $0xcf] sm:$0xff]
        %v6336 = vld [vmem:[#allocation2 + $0xd7] sm:$0xff]
        %v6337 = vld [vmem:[#allocation2 + $0xdf] sm:$0xff]
        %v6338 = vld [vmem:[#allocation2 + $0xe7] sm:$0xff]
        %v6339 = vld [vmem:[#allocation2 + $0xef] sm:$0xff]
        %v6340 = vld [vmem:[#allocation2 + $0xf7] sm:$0xff]
        %v6341 = vld [vmem:[#allocation2 + $0xff] sm:$0xff]
        %v6342 = vld [vmem:[#allocation2 + $0x107] sm:$0xff]
        %v6343 = vpack.c.bf16 %v6312, %v6311
        %v6344 = vpack.c.bf16 %v6314, %v6313
        %v6345 = vpack.c.bf16 %v6316, %v6315
        %v6346 = vpack.c.bf16 %v6318, %v6317
        %v6347 = vpack.c.bf16 %v6320, %v6319
        %v6348 = vpack.c.bf16 %v6322, %v6321
        %v6349 = vpack.c.bf16 %v6324, %v6323
        %v6350 = vpack.c.bf16 %v6326, %v6325
        %v6351 = vpack.c.bf16 %v6328, %v6327
        %v6352 = vpack.c.bf16 %v6330, %v6329
        %v6353 = vpack.c.bf16 %v6332, %v6331
        %v6354 = vpack.c.bf16 %v6334, %v6333
        %v6355 = vpack.c.bf16 %v6336, %v6335
        %v6356 = vpack.c.bf16 %v6338, %v6337
        %v6357 = vpack.c.bf16 %v6340, %v6339
        %v6358 = vpack.c.bf16 %v6342, %v6341
        %v6359 = vsel %vm582, %v6343, 0
        %v6360 = vsel %vm583, %v6344, 0
        %v6361 = vsel %vm584, %v6345, 0
        %v6362 = vsel %vm585, %v6346, 0
        %v6363 = vsel %vm586, %v6347, 0
        %v6364 = vsel %vm587, %v6348, 0
        %v6365 = vsel %vm588, %v6349, 0
        %v6366 = vsel %vm589, %v6350, 0
        %v6367 = vsel %vm590, %v6351, 0
        %v6368 = vsel %vm591, %v6352, 0
        %v6369 = vsel %vm592, %v6353, 0
        %v6370 = vsel %vm593, %v6354, 0
        %v6371 = vsel %vm594, %v6355, 0
        %v6372 = vsel %vm595, %v6356, 0
        %v6373 = vsel %vm596, %v6357, 0
        %v6374 = vsel %vm597, %v6358, 0
        %v6375 = vld [vmem:[#allocation2 + $0x10] sm:$0xff]
        %v6376 = vld [vmem:[#allocation2 + $0x18] sm:$0xff]
        %v6377 = vld [vmem:[#allocation2 + $0x20] sm:$0xff]
        %v6378 = vld [vmem:[#allocation2 + $0x28] sm:$0xff]
        %v6379 = vld [vmem:[#allocation2 + $0x30] sm:$0xff]
        %v6380 = vld [vmem:[#allocation2 + $0x38] sm:$0xff]
        %v6381 = vld [vmem:[#allocation2 + $0x40] sm:$0xff]
        %v6382 = vld [vmem:[#allocation2 + $0x48] sm:$0xff]
        %v6383 = vld [vmem:[#allocation2 + $0x50] sm:$0xff]
        %v6384 = vld [vmem:[#allocation2 + $0x58] sm:$0xff]
        %v6385 = vld [vmem:[#allocation2 + $0x60] sm:$0xff]
        %v6386 = vld [vmem:[#allocation2 + $0x68] sm:$0xff]
        %v6387 = vld [vmem:[#allocation2 + $0x70] sm:$0xff]
        %v6388 = vld [vmem:[#allocation2 + $0x78] sm:$0xff]
        %v6389 = vld [vmem:[#allocation2 + $0x80] sm:$0xff]
        %v6390 = vld [vmem:[#allocation2 + $0x88] sm:$0xff]
        %v6391 = vld [vmem:[#allocation2 + $0x90] sm:$0xff]
        %v6392 = vld [vmem:[#allocation2 + $0x98] sm:$0xff]
        %v6393 = vld [vmem:[#allocation2 + $0xa0] sm:$0xff]
        %v6394 = vld [vmem:[#allocation2 + $0xa8] sm:$0xff]
        %v6395 = vld [vmem:[#allocation2 + $0xb0] sm:$0xff]
        %v6396 = vld [vmem:[#allocation2 + $0xb8] sm:$0xff]
        %v6397 = vld [vmem:[#allocation2 + $0xc0] sm:$0xff]
        %v6398 = vld [vmem:[#allocation2 + $0xc8] sm:$0xff]
        %v6399 = vld [vmem:[#allocation2 + $0xd0] sm:$0xff]
        %v6400 = vld [vmem:[#allocation2 + $0xd8] sm:$0xff]
        %v6401 = vld [vmem:[#allocation2 + $0xe0] sm:$0xff]
        %v6402 = vld [vmem:[#allocation2 + $0xe8] sm:$0xff]
        %v6403 = vld [vmem:[#allocation2 + $0xf0] sm:$0xff]
        %v6404 = vld [vmem:[#allocation2 + $0xf8] sm:$0xff]
        %v6405 = vld [vmem:[#allocation2 + $0x100] sm:$0xff]
        %v6406 = vld [vmem:[#allocation2 + $0x108] sm:$0xff]
        %v6407 = vpack.c.bf16 %v6376, %v6375
        %v6408 = vpack.c.bf16 %v6378, %v6377
        %v6409 = vpack.c.bf16 %v6380, %v6379
        %v6410 = vpack.c.bf16 %v6382, %v6381
        %v6411 = vpack.c.bf16 %v6384, %v6383
        %v6412 = vpack.c.bf16 %v6386, %v6385
        %v6413 = vpack.c.bf16 %v6388, %v6387
        %v6414 = vpack.c.bf16 %v6390, %v6389
        %v6415 = vpack.c.bf16 %v6392, %v6391
        %v6416 = vpack.c.bf16 %v6394, %v6393
        %v6417 = vpack.c.bf16 %v6396, %v6395
        %v6418 = vpack.c.bf16 %v6398, %v6397
        %v6419 = vpack.c.bf16 %v6400, %v6399
        %v6420 = vpack.c.bf16 %v6402, %v6401
        %v6421 = vpack.c.bf16 %v6404, %v6403
        %v6422 = vpack.c.bf16 %v6406, %v6405
        %v6423 = vld [vmem:[#allocation2 + $0x11] sm:$0xff]
        %v6424 = vld [vmem:[#allocation2 + $0x19] sm:$0xff]
        %v6425 = vld [vmem:[#allocation2 + $0x21] sm:$0xff]
        %v6426 = vld [vmem:[#allocation2 + $0x29] sm:$0xff]
        %v6427 = vld [vmem:[#allocation2 + $0x31] sm:$0xff]
        %v6428 = vld [vmem:[#allocation2 + $0x39] sm:$0xff]
        %v6429 = vld [vmem:[#allocation2 + $0x41] sm:$0xff]
        %v6430 = vld [vmem:[#allocation2 + $0x49] sm:$0xff]
        %v6431 = vld [vmem:[#allocation2 + $0x51] sm:$0xff]
        %v6432 = vld [vmem:[#allocation2 + $0x59] sm:$0xff]
        %v6433 = vld [vmem:[#allocation2 + $0x61] sm:$0xff]
        %v6434 = vld [vmem:[#allocation2 + $0x69] sm:$0xff]
        %v6435 = vld [vmem:[#allocation2 + $0x71] sm:$0xff]
        %v6436 = vld [vmem:[#allocation2 + $0x79] sm:$0xff]
        %v6437 = vld [vmem:[#allocation2 + $0x81] sm:$0xff]
        %v6438 = vld [vmem:[#allocation2 + $0x89] sm:$0xff]
        %v6439 = vld [vmem:[#allocation2 + $0x91] sm:$0xff]
        %v6440 = vld [vmem:[#allocation2 + $0x99] sm:$0xff]
        %v6441 = vld [vmem:[#allocation2 + $0xa1] sm:$0xff]
        %v6442 = vld [vmem:[#allocation2 + $0xa9] sm:$0xff]
        %v6443 = vld [vmem:[#allocation2 + $0xb1] sm:$0xff]
        %v6444 = vld [vmem:[#allocation2 + $0xb9] sm:$0xff]
        %v6445 = vld [vmem:[#allocation2 + $0xc1] sm:$0xff]
        %v6446 = vld [vmem:[#allocation2 + $0xc9] sm:$0xff]
        %v6447 = vld [vmem:[#allocation2 + $0xd1] sm:$0xff]
        %v6448 = vld [vmem:[#allocation2 + $0xd9] sm:$0xff]
        %v6449 = vld [vmem:[#allocation2 + $0xe1] sm:$0xff]
        %v6450 = vld [vmem:[#allocation2 + $0xe9] sm:$0xff]
        %v6451 = vld [vmem:[#allocation2 + $0xf1] sm:$0xff]
        %v6452 = vld [vmem:[#allocation2 + $0xf9] sm:$0xff]
        %v6453 = vld [vmem:[#allocation2 + $0x101] sm:$0xff]
        %v6454 = vld [vmem:[#allocation2 + $0x109] sm:$0xff]
        %v6455 = vpack.c.bf16 %v6424, %v6423
        %v6456 = vpack.c.bf16 %v6426, %v6425
        %v6457 = vpack.c.bf16 %v6428, %v6427
        %v6458 = vpack.c.bf16 %v6430, %v6429
        %v6459 = vpack.c.bf16 %v6432, %v6431
        %v6460 = vpack.c.bf16 %v6434, %v6433
        %v6461 = vpack.c.bf16 %v6436, %v6435
        %v6462 = vpack.c.bf16 %v6438, %v6437
        %v6463 = vpack.c.bf16 %v6440, %v6439
        %v6464 = vpack.c.bf16 %v6442, %v6441
        %v6465 = vpack.c.bf16 %v6444, %v6443
        %v6466 = vpack.c.bf16 %v6446, %v6445
        %v6467 = vpack.c.bf16 %v6448, %v6447
        %v6468 = vpack.c.bf16 %v6450, %v6449
        %v6469 = vpack.c.bf16 %v6452, %v6451
        %v6470 = vpack.c.bf16 %v6454, %v6453
        %v6471 = vsel %vm822, %v6455, 0
        %v6472 = vsel %vm823, %v6456, 0
        %v6473 = vsel %vm824, %v6457, 0
        %v6474 = vsel %vm825, %v6458, 0
        %v6475 = vsel %vm826, %v6459, 0
        %v6476 = vsel %vm827, %v6460, 0
        %v6477 = vsel %vm828, %v6461, 0
        %v6478 = vsel %vm829, %v6462, 0
        %v6479 = vsel %vm830, %v6463, 0
        %v6480 = vsel %vm831, %v6464, 0
        %v6481 = vsel %vm832, %v6465, 0
        %v6482 = vsel %vm833, %v6466, 0
        %v6483 = vsel %vm834, %v6467, 0
        %v6484 = vsel %vm835, %v6468, 0
        %v6485 = vsel %vm836, %v6469, 0
        %v6486 = vsel %vm837, %v6470, 0
        %v6487 = vld [vmem:[#allocation2 + $0x10f] sm:$0xff]
        %v6488 = vld [vmem:[#allocation2 + $0x117] sm:$0xff]
        %v6489 = vpack.c.bf16 %v6488, %v6487
        %v6490 = vsel %vm582, %v6344, 0
        %v6491 = vsel %vm583, %v6345, 0
        %v6492 = vsel %vm584, %v6346, 0
        %v6493 = vsel %vm585, %v6347, 0
        %v6494 = vsel %vm586, %v6348, 0
        %v6495 = vsel %vm587, %v6349, 0
        %v6496 = vsel %vm588, %v6350, 0
        %v6497 = vsel %vm589, %v6351, 0
        %v6498 = vsel %vm590, %v6352, 0
        %v6499 = vsel %vm591, %v6353, 0
        %v6500 = vsel %vm592, %v6354, 0
        %v6501 = vsel %vm593, %v6355, 0
        %v6502 = vsel %vm594, %v6356, 0
        %v6503 = vsel %vm595, %v6357, 0
        %v6504 = vsel %vm596, %v6358, 0
        %v6505 = vsel %vm597, %v6489, 0
        %v6506 = vld [vmem:[#allocation2 + $0x110] sm:$0xff]
        %v6507 = vld [vmem:[#allocation2 + $0x118] sm:$0xff]
        %v6508 = vpack.c.bf16 %v6507, %v6506
        %v6509 = vld [vmem:[#allocation2 + $0x111] sm:$0xff]
        %v6510 = vld [vmem:[#allocation2 + $0x119] sm:$0xff]
        %v6511 = vpack.c.bf16 %v6510, %v6509
        %v6512 = vsel %vm822, %v6456, 0
        %v6513 = vsel %vm823, %v6457, 0
        %v6514 = vsel %vm824, %v6458, 0
        %v6515 = vsel %vm825, %v6459, 0
        %v6516 = vsel %vm826, %v6460, 0
        %v6517 = vsel %vm827, %v6461, 0
        %v6518 = vsel %vm828, %v6462, 0
        %v6519 = vsel %vm829, %v6463, 0
        %v6520 = vsel %vm830, %v6464, 0
        %v6521 = vsel %vm831, %v6465, 0
        %v6522 = vsel %vm832, %v6466, 0
        %v6523 = vsel %vm833, %v6467, 0
        %v6524 = vsel %vm834, %v6468, 0
        %v6525 = vsel %vm835, %v6469, 0
        %v6526 = vsel %vm836, %v6470, 0
        %v6527 = vsel %vm837, %v6511, 0
        %v6528 = vld [vmem:[#allocation2 + $0x11f] sm:$0xff]
        %v6529 = vld [vmem:[#allocation2 + $0x127] sm:$0xff]
        %v6530 = vpack.c.bf16 %v6529, %v6528
        %v6531 = vsel %vm582, %v6345, 0
        %v6532 = vsel %vm583, %v6346, 0
        %v6533 = vsel %vm584, %v6347, 0
        %v6534 = vsel %vm585, %v6348, 0
        %v6535 = vsel %vm586, %v6349, 0
        %v6536 = vsel %vm587, %v6350, 0
        %v6537 = vsel %vm588, %v6351, 0
        %v6538 = vsel %vm589, %v6352, 0
        %v6539 = vsel %vm590, %v6353, 0
        %v6540 = vsel %vm591, %v6354, 0
        %v6541 = vsel %vm592, %v6355, 0
        %v6542 = vsel %vm593, %v6356, 0
        %v6543 = vsel %vm594, %v6357, 0
        %v6544 = vsel %vm595, %v6358, 0
        %v6545 = vsel %vm596, %v6489, 0
        %v6546 = vsel %vm597, %v6530, 0
        %v6547 = vld [vmem:[#allocation2 + $0x120] sm:$0xff]
        %v6548 = vld [vmem:[#allocation2 + $0x128] sm:$0xff]
        %v6549 = vpack.c.bf16 %v6548, %v6547
        %v6550 = vld [vmem:[#allocation2 + $0x121] sm:$0xff]
        %v6551 = vld [vmem:[#allocation2 + $0x129] sm:$0xff]
        %v6552 = vpack.c.bf16 %v6551, %v6550
        %v6553 = vsel %vm822, %v6457, 0
        %v6554 = vsel %vm823, %v6458, 0
        %v6555 = vsel %vm824, %v6459, 0
        %v6556 = vsel %vm825, %v6460, 0
        %v6557 = vsel %vm826, %v6461, 0
        %v6558 = vsel %vm827, %v6462, 0
        %v6559 = vsel %vm828, %v6463, 0
        %v6560 = vsel %vm829, %v6464, 0
        %v6561 = vsel %vm830, %v6465, 0
        %v6562 = vsel %vm831, %v6466, 0
        %v6563 = vsel %vm832, %v6467, 0
        %v6564 = vsel %vm833, %v6468, 0
        %v6565 = vsel %vm834, %v6469, 0
        %v6566 = vsel %vm835, %v6470, 0
        %v6567 = vsel %vm836, %v6511, 0
        %v6568 = vsel %vm837, %v6552, 0
        %s6569 = scalar_lea.vmem [#allocation8], 576
        %v6570 = vld [vmem:[%s6569] sm:$0xf]
        %v6571 = vld [vmem:[%s6569 + $0x4] sm:$0xf]
        %v6572 = vld [vmem:[%s6569 + $0x8] sm:$0xf]
        %v6573 = vld [vmem:[%s6569 + $0xc] sm:$0xf]
        %v6574 = vld [vmem:[%s6569 + $0x10] sm:$0xf]
        %v6575 = vld [vmem:[%s6569 + $0x14] sm:$0xf]
        %v6576 = vld [vmem:[%s6569 + $0x18] sm:$0xf]
        %v6577 = vld [vmem:[%s6569 + $0x1c] sm:$0xf]
        %v6578 = vld [vmem:[%s6569 + $0x20] sm:$0xf]
        %v6579 = vld [vmem:[%s6569 + $0x24] sm:$0xf]
        %v6580 = vld [vmem:[%s6569 + $0x28] sm:$0xf]
        %v6581 = vld [vmem:[%s6569 + $0x2c] sm:$0xf]
        %v6582 = vld [vmem:[%s6569 + $0x30] sm:$0xf]
        %v6583 = vld [vmem:[%s6569 + $0x34] sm:$0xf]
        %v6584 = vld [vmem:[%s6569 + $0x38] sm:$0xf]
        %v6585 = vld [vmem:[%s6569 + $0x3c] sm:$0xf]
        %v6586 = vld [vmem:[%s6569 + $0x40] sm:$0xf]
        %v6587 = vld [vmem:[%s6569 + $0x44] sm:$0xf]
        %v6588 = vld [vmem:[%s6569 + $0x48] sm:$0xf]
        %v6589 = vld [vmem:[%s6569 + $0x4c] sm:$0xf]
        %v6590 = vld [vmem:[%s6569 + $0x50] sm:$0xf]
        %v6591 = vld [vmem:[%s6569 + $0x54] sm:$0xf]
        %v6592 = vld [vmem:[%s6569 + $0x58] sm:$0xf]
        %v6593 = vld [vmem:[%s6569 + $0x5c] sm:$0xf]
        %v6594 = vld [vmem:[%s6569 + $0x60] sm:$0xf]
        %v6595 = vld [vmem:[%s6569 + $0x64] sm:$0xf]
        %v6596 = vld [vmem:[%s6569 + $0x68] sm:$0xf]
        %v6597 = vld [vmem:[%s6569 + $0x6c] sm:$0xf]
        %v6598 = vld [vmem:[%s6569 + $0x70] sm:$0xf]
        %v6599 = vld [vmem:[%s6569 + $0x74] sm:$0xf]
        %v6600 = vld [vmem:[%s6569 + $0x78] sm:$0xf]
        %v6601 = vld [vmem:[%s6569 + $0x7c] sm:$0xf]
        %v6602 = vld [vmem:[%s6569 + $0x80] sm:$0xf]
        %v6603 = vld [vmem:[%s6569 + $0x84] sm:$0xf]
        %v6604 = vld [vmem:[%s6569 + $0x88] sm:$0xf]
        %v6605 = vld [vmem:[%s6569 + $0x8c] sm:$0xf]
        %v6606 = vld [vmem:[%s6569 + $0x90] sm:$0xf]
        %v6607 = vld [vmem:[%s6569 + $0x94] sm:$0xf]
        %v6608 = vld [vmem:[%s6569 + $0x98] sm:$0xf]
        %v6609 = vld [vmem:[%s6569 + $0x9c] sm:$0xf]
        %v6610 = vld [vmem:[%s6569 + $0xa0] sm:$0xf]
        %v6611 = vld [vmem:[%s6569 + $0xa4] sm:$0xf]
        %v6612 = vld [vmem:[%s6569 + $0xa8] sm:$0xf]
        %v6613 = vld [vmem:[%s6569 + $0xac] sm:$0xf]
        %v6614 = vld [vmem:[%s6569 + $0xb0] sm:$0xf]
        %v6615 = vld [vmem:[%s6569 + $0xb4] sm:$0xf]
        %v6616 = vld [vmem:[%s6569 + $0xb8] sm:$0xf]
        %v6617 = vld [vmem:[%s6569 + $0xbc] sm:$0xf]
        %v6618 = vld [vmem:[%s6569 + $0xc0] sm:$0xf]
        %v6619 = vld [vmem:[%s6569 + $0xc4] sm:$0xf]
        %v6620 = vld [vmem:[%s6569 + $0xc8] sm:$0xf]
        %v6621 = vld [vmem:[%s6569 + $0xcc] sm:$0xf]
        %v6622 = vld [vmem:[%s6569 + $0xd0] sm:$0xf]
        %v6623 = vld [vmem:[%s6569 + $0xd4] sm:$0xf]
        %v6624 = vld [vmem:[%s6569 + $0xd8] sm:$0xf]
        %v6625 = vld [vmem:[%s6569 + $0xdc] sm:$0xf]
        %v6626 = vld [vmem:[%s6569 + $0xe0] sm:$0xf]
        %v6627 = vld [vmem:[%s6569 + $0xe4] sm:$0xf]
        %v6628 = vld [vmem:[%s6569 + $0xe8] sm:$0xf]
        %v6629 = vld [vmem:[%s6569 + $0xec] sm:$0xf]
        %v6630 = vld [vmem:[%s6569 + $0xf0] sm:$0xf]
        %v6631 = vld [vmem:[%s6569 + $0xf4] sm:$0xf]
        %v6632 = vld [vmem:[%s6569 + $0xf8] sm:$0xf]
        %v6633 = vld [vmem:[%s6569 + $0xfc] sm:$0xf]
        %v6634 = vld [vmem:[%s6569 + $0x100] sm:$0xf]
        %v6635 = vld [vmem:[%s6569 + $0x104] sm:$0xf]
        %v6636 = vld [vmem:[%s6569 + $0x108] sm:$0xf]
        %v6637 = vld [vmem:[%s6569 + $0x10c] sm:$0xf]
        %v6638 = vld [vmem:[%s6569 + $0x110] sm:$0xf]
        %v6639 = vld [vmem:[%s6569 + $0x114] sm:$0xf]
        %v6640 = vld [vmem:[%s6569 + $0x118] sm:$0xf]
        %v6641 = vld [vmem:[%s6569 + $0x11c] sm:$0xf]
        %v6642 = vld [vmem:[%s6569 + $0x120] sm:$0xf]
        %v6643 = vld [vmem:[%s6569 + $0x124] sm:$0xf]
        %v6644 = vld [vmem:[%s6569 + $0x128] sm:$0xf]
        %v6645 = vld [vmem:[%s6569 + $0x12c] sm:$0xf]
        %v6646 = vld [vmem:[%s6569 + $0x130] sm:$0xf]
        %v6647 = vld [vmem:[%s6569 + $0x134] sm:$0xf]
        %v6648 = vld [vmem:[%s6569 + $0x138] sm:$0xf]
        %v6649 = vld [vmem:[%s6569 + $0x13c] sm:$0xf]
        %v6650 = vld [vmem:[%s6569 + $0x140] sm:$0xf]
        %v6651 = vld [vmem:[%s6569 + $0x144] sm:$0xf]
        %v6652 = vld [vmem:[%s6569 + $0x148] sm:$0xf]
        %v6653 = vld [vmem:[%s6569 + $0x14c] sm:$0xf]
        %v6654 = vld [vmem:[%s6569 + $0x150] sm:$0xf]
        %v6655 = vld [vmem:[%s6569 + $0x154] sm:$0xf]
        %v6656 = vld [vmem:[%s6569 + $0x158] sm:$0xf]
        %v6657 = vld [vmem:[%s6569 + $0x15c] sm:$0xf]
        %v6658 = vld [vmem:[%s6569 + $0x160] sm:$0xf]
        %v6659 = vld [vmem:[%s6569 + $0x164] sm:$0xf]
        %v6660 = vld [vmem:[%s6569 + $0x168] sm:$0xf]
        %v6661 = vld [vmem:[%s6569 + $0x16c] sm:$0xf]
        %v6662 = vld [vmem:[%s6569 + $0x170] sm:$0xf]
        %v6663 = vld [vmem:[%s6569 + $0x174] sm:$0xf]
        %v6664 = vld [vmem:[%s6569 + $0x178] sm:$0xf]
        %v6665 = vld [vmem:[%s6569 + $0x17c] sm:$0xf]
        %v6666 = vld [vmem:[%s6569 + $0x180] sm:$0xf]
        %v6667 = vld [vmem:[%s6569 + $0x184] sm:$0xf]
        %v6668 = vld [vmem:[%s6569 + $0x188] sm:$0xf]
        %v6669 = vld [vmem:[%s6569 + $0x18c] sm:$0xf]
        %v6670 = vld [vmem:[%s6569 + $0x190] sm:$0xf]
        %v6671 = vld [vmem:[%s6569 + $0x194] sm:$0xf]
        %v6672 = vld [vmem:[%s6569 + $0x198] sm:$0xf]
        %v6673 = vld [vmem:[%s6569 + $0x19c] sm:$0xf]
        %v6674 = vld [vmem:[%s6569 + $0x1a0] sm:$0xf]
        %v6675 = vld [vmem:[%s6569 + $0x1a4] sm:$0xf]
        %v6676 = vld [vmem:[%s6569 + $0x1a8] sm:$0xf]
        %v6677 = vld [vmem:[%s6569 + $0x1ac] sm:$0xf]
        %v6678 = vld [vmem:[%s6569 + $0x1b0] sm:$0xf]
        %v6679 = vld [vmem:[%s6569 + $0x1b4] sm:$0xf]
        %v6680 = vld [vmem:[%s6569 + $0x1b8] sm:$0xf]
        %v6681 = vld [vmem:[%s6569 + $0x1bc] sm:$0xf]
        %v6682 = vld [vmem:[%s6569 + $0x1c0] sm:$0xf]
        %v6683 = vld [vmem:[%s6569 + $0x1c4] sm:$0xf]
        %v6684 = vld [vmem:[%s6569 + $0x1c8] sm:$0xf]
        %v6685 = vld [vmem:[%s6569 + $0x1cc] sm:$0xf]
        %v6686 = vld [vmem:[%s6569 + $0x1d0] sm:$0xf]
        %v6687 = vld [vmem:[%s6569 + $0x1d4] sm:$0xf]
        %v6688 = vld [vmem:[%s6569 + $0x1d8] sm:$0xf]
        %v6689 = vld [vmem:[%s6569 + $0x1dc] sm:$0xf]
        %v6690 = vld [vmem:[%s6569 + $0x1e0] sm:$0xf]
        %v6691 = vld [vmem:[%s6569 + $0x1e4] sm:$0xf]
        %v6692 = vld [vmem:[%s6569 + $0x1e8] sm:$0xf]
        %v6693 = vld [vmem:[%s6569 + $0x1ec] sm:$0xf]
        %v6694 = vld [vmem:[%s6569 + $0x1f0] sm:$0xf]
        %v6695 = vld [vmem:[%s6569 + $0x1f4] sm:$0xf]
        %v6696 = vld [vmem:[%s6569 + $0x1f8] sm:$0xf]
        %v6697 = vld [vmem:[%s6569 + $0x1fc] sm:$0xf]
        %v6698 = vld [vmem:[%s6569 + $0x200] sm:$0xf]
        %v6699 = vld [vmem:[%s6569 + $0x204] sm:$0xf]
        %v6700 = vld [vmem:[%s6569 + $0x208] sm:$0xf]
        %v6701 = vld [vmem:[%s6569 + $0x20c] sm:$0xf]
        %v6702 = vld [vmem:[%s6569 + $0x210] sm:$0xf]
        %v6703 = vld [vmem:[%s6569 + $0x214] sm:$0xf]
        %v6704 = vld [vmem:[%s6569 + $0x218] sm:$0xf]
        %v6705 = vld [vmem:[%s6569 + $0x21c] sm:$0xf]
        %v6706 = vld [vmem:[%s6569 + $0x220] sm:$0xf]
        %v6707 = vld [vmem:[%s6569 + $0x224] sm:$0xf]
        %v6708 = vld [vmem:[%s6569 + $0x228] sm:$0xf]
        %v6709 = vld [vmem:[%s6569 + $0x22c] sm:$0xf]
        %v6710 = vld [vmem:[%s6569 + $0x230] sm:$0xf]
        %v6711 = vld [vmem:[%s6569 + $0x234] sm:$0xf]
        %v6712 = vld [vmem:[%s6569 + $0x238] sm:$0xf]
        %v6713 = vld [vmem:[%s6569 + $0x23c] sm:$0xf]
        %v6858 = vunpack.c.l.b16 %v6570
        %v6859 = vunpack.c.l.b16 %v6571
        %v6860 = vunpack.c.l.b16 %v6572
        %v6861 = vunpack.c.l.b16 %v6573
        %v6862 = vunpack.c.l.b16 %v6574
        %v6863 = vunpack.c.l.b16 %v6575
        %v6864 = vunpack.c.l.b16 %v6576
        %v6865 = vunpack.c.l.b16 %v6577
        %v6866 = vunpack.c.l.b16 %v6578
        %v6867 = vunpack.c.l.b16 %v6579
        %v6868 = vunpack.c.l.b16 %v6580
        %v6869 = vunpack.c.l.b16 %v6581
        %v6870 = vunpack.c.l.b16 %v6582
        %v6871 = vunpack.c.l.b16 %v6583
        %v6872 = vunpack.c.l.b16 %v6584
        %v6873 = vunpack.c.l.b16 %v6585
        %v6874 = vunpack.c.l.b16 %v6586
        %v6875 = vunpack.c.l.b16 %v6587
        %v6876 = vunpack.c.l.b16 %v6588
        %v6877 = vunpack.c.l.b16 %v6589
        %v6878 = vunpack.c.l.b16 %v6590
        %v6879 = vunpack.c.l.b16 %v6591
        %v6880 = vunpack.c.l.b16 %v6592
        %v6881 = vunpack.c.l.b16 %v6593
        %v6882 = vunpack.c.l.b16 %v6594
        %v6883 = vunpack.c.l.b16 %v6595
        %v6884 = vunpack.c.l.b16 %v6596
        %v6885 = vunpack.c.l.b16 %v6597
        %v6886 = vunpack.c.l.b16 %v6598
        %v6887 = vunpack.c.l.b16 %v6599
        %v6888 = vunpack.c.l.b16 %v6600
        %v6889 = vunpack.c.l.b16 %v6601
        %v6890 = vunpack.c.l.b16 %v6602
        %v6891 = vunpack.c.l.b16 %v6603
        %v6892 = vunpack.c.l.b16 %v6604
        %v6893 = vunpack.c.l.b16 %v6605
        %v6894 = vunpack.c.l.b16 %v6606
        %v6895 = vunpack.c.l.b16 %v6607
        %v6896 = vunpack.c.l.b16 %v6608
        %v6897 = vunpack.c.l.b16 %v6609
        %v6898 = vunpack.c.l.b16 %v6610
        %v6899 = vunpack.c.l.b16 %v6611
        %v6900 = vunpack.c.l.b16 %v6612
        %v6901 = vunpack.c.l.b16 %v6613
        %v6902 = vunpack.c.l.b16 %v6614
        %v6903 = vunpack.c.l.b16 %v6615
        %v6904 = vunpack.c.l.b16 %v6616
        %v6905 = vunpack.c.l.b16 %v6617
        %v6906 = vunpack.c.l.b16 %v6618
        %v6907 = vunpack.c.l.b16 %v6619
        %v6908 = vunpack.c.l.b16 %v6620
        %v6909 = vunpack.c.l.b16 %v6621
        %v6910 = vunpack.c.l.b16 %v6622
        %v6911 = vunpack.c.l.b16 %v6623
        %v6912 = vunpack.c.l.b16 %v6624
        %v6913 = vunpack.c.l.b16 %v6625
        %v6914 = vunpack.c.l.b16 %v6626
        %v6915 = vunpack.c.l.b16 %v6627
        %v6916 = vunpack.c.l.b16 %v6628
        %v6917 = vunpack.c.l.b16 %v6629
        %v6918 = vunpack.c.l.b16 %v6630
        %v6919 = vunpack.c.l.b16 %v6631
        %v6920 = vunpack.c.l.b16 %v6632
        %v6921 = vunpack.c.l.b16 %v6633
        %v6922 = vunpack.c.l.b16 %v6634
        %v6923 = vunpack.c.l.b16 %v6635
        %v6924 = vunpack.c.l.b16 %v6636
        %v6925 = vunpack.c.l.b16 %v6637
        %v6926 = vunpack.c.l.b16 %v6638
        %v6927 = vunpack.c.l.b16 %v6639
        %v6928 = vunpack.c.l.b16 %v6640
        %v6929 = vunpack.c.l.b16 %v6641
        %v6930 = vunpack.c.l.b16 %v6642
        %v6931 = vunpack.c.l.b16 %v6643
        %v6932 = vunpack.c.l.b16 %v6644
        %v6933 = vunpack.c.l.b16 %v6645
        %v6934 = vunpack.c.l.b16 %v6646
        %v6935 = vunpack.c.l.b16 %v6647
        %v6936 = vunpack.c.l.b16 %v6648
        %v6937 = vunpack.c.l.b16 %v6649
        %v6938 = vunpack.c.l.b16 %v6650
        %v6939 = vunpack.c.l.b16 %v6651
        %v6940 = vunpack.c.l.b16 %v6652
        %v6941 = vunpack.c.l.b16 %v6653
        %v6942 = vunpack.c.l.b16 %v6654
        %v6943 = vunpack.c.l.b16 %v6655
        %v6944 = vunpack.c.l.b16 %v6656
        %v6945 = vunpack.c.l.b16 %v6657
        %v6946 = vunpack.c.l.b16 %v6658
        %v6947 = vunpack.c.l.b16 %v6659
        %v6948 = vunpack.c.l.b16 %v6660
        %v6949 = vunpack.c.l.b16 %v6661
        %v6950 = vunpack.c.l.b16 %v6662
        %v6951 = vunpack.c.l.b16 %v6663
        %v6952 = vunpack.c.l.b16 %v6664
        %v6953 = vunpack.c.l.b16 %v6665
        %v6954 = vunpack.c.l.b16 %v6666
        %v6955 = vunpack.c.l.b16 %v6667
        %v6956 = vunpack.c.l.b16 %v6668
        %v6957 = vunpack.c.l.b16 %v6669
        %v6958 = vunpack.c.l.b16 %v6670
        %v6959 = vunpack.c.l.b16 %v6671
        %v6960 = vunpack.c.l.b16 %v6672
        %v6961 = vunpack.c.l.b16 %v6673
        %v6962 = vunpack.c.l.b16 %v6674
        %v6963 = vunpack.c.l.b16 %v6675
        %v6964 = vunpack.c.l.b16 %v6676
        %v6965 = vunpack.c.l.b16 %v6677
        %v6966 = vunpack.c.l.b16 %v6678
        %v6967 = vunpack.c.l.b16 %v6679
        %v6968 = vunpack.c.l.b16 %v6680
        %v6969 = vunpack.c.l.b16 %v6681
        %v6970 = vunpack.c.l.b16 %v6682
        %v6971 = vunpack.c.l.b16 %v6683
        %v6972 = vunpack.c.l.b16 %v6684
        %v6973 = vunpack.c.l.b16 %v6685
        %v6974 = vunpack.c.l.b16 %v6686
        %v6975 = vunpack.c.l.b16 %v6687
        %v6976 = vunpack.c.l.b16 %v6688
        %v6977 = vunpack.c.l.b16 %v6689
        %v6978 = vunpack.c.l.b16 %v6690
        %v6979 = vunpack.c.l.b16 %v6691
        %v6980 = vunpack.c.l.b16 %v6692
        %v6981 = vunpack.c.l.b16 %v6693
        %v6982 = vunpack.c.l.b16 %v6694
        %v6983 = vunpack.c.l.b16 %v6695
        %v6984 = vunpack.c.l.b16 %v6696
        %v6985 = vunpack.c.l.b16 %v6697
        %v6986 = vunpack.c.l.b16 %v6698
        %v6987 = vunpack.c.l.b16 %v6699
        %v6988 = vunpack.c.l.b16 %v6700
        %v6989 = vunpack.c.l.b16 %v6701
        %v6990 = vunpack.c.l.b16 %v6702
        %v6991 = vunpack.c.l.b16 %v6703
        %v6992 = vunpack.c.l.b16 %v6704
        %v6993 = vunpack.c.l.b16 %v6705
        %v6994 = vunpack.c.l.b16 %v6706
        %v6995 = vunpack.c.l.b16 %v6707
        %v6996 = vunpack.c.l.b16 %v6708
        %v6997 = vunpack.c.l.b16 %v6709
        %v6998 = vunpack.c.l.b16 %v6710
        %v6999 = vunpack.c.l.b16 %v6711
        %v7000 = vunpack.c.l.b16 %v6712
        %v7001 = vunpack.c.l.b16 %v6713
        %v7002 = vpack.c.b16 %v6859, %v6858
        %v7003 = vpack.c.b16 %v6861, %v6860
        %v7004 = vpack.c.b16 %v6863, %v6862
        %v7005 = vpack.c.b16 %v6865, %v6864
        %v7006 = vpack.c.b16 %v6867, %v6866
        %v7007 = vpack.c.b16 %v6869, %v6868
        %v7008 = vpack.c.b16 %v6871, %v6870
        %v7009 = vpack.c.b16 %v6873, %v6872
        %v7010 = vpack.c.b16 %v6875, %v6874
        %v7011 = vpack.c.b16 %v6877, %v6876
        %v7012 = vpack.c.b16 %v6879, %v6878
        %v7013 = vpack.c.b16 %v6881, %v6880
        %v7014 = vpack.c.b16 %v6883, %v6882
        %v7015 = vpack.c.b16 %v6885, %v6884
        %v7016 = vpack.c.b16 %v6887, %v6886
        %v7017 = vpack.c.b16 %v6889, %v6888
        %v7018 = vpack.c.b16 %v6891, %v6890
        %v7019 = vpack.c.b16 %v6893, %v6892
        %v7020 = vpack.c.b16 %v6895, %v6894
        %v7021 = vpack.c.b16 %v6897, %v6896
        %v7022 = vpack.c.b16 %v6899, %v6898
        %v7023 = vpack.c.b16 %v6901, %v6900
        %v7024 = vpack.c.b16 %v6903, %v6902
        %v7025 = vpack.c.b16 %v6905, %v6904
        %v7026 = vpack.c.b16 %v6907, %v6906
        %v7027 = vpack.c.b16 %v6909, %v6908
        %v7028 = vpack.c.b16 %v6911, %v6910
        %v7029 = vpack.c.b16 %v6913, %v6912
        %v7030 = vpack.c.b16 %v6915, %v6914
        %v7031 = vpack.c.b16 %v6917, %v6916
        %v7032 = vpack.c.b16 %v6919, %v6918
        %v7033 = vpack.c.b16 %v6921, %v6920
        %v7034 = vpack.c.b16 %v6923, %v6922
        %v7035 = vpack.c.b16 %v6925, %v6924
        %v7036 = vpack.c.b16 %v6927, %v6926
        %v7037 = vpack.c.b16 %v6929, %v6928
        %v7038 = vpack.c.b16 %v6931, %v6930
        %v7039 = vpack.c.b16 %v6933, %v6932
        %v7040 = vpack.c.b16 %v6935, %v6934
        %v7041 = vpack.c.b16 %v6937, %v6936
        %v7042 = vpack.c.b16 %v6939, %v6938
        %v7043 = vpack.c.b16 %v6941, %v6940
        %v7044 = vpack.c.b16 %v6943, %v6942
        %v7045 = vpack.c.b16 %v6945, %v6944
        %v7046 = vpack.c.b16 %v6947, %v6946
        %v7047 = vpack.c.b16 %v6949, %v6948
        %v7048 = vpack.c.b16 %v6951, %v6950
        %v7049 = vpack.c.b16 %v6953, %v6952
        %v7050 = vpack.c.b16 %v6955, %v6954
        %v7051 = vpack.c.b16 %v6957, %v6956
        %v7052 = vpack.c.b16 %v6959, %v6958
        %v7053 = vpack.c.b16 %v6961, %v6960
        %v7054 = vpack.c.b16 %v6963, %v6962
        %v7055 = vpack.c.b16 %v6965, %v6964
        %v7056 = vpack.c.b16 %v6967, %v6966
        %v7057 = vpack.c.b16 %v6969, %v6968
        %v7058 = vpack.c.b16 %v6971, %v6970
        %v7059 = vpack.c.b16 %v6973, %v6972
        %v7060 = vpack.c.b16 %v6975, %v6974
        %v7061 = vpack.c.b16 %v6977, %v6976
        %v7062 = vpack.c.b16 %v6979, %v6978
        %v7063 = vpack.c.b16 %v6981, %v6980
        %v7064 = vpack.c.b16 %v6983, %v6982
        %v7065 = vpack.c.b16 %v6985, %v6984
        %v7066 = vpack.c.b16 %v6987, %v6986
        %v7067 = vpack.c.b16 %v6989, %v6988
        %v7068 = vpack.c.b16 %v6991, %v6990
        %v7069 = vpack.c.b16 %v6993, %v6992
        %v7070 = vpack.c.b16 %v6995, %v6994
        %v7071 = vpack.c.b16 %v6997, %v6996
        %v7072 = vpack.c.b16 %v6999, %v6998
        %v7073 = vpack.c.b16 %v7001, %v7000
        %7146 = vmatprep.subr.bf16.mxu0 0
        %7147 = vmatpush1.bf16.msra.mxu0 %v7002
        %7148 = vmatprep.subr.bf16.mxu0 0
        %7149 = vmatpush1.bf16.msra.mxu0 %v7003
        %7150 = vmatprep.subr.bf16.mxu0 0
        %7151 = vmatpush1.bf16.msra.mxu0 %v7004
        %7152 = vmatprep.subr.bf16.mxu0 0
        %7153 = vmatpush1.bf16.msra.mxu0 %v7005
        %7154 = vmatprep.subr.bf16.mxu0 0
        %7155 = vmatpush1.bf16.msra.mxu0 %v7006
        %7156 = vmatprep.subr.bf16.mxu0 0
        %7157 = vmatpush1.bf16.msra.mxu0 %v7007
        %7158 = vmatprep.subr.bf16.mxu0 0
        %7159 = vmatpush1.bf16.msra.mxu0 %v7008
        %7160 = vmatprep.subr.bf16.mxu0 0
        %7161 = vmatpush1.bf16.msra.mxu0 %v7009
        %7162 = vmatprep.subr.bf16.mxu0 0
        %7163 = vmatpush1.bf16.msra.mxu0 %v7010
        %7164 = vmatprep.subr.bf16.mxu0 0
        %7165 = vmatpush1.bf16.msra.mxu0 %v7011
        %7166 = vmatprep.subr.bf16.mxu0 0
        %7167 = vmatpush1.bf16.msra.mxu0 %v7012
        %7168 = vmatprep.subr.bf16.mxu0 0
        %7169 = vmatpush1.bf16.msra.mxu0 %v7013
        %7170 = vmatprep.subr.bf16.mxu0 0
        %7171 = vmatpush1.bf16.msra.mxu0 %v7014
        %7172 = vmatprep.subr.bf16.mxu0 0
        %7173 = vmatpush1.bf16.msra.mxu0 %v7015
        %7174 = vmatprep.subr.bf16.mxu0 0
        %7175 = vmatpush1.bf16.msra.mxu0 %v7016
        %7176 = vmatprep.subr.bf16.mxu0 0
        %7177 = vmatpush1.bf16.msra.mxu0 %v7017
        %7178 = vmatprep.mubr.bf16.mxu0 %v6407
        %7179 = vmatmul.mubr.bf16.gmra.mrb[0].mxu0 %v6359
        %v7180 = vpop.f32.mrb[0].mxu0
        %v7181 = vadd.f32 0.0, %v7180
        %v7182 = vpop.f32.mrb[0].mxu0
        %v7183 = vpop.f32.mrb[0].mxu0
        %v7184 = vadd.f32 0.0, %v7183
        %v7185 = vpop.f32.mrb[0].mxu0
        %7186 = vmatprep.mubr.bf16.mxu0 %v6408
        %7187 = vmatmul.mubr.bf16.gmra.mrb[0].mxu0 %v6360
        %v7188 = vpop.f32.mrb[0].mxu0
        %v7189 = vadd.f32 0.0, %v7188
        %v7190 = vpop.f32.mrb[0].mxu0
        %v7191 = vpop.f32.mrb[0].mxu0
        %v7192 = vadd.f32 0.0, %v7191
        %v7193 = vpop.f32.mrb[0].mxu0
        %7194 = vmatprep.mubr.bf16.mxu0 %v6409
        %7195 = vmatmul.mubr.bf16.gmra.mrb[0].mxu0 %v6361
        %v7196 = vpop.f32.mrb[0].mxu0
        %v7197 = vadd.f32 0.0, %v7196
        %v7198 = vpop.f32.mrb[0].mxu0
        %v7199 = vpop.f32.mrb[0].mxu0
        %v7200 = vadd.f32 0.0, %v7199
        %v7201 = vpop.f32.mrb[0].mxu0
        %7202 = vmatprep.mubr.bf16.mxu0 %v6410
        %7203 = vmatmul.mubr.bf16.gmra.mrb[0].mxu0 %v6362
        %v7204 = vpop.f32.mrb[0].mxu0
        %v7205 = vadd.f32 0.0, %v7204
        %v7206 = vpop.f32.mrb[0].mxu0
        %v7207 = vpop.f32.mrb[0].mxu0
        %v7208 = vadd.f32 0.0, %v7207
        %v7209 = vpop.f32.mrb[0].mxu0
        %7210 = vmatprep.mubr.bf16.mxu0 %v6411
        %7211 = vmatmul.mubr.bf16.gmra.mrb[0].mxu0 %v6363
        %v7212 = vpop.f32.mrb[0].mxu0
        %v7213 = vadd.f32 0.0, %v7212
        %v7214 = vpop.f32.mrb[0].mxu0
        %v7215 = vpop.f32.mrb[0].mxu0
        %v7216 = vadd.f32 0.0, %v7215
        %v7217 = vpop.f32.mrb[0].mxu0
        %7218 = vmatprep.mubr.bf16.mxu0 %v6412
        %7219 = vmatmul.mubr.bf16.gmra.mrb[0].mxu0 %v6364
        %v7220 = vpop.f32.mrb[0].mxu0
        %v7221 = vadd.f32 0.0, %v7220
        %v7222 = vpop.f32.mrb[0].mxu0
        %v7223 = vpop.f32.mrb[0].mxu0
        %v7224 = vadd.f32 0.0, %v7223
        %v7225 = vpop.f32.mrb[0].mxu0
        %7226 = vmatprep.mubr.bf16.mxu0 %v6413
        %7227 = vmatmul.mubr.bf16.gmra.mrb[0].mxu0 %v6365
        %v7228 = vpop.f32.mrb[0].mxu0
        %v7229 = vadd.f32 0.0, %v7228
        %v7230 = vpop.f32.mrb[0].mxu0
        %v7231 = vpop.f32.mrb[0].mxu0
        %v7232 = vadd.f32 0.0, %v7231
        %v7233 = vpop.f32.mrb[0].mxu0
        %7234 = vmatprep.mubr.bf16.mxu0 %v6414
        %7235 = vmatmul.mubr.bf16.gmra.mrb[0].mxu0 %v6366
        %v7236 = vpop.f32.mrb[0].mxu0
        %v7237 = vadd.f32 0.0, %v7236
        %v7238 = vpop.f32.mrb[0].mxu0
        %v7239 = vpop.f32.mrb[0].mxu0
        %v7240 = vadd.f32 0.0, %v7239
        %v7241 = vpop.f32.mrb[0].mxu0
        %7242 = vmatprep.mubr.bf16.mxu0 %v6415
        %7243 = vmatmul.mubr.bf16.gmra.mrb[0].mxu0 %v6367
        %v7244 = vpop.f32.mrb[0].mxu0
        %v7245 = vadd.f32 0.0, %v7244
        %v7246 = vpop.f32.mrb[0].mxu0
        %v7247 = vpop.f32.mrb[0].mxu0
        %v7248 = vadd.f32 0.0, %v7247
        %v7249 = vpop.f32.mrb[0].mxu0
        %7250 = vmatprep.mubr.bf16.mxu0 %v6416
        %7251 = vmatmul.mubr.bf16.gmra.mrb[0].mxu0 %v6368
        %v7252 = vpop.f32.mrb[0].mxu0
        %v7253 = vadd.f32 0.0, %v7252
        %v7254 = vpop.f32.mrb[0].mxu0
        %v7255 = vpop.f32.mrb[0].mxu0
        %v7256 = vadd.f32 0.0, %v7255
        %v7257 = vpop.f32.mrb[0].mxu0
        %7258 = vmatprep.mubr.bf16.mxu0 %v6417
        %7259 = vmatmul.mubr.bf16.gmra.mrb[0].mxu0 %v6369
        %v7260 = vpop.f32.mrb[0].mxu0
        %v7261 = vadd.f32 0.0, %v7260
        %v7262 = vpop.f32.mrb[0].mxu0
        %v7263 = vpop.f32.mrb[0].mxu0
        %v7264 = vadd.f32 0.0, %v7263
        %v7265 = vpop.f32.mrb[0].mxu0
        %7266 = vmatprep.mubr.bf16.mxu0 %v6418
        %7267 = vmatmul.mubr.bf16.gmra.mrb[0].mxu0 %v6370
        %v7268 = vpop.f32.mrb[0].mxu0
        %v7269 = vadd.f32 0.0, %v7268
        %v7270 = vpop.f32.mrb[0].mxu0
        %v7271 = vpop.f32.mrb[0].mxu0
        %v7272 = vadd.f32 0.0, %v7271
        %v7273 = vpop.f32.mrb[0].mxu0
        %7274 = vmatprep.mubr.bf16.mxu0 %v6419
        %7275 = vmatmul.mubr.bf16.gmra.mrb[0].mxu0 %v6371
        %v7276 = vpop.f32.mrb[0].mxu0
        %v7277 = vadd.f32 0.0, %v7276
        %v7278 = vpop.f32.mrb[0].mxu0
        %v7279 = vpop.f32.mrb[0].mxu0
        %v7280 = vadd.f32 0.0, %v7279
        %v7281 = vpop.f32.mrb[0].mxu0
        %7282 = vmatprep.mubr.bf16.mxu0 %v6420
        %7283 = vmatmul.mubr.bf16.gmra.mrb[0].mxu0 %v6372
        %v7284 = vpop.f32.mrb[0].mxu0
        %v7285 = vadd.f32 0.0, %v7284
        %v7286 = vpop.f32.mrb[0].mxu0
        %v7287 = vpop.f32.mrb[0].mxu0
        %v7288 = vadd.f32 0.0, %v7287
        %v7289 = vpop.f32.mrb[0].mxu0
        %7290 = vmatprep.mubr.bf16.mxu0 %v6421
        %7291 = vmatmul.mubr.bf16.gmra.mrb[0].mxu0 %v6373
        %v7292 = vpop.f32.mrb[0].mxu0
        %v7293 = vadd.f32 0.0, %v7292
        %v7294 = vpop.f32.mrb[0].mxu0
        %v7295 = vpop.f32.mrb[0].mxu0
        %v7296 = vadd.f32 0.0, %v7295
        %v7297 = vpop.f32.mrb[0].mxu0
        %7298 = vmatprep.mubr.bf16.mxu0 %v6422
        %7299 = vmatmul.mubr.bf16.gmra.mrb[0].mxu0 %v6374
        %v7300 = vpop.f32.mrb[0].mxu0
        %v7301 = vadd.f32 0.0, %v7300
        %v7302 = vpop.f32.mrb[0].mxu0
        %v7303 = vpop.f32.mrb[0].mxu0
        %v7304 = vadd.f32 0.0, %v7303
        %v7305 = vpop.f32.mrb[0].mxu0
        %7306 = vdwg.mxu0
        %7307 = vmatprep.subr.bf16.mxu0 0
        %7308 = vmatpush1.bf16.msra.mxu0 %v7018
        %7309 = vmatprep.subr.bf16.mxu0 0
        %7310 = vmatpush1.bf16.msra.mxu0 %v7019
        %7311 = vmatprep.subr.bf16.mxu0 0
        %7312 = vmatpush1.bf16.msra.mxu0 %v7020
        %7313 = vmatprep.subr.bf16.mxu0 0
        %7314 = vmatpush1.bf16.msra.mxu0 %v7021
        %7315 = vmatprep.subr.bf16.mxu0 0
        %7316 = vmatpush1.bf16.msra.mxu0 %v7022
        %7317 = vmatprep.subr.bf16.mxu0 0
        %7318 = vmatpush1.bf16.msra.mxu0 %v7023
        %7319 = vmatprep.subr.bf16.mxu0 0
        %7320 = vmatpush1.bf16.msra.mxu0 %v7024
        %7321 = vmatprep.subr.bf16.mxu0 0
        %7322 = vmatpush1.bf16.msra.mxu0 %v7025
        %7323 = vmatprep.subr.bf16.mxu0 0
        %7324 = vmatpush1.bf16.msra.mxu0 %v7026
        %7325 = vmatprep.subr.bf16.mxu0 0
        %7326 = vmatpush1.bf16.msra.mxu0 %v7027
        %7327 = vmatprep.subr.bf16.mxu0 0
        %7328 = vmatpush1.bf16.msra.mxu0 %v7028
        %7329 = vmatprep.subr.bf16.mxu0 0
        %7330 = vmatpush1.bf16.msra.mxu0 %v7029
        %7331 = vmatprep.subr.bf16.mxu0 0
        %7332 = vmatpush1.bf16.msra.mxu0 %v7030
        %7333 = vmatprep.subr.bf16.mxu0 0
        %7334 = vmatpush1.bf16.msra.mxu0 %v7031
        %7335 = vmatprep.subr.bf16.mxu0 0
        %7336 = vmatpush1.bf16.msra.mxu0 %v7032
        %7337 = vmatprep.subr.bf16.mxu0 0
        %7338 = vmatpush1.bf16.msra.mxu0 %v7033
        %7339 = vmatprep.mubr.bf16.mxu0 %v6490
        %7340 = vmatmul.mubr.bf16.gmra.mrb[0].mxu0 %v6471
        %v7341 = vpop.f32.mrb[0].mxu0
        %v7342 = vadd.f32 %v7181, %v7341
        %v7343 = vpop.f32.mrb[0].mxu0
        %v7344 = vpop.f32.mrb[0].mxu0
        %v7345 = vadd.f32 %v7184, %v7344
        %v7346 = vpop.f32.mrb[0].mxu0
        %7347 = vmatprep.mubr.bf16.mxu0 %v6491
        %7348 = vmatmul.mubr.bf16.gmra.mrb[0].mxu0 %v6472
        %v7349 = vpop.f32.mrb[0].mxu0
        %v7350 = vadd.f32 %v7189, %v7349
        %v7351 = vpop.f32.mrb[0].mxu0
        %v7352 = vpop.f32.mrb[0].mxu0
        %v7353 = vadd.f32 %v7192, %v7352
        %v7354 = vpop.f32.mrb[0].mxu0
        %7355 = vmatprep.mubr.bf16.mxu0 %v6492
        %7356 = vmatmul.mubr.bf16.gmra.mrb[0].mxu0 %v6473
        %v7357 = vpop.f32.mrb[0].mxu0
        %v7358 = vadd.f32 %v7197, %v7357
        %v7359 = vpop.f32.mrb[0].mxu0
        %v7360 = vpop.f32.mrb[0].mxu0
        %v7361 = vadd.f32 %v7200, %v7360
        %v7362 = vpop.f32.mrb[0].mxu0
        %7363 = vmatprep.mubr.bf16.mxu0 %v6493
        %7364 = vmatmul.mubr.bf16.gmra.mrb[0].mxu0 %v6474
        %v7365 = vpop.f32.mrb[0].mxu0
        %v7366 = vadd.f32 %v7205, %v7365
        %v7367 = vpop.f32.mrb[0].mxu0
        %v7368 = vpop.f32.mrb[0].mxu0
        %v7369 = vadd.f32 %v7208, %v7368
        %v7370 = vpop.f32.mrb[0].mxu0
        %7371 = vmatprep.mubr.bf16.mxu0 %v6494
        %7372 = vmatmul.mubr.bf16.gmra.mrb[0].mxu0 %v6475
        %v7373 = vpop.f32.mrb[0].mxu0
        %v7374 = vadd.f32 %v7213, %v7373
        %v7375 = vpop.f32.mrb[0].mxu0
        %v7376 = vpop.f32.mrb[0].mxu0
        %v7377 = vadd.f32 %v7216, %v7376
        %v7378 = vpop.f32.mrb[0].mxu0
        %7379 = vmatprep.mubr.bf16.mxu0 %v6495
        %7380 = vmatmul.mubr.bf16.gmra.mrb[0].mxu0 %v6476
        %v7381 = vpop.f32.mrb[0].mxu0
        %v7382 = vadd.f32 %v7221, %v7381
        %v7383 = vpop.f32.mrb[0].mxu0
        %v7384 = vpop.f32.mrb[0].mxu0
        %v7385 = vadd.f32 %v7224, %v7384
        %v7386 = vpop.f32.mrb[0].mxu0
        %7387 = vmatprep.mubr.bf16.mxu0 %v6496
        %7388 = vmatmul.mubr.bf16.gmra.mrb[0].mxu0 %v6477
        %v7389 = vpop.f32.mrb[0].mxu0
        %v7390 = vadd.f32 %v7229, %v7389
        %v7391 = vpop.f32.mrb[0].mxu0
        %v7392 = vpop.f32.mrb[0].mxu0
        %v7393 = vadd.f32 %v7232, %v7392
        %v7394 = vpop.f32.mrb[0].mxu0
        %7395 = vmatprep.mubr.bf16.mxu0 %v6497
        %7396 = vmatmul.mubr.bf16.gmra.mrb[0].mxu0 %v6478
        %v7397 = vpop.f32.mrb[0].mxu0
        %v7398 = vadd.f32 %v7237, %v7397
        %v7399 = vpop.f32.mrb[0].mxu0
        %v7400 = vpop.f32.mrb[0].mxu0
        %v7401 = vadd.f32 %v7240, %v7400
        %v7402 = vpop.f32.mrb[0].mxu0
        %7403 = vmatprep.mubr.bf16.mxu0 %v6498
        %7404 = vmatmul.mubr.bf16.gmra.mrb[0].mxu0 %v6479
        %v7405 = vpop.f32.mrb[0].mxu0
        %v7406 = vadd.f32 %v7245, %v7405
        %v7407 = vpop.f32.mrb[0].mxu0
        %v7408 = vpop.f32.mrb[0].mxu0
        %v7409 = vadd.f32 %v7248, %v7408
        %v7410 = vpop.f32.mrb[0].mxu0
        %7411 = vmatprep.mubr.bf16.mxu0 %v6499
        %7412 = vmatmul.mubr.bf16.gmra.mrb[0].mxu0 %v6480
        %v7413 = vpop.f32.mrb[0].mxu0
        %v7414 = vadd.f32 %v7253, %v7413
        %v7415 = vpop.f32.mrb[0].mxu0
        %v7416 = vpop.f32.mrb[0].mxu0
        %v7417 = vadd.f32 %v7256, %v7416
        %v7418 = vpop.f32.mrb[0].mxu0
        %7419 = vmatprep.mubr.bf16.mxu0 %v6500
        %7420 = vmatmul.mubr.bf16.gmra.mrb[0].mxu0 %v6481
        %v7421 = vpop.f32.mrb[0].mxu0
        %v7422 = vadd.f32 %v7261, %v7421
        %v7423 = vpop.f32.mrb[0].mxu0
        %v7424 = vpop.f32.mrb[0].mxu0
        %v7425 = vadd.f32 %v7264, %v7424
        %v7426 = vpop.f32.mrb[0].mxu0
        %7427 = vmatprep.mubr.bf16.mxu0 %v6501
        %7428 = vmatmul.mubr.bf16.gmra.mrb[0].mxu0 %v6482
        %v7429 = vpop.f32.mrb[0].mxu0
        %v7430 = vadd.f32 %v7269, %v7429
        %v7431 = vpop.f32.mrb[0].mxu0
        %v7432 = vpop.f32.mrb[0].mxu0
        %v7433 = vadd.f32 %v7272, %v7432
        %v7434 = vpop.f32.mrb[0].mxu0
        %7435 = vmatprep.mubr.bf16.mxu0 %v6502
        %7436 = vmatmul.mubr.bf16.gmra.mrb[0].mxu0 %v6483
        %v7437 = vpop.f32.mrb[0].mxu0
        %v7438 = vadd.f32 %v7277, %v7437
        %v7439 = vpop.f32.mrb[0].mxu0
        %v7440 = vpop.f32.mrb[0].mxu0
        %v7441 = vadd.f32 %v7280, %v7440
        %v7442 = vpop.f32.mrb[0].mxu0
        %7443 = vmatprep.mubr.bf16.mxu0 %v6503
        %7444 = vmatmul.mubr.bf16.gmra.mrb[0].mxu0 %v6484
        %v7445 = vpop.f32.mrb[0].mxu0
        %v7446 = vadd.f32 %v7285, %v7445
        %v7447 = vpop.f32.mrb[0].mxu0
        %v7448 = vpop.f32.mrb[0].mxu0
        %v7449 = vadd.f32 %v7288, %v7448
        %v7450 = vpop.f32.mrb[0].mxu0
        %7451 = vmatprep.mubr.bf16.mxu0 %v6504
        %7452 = vmatmul.mubr.bf16.gmra.mrb[0].mxu0 %v6485
        %v7453 = vpop.f32.mrb[0].mxu0
        %v7454 = vadd.f32 %v7293, %v7453
        %v7455 = vpop.f32.mrb[0].mxu0
        %v7456 = vpop.f32.mrb[0].mxu0
        %v7457 = vadd.f32 %v7296, %v7456
        %v7458 = vpop.f32.mrb[0].mxu0
        %7459 = vmatprep.mubr.bf16.mxu0 %v6505
        %7460 = vmatmul.mubr.bf16.gmra.mrb[0].mxu0 %v6486
        %v7461 = vpop.f32.mrb[0].mxu0
        %v7462 = vadd.f32 %v7301, %v7461
        %v7463 = vpop.f32.mrb[0].mxu0
        %v7464 = vpop.f32.mrb[0].mxu0
        %v7465 = vadd.f32 %v7304, %v7464
        %v7466 = vpop.f32.mrb[0].mxu0
        %7467 = vdwg.mxu0
        %7468 = vmatprep.subr.bf16.mxu0 0
        %7469 = vmatpush1.bf16.msra.mxu0 %v7034
        %7470 = vmatprep.subr.bf16.mxu0 0
        %7471 = vmatpush1.bf16.msra.mxu0 %v7035
        %7472 = vmatprep.subr.bf16.mxu0 0
        %7473 = vmatpush1.bf16.msra.mxu0 %v7036
        %7474 = vmatprep.subr.bf16.mxu0 0
        %7475 = vmatpush1.bf16.msra.mxu0 %v7037
        %7476 = vmatprep.subr.bf16.mxu0 0
        %7477 = vmatpush1.bf16.msra.mxu0 %v7038
        %7478 = vmatprep.subr.bf16.mxu0 0
        %7479 = vmatpush1.bf16.msra.mxu0 %v7039
        %7480 = vmatprep.subr.bf16.mxu0 0
        %7481 = vmatpush1.bf16.msra.mxu0 %v7040
        %7482 = vmatprep.subr.bf16.mxu0 0
        %7483 = vmatpush1.bf16.msra.mxu0 %v7041
        %7484 = vmatprep.subr.bf16.mxu0 0
        %7485 = vmatpush1.bf16.msra.mxu0 %v7042
        %7486 = vmatprep.subr.bf16.mxu0 0
        %7487 = vmatpush1.bf16.msra.mxu0 %v7043
        %7488 = vmatprep.subr.bf16.mxu0 0
        %7489 = vmatpush1.bf16.msra.mxu0 %v7044
        %7490 = vmatprep.subr.bf16.mxu0 0
        %7491 = vmatpush1.bf16.msra.mxu0 %v7045
        %7492 = vmatprep.subr.bf16.mxu0 0
        %7493 = vmatpush1.bf16.msra.mxu0 %v7046
        %7494 = vmatprep.subr.bf16.mxu0 0
        %7495 = vmatpush1.bf16.msra.mxu0 %v7047
        %7496 = vmatprep.subr.bf16.mxu0 0
        %7497 = vmatpush1.bf16.msra.mxu0 %v7048
        %7498 = vmatprep.subr.bf16.mxu0 0
        %7499 = vmatpush1.bf16.msra.mxu0 %v7049
        %7500 = vmatprep.mubr.bf16.mxu0 %v6512
        %7501 = vmatmul.mubr.bf16.gmra.mrb[0].mxu0 %v6408
        %v7502 = vpop.f32.mrb[0].mxu0
        %v7503 = vadd.f32 %v7342, %v7502
        %v7504 = vpop.f32.mrb[0].mxu0
        %v7505 = vpop.f32.mrb[0].mxu0
        %v7506 = vadd.f32 %v7345, %v7505
        %v7507 = vpop.f32.mrb[0].mxu0
        %7508 = vmatprep.mubr.bf16.mxu0 %v6513
        %7509 = vmatmul.mubr.bf16.gmra.mrb[0].mxu0 %v6409
        %v7510 = vpop.f32.mrb[0].mxu0
        %v7511 = vadd.f32 %v7350, %v7510
        %v7512 = vpop.f32.mrb[0].mxu0
        %v7513 = vpop.f32.mrb[0].mxu0
        %v7514 = vadd.f32 %v7353, %v7513
        %v7515 = vpop.f32.mrb[0].mxu0
        %7516 = vmatprep.mubr.bf16.mxu0 %v6514
        %7517 = vmatmul.mubr.bf16.gmra.mrb[0].mxu0 %v6410
        %v7518 = vpop.f32.mrb[0].mxu0
        %v7519 = vadd.f32 %v7358, %v7518
        %v7520 = vpop.f32.mrb[0].mxu0
        %v7521 = vpop.f32.mrb[0].mxu0
        %v7522 = vadd.f32 %v7361, %v7521
        %v7523 = vpop.f32.mrb[0].mxu0
        %7524 = vmatprep.mubr.bf16.mxu0 %v6515
        %7525 = vmatmul.mubr.bf16.gmra.mrb[0].mxu0 %v6411
        %v7526 = vpop.f32.mrb[0].mxu0
        %v7527 = vadd.f32 %v7366, %v7526
        %v7528 = vpop.f32.mrb[0].mxu0
        %v7529 = vpop.f32.mrb[0].mxu0
        %v7530 = vadd.f32 %v7369, %v7529
        %v7531 = vpop.f32.mrb[0].mxu0
        %7532 = vmatprep.mubr.bf16.mxu0 %v6516
        %7533 = vmatmul.mubr.bf16.gmra.mrb[0].mxu0 %v6412
        %v7534 = vpop.f32.mrb[0].mxu0
        %v7535 = vadd.f32 %v7374, %v7534
        %v7536 = vpop.f32.mrb[0].mxu0
        %v7537 = vpop.f32.mrb[0].mxu0
        %v7538 = vadd.f32 %v7377, %v7537
        %v7539 = vpop.f32.mrb[0].mxu0
        %7540 = vmatprep.mubr.bf16.mxu0 %v6517
        %7541 = vmatmul.mubr.bf16.gmra.mrb[0].mxu0 %v6413
        %v7542 = vpop.f32.mrb[0].mxu0
        %v7543 = vadd.f32 %v7382, %v7542
        %v7544 = vpop.f32.mrb[0].mxu0
        %v7545 = vpop.f32.mrb[0].mxu0
        %v7546 = vadd.f32 %v7385, %v7545
        %v7547 = vpop.f32.mrb[0].mxu0
        %7548 = vmatprep.mubr.bf16.mxu0 %v6518
        %7549 = vmatmul.mubr.bf16.gmra.mrb[0].mxu0 %v6414
        %v7550 = vpop.f32.mrb[0].mxu0
        %v7551 = vadd.f32 %v7390, %v7550
        %v7552 = vpop.f32.mrb[0].mxu0
        %v7553 = vpop.f32.mrb[0].mxu0
        %v7554 = vadd.f32 %v7393, %v7553
        %v7555 = vpop.f32.mrb[0].mxu0
        %7556 = vmatprep.mubr.bf16.mxu0 %v6519
        %7557 = vmatmul.mubr.bf16.gmra.mrb[0].mxu0 %v6415
        %v7558 = vpop.f32.mrb[0].mxu0
        %v7559 = vadd.f32 %v7398, %v7558
        %v7560 = vpop.f32.mrb[0].mxu0
        %v7561 = vpop.f32.mrb[0].mxu0
        %v7562 = vadd.f32 %v7401, %v7561
        %v7563 = vpop.f32.mrb[0].mxu0
        %7564 = vmatprep.mubr.bf16.mxu0 %v6520
        %7565 = vmatmul.mubr.bf16.gmra.mrb[0].mxu0 %v6416
        %v7566 = vpop.f32.mrb[0].mxu0
        %v7567 = vadd.f32 %v7406, %v7566
        %v7568 = vpop.f32.mrb[0].mxu0
        %v7569 = vpop.f32.mrb[0].mxu0
        %v7570 = vadd.f32 %v7409, %v7569
        %v7571 = vpop.f32.mrb[0].mxu0
        %7572 = vmatprep.mubr.bf16.mxu0 %v6521
        %7573 = vmatmul.mubr.bf16.gmra.mrb[0].mxu0 %v6417
        %v7574 = vpop.f32.mrb[0].mxu0
        %v7575 = vadd.f32 %v7414, %v7574
        %v7576 = vpop.f32.mrb[0].mxu0
        %v7577 = vpop.f32.mrb[0].mxu0
        %v7578 = vadd.f32 %v7417, %v7577
        %v7579 = vpop.f32.mrb[0].mxu0
        %7580 = vmatprep.mubr.bf16.mxu0 %v6522
        %7581 = vmatmul.mubr.bf16.gmra.mrb[0].mxu0 %v6418
        %v7582 = vpop.f32.mrb[0].mxu0
        %v7583 = vadd.f32 %v7422, %v7582
        %v7584 = vpop.f32.mrb[0].mxu0
        %v7585 = vpop.f32.mrb[0].mxu0
        %v7586 = vadd.f32 %v7425, %v7585
        %v7587 = vpop.f32.mrb[0].mxu0
        %7588 = vmatprep.mubr.bf16.mxu0 %v6523
        %7589 = vmatmul.mubr.bf16.gmra.mrb[0].mxu0 %v6419
        %v7590 = vpop.f32.mrb[0].mxu0
        %v7591 = vadd.f32 %v7430, %v7590
        %v7592 = vpop.f32.mrb[0].mxu0
        %v7593 = vpop.f32.mrb[0].mxu0
        %v7594 = vadd.f32 %v7433, %v7593
        %v7595 = vpop.f32.mrb[0].mxu0
        %7596 = vmatprep.mubr.bf16.mxu0 %v6524
        %7597 = vmatmul.mubr.bf16.gmra.mrb[0].mxu0 %v6420
        %v7598 = vpop.f32.mrb[0].mxu0
        %v7599 = vadd.f32 %v7438, %v7598
        %v7600 = vpop.f32.mrb[0].mxu0
        %v7601 = vpop.f32.mrb[0].mxu0
        %v7602 = vadd.f32 %v7441, %v7601
        %v7603 = vpop.f32.mrb[0].mxu0
        %7604 = vmatprep.mubr.bf16.mxu0 %v6525
        %7605 = vmatmul.mubr.bf16.gmra.mrb[0].mxu0 %v6421
        %v7606 = vpop.f32.mrb[0].mxu0
        %v7607 = vadd.f32 %v7446, %v7606
        %v7608 = vpop.f32.mrb[0].mxu0
        %v7609 = vpop.f32.mrb[0].mxu0
        %v7610 = vadd.f32 %v7449, %v7609
        %v7611 = vpop.f32.mrb[0].mxu0
        %7612 = vmatprep.mubr.bf16.mxu0 %v6526
        %7613 = vmatmul.mubr.bf16.gmra.mrb[0].mxu0 %v6422
        %v7614 = vpop.f32.mrb[0].mxu0
        %v7615 = vadd.f32 %v7454, %v7614
        %v7616 = vpop.f32.mrb[0].mxu0
        %v7617 = vpop.f32.mrb[0].mxu0
        %v7618 = vadd.f32 %v7457, %v7617
        %v7619 = vpop.f32.mrb[0].mxu0
        %7620 = vmatprep.mubr.bf16.mxu0 %v6527
        %7621 = vmatmul.mubr.bf16.gmra.mrb[0].mxu0 %v6508
        %v7622 = vpop.f32.mrb[0].mxu0
        %v7623 = vadd.f32 %v7462, %v7622
        %v7624 = vpop.f32.mrb[0].mxu0
        %v7625 = vpop.f32.mrb[0].mxu0
        %v7626 = vadd.f32 %v7465, %v7625
        %v7627 = vpop.f32.mrb[0].mxu0
        %7628 = vdwg.mxu0
        %7629 = vmatprep.subr.bf16.mxu0 0
        %7630 = vmatpush1.bf16.msra.mxu0 %v7050
        %7631 = vmatprep.subr.bf16.mxu0 0
        %7632 = vmatpush1.bf16.msra.mxu0 %v7051
        %7633 = vmatprep.subr.bf16.mxu0 0
        %7634 = vmatpush1.bf16.msra.mxu0 %v7052
        %7635 = vmatprep.subr.bf16.mxu0 0
        %7636 = vmatpush1.bf16.msra.mxu0 %v7053
        %7637 = vmatprep.subr.bf16.mxu0 0
        %7638 = vmatpush1.bf16.msra.mxu0 %v7054
        %7639 = vmatprep.subr.bf16.mxu0 0
        %7640 = vmatpush1.bf16.msra.mxu0 %v7055
        %7641 = vmatprep.subr.bf16.mxu0 0
        %7642 = vmatpush1.bf16.msra.mxu0 %v7056
        %7643 = vmatprep.subr.bf16.mxu0 0
        %7644 = vmatpush1.bf16.msra.mxu0 %v7057
        %7645 = vmatprep.subr.bf16.mxu0 0
        %7646 = vmatpush1.bf16.msra.mxu0 %v7058
        %7647 = vmatprep.subr.bf16.mxu0 0
        %7648 = vmatpush1.bf16.msra.mxu0 %v7059
        %7649 = vmatprep.subr.bf16.mxu0 0
        %7650 = vmatpush1.bf16.msra.mxu0 %v7060
        %7651 = vmatprep.subr.bf16.mxu0 0
        %7652 = vmatpush1.bf16.msra.mxu0 %v7061
        %7653 = vmatprep.subr.bf16.mxu0 0
        %7654 = vmatpush1.bf16.msra.mxu0 %v7062
        %7655 = vmatprep.subr.bf16.mxu0 0
        %7656 = vmatpush1.bf16.msra.mxu0 %v7063
        %7657 = vmatprep.subr.bf16.mxu0 0
        %7658 = vmatpush1.bf16.msra.mxu0 %v7064
        %7659 = vmatprep.subr.bf16.mxu0 0
        %7660 = vmatpush1.bf16.msra.mxu0 %v7065
        %7661 = vmatprep.mubr.bf16.mxu0 %v6409
        %7662 = vmatmul.mubr.bf16.gmra.mrb[0].mxu0 %v6531
        %v7663 = vpop.f32.mrb[0].mxu0
        %v7664 = vadd.f32 %v7503, %v7663
        %v7665 = vpop.f32.mrb[0].mxu0
        %v7666 = vpop.f32.mrb[0].mxu0
        %v7667 = vadd.f32 %v7506, %v7666
        %v7668 = vpop.f32.mrb[0].mxu0
        %7669 = vmatprep.mubr.bf16.mxu0 %v6410
        %7670 = vmatmul.mubr.bf16.gmra.mrb[0].mxu0 %v6532
        %v7671 = vpop.f32.mrb[0].mxu0
        %v7672 = vadd.f32 %v7511, %v7671
        %v7673 = vpop.f32.mrb[0].mxu0
        %v7674 = vpop.f32.mrb[0].mxu0
        %v7675 = vadd.f32 %v7514, %v7674
        %v7676 = vpop.f32.mrb[0].mxu0
        %7677 = vmatprep.mubr.bf16.mxu0 %v6411
        %7678 = vmatmul.mubr.bf16.gmra.mrb[0].mxu0 %v6533
        %v7679 = vpop.f32.mrb[0].mxu0
        %v7680 = vadd.f32 %v7519, %v7679
        %v7681 = vpop.f32.mrb[0].mxu0
        %v7682 = vpop.f32.mrb[0].mxu0
        %v7683 = vadd.f32 %v7522, %v7682
        %v7684 = vpop.f32.mrb[0].mxu0
        %7685 = vmatprep.mubr.bf16.mxu0 %v6412
        %7686 = vmatmul.mubr.bf16.gmra.mrb[0].mxu0 %v6534
        %v7687 = vpop.f32.mrb[0].mxu0
        %v7688 = vadd.f32 %v7527, %v7687
        %v7689 = vpop.f32.mrb[0].mxu0
        %v7690 = vpop.f32.mrb[0].mxu0
        %v7691 = vadd.f32 %v7530, %v7690
        %v7692 = vpop.f32.mrb[0].mxu0
        %7693 = vmatprep.mubr.bf16.mxu0 %v6413
        %7694 = vmatmul.mubr.bf16.gmra.mrb[0].mxu0 %v6535
        %v7695 = vpop.f32.mrb[0].mxu0
        %v7696 = vadd.f32 %v7535, %v7695
        %v7697 = vpop.f32.mrb[0].mxu0
        %v7698 = vpop.f32.mrb[0].mxu0
        %v7699 = vadd.f32 %v7538, %v7698
        %v7700 = vpop.f32.mrb[0].mxu0
        %7701 = vmatprep.mubr.bf16.mxu0 %v6414
        %7702 = vmatmul.mubr.bf16.gmra.mrb[0].mxu0 %v6536
        %v7703 = vpop.f32.mrb[0].mxu0
        %v7704 = vadd.f32 %v7543, %v7703
        %v7705 = vpop.f32.mrb[0].mxu0
        %v7706 = vpop.f32.mrb[0].mxu0
        %v7707 = vadd.f32 %v7546, %v7706
        %v7708 = vpop.f32.mrb[0].mxu0
        %7709 = vmatprep.mubr.bf16.mxu0 %v6415
        %7710 = vmatmul.mubr.bf16.gmra.mrb[0].mxu0 %v6537
        %v7711 = vpop.f32.mrb[0].mxu0
        %v7712 = vadd.f32 %v7551, %v7711
        %v7713 = vpop.f32.mrb[0].mxu0
        %v7714 = vpop.f32.mrb[0].mxu0
        %v7715 = vadd.f32 %v7554, %v7714
        %v7716 = vpop.f32.mrb[0].mxu0
        %7717 = vmatprep.mubr.bf16.mxu0 %v6416
        %7718 = vmatmul.mubr.bf16.gmra.mrb[0].mxu0 %v6538
        %v7719 = vpop.f32.mrb[0].mxu0
        %v7720 = vadd.f32 %v7559, %v7719
        %v7721 = vpop.f32.mrb[0].mxu0
        %v7722 = vpop.f32.mrb[0].mxu0
        %v7723 = vadd.f32 %v7562, %v7722
        %v7724 = vpop.f32.mrb[0].mxu0
        %7725 = vmatprep.mubr.bf16.mxu0 %v6417
        %7726 = vmatmul.mubr.bf16.gmra.mrb[0].mxu0 %v6539
        %v7727 = vpop.f32.mrb[0].mxu0
        %v7728 = vadd.f32 %v7567, %v7727
        %v7729 = vpop.f32.mrb[0].mxu0
        %v7730 = vpop.f32.mrb[0].mxu0
        %v7731 = vadd.f32 %v7570, %v7730
        %v7732 = vpop.f32.mrb[0].mxu0
        %7733 = vmatprep.mubr.bf16.mxu0 %v6418
        %7734 = vmatmul.mubr.bf16.gmra.mrb[0].mxu0 %v6540
        %v7735 = vpop.f32.mrb[0].mxu0
        %v7736 = vadd.f32 %v7575, %v7735
        %v7737 = vpop.f32.mrb[0].mxu0
        %v7738 = vpop.f32.mrb[0].mxu0
        %v7739 = vadd.f32 %v7578, %v7738
        %v7740 = vpop.f32.mrb[0].mxu0
        %7741 = vmatprep.mubr.bf16.mxu0 %v6419
        %7742 = vmatmul.mubr.bf16.gmra.mrb[0].mxu0 %v6541
        %v7743 = vpop.f32.mrb[0].mxu0
        %v7744 = vadd.f32 %v7583, %v7743
        %v7745 = vpop.f32.mrb[0].mxu0
        %v7746 = vpop.f32.mrb[0].mxu0
        %v7747 = vadd.f32 %v7586, %v7746
        %v7748 = vpop.f32.mrb[0].mxu0
        %7749 = vmatprep.mubr.bf16.mxu0 %v6420
        %7750 = vmatmul.mubr.bf16.gmra.mrb[0].mxu0 %v6542
        %v7751 = vpop.f32.mrb[0].mxu0
        %v7752 = vadd.f32 %v7591, %v7751
        %v7753 = vpop.f32.mrb[0].mxu0
        %v7754 = vpop.f32.mrb[0].mxu0
        %v7755 = vadd.f32 %v7594, %v7754
        %v7756 = vpop.f32.mrb[0].mxu0
        %7757 = vmatprep.mubr.bf16.mxu0 %v6421
        %7758 = vmatmul.mubr.bf16.gmra.mrb[0].mxu0 %v6543
        %v7759 = vpop.f32.mrb[0].mxu0
        %v7760 = vadd.f32 %v7599, %v7759
        %v7761 = vpop.f32.mrb[0].mxu0
        %v7762 = vpop.f32.mrb[0].mxu0
        %v7763 = vadd.f32 %v7602, %v7762
        %v7764 = vpop.f32.mrb[0].mxu0
        %7765 = vmatprep.mubr.bf16.mxu0 %v6422
        %7766 = vmatmul.mubr.bf16.gmra.mrb[0].mxu0 %v6544
        %v7767 = vpop.f32.mrb[0].mxu0
        %v7768 = vadd.f32 %v7607, %v7767
        %v7769 = vpop.f32.mrb[0].mxu0
        %v7770 = vpop.f32.mrb[0].mxu0
        %v7771 = vadd.f32 %v7610, %v7770
        %v7772 = vpop.f32.mrb[0].mxu0
        %7773 = vmatprep.mubr.bf16.mxu0 %v6508
        %7774 = vmatmul.mubr.bf16.gmra.mrb[0].mxu0 %v6545
        %v7775 = vpop.f32.mrb[0].mxu0
        %v7776 = vadd.f32 %v7615, %v7775
        %v7777 = vpop.f32.mrb[0].mxu0
        %v7778 = vpop.f32.mrb[0].mxu0
        %v7779 = vadd.f32 %v7618, %v7778
        %v7780 = vpop.f32.mrb[0].mxu0
        %7781 = vmatprep.mubr.bf16.mxu0 %v6549
        %7782 = vmatmul.mubr.bf16.gmra.mrb[0].mxu0 %v6546
        %v7783 = vpop.f32.mrb[0].mxu0
        %v7784 = vadd.f32 %v7623, %v7783
        %v7785 = vpop.f32.mrb[0].mxu0
        %v7786 = vpop.f32.mrb[0].mxu0
        %v7787 = vadd.f32 %v7626, %v7786
        %v7788 = vpop.f32.mrb[0].mxu0
        %7789 = vdwg.mxu0
        %7790 = vmatprep.subr.bf16.mxu0 0
        %7791 = vmatpush1.bf16.msra.mxu0 %v7066
        %7792 = vmatprep.subr.bf16.mxu0 0
        %7793 = vmatpush1.bf16.msra.mxu0 %v7067
        %7794 = vmatprep.subr.bf16.mxu0 0
        %7795 = vmatpush1.bf16.msra.mxu0 %v7068
        %7796 = vmatprep.subr.bf16.mxu0 0
        %7797 = vmatpush1.bf16.msra.mxu0 %v7069
        %7798 = vmatprep.subr.bf16.mxu0 0
        %7799 = vmatpush1.bf16.msra.mxu0 %v7070
        %7800 = vmatprep.subr.bf16.mxu0 0
        %7801 = vmatpush1.bf16.msra.mxu0 %v7071
        %7802 = vmatprep.subr.bf16.mxu0 0
        %7803 = vmatpush1.bf16.msra.mxu0 %v7072
        %7804 = vmatprep.subr.bf16.mxu0 0
        %7805 = vmatpush1.bf16.msra.mxu0 %v7073
        %7806 = vmatprep.subr.bf16.mxu0 0
        %7807 = vmatpush1.bf16.msra.mxu0 0
        %7808 = vmatprep.subr.bf16.mxu0 0
        %7809 = vmatpush1.bf16.msra.mxu0 0
        %7810 = vmatprep.subr.bf16.mxu0 0
        %7811 = vmatpush1.bf16.msra.mxu0 0
        %7812 = vmatprep.subr.bf16.mxu0 0
        %7813 = vmatpush1.bf16.msra.mxu0 0
        %7814 = vmatprep.subr.bf16.mxu0 0
        %7815 = vmatpush1.bf16.msra.mxu0 0
        %7816 = vmatprep.subr.bf16.mxu0 0
        %7817 = vmatpush1.bf16.msra.mxu0 0
        %7818 = vmatprep.subr.bf16.mxu0 0
        %7819 = vmatpush1.bf16.msra.mxu0 0
        %7820 = vmatprep.subr.bf16.mxu0 0
        %7821 = vmatpush1.bf16.msra.mxu0 0
        %7822 = vmatprep.mubr.bf16.mxu0 0
        %7823 = vmatmul.mubr.bf16.gmra.mrb[0].mxu0 %v6553
        %v7824 = vpop.f32.mrb[0].mxu0
        %v7825 = vadd.f32 %v7664, %v7824
        %v7826 = vpop.f32.mrb[0].mxu0
        %v7827 = vpop.f32.mrb[0].mxu0
        %v7828 = vadd.f32 %v7667, %v7827
        %v7829 = vpop.f32.mrb[0].mxu0
        %7830 = vmatprep.mubr.bf16.mxu0 0
        %7831 = vmatmul.mubr.bf16.gmra.mrb[0].mxu0 %v6554
        %v7832 = vpop.f32.mrb[0].mxu0
        %v7833 = vadd.f32 %v7672, %v7832
        %v7834 = vpop.f32.mrb[0].mxu0
        %v7835 = vpop.f32.mrb[0].mxu0
        %v7836 = vadd.f32 %v7675, %v7835
        %v7837 = vpop.f32.mrb[0].mxu0
        %7838 = vmatprep.mubr.bf16.mxu0 0
        %7839 = vmatmul.mubr.bf16.gmra.mrb[0].mxu0 %v6555
        %v7840 = vpop.f32.mrb[0].mxu0
        %v7841 = vadd.f32 %v7680, %v7840
        %v7842 = vpop.f32.mrb[0].mxu0
        %v7843 = vpop.f32.mrb[0].mxu0
        %v7844 = vadd.f32 %v7683, %v7843
        %v7845 = vpop.f32.mrb[0].mxu0
        %7846 = vmatprep.mubr.bf16.mxu0 0
        %7847 = vmatmul.mubr.bf16.gmra.mrb[0].mxu0 %v6556
        %v7848 = vpop.f32.mrb[0].mxu0
        %v7849 = vadd.f32 %v7688, %v7848
        %v7850 = vpop.f32.mrb[0].mxu0
        %v7851 = vpop.f32.mrb[0].mxu0
        %v7852 = vadd.f32 %v7691, %v7851
        %v7853 = vpop.f32.mrb[0].mxu0
        %7854 = vmatprep.mubr.bf16.mxu0 0
        %7855 = vmatmul.mubr.bf16.gmra.mrb[0].mxu0 %v6557
        %v7856 = vpop.f32.mrb[0].mxu0
        %v7857 = vadd.f32 %v7696, %v7856
        %v7858 = vpop.f32.mrb[0].mxu0
        %v7859 = vpop.f32.mrb[0].mxu0
        %v7860 = vadd.f32 %v7699, %v7859
        %v7861 = vpop.f32.mrb[0].mxu0
        %7862 = vmatprep.mubr.bf16.mxu0 0
        %7863 = vmatmul.mubr.bf16.gmra.mrb[0].mxu0 %v6558
        %v7864 = vpop.f32.mrb[0].mxu0
        %v7865 = vadd.f32 %v7704, %v7864
        %v7866 = vpop.f32.mrb[0].mxu0
        %v7867 = vpop.f32.mrb[0].mxu0
        %v7868 = vadd.f32 %v7707, %v7867
        %v7869 = vpop.f32.mrb[0].mxu0
        %7870 = vmatprep.mubr.bf16.mxu0 0
        %7871 = vmatmul.mubr.bf16.gmra.mrb[0].mxu0 %v6559
        %v7872 = vpop.f32.mrb[0].mxu0
        %v7873 = vadd.f32 %v7712, %v7872
        %v7874 = vpop.f32.mrb[0].mxu0
        %v7875 = vpop.f32.mrb[0].mxu0
        %v7876 = vadd.f32 %v7715, %v7875
        %v7877 = vpop.f32.mrb[0].mxu0
        %7878 = vmatprep.mubr.bf16.mxu0 0
        %7879 = vmatmul.mubr.bf16.gmra.mrb[0].mxu0 %v6560
        %v7880 = vpop.f32.mrb[0].mxu0
        %v7881 = vadd.f32 %v7720, %v7880
        %v7882 = vpop.f32.mrb[0].mxu0
        %v7883 = vpop.f32.mrb[0].mxu0
        %v7884 = vadd.f32 %v7723, %v7883
        %v7885 = vpop.f32.mrb[0].mxu0
        %7886 = vmatprep.mubr.bf16.mxu0 0
        %7887 = vmatmul.mubr.bf16.gmra.mrb[0].mxu0 %v6561
        %v7888 = vpop.f32.mrb[0].mxu0
        %v7889 = vadd.f32 %v7728, %v7888
        %v7890 = vpop.f32.mrb[0].mxu0
        %v7891 = vpop.f32.mrb[0].mxu0
        %v7892 = vadd.f32 %v7731, %v7891
        %v7893 = vpop.f32.mrb[0].mxu0
        %7894 = vmatprep.mubr.bf16.mxu0 0
        %7895 = vmatmul.mubr.bf16.gmra.mrb[0].mxu0 %v6562
        %v7896 = vpop.f32.mrb[0].mxu0
        %v7897 = vadd.f32 %v7736, %v7896
        %v7898 = vpop.f32.mrb[0].mxu0
        %v7899 = vpop.f32.mrb[0].mxu0
        %v7900 = vadd.f32 %v7739, %v7899
        %v7901 = vpop.f32.mrb[0].mxu0
        %7902 = vmatprep.mubr.bf16.mxu0 0
        %7903 = vmatmul.mubr.bf16.gmra.mrb[0].mxu0 %v6563
        %v7904 = vpop.f32.mrb[0].mxu0
        %v7905 = vadd.f32 %v7744, %v7904
        %v7906 = vpop.f32.mrb[0].mxu0
        %v7907 = vpop.f32.mrb[0].mxu0
        %v7908 = vadd.f32 %v7747, %v7907
        %v7909 = vpop.f32.mrb[0].mxu0
        %7910 = vmatprep.mubr.bf16.mxu0 0
        %7911 = vmatmul.mubr.bf16.gmra.mrb[0].mxu0 %v6564
        %v7912 = vpop.f32.mrb[0].mxu0
        %v7913 = vadd.f32 %v7752, %v7912
        %v7914 = vpop.f32.mrb[0].mxu0
        %v7915 = vpop.f32.mrb[0].mxu0
        %v7916 = vadd.f32 %v7755, %v7915
        %v7917 = vpop.f32.mrb[0].mxu0
        %7918 = vmatprep.mubr.bf16.mxu0 0
        %7919 = vmatmul.mubr.bf16.gmra.mrb[0].mxu0 %v6565
        %v7920 = vpop.f32.mrb[0].mxu0
        %v7921 = vadd.f32 %v7760, %v7920
        %v7922 = vpop.f32.mrb[0].mxu0
        %v7923 = vpop.f32.mrb[0].mxu0
        %v7924 = vadd.f32 %v7763, %v7923
        %v7925 = vpop.f32.mrb[0].mxu0
        %7926 = vmatprep.mubr.bf16.mxu0 0
        %7927 = vmatmul.mubr.bf16.gmra.mrb[0].mxu0 %v6566
        %v7928 = vpop.f32.mrb[0].mxu0
        %v7929 = vadd.f32 %v7768, %v7928
        %v7930 = vpop.f32.mrb[0].mxu0
        %v7931 = vpop.f32.mrb[0].mxu0
        %v7932 = vadd.f32 %v7771, %v7931
        %v7933 = vpop.f32.mrb[0].mxu0
        %7934 = vmatprep.mubr.bf16.mxu0 0
        %7935 = vmatmul.mubr.bf16.gmra.mrb[0].mxu0 %v6567
        %v7936 = vpop.f32.mrb[0].mxu0
        %v7937 = vadd.f32 %v7776, %v7936
        %v7938 = vpop.f32.mrb[0].mxu0
        %v7939 = vpop.f32.mrb[0].mxu0
        %v7940 = vadd.f32 %v7779, %v7939
        %v7941 = vpop.f32.mrb[0].mxu0
        %7942 = vmatprep.mubr.bf16.mxu0 0
        %7943 = vmatmul.mubr.bf16.gmra.mrb[0].mxu0 %v6568
        %v7944 = vpop.f32.mrb[0].mxu0
        %v7945 = vadd.f32 %v7784, %v7944
        %v7946 = vpop.f32.mrb[0].mxu0
        %v7947 = vpop.f32.mrb[0].mxu0
        %v7948 = vadd.f32 %v7787, %v7947
        %v7949 = vpop.f32.mrb[0].mxu0
        %7950 = vdwg.mxu0
        %v7951 = vadd.f32 %v7825, %v7828
        %v7952 = vadd.f32 %v7951, %v7833
        %v7953 = vadd.f32 %v7952, %v7836
        %v7954 = vadd.f32 %v7953, %v7841
        %v7955 = vadd.f32 %v7954, %v7844
        %v7956 = vadd.f32 %v7955, %v7849
        %v7957 = vadd.f32 %v7956, %v7852
        %v7958 = vadd.f32 %v7957, %v7857
        %v7959 = vadd.f32 %v7958, %v7860
        %v7960 = vadd.f32 %v7959, %v7865
        %v7961 = vadd.f32 %v7960, %v7868
        %v7962 = vadd.f32 %v7961, %v7873
        %v7963 = vadd.f32 %v7962, %v7876
        %v7964 = vadd.f32 %v7963, %v7881
        %v7965 = vadd.f32 %v7964, %v7884
        %v7966 = vadd.f32 %v7965, %v7889
        %v7967 = vadd.f32 %v7966, %v7892
        %v7968 = vadd.f32 %v7967, %v7897
        %v7969 = vadd.f32 %v7968, %v7900
        %v7970 = vadd.f32 %v7969, %v7905
        %v7971 = vadd.f32 %v7970, %v7908
        %v7972 = vadd.f32 %v7971, %v7913
        %v7973 = vadd.f32 %v7972, %v7916
        %v7974 = vadd.f32 %v7973, %v7921
        %v7975 = vadd.f32 %v7974, %v7924
        %v7976 = vadd.f32 %v7975, %v7929
        %v7977 = vadd.f32 %v7976, %v7932
        %v7978 = vadd.f32 %v7977, %v7937
        %v7979 = vadd.f32 %v7978, %v7940
        %v7980 = vadd.f32 %v7979, %v7945
        %v7981 = vadd.f32 %v7980, %v7948
        %v7982 = vrot.slane %v7981, 4
        %v7983 = vadd.f32 %v7981, %v7982
        %v7984 = vrot.slane %v7983, 2
        %v7985 = vadd.f32 %v7983, %v7984
        %v7986 = vrot.slane %v7985, 1
        %v7987 = vadd.f32 %v7985, %v7986
        %v7988 = vmul.f32 %v7987, %v2354
        %v7989 = vsub.f32 %v7825, %v7988
        %v7990 = vsub.f32 %v7828, %v7988
        %v7991 = vsub.f32 %v7833, %v7988
        %v7992 = vsub.f32 %v7836, %v7988
        %v7993 = vsub.f32 %v7841, %v7988
        %v7994 = vsub.f32 %v7844, %v7988
        %v7995 = vsub.f32 %v7849, %v7988
        %v7996 = vsub.f32 %v7852, %v7988
        %v7997 = vsub.f32 %v7857, %v7988
        %v7998 = vsub.f32 %v7860, %v7988
        %v7999 = vsub.f32 %v7865, %v7988
        %v8000 = vsub.f32 %v7868, %v7988
        %v8001 = vsub.f32 %v7873, %v7988
        %v8002 = vsub.f32 %v7876, %v7988
        %v8003 = vsub.f32 %v7881, %v7988
        %v8004 = vsub.f32 %v7884, %v7988
        %v8005 = vsub.f32 %v7889, %v7988
        %v8006 = vsub.f32 %v7892, %v7988
        %v8007 = vsub.f32 %v7897, %v7988
        %v8008 = vsub.f32 %v7900, %v7988
        %v8009 = vsub.f32 %v7905, %v7988
        %v8010 = vsub.f32 %v7908, %v7988
        %v8011 = vsub.f32 %v7913, %v7988
        %v8012 = vsub.f32 %v7916, %v7988
        %v8013 = vsub.f32 %v7921, %v7988
        %v8014 = vsub.f32 %v7924, %v7988
        %v8015 = vsub.f32 %v7929, %v7988
        %v8016 = vsub.f32 %v7932, %v7988
        %v8017 = vsub.f32 %v7937, %v7988
        %v8018 = vsub.f32 %v7940, %v7988
        %v8019 = vsub.f32 %v7945, %v7988
        %v8020 = vsub.f32 %v7948, %v7988
        %v8021 = vmul.f32 %v7989, %v7989
        %v8022 = vmul.f32 %v7990, %v7990
        %v8023 = vmul.f32 %v7991, %v7991
        %v8024 = vmul.f32 %v7992, %v7992
        %v8025 = vmul.f32 %v7993, %v7993
        %v8026 = vmul.f32 %v7994, %v7994
        %v8027 = vmul.f32 %v7995, %v7995
        %v8028 = vmul.f32 %v7996, %v7996
        %v8029 = vmul.f32 %v7997, %v7997
        %v8030 = vmul.f32 %v7998, %v7998
        %v8031 = vmul.f32 %v7999, %v7999
        %v8032 = vmul.f32 %v8000, %v8000
        %v8033 = vmul.f32 %v8001, %v8001
        %v8034 = vmul.f32 %v8002, %v8002
        %v8035 = vmul.f32 %v8003, %v8003
        %v8036 = vmul.f32 %v8004, %v8004
        %v8037 = vmul.f32 %v8005, %v8005
        %v8038 = vmul.f32 %v8006, %v8006
        %v8039 = vmul.f32 %v8007, %v8007
        %v8040 = vmul.f32 %v8008, %v8008
        %v8041 = vmul.f32 %v8009, %v8009
        %v8042 = vmul.f32 %v8010, %v8010
        %v8043 = vmul.f32 %v8011, %v8011
        %v8044 = vmul.f32 %v8012, %v8012
        %v8045 = vmul.f32 %v8013, %v8013
        %v8046 = vmul.f32 %v8014, %v8014
        %v8047 = vmul.f32 %v8015, %v8015
        %v8048 = vmul.f32 %v8016, %v8016
        %v8049 = vmul.f32 %v8017, %v8017
        %v8050 = vmul.f32 %v8018, %v8018
        %v8051 = vmul.f32 %v8019, %v8019
        %v8052 = vmul.f32 %v8020, %v8020
        %v8053 = vadd.f32 %v8021, %v8022
        %v8054 = vadd.f32 %v8053, %v8023
        %v8055 = vadd.f32 %v8054, %v8024
        %v8056 = vadd.f32 %v8055, %v8025
        %v8057 = vadd.f32 %v8056, %v8026
        %v8058 = vadd.f32 %v8057, %v8027
        %v8059 = vadd.f32 %v8058, %v8028
        %v8060 = vadd.f32 %v8059, %v8029
        %v8061 = vadd.f32 %v8060, %v8030
        %v8062 = vadd.f32 %v8061, %v8031
        %v8063 = vadd.f32 %v8062, %v8032
        %v8064 = vadd.f32 %v8063, %v8033
        %v8065 = vadd.f32 %v8064, %v8034
        %v8066 = vadd.f32 %v8065, %v8035
        %v8067 = vadd.f32 %v8066, %v8036
        %v8068 = vadd.f32 %v8067, %v8037
        %v8069 = vadd.f32 %v8068, %v8038
        %v8070 = vadd.f32 %v8069, %v8039
        %v8071 = vadd.f32 %v8070, %v8040
        %v8072 = vadd.f32 %v8071, %v8041
        %v8073 = vadd.f32 %v8072, %v8042
        %v8074 = vadd.f32 %v8073, %v8043
        %v8075 = vadd.f32 %v8074, %v8044
        %v8076 = vadd.f32 %v8075, %v8045
        %v8077 = vadd.f32 %v8076, %v8046
        %v8078 = vadd.f32 %v8077, %v8047
        %v8079 = vadd.f32 %v8078, %v8048
        %v8080 = vadd.f32 %v8079, %v8049
        %v8081 = vadd.f32 %v8080, %v8050
        %v8082 = vadd.f32 %v8081, %v8051
        %v8083 = vadd.f32 %v8082, %v8052
        %v8084 = vrot.slane %v8083, 4
        %v8085 = vadd.f32 %v8083, %v8084
        %v8086 = vrot.slane %v8085, 2
        %v8087 = vadd.f32 %v8085, %v8086
        %v8088 = vrot.slane %v8087, 1
        %v8089 = vadd.f32 %v8087, %v8088
        %v8090 = vmul.f32 %v8089, %v2354
        %v8091 = vadd.f32 %v8090, 1e-05
        %v8092 = vrsqrt.pop %v8091
        %v8093 = vmul.f32 %v7989, %v8092
        %v8094 = vmul.f32 %v7990, %v8092
        %v8095 = vmul.f32 %v7991, %v8092
        %v8096 = vmul.f32 %v7992, %v8092
        %v8097 = vmul.f32 %v7993, %v8092
        %v8098 = vmul.f32 %v7994, %v8092
        %v8099 = vmul.f32 %v7995, %v8092
        %v8100 = vmul.f32 %v7996, %v8092
        %v8101 = vmul.f32 %v7997, %v8092
        %v8102 = vmul.f32 %v7998, %v8092
        %v8103 = vmul.f32 %v7999, %v8092
        %v8104 = vmul.f32 %v8000, %v8092
        %v8105 = vmul.f32 %v8001, %v8092
        %v8106 = vmul.f32 %v8002, %v8092
        %v8107 = vmul.f32 %v8003, %v8092
        %v8108 = vmul.f32 %v8004, %v8092
        %v8109 = vmul.f32 %v8005, %v8092
        %v8110 = vmul.f32 %v8006, %v8092
        %v8111 = vmul.f32 %v8007, %v8092
        %v8112 = vmul.f32 %v8008, %v8092
        %v8113 = vmul.f32 %v8009, %v8092
        %v8114 = vmul.f32 %v8010, %v8092
        %v8115 = vmul.f32 %v8011, %v8092
        %v8116 = vmul.f32 %v8012, %v8092
        %v8117 = vmul.f32 %v8013, %v8092
        %v8118 = vmul.f32 %v8014, %v8092
        %v8119 = vmul.f32 %v8015, %v8092
        %v8120 = vmul.f32 %v8016, %v8092
        %v8121 = vmul.f32 %v8017, %v8092
        %v8122 = vmul.f32 %v8018, %v8092
        %v8123 = vmul.f32 %v8019, %v8092
        %v8124 = vmul.f32 %v8020, %v8092
        %v8125 = vadd.f32 %v8093, %v4369
        %v8126 = vadd.f32 %v8094, %v4370
        %v8127 = vadd.f32 %v8095, %v4371
        %v8128 = vadd.f32 %v8096, %v4372
        %v8129 = vadd.f32 %v8097, %v4373
        %v8130 = vadd.f32 %v8098, %v4374
        %v8131 = vadd.f32 %v8099, %v4375
        %v8132 = vadd.f32 %v8100, %v4376
        %v8133 = vadd.f32 %v8101, %v4377
        %v8134 = vadd.f32 %v8102, %v4378
        %v8135 = vadd.f32 %v8103, %v4379
        %v8136 = vadd.f32 %v8104, %v4380
        %v8137 = vadd.f32 %v8105, %v4381
        %v8138 = vadd.f32 %v8106, %v4382
        %v8139 = vadd.f32 %v8107, %v4383
        %v8140 = vadd.f32 %v8108, %v4384
        %v8141 = vadd.f32 %v8109, %v4385
        %v8142 = vadd.f32 %v8110, %v4386
        %v8143 = vadd.f32 %v8111, %v4387
        %v8144 = vadd.f32 %v8112, %v4388
        %v8145 = vadd.f32 %v8113, %v4389
        %v8146 = vadd.f32 %v8114, %v4390
        %v8147 = vadd.f32 %v8115, %v4391
        %v8148 = vadd.f32 %v8116, %v4392
        %v8149 = vadd.f32 %v8117, %v4393
        %v8150 = vadd.f32 %v8118, %v4394
        %v8151 = vadd.f32 %v8119, %v4395
        %v8152 = vadd.f32 %v8120, %v4396
        %v8153 = vadd.f32 %v8121, %v4397
        %v8154 = vadd.f32 %v8122, %v4398
        %v8155 = vadd.f32 %v8123, %v4399
        %v8156 = vadd.f32 %v8124, %v4400
        %8157 = vst [vmem:[%s217] sm:$0xff] %v8125
        %8158 = vst [vmem:[%s217 + $0x8] sm:$0xff] %v8126
        %8159 = vst [vmem:[%s217 + $0x10] sm:$0xff] %v8127
        %8160 = vst [vmem:[%s217 + $0x18] sm:$0xff] %v8128
        %8161 = vst [vmem:[%s217 + $0x20] sm:$0xff] %v8129
        %8162 = vst [vmem:[%s217 + $0x28] sm:$0xff] %v8130
        %8163 = vst [vmem:[%s217 + $0x30] sm:$0xff] %v8131
        %8164 = vst [vmem:[%s217 + $0x38] sm:$0xff] %v8132
        %8165 = vst [vmem:[%s217 + $0x40] sm:$0xff] %v8133
        %8166 = vst [vmem:[%s217 + $0x48] sm:$0xff] %v8134
        %8167 = vst [vmem:[%s217 + $0x50] sm:$0xff] %v8135
        %8168 = vst [vmem:[%s217 + $0x58] sm:$0xff] %v8136
        %8169 = vst [vmem:[%s217 + $0x60] sm:$0xff] %v8137
        %8170 = vst [vmem:[%s217 + $0x68] sm:$0xff] %v8138
        %8171 = vst [vmem:[%s217 + $0x70] sm:$0xff] %v8139
        %8172 = vst [vmem:[%s217 + $0x78] sm:$0xff] %v8140
        %8173 = vst [vmem:[%s217 + $0x80] sm:$0xff] %v8141
        %8174 = vst [vmem:[%s217 + $0x88] sm:$0xff] %v8142
        %8175 = vst [vmem:[%s217 + $0x90] sm:$0xff] %v8143
        %8176 = vst [vmem:[%s217 + $0x98] sm:$0xff] %v8144
        %8177 = vst [vmem:[%s217 + $0xa0] sm:$0xff] %v8145
        %8178 = vst [vmem:[%s217 + $0xa8] sm:$0xff] %v8146
        %8179 = vst [vmem:[%s217 + $0xb0] sm:$0xff] %v8147
        %8180 = vst [vmem:[%s217 + $0xb8] sm:$0xff] %v8148
        %8181 = vst [vmem:[%s217 + $0xc0] sm:$0xff] %v8149
        %8182 = vst [vmem:[%s217 + $0xc8] sm:$0xff] %v8150
        %8183 = vst [vmem:[%s217 + $0xd0] sm:$0xff] %v8151
        %8184 = vst [vmem:[%s217 + $0xd8] sm:$0xff] %v8152
        %8185 = vst [vmem:[%s217 + $0xe0] sm:$0xff] %v8153
        %8186 = vst [vmem:[%s217 + $0xe8] sm:$0xff] %v8154
        %8187 = vst [vmem:[%s217 + $0xf0] sm:$0xff] %v8155
        %8188 = vst [vmem:[%s217 + $0xf8] sm:$0xff] %v8156
        %s8189 = sand.u32 %s97, 1
        %s8190 = scalar_lea.sflag [#allocation5], %s8189
        %s8191 = sand.u32 %s97, 1
        %s8192 = smul.addr %s8191, 256
        %s8193 = scalar_lea.vmem [#allocation9], %s8192
        // Predicated region
        $region45: #{resblocks_forward.1} parent=31 // pred_check
          %p8194 = pneg %p107
        $region46: #{resblocks_forward.1} parent=31 // pred_check_branch
          %8196 = sbr.rel (%p8194) target = $region48
        $region47: #{resblocks_forward.1} parent=31 // pred_region
          %s8198 = ssub.s32 4096, 4096
          %8199 = vsyncadd %s8190, %s8198
          %s8200 = smul.addr %s21, 32
          %s8201 = smul.addr %s8200, 128
          %s8202 = scalar_lea.hbm %s3, %s8201
          %s8203 = sshll.u32 %s8193, 4
          %s8204 = int_to_ptr.vmem [resolvable:$true] %s8203
          %8209 = dma.vmem_to_hbm [thread:$0]  %s8204, 4096, %s8202, %s8190, 128, 128, 8
        $region48: #{resblocks_forward.1} parent=31 // pred_fallthru
          _
      $region32: #{resblocks_forward.1} parent=5 // pred_fallthru
        _
      %p8210 = scmp.le.s32.totalorder 2, %s16
      // Predicated region
      $region49: #{resblocks_forward.1} parent=5 // pred_check
        %p8211 = pneg %p8210
      $region50: #{resblocks_forward.1} parent=5 // pred_check_branch
        %8213 = sbr.rel (%p8211) target = $region52
      $region51: #{resblocks_forward.1} parent=5 // pred_region
        %s8214 = ssub.s32 %s16, 2
        // Predicated region
        $region53: #{resblocks_forward.1} parent=51 // pred_check
          %p8215 = pneg %p113
        $region54: #{resblocks_forward.1} parent=51 // pred_check_branch
          %8217 = sbr.rel (%p8215) target = $region56
        $region55: #{resblocks_forward.1} parent=51 // pred_region
          %s8218 = sand.u32 %s98, 1
          %s8219 = scalar_lea.sflag [#allocation5], %s8218
          %s8220 = sand.u32 %s98, 1
          %s8221 = smul.addr %s8220, 256
          %s8222 = scalar_lea.vmem [#allocation9], %s8221
          %8223 = dma.done %s8219, 4096
        $region56: #{resblocks_forward.1} parent=51 // pred_fallthru
          _
      $region52: #{resblocks_forward.1} parent=5 // pred_fallthru
        _
    $region6: #{resblocks_forward.1} parent=1 // loop_footer
      %s20 = sadd.s32 1, %s16
    $region7: #{resblocks_forward.1} parent=1 // loop_footer_branch
      %15 = sbr.rel target = $region3
    $region8: #{resblocks_forward.1} parent=1 // loop_exit
      _
    %8224 = vsyncpa [#allocation4], 1
    %s8225 = scalar_lea.sflag [#allocation4], 1
    %8226 = vsyncpa %s8225, 1
    %8227 = vsyncpa [#allocation7], 1
    %8228 = vsyncpa [#allocation5], 1
    %s8229 = scalar_lea.sflag [#allocation5], 1
    %8230 = vsyncpa %s8229, 1

</llo_original>
